<compile_context>
chip_gen: v5e
topology: v5e:2x2
jax: 0.10.0
libtpu: 0.0.40
codegen_flags: <defaults>
</compile_context>

<pallas_src>
import functools
import math

import jax
import jax.numpy as jnp
from jax.experimental import pallas as pl
from jax.experimental.pallas import tpu as pltpu

BN_EPS = 1e-5
DILATIONS = (6, 12, 18, 24)

_PARALLEL = pltpu.CompilerParams(dimension_semantics=("parallel",))


# ------------------------------ Pallas kernels -------------------------------

def _col_stats(y):
    """Per-tile BN partials: rows = [sum, sum_sq] over the tile's M rows."""
    s1 = jnp.sum(y, axis=0, keepdims=True)
    s2 = jnp.sum(y * y, axis=0, keepdims=True)
    return jnp.concatenate([s1, s2], axis=0)[None]          # (1, 2, C)


def _conv_stats_kernel(p_ref, w_ref, b_ref, z_ref, s_ref):
    # conv (im2col'd) -> MXU matmul + bias, fused with BN partial statistics.
    z = jnp.dot(p_ref[...], w_ref[...],
                preferred_element_type=jnp.float32) + b_ref[...]
    z_ref[...] = z
    s_ref[...] = _col_stats(z)


def _bn_relu_kernel(z_ref, sc_ref, sh_ref, h_ref):
    # BN apply (precomputed scale/shift) + ReLU.
    h_ref[...] = jnp.maximum(z_ref[...] * sc_ref[...] + sh_ref[...], 0.0)


def _bnrelu_gconv_stats_kernel(z_ref, sc_ref, sh_ref, w_ref, b_ref,
                               y_ref, s_ref, *, n_groups, cg_in):
    # Fused: BN+ReLU of the previous layer, then `n_groups` independent 1x1
    # convs (one per ASPP branch) on 128-column channel groups, + bias + BN
    # partials — all in one kernel call.
    h = jnp.maximum(z_ref[...] * sc_ref[...] + sh_ref[...], 0.0)
    outs = []
    for g in range(n_groups):
        hg = h[:, g * cg_in:(g + 1) * cg_in]
        wg = w_ref[g * cg_in:(g + 1) * cg_in, :]
        outs.append(jnp.dot(hg, wg, preferred_element_type=jnp.float32))
    y = jnp.concatenate(outs, axis=1) + b_ref[...]
    y_ref[...] = y
    s_ref[...] = _col_stats(y)


def _bnrelu_rowdot_kernel(z_ref, sc_ref, sh_ref, w_ref, b_ref, y_ref):
    # Fused: BN+ReLU, then the four 128->1 projections + branch sum expressed
    # as one lane-reduction against a (1, 512) weight row.
    h = jnp.maximum(z_ref[...] * sc_ref[...] + sh_ref[...], 0.0)
    y_ref[...] = jnp.sum(h * w_ref[...], axis=1, keepdims=True) + b_ref[...]


# ------------------------------ pallas_call glue ------------------------------

def _mspec(shape):
    """Grid-invariant operand (weights / bias / BN scale-shift): full block."""
    nd = len(shape)
    return pl.BlockSpec(shape, lambda i: (0,) * nd)


def _tile_m(m):
    for t in (256, 512, 128, 64, 32, 16, 8):
        if m % t == 0:
            return t
    return m


def pallas_conv_stats(patches, w, b, tile_m):
    m, kdim = patches.shape
    cout = w.shape[1]
    nt = m // tile_m
    return pl.pallas_call(
        _conv_stats_kernel,
        grid=(nt,),
        in_specs=[pl.BlockSpec((tile_m, kdim), lambda i: (i, 0)),
                  _mspec((kdim, cout)),
                  _mspec((1, cout))],
        out_specs=(pl.BlockSpec((tile_m, cout), lambda i: (i, 0)),
                   pl.BlockSpec((1, 2, cout), lambda i: (i, 0, 0))),
        out_shape=(jax.ShapeDtypeStruct((m, cout), jnp.float32),
                   jax.ShapeDtypeStruct((nt, 2, cout), jnp.float32)),
        compiler_params=_PARALLEL,
    )(patches, w, b)


def pallas_bn_relu(z, scale, shift, tile_m):
    m, c = z.shape
    nt = m // tile_m
    return pl.pallas_call(
        _bn_relu_kernel,
        grid=(nt,),
        in_specs=[pl.BlockSpec((tile_m, c), lambda i: (i, 0)),
                  _mspec((1, c)), _mspec((1, c))],
        out_specs=pl.BlockSpec((tile_m, c), lambda i: (i, 0)),
        out_shape=jax.ShapeDtypeStruct((m, c), jnp.float32),
        compiler_params=_PARALLEL,
    )(z, scale, shift)


def pallas_bnrelu_gconv_stats(z, scale, shift, w, b, n_groups, tile_m):
    m, cin_all = z.shape
    cg_in = cin_all // n_groups
    cg_out = w.shape[1]
    cout_all = n_groups * cg_out
    nt = m // tile_m
    kernel = functools.partial(_bnrelu_gconv_stats_kernel,
                               n_groups=n_groups, cg_in=cg_in)
    return pl.pallas_call(
        kernel,
        grid=(nt,),
        in_specs=[pl.BlockSpec((tile_m, cin_all), lambda i: (i, 0)),
                  _mspec((1, cin_all)), _mspec((1, cin_all)),
                  _mspec((cin_all, cg_out)), _mspec((1, cout_all))],
        out_specs=(pl.BlockSpec((tile_m, cout_all), lambda i: (i, 0)),
                   pl.BlockSpec((1, 2, cout_all), lambda i: (i, 0, 0))),
        out_shape=(jax.ShapeDtypeStruct((m, cout_all), jnp.float32),
                   jax.ShapeDtypeStruct((nt, 2, cout_all), jnp.float32)),
        compiler_params=_PARALLEL,
    )(z, scale, shift, w, b)


def pallas_bnrelu_rowdot(z, scale, shift, w_row, b, tile_m):
    m, c = z.shape
    nt = m // tile_m
    return pl.pallas_call(
        _bnrelu_rowdot_kernel,
        grid=(nt,),
        in_specs=[pl.BlockSpec((tile_m, c), lambda i: (i, 0)),
                  _mspec((1, c)), _mspec((1, c)),
                  _mspec((1, c)), _mspec((1, 1))],
        out_specs=pl.BlockSpec((tile_m, 1), lambda i: (i, 0)),
        out_shape=jax.ShapeDtypeStruct((m, 1), jnp.float32),
        compiler_params=_PARALLEL,
    )(z, scale, shift, w_row, b)


# --------------------------------- JAX glue -----------------------------------

def _bn_scale_shift(stats, m):
    """Reduce per-tile [sum, sum_sq] partials -> per-channel (scale, shift)."""
    s = jnp.sum(stats, axis=0)                       # (2, C), f32 accumulation
    mean = s[0] / m
    var = jnp.maximum(s[1] / m - mean * mean, 0.0)   # biased var (PyTorch train)
    scale = jax.lax.rsqrt(var + BN_EPS)
    shift = -mean * scale
    return scale[None, :], shift[None, :]


def _im2col(x_nhwc, k, dil):
    """(N,H,W,C) -> (N*H*W, k*k*C) patches for a stride-1 'same' dilated conv."""
    n, h, w, c = x_nhwc.shape
    pad = dil * (k - 1) // 2
    xp = jnp.pad(x_nhwc, ((0, 0), (pad, pad), (pad, pad), (0, 0)))
    cols = []
    for kh in range(k):
        for kw in range(k):
            cols.append(xp[:, kh * dil:kh * dil + h, kw * dil:kw * dil + w, :])
    return jnp.concatenate(cols, axis=-1).reshape(n * h * w, k * k * c)


def _w3x3_to_mat(w):   # OIHW (O, I, 3, 3) -> (9*I, O), matching (kh, kw, ci)
    return jnp.transpose(w, (2, 3, 1, 0)).reshape(-1, w.shape[0])


def _w1x1_to_mat(w):   # OIHW (O, I, 1, 1) -> (I, O)
    return w[:, :, 0, 0].T


def refinenet_forward(y, upconv4, params):
    n, h, w, _ = y.shape
    m = n * h * w
    tile_m = _tile_m(m)

    up_nhwc = jnp.transpose(upconv4, (0, 2, 3, 1)).astype(jnp.float32)
    act = jnp.concatenate([y.astype(jnp.float32), up_nhwc], axis=-1)  # (N,H,W,34)

    # ---- last_conv: 3 x (3x3 conv + BN + ReLU) ----
    for (wc, bc) in params["last_conv"]:
        patches = _im2col(act, 3, 1)
        z, st = pallas_conv_stats(patches, _w3x3_to_mat(wc), bc[None, :], tile_m)
        sc, sh = _bn_scale_shift(st, m)
        act = pallas_bn_relu(z, sc, sh, tile_m).reshape(n, h, w, -1)

    # ---- ASPP: 4 dilated convs, then the 4 branch tails merged. ----
    z1_list, sc1_list, sh1_list = [], [], []
    for d, br in zip(DILATIONS, params["aspp"]):
        w1, b1 = br["conv1"]
        patches = _im2col(act, 3, d)
        z1, st1 = pallas_conv_stats(patches, _w3x3_to_mat(w1), b1[None, :], tile_m)
        sc1, sh1 = _bn_scale_shift(st1, m)
        z1_list.append(z1)
        sc1_list.append(sc1)
        sh1_list.append(sh1)

    z1_all = jnp.concatenate(z1_list, axis=1)                    # (M, 512)
    sc1_all = jnp.concatenate(sc1_list, axis=1)                  # (1, 512)
    sh1_all = jnp.concatenate(sh1_list, axis=1)                  # (1, 512)
    w2_all = jnp.concatenate(
        [_w1x1_to_mat(br["conv2"][0]) for br in params["aspp"]], axis=0)  # (512,128)
    b2_all = jnp.concatenate(
        [br["conv2"][1] for br in params["aspp"]])[None, :]               # (1, 512)

    # fused: BN+ReLU of the dilated convs + 4x (1x1 128->128) + BN partials
    z2_all, st2 = pallas_bnrelu_gconv_stats(
        z1_all, sc1_all, sh1_all, w2_all, b2_all, len(DILATIONS), tile_m)
    sc2_all, sh2_all = _bn_scale_shift(st2, m)

    # fused: BN+ReLU + 4x (1x1 128->1) + branch sum as one lane-reduction
    w3_row = jnp.concatenate(
        [br["conv3"][0][:, :, 0, 0] for br in params["aspp"]], axis=1)    # (1, 512)
    b3_sum = sum(br["conv3"][1][0] for br in params["aspp"]).reshape(1, 1)
    out = pallas_bnrelu_rowdot(z2_all, sc2_all, sh2_all, w3_row, b3_sum, tile_m)

    return out.reshape(n, h, w, 1)


# ------------------------------- params init ----------------------------------

def init_refinenet_params(key):
    keys = iter(jax.random.split(key, 16))

    def conv(cout, cin, k):
        kw, kb = jax.random.split(next(keys))
        bound = 1.0 / math.sqrt(cin * k * k)
        wgt = jax.random.uniform(kw, (cout, cin, k, k), jnp.float32, -bound, bound)
        bias = jax.random.uniform(kb, (cout,), jnp.float32, -bound, bound)
        return wgt, bias

    return {
        "last_conv": [conv(64, 34, 3), conv(64, 64, 3), conv(64, 64, 3)],
        "aspp": [{"conv1": conv(128, 64, 3),
                  "conv2": conv(128, 128, 1),
                  "conv3": conv(1, 128, 1)} for _ in DILATIONS],
    }


# ----------------------------- pure-JAX reference ------------------------------

def _conv_ref(x, w, b, dil, pad):
    out = jax.lax.conv_general_dilated(
        x, w, (1, 1), [(pad, pad), (pad, pad)], rhs_dilation=(dil, dil),
        dimension_numbers=("NCHW", "OIHW", "NCHW"),
        precision=jax.lax.Precision.HIGHEST)
    return out + b[None, :, None, None]


def _bn_relu_ref(x):
    mu = jnp.mean(x, axis=(0, 2, 3), keepdims=True)
    var = jnp.mean(jnp.square(x - mu), axis=(0, 2, 3), keepdims=True)
    return jax.nn.relu((x - mu) * jax.lax.rsqrt(var + BN_EPS))


def refinenet_ref(y, upconv4, params):
    x = jnp.concatenate([jnp.transpose(y, (0, 3, 1, 2)), upconv4], axis=1)
    for (w, b) in params["last_conv"]:
        x = _bn_relu_ref(_conv_ref(x, w, b, 1, 1))
    out = 0.0
    for d, br in zip(DILATIONS, params["aspp"]):
        h1 = _bn_relu_ref(_conv_ref(x, br["conv1"][0], br["conv1"][1], d, d))
        h2 = _bn_relu_ref(_conv_ref(h1, br["conv2"][0], br["conv2"][1], 1, 0))
        out = out + _conv_ref(h2, br["conv3"][0], br["conv3"][1], 1, 0)
    return jnp.transpose(out, (0, 2, 3, 1))


# ----------------------------------- main --------------------------------------

if __name__ == "__main__":
    N, H, W = 2, 16, 16

    key = jax.random.PRNGKey(0)
    k_y, k_u, k_p = jax.random.split(key, 3)
    y = jax.random.normal(k_y, (N, H, W, 2), jnp.float32)        # score maps (NHWC)
    upconv4 = jax.random.normal(k_u, (N, 32, H, W), jnp.float32)  # backbone feat (NCHW)
    params = init_refinenet_params(k_p)

    fwd = jax.jit(refinenet_forward)
    out = jax.block_until_ready(fwd(y, upconv4, params))
    assert out.shape == (N, H, W, 1)

    ref = refinenet_ref(y, upconv4, params)
    max_err = float(jnp.max(jnp.abs(out - ref)))
    assert bool(jnp.allclose(out, ref, atol=5e-3, rtol=5e-3)), max_err

    print("KERNEL_OK")
</pallas_src>

<mosaic_0001>
module attributes {stable_mosaic.version = 11 : i64} {
  func.func @_conv_stats_kernel(%arg0: i32, %arg1: memref<256x306xf32, #tpu.memory_space<vmem>>, %arg2: memref<306x64xf32, #tpu.memory_space<vmem>>, %arg3: memref<1x64xf32, #tpu.memory_space<vmem>>, %arg4: memref<256x64xf32, #tpu.memory_space<vmem>>, %arg5: memref<1x2x64xf32, #tpu.memory_space<vmem>>) attributes {dimension_semantics = [#tpu.dimension_semantics<parallel>], iteration_bounds = array<i64: 2>, scalar_prefetch = 0 : i64, scratch_operands = 0 : i64, tpu.core_type = #tpu.core_type<tc>, window_params = [{transform_indices = @transform_0, window_bounds = array<i64: 256, 306>}, {pipeline_mode = #tpu.pipeline_mode<synchronous>, transform_indices = @transform_1, window_bounds = array<i64: 306, 64>}, {pipeline_mode = #tpu.pipeline_mode<synchronous>, transform_indices = @transform_2, window_bounds = array<i64: 1, 64>}, {transform_indices = @transform_3, window_bounds = array<i64: 256, 64>}, {transform_indices = @transform_4, window_bounds = array<i64: 1, 2, 64>}]} {
    %c0 = arith.constant 0 : index
    %c0_0 = arith.constant 0 : index
    %0 = vector.load %arg1[%c0, %c0_0] : memref<256x306xf32, #tpu.memory_space<vmem>>, vector<256x306xf32>
    %c0_1 = arith.constant 0 : index
    %c0_2 = arith.constant 0 : index
    %1 = vector.load %arg2[%c0_1, %c0_2] : memref<306x64xf32, #tpu.memory_space<vmem>>, vector<306x64xf32>
    %cst = arith.constant dense<0.000000e+00> : vector<256x64xf32>
    %2 = tpu.matmul %0, %1, %cst {dimension_numbers = #tpu.dot_dimension_numbers<[1], [0], [0], [1], [0, 0, 1, 1], [], []>} : vector<256x306xf32>, vector<306x64xf32>, vector<256x64xf32> -> vector<256x64xf32>
    %c0_3 = arith.constant 0 : index
    %c0_4 = arith.constant 0 : index
    %3 = vector.load %arg3[%c0_3, %c0_4] : memref<1x64xf32, #tpu.memory_space<vmem>>, vector<1x64xf32>
    %4 = vector.broadcast %3 : vector<1x64xf32> to vector<256x64xf32>
    %5 = arith.addf %2, %4 : vector<256x64xf32>
    %c0_5 = arith.constant 0 : index
    %c0_6 = arith.constant 0 : index
    %6 = vector.load %arg4[%c0_5, %c0_6] : memref<256x64xf32, #tpu.memory_space<vmem>>, vector<256x64xf32>
    tpu.vector_store %arg4[%c0_5, %c0_6], %5 {strides = array<i32>} : memref<256x64xf32, #tpu.memory_space<vmem>>, vector<256x64xf32>,
    %cst_7 = arith.constant dense<0.000000e+00> : vector<64xf32>
    %7 = vector.multi_reduction <add>, %5, %cst_7 [0] : vector<256x64xf32> to vector<64xf32>
    %8 = vector.shape_cast %7 : vector<64xf32> to vector<1x64xf32>
    %9 = arith.mulf %5, %5 : vector<256x64xf32>
    %cst_8 = arith.constant dense<0.000000e+00> : vector<64xf32>
    %10 = vector.multi_reduction <add>, %9, %cst_8 [0] : vector<256x64xf32> to vector<64xf32>
    %11 = vector.shape_cast %10 : vector<64xf32> to vector<1x64xf32>
    %12 = tpu.concatenate %8, %11 in 0 : vector<1x64xf32>, vector<1x64xf32> -> vector<2x64xf32>
    %13 = vector.shape_cast %12 : vector<2x64xf32> to vector<1x2x64xf32>
    %c0_9 = arith.constant 0 : index
    %c0_10 = arith.constant 0 : index
    %c0_11 = arith.constant 0 : index
    %14 = vector.load %arg5[%c0_9, %c0_10, %c0_11] : memref<1x2x64xf32, #tpu.memory_space<vmem>>, vector<1x2x64xf32>
    tpu.vector_store %arg5[%c0_9, %c0_10, %c0_11], %13 {strides = array<i32>} : memref<1x2x64xf32, #tpu.memory_space<vmem>>, vector<1x2x64xf32>,
    return
  }
  func.func @transform_0(%arg0: i32) -> (i32, i32) {
    %c0_i32 = arith.constant 0 : i32
    %c0_i32_0 = arith.constant 0 : i32
    return %arg0, %c0_i32 : i32, i32
  }
  func.func @transform_1(%arg0: i32) -> (i32, i32) {
    %c0_i32 = arith.constant 0 : i32
    %c0_i32_0 = arith.constant 0 : i32
    %c0_i32_1 = arith.constant 0 : i32
    return %c0_i32, %c0_i32_0 : i32, i32
  }
  func.func @transform_2(%arg0: i32) -> (i32, i32) {
    %c0_i32 = arith.constant 0 : i32
    %c0_i32_0 = arith.constant 0 : i32
    %c0_i32_1 = arith.constant 0 : i32
    return %c0_i32, %c0_i32_0 : i32, i32
  }
  func.func @transform_3(%arg0: i32) -> (i32, i32) {
    %c0_i32 = arith.constant 0 : i32
    %c0_i32_0 = arith.constant 0 : i32
    return %arg0, %c0_i32 : i32, i32
  }
  func.func @transform_4(%arg0: i32) -> (i32, i32, i32) {
    %c0_i32 = arith.constant 0 : i32
    %c0_i32_0 = arith.constant 0 : i32
    %c0_i32_1 = arith.constant 0 : i32
    return %arg0, %c0_i32, %c0_i32_0 : i32, i32, i32
  }
}

module attributes {stable_mosaic.version = 11 : i64} {
  func.func @_bn_relu_kernel(%arg0: i32, %arg1: memref<256x64xf32, #tpu.memory_space<vmem>>, %arg2: memref<1x64xf32, #tpu.memory_space<vmem>>, %arg3: memref<1x64xf32, #tpu.memory_space<vmem>>, %arg4: memref<256x64xf32, #tpu.memory_space<vmem>>) attributes {dimension_semantics = [#tpu.dimension_semantics<parallel>], iteration_bounds = array<i64: 2>, scalar_prefetch = 0 : i64, scratch_operands = 0 : i64, tpu.core_type = #tpu.core_type<tc>, window_params = [{transform_indices = @transform_0, window_bounds = array<i64: 256, 64>}, {pipeline_mode = #tpu.pipeline_mode<synchronous>, transform_indices = @transform_1, window_bounds = array<i64: 1, 64>}, {pipeline_mode = #tpu.pipeline_mode<synchronous>, transform_indices = @transform_2, window_bounds = array<i64: 1, 64>}, {transform_indices = @transform_3, window_bounds = array<i64: 256, 64>}]} {
    %c0 = arith.constant 0 : index
    %c0_0 = arith.constant 0 : index
    %0 = vector.load %arg1[%c0, %c0_0] : memref<256x64xf32, #tpu.memory_space<vmem>>, vector<256x64xf32>
    %c0_1 = arith.constant 0 : index
    %c0_2 = arith.constant 0 : index
    %1 = vector.load %arg2[%c0_1, %c0_2] : memref<1x64xf32, #tpu.memory_space<vmem>>, vector<1x64xf32>
    %2 = vector.broadcast %1 : vector<1x64xf32> to vector<256x64xf32>
    %3 = arith.mulf %0, %2 : vector<256x64xf32>
    %c0_3 = arith.constant 0 : index
    %c0_4 = arith.constant 0 : index
    %4 = vector.load %arg3[%c0_3, %c0_4] : memref<1x64xf32, #tpu.memory_space<vmem>>, vector<1x64xf32>
    %5 = vector.broadcast %4 : vector<1x64xf32> to vector<256x64xf32>
    %6 = arith.addf %3, %5 : vector<256x64xf32>
    %cst = arith.constant 0.000000e+00 : f32
    %7 = vector.broadcast %cst : f32 to vector<256x64xf32>
    %8 = arith.maximumf %6, %7 : vector<256x64xf32>
    %c0_5 = arith.constant 0 : index
    %c0_6 = arith.constant 0 : index
    %9 = vector.load %arg4[%c0_5, %c0_6] : memref<256x64xf32, #tpu.memory_space<vmem>>, vector<256x64xf32>
    tpu.vector_store %arg4[%c0_5, %c0_6], %8 {strides = array<i32>} : memref<256x64xf32, #tpu.memory_space<vmem>>, vector<256x64xf32>,
    return
  }
  func.func @transform_0(%arg0: i32) -> (i32, i32) {
    %c0_i32 = arith.constant 0 : i32
    %c0_i32_0 = arith.constant 0 : i32
    return %arg0, %c0_i32 : i32, i32
  }
  func.func @transform_1(%arg0: i32) -> (i32, i32) {
    %c0_i32 = arith.constant 0 : i32
    %c0_i32_0 = arith.constant 0 : i32
    %c0_i32_1 = arith.constant 0 : i32
    return %c0_i32, %c0_i32_0 : i32, i32
  }
  func.func @transform_2(%arg0: i32) -> (i32, i32) {
    %c0_i32 = arith.constant 0 : i32
    %c0_i32_0 = arith.constant 0 : i32
    %c0_i32_1 = arith.constant 0 : i32
    return %c0_i32, %c0_i32_0 : i32, i32
  }
  func.func @transform_3(%arg0: i32) -> (i32, i32) {
    %c0_i32 = arith.constant 0 : i32
    %c0_i32_0 = arith.constant 0 : i32
    return %arg0, %c0_i32 : i32, i32
  }
}

module attributes {stable_mosaic.version = 11 : i64} {
  func.func @_conv_stats_kernel(%arg0: i32, %arg1: memref<256x576xf32, #tpu.memory_space<vmem>>, %arg2: memref<576x64xf32, #tpu.memory_space<vmem>>, %arg3: memref<1x64xf32, #tpu.memory_space<vmem>>, %arg4: memref<256x64xf32, #tpu.memory_space<vmem>>, %arg5: memref<1x2x64xf32, #tpu.memory_space<vmem>>) attributes {dimension_semantics = [#tpu.dimension_semantics<parallel>], iteration_bounds = array<i64: 2>, scalar_prefetch = 0 : i64, scratch_operands = 0 : i64, tpu.core_type = #tpu.core_type<tc>, window_params = [{transform_indices = @transform_0, window_bounds = array<i64: 256, 576>}, {pipeline_mode = #tpu.pipeline_mode<synchronous>, transform_indices = @transform_1, window_bounds = array<i64: 576, 64>}, {pipeline_mode = #tpu.pipeline_mode<synchronous>, transform_indices = @transform_2, window_bounds = array<i64: 1, 64>}, {transform_indices = @transform_3, window_bounds = array<i64: 256, 64>}, {transform_indices = @transform_4, window_bounds = array<i64: 1, 2, 64>}]} {
    %c0 = arith.constant 0 : index
    %c0_0 = arith.constant 0 : index
    %0 = vector.load %arg1[%c0, %c0_0] : memref<256x576xf32, #tpu.memory_space<vmem>>, vector<256x576xf32>
    %c0_1 = arith.constant 0 : index
    %c0_2 = arith.constant 0 : index
    %1 = vector.load %arg2[%c0_1, %c0_2] : memref<576x64xf32, #tpu.memory_space<vmem>>, vector<576x64xf32>
    %cst = arith.constant dense<0.000000e+00> : vector<256x64xf32>
    %2 = tpu.matmul %0, %1, %cst {dimension_numbers = #tpu.dot_dimension_numbers<[1], [0], [0], [1], [0, 0, 1, 1], [], []>} : vector<256x576xf32>, vector<576x64xf32>, vector<256x64xf32> -> vector<256x64xf32>
    %c0_3 = arith.constant 0 : index
    %c0_4 = arith.constant 0 : index
    %3 = vector.load %arg3[%c0_3, %c0_4] : memref<1x64xf32, #tpu.memory_space<vmem>>, vector<1x64xf32>
    %4 = vector.broadcast %3 : vector<1x64xf32> to vector<256x64xf32>
    %5 = arith.addf %2, %4 : vector<256x64xf32>
    %c0_5 = arith.constant 0 : index
    %c0_6 = arith.constant 0 : index
    %6 = vector.load %arg4[%c0_5, %c0_6] : memref<256x64xf32, #tpu.memory_space<vmem>>, vector<256x64xf32>
    tpu.vector_store %arg4[%c0_5, %c0_6], %5 {strides = array<i32>} : memref<256x64xf32, #tpu.memory_space<vmem>>, vector<256x64xf32>,
    %cst_7 = arith.constant dense<0.000000e+00> : vector<64xf32>
    %7 = vector.multi_reduction <add>, %5, %cst_7 [0] : vector<256x64xf32> to vector<64xf32>
    %8 = vector.shape_cast %7 : vector<64xf32> to vector<1x64xf32>
    %9 = arith.mulf %5, %5 : vector<256x64xf32>
    %cst_8 = arith.constant dense<0.000000e+00> : vector<64xf32>
    %10 = vector.multi_reduction <add>, %9, %cst_8 [0] : vector<256x64xf32> to vector<64xf32>
    %11 = vector.shape_cast %10 : vector<64xf32> to vector<1x64xf32>
    %12 = tpu.concatenate %8, %11 in 0 : vector<1x64xf32>, vector<1x64xf32> -> vector<2x64xf32>
    %13 = vector.shape_cast %12 : vector<2x64xf32> to vector<1x2x64xf32>
    %c0_9 = arith.constant 0 : index
    %c0_10 = arith.constant 0 : index
    %c0_11 = arith.constant 0 : index
    %14 = vector.load %arg5[%c0_9, %c0_10, %c0_11] : memref<1x2x64xf32, #tpu.memory_space<vmem>>, vector<1x2x64xf32>
    tpu.vector_store %arg5[%c0_9, %c0_10, %c0_11], %13 {strides = array<i32>} : memref<1x2x64xf32, #tpu.memory_space<vmem>>, vector<1x2x64xf32>,
    return
  }
  func.func @transform_0(%arg0: i32) -> (i32, i32) {
    %c0_i32 = arith.constant 0 : i32
    %c0_i32_0 = arith.constant 0 : i32
    return %arg0, %c0_i32 : i32, i32
  }
  func.func @transform_1(%arg0: i32) -> (i32, i32) {
    %c0_i32 = arith.constant 0 : i32
    %c0_i32_0 = arith.constant 0 : i32
    %c0_i32_1 = arith.constant 0 : i32
    return %c0_i32, %c0_i32_0 : i32, i32
  }
  func.func @transform_2(%arg0: i32) -> (i32, i32) {
    %c0_i32 = arith.constant 0 : i32
    %c0_i32_0 = arith.constant 0 : i32
    %c0_i32_1 = arith.constant 0 : i32
    return %c0_i32, %c0_i32_0 : i32, i32
  }
  func.func @transform_3(%arg0: i32) -> (i32, i32) {
    %c0_i32 = arith.constant 0 : i32
    %c0_i32_0 = arith.constant 0 : i32
    return %arg0, %c0_i32 : i32, i32
  }
  func.func @transform_4(%arg0: i32) -> (i32, i32, i32) {
    %c0_i32 = arith.constant 0 : i32
    %c0_i32_0 = arith.constant 0 : i32
    %c0_i32_1 = arith.constant 0 : i32
    return %arg0, %c0_i32, %c0_i32_0 : i32, i32, i32
  }
}

module attributes {stable_mosaic.version = 11 : i64} {
  func.func @_conv_stats_kernel(%arg0: i32, %arg1: memref<256x576xf32, #tpu.memory_space<vmem>>, %arg2: memref<576x128xf32, #tpu.memory_space<vmem>>, %arg3: memref<1x128xf32, #tpu.memory_space<vmem>>, %arg4: memref<256x128xf32, #tpu.memory_space<vmem>>, %arg5: memref<1x2x128xf32, #tpu.memory_space<vmem>>) attributes {dimension_semantics = [#tpu.dimension_semantics<parallel>], iteration_bounds = array<i64: 2>, scalar_prefetch = 0 : i64, scratch_operands = 0 : i64, tpu.core_type = #tpu.core_type<tc>, window_params = [{transform_indices = @transform_0, window_bounds = array<i64: 256, 576>}, {pipeline_mode = #tpu.pipeline_mode<synchronous>, transform_indices = @transform_1, window_bounds = array<i64: 576, 128>}, {pipeline_mode = #tpu.pipeline_mode<synchronous>, transform_indices = @transform_2, window_bounds = array<i64: 1, 128>}, {transform_indices = @transform_3, window_bounds = array<i64: 256, 128>}, {transform_indices = @transform_4, window_bounds = array<i64: 1, 2, 128>}]} {
    %c0 = arith.constant 0 : index
    %c0_0 = arith.constant 0 : index
    %0 = vector.load %arg1[%c0, %c0_0] : memref<256x576xf32, #tpu.memory_space<vmem>>, vector<256x576xf32>
    %c0_1 = arith.constant 0 : index
    %c0_2 = arith.constant 0 : index
    %1 = vector.load %arg2[%c0_1, %c0_2] : memref<576x128xf32, #tpu.memory_space<vmem>>, vector<576x128xf32>
    %cst = arith.constant dense<0.000000e+00> : vector<256x128xf32>
    %2 = tpu.matmul %0, %1, %cst {dimension_numbers = #tpu.dot_dimension_numbers<[1], [0], [0], [1], [0, 0, 1, 1], [], []>} : vector<256x576xf32>, vector<576x128xf32>, vector<256x128xf32> -> vector<256x128xf32>
    %c0_3 = arith.constant 0 : index
    %c0_4 = arith.constant 0 : index
    %3 = vector.load %arg3[%c0_3, %c0_4] : memref<1x128xf32, #tpu.memory_space<vmem>>, vector<1x128xf32>
    %4 = vector.broadcast %3 : vector<1x128xf32> to vector<256x128xf32>
    %5 = arith.addf %2, %4 : vector<256x128xf32>
    %c0_5 = arith.constant 0 : index
    %c0_6 = arith.constant 0 : index
    %6 = vector.load %arg4[%c0_5, %c0_6] : memref<256x128xf32, #tpu.memory_space<vmem>>, vector<256x128xf32>
    tpu.vector_store %arg4[%c0_5, %c0_6], %5 {strides = array<i32>} : memref<256x128xf32, #tpu.memory_space<vmem>>, vector<256x128xf32>,
    %cst_7 = arith.constant dense<0.000000e+00> : vector<128xf32>
    %7 = vector.multi_reduction <add>, %5, %cst_7 [0] : vector<256x128xf32> to vector<128xf32>
    %8 = vector.shape_cast %7 : vector<128xf32> to vector<1x128xf32>
    %9 = arith.mulf %5, %5 : vector<256x128xf32>
    %cst_8 = arith.constant dense<0.000000e+00> : vector<128xf32>
    %10 = vector.multi_reduction <add>, %9, %cst_8 [0] : vector<256x128xf32> to vector<128xf32>
    %11 = vector.shape_cast %10 : vector<128xf32> to vector<1x128xf32>
    %12 = tpu.concatenate %8, %11 in 0 : vector<1x128xf32>, vector<1x128xf32> -> vector<2x128xf32>
    %13 = vector.shape_cast %12 : vector<2x128xf32> to vector<1x2x128xf32>
    %c0_9 = arith.constant 0 : index
    %c0_10 = arith.constant 0 : index
    %c0_11 = arith.constant 0 : index
    %14 = vector.load %arg5[%c0_9, %c0_10, %c0_11] : memref<1x2x128xf32, #tpu.memory_space<vmem>>, vector<1x2x128xf32>
    tpu.vector_store %arg5[%c0_9, %c0_10, %c0_11], %13 {strides = array<i32>} : memref<1x2x128xf32, #tpu.memory_space<vmem>>, vector<1x2x128xf32>,
    return
  }
  func.func @transform_0(%arg0: i32) -> (i32, i32) {
    %c0_i32 = arith.constant 0 : i32
    %c0_i32_0 = arith.constant 0 : i32
    return %arg0, %c0_i32 : i32, i32
  }
  func.func @transform_1(%arg0: i32) -> (i32, i32) {
    %c0_i32 = arith.constant 0 : i32
    %c0_i32_0 = arith.constant 0 : i32
    %c0_i32_1 = arith.constant 0 : i32
    return %c0_i32, %c0_i32_0 : i32, i32
  }
  func.func @transform_2(%arg0: i32) -> (i32, i32) {
    %c0_i32 = arith.constant 0 : i32
    %c0_i32_0 = arith.constant 0 : i32
    %c0_i32_1 = arith.constant 0 : i32
    return %c0_i32, %c0_i32_0 : i32, i32
  }
  func.func @transform_3(%arg0: i32) -> (i32, i32) {
    %c0_i32 = arith.constant 0 : i32
    %c0_i32_0 = arith.constant 0 : i32
    return %arg0, %c0_i32 : i32, i32
  }
  func.func @transform_4(%arg0: i32) -> (i32, i32, i32) {
    %c0_i32 = arith.constant 0 : i32
    %c0_i32_0 = arith.constant 0 : i32
    %c0_i32_1 = arith.constant 0 : i32
    return %arg0, %c0_i32, %c0_i32_0 : i32, i32, i32
  }
}

module attributes {stable_mosaic.version = 11 : i64} {
  func.func @_bnrelu_gconv_stats_kernel(%arg0: i32, %arg1: memref<256x512xf32, #tpu.memory_space<vmem>>, %arg2: memref<1x512xf32, #tpu.memory_space<vmem>>, %arg3: memref<1x512xf32, #tpu.memory_space<vmem>>, %arg4: memref<512x128xf32, #tpu.memory_space<vmem>>, %arg5: memref<1x512xf32, #tpu.memory_space<vmem>>, %arg6: memref<256x512xf32, #tpu.memory_space<vmem>>, %arg7: memref<1x2x512xf32, #tpu.memory_space<vmem>>) attributes {dimension_semantics = [#tpu.dimension_semantics<parallel>], iteration_bounds = array<i64: 2>, scalar_prefetch = 0 : i64, scratch_operands = 0 : i64, tpu.core_type = #tpu.core_type<tc>, window_params = [{transform_indices = @transform_0, window_bounds = array<i64: 256, 512>}, {pipeline_mode = #tpu.pipeline_mode<synchronous>, transform_indices = @transform_1, window_bounds = array<i64: 1, 512>}, {pipeline_mode = #tpu.pipeline_mode<synchronous>, transform_indices = @transform_2, window_bounds = array<i64: 1, 512>}, {pipeline_mode = #tpu.pipeline_mode<synchronous>, transform_indices = @transform_3, window_bounds = array<i64: 512, 128>}, {pipeline_mode = #tpu.pipeline_mode<synchronous>, transform_indices = @transform_4, window_bounds = array<i64: 1, 512>}, {transform_indices = @transform_5, window_bounds = array<i64: 256, 512>}, {transform_indices = @transform_6, window_bounds = array<i64: 1, 2, 512>}]} {
    %c0 = arith.constant 0 : index
    %c0_0 = arith.constant 0 : index
    %0 = vector.load %arg1[%c0, %c0_0] : memref<256x512xf32, #tpu.memory_space<vmem>>, vector<256x512xf32>
    %c0_1 = arith.constant 0 : index
    %c0_2 = arith.constant 0 : index
    %1 = vector.load %arg2[%c0_1, %c0_2] : memref<1x512xf32, #tpu.memory_space<vmem>>, vector<1x512xf32>
    %2 = vector.broadcast %1 : vector<1x512xf32> to vector<256x512xf32>
    %3 = arith.mulf %0, %2 : vector<256x512xf32>
    %c0_3 = arith.constant 0 : index
    %c0_4 = arith.constant 0 : index
    %4 = vector.load %arg3[%c0_3, %c0_4] : memref<1x512xf32, #tpu.memory_space<vmem>>, vector<1x512xf32>
    %5 = vector.broadcast %4 : vector<1x512xf32> to vector<256x512xf32>
    %6 = arith.addf %3, %5 : vector<256x512xf32>
    %cst = arith.constant 0.000000e+00 : f32
    %7 = vector.broadcast %cst : f32 to vector<256x512xf32>
    %8 = arith.maximumf %6, %7 : vector<256x512xf32>
    %9 = vector.extract_strided_slice %8 {offsets = [0, 0], sizes = [256, 128], strides = [1, 1]} : vector<256x512xf32> to vector<256x128xf32>
    %c0_5 = arith.constant 0 : index
    %c0_6 = arith.constant 0 : index
    %10 = vector.load %arg4[%c0_5, %c0_6] : memref<512x128xf32, #tpu.memory_space<vmem>>, vector<128x128xf32>
    %cst_7 = arith.constant dense<0.000000e+00> : vector<256x128xf32>
    %11 = tpu.matmul %9, %10, %cst_7 {dimension_numbers = #tpu.dot_dimension_numbers<[1], [0], [0], [1], [0, 0, 1, 1], [], []>} : vector<256x128xf32>, vector<128x128xf32>, vector<256x128xf32> -> vector<256x128xf32>
    %12 = vector.extract_strided_slice %8 {offsets = [0, 128], sizes = [256, 128], strides = [1, 1]} : vector<256x512xf32> to vector<256x128xf32>
    %c128 = arith.constant 128 : index
    %c0_8 = arith.constant 0 : index
    %13 = vector.load %arg4[%c128, %c0_8] : memref<512x128xf32, #tpu.memory_space<vmem>>, vector<128x128xf32>
    %cst_9 = arith.constant dense<0.000000e+00> : vector<256x128xf32>
    %14 = tpu.matmul %12, %13, %cst_9 {dimension_numbers = #tpu.dot_dimension_numbers<[1], [0], [0], [1], [0, 0, 1, 1], [], []>} : vector<256x128xf32>, vector<128x128xf32>, vector<256x128xf32> -> vector<256x128xf32>
    %15 = vector.extract_strided_slice %8 {offsets = [0, 256], sizes = [256, 128], strides = [1, 1]} : vector<256x512xf32> to vector<256x128xf32>
    %c256 = arith.constant 256 : index
    %c0_10 = arith.constant 0 : index
    %16 = vector.load %arg4[%c256, %c0_10] : memref<512x128xf32, #tpu.memory_space<vmem>>, vector<128x128xf32>
    %cst_11 = arith.constant dense<0.000000e+00> : vector<256x128xf32>
    %17 = tpu.matmul %15, %16, %cst_11 {dimension_numbers = #tpu.dot_dimension_numbers<[1], [0], [0], [1], [0, 0, 1, 1], [], []>} : vector<256x128xf32>, vector<128x128xf32>, vector<256x128xf32> -> vector<256x128xf32>
    %18 = vector.extract_strided_slice %8 {offsets = [0, 384], sizes = [256, 128], strides = [1, 1]} : vector<256x512xf32> to vector<256x128xf32>
    %c384 = arith.constant 384 : index
    %c0_12 = arith.constant 0 : index
    %19 = vector.load %arg4[%c384, %c0_12] : memref<512x128xf32, #tpu.memory_space<vmem>>, vector<128x128xf32>
    %cst_13 = arith.constant dense<0.000000e+00> : vector<256x128xf32>
    %20 = tpu.matmul %18, %19, %cst_13 {dimension_numbers = #tpu.dot_dimension_numbers<[1], [0], [0], [1], [0, 0, 1, 1], [], []>} : vector<256x128xf32>, vector<128x128xf32>, vector<256x128xf32> -> vector<256x128xf32>
    %21 = tpu.concatenate %11, %14, %17, %20 in 1 : vector<256x128xf32>, vector<256x128xf32>, vector<256x128xf32>, vector<256x128xf32> -> vector<256x512xf32>
    %c0_14 = arith.constant 0 : index
    %c0_15 = arith.constant 0 : index
    %22 = vector.load %arg5[%c0_14, %c0_15] : memref<1x512xf32, #tpu.memory_space<vmem>>, vector<1x512xf32>
    %23 = vector.broadcast %22 : vector<1x512xf32> to vector<256x512xf32>
    %24 = arith.addf %21, %23 : vector<256x512xf32>
    %c0_16 = arith.constant 0 : index
    %c0_17 = arith.constant 0 : index
    %25 = vector.load %arg6[%c0_16, %c0_17] : memref<256x512xf32, #tpu.memory_space<vmem>>, vector<256x512xf32>
    tpu.vector_store %arg6[%c0_16, %c0_17], %24 {strides = array<i32>} : memref<256x512xf32, #tpu.memory_space<vmem>>, vector<256x512xf32>,
    %cst_18 = arith.constant dense<0.000000e+00> : vector<512xf32>
    %26 = vector.multi_reduction <add>, %24, %cst_18 [0] : vector<256x512xf32> to vector<512xf32>
    %27 = vector.shape_cast %26 : vector<512xf32> to vector<1x512xf32>
    %28 = arith.mulf %24, %24 : vector<256x512xf32>
    %cst_19 = arith.constant dense<0.000000e+00> : vector<512xf32>
    %29 = vector.multi_reduction <add>, %28, %cst_19 [0] : vector<256x512xf32> to vector<512xf32>
    %30 = vector.shape_cast %29 : vector<512xf32> to vector<1x512xf32>
    %31 = tpu.concatenate %27, %30 in 0 : vector<1x512xf32>, vector<1x512xf32> -> vector<2x512xf32>
    %32 = vector.shape_cast %31 : vector<2x512xf32> to vector<1x2x512xf32>
    %c0_20 = arith.constant 0 : index
    %c0_21 = arith.constant 0 : index
    %c0_22 = arith.constant 0 : index
    %33 = vector.load %arg7[%c0_20, %c0_21, %c0_22] : memref<1x2x512xf32, #tpu.memory_space<vmem>>, vector<1x2x512xf32>
    tpu.vector_store %arg7[%c0_20, %c0_21, %c0_22], %32 {strides = array<i32>} : memref<1x2x512xf32, #tpu.memory_space<vmem>>, vector<1x2x512xf32>,
    return
  }
  func.func @transform_0(%arg0: i32) -> (i32, i32) {
    %c0_i32 = arith.constant 0 : i32
    %c0_i32_0 = arith.constant 0 : i32
    return %arg0, %c0_i32 : i32, i32
  }
  func.func @transform_1(%arg0: i32) -> (i32, i32) {
    %c0_i32 = arith.constant 0 : i32
    %c0_i32_0 = arith.constant 0 : i32
    %c0_i32_1 = arith.constant 0 : i32
    return %c0_i32, %c0_i32_0 : i32, i32
  }
  func.func @transform_2(%arg0: i32) -> (i32, i32) {
    %c0_i32 = arith.constant 0 : i32
    %c0_i32_0 = arith.constant 0 : i32
    %c0_i32_1 = arith.constant 0 : i32
    return %c0_i32, %c0_i32_0 : i32, i32
  }
  func.func @transform_3(%arg0: i32) -> (i32, i32) {
    %c0_i32 = arith.constant 0 : i32
    %c0_i32_0 = arith.constant 0 : i32
    %c0_i32_1 = arith.constant 0 : i32
    return %c0_i32, %c0_i32_0 : i32, i32
  }
  func.func @transform_4(%arg0: i32) -> (i32, i32) {
    %c0_i32 = arith.constant 0 : i32
    %c0_i32_0 = arith.constant 0 : i32
    %c0_i32_1 = arith.constant 0 : i32
    return %c0_i32, %c0_i32_0 : i32, i32
  }
  func.func @transform_5(%arg0: i32) -> (i32, i32) {
    %c0_i32 = arith.constant 0 : i32
    %c0_i32_0 = arith.constant 0 : i32
    return %arg0, %c0_i32 : i32, i32
  }
  func.func @transform_6(%arg0: i32) -> (i32, i32, i32) {
    %c0_i32 = arith.constant 0 : i32
    %c0_i32_0 = arith.constant 0 : i32
    %c0_i32_1 = arith.constant 0 : i32
    return %arg0, %c0_i32, %c0_i32_0 : i32, i32, i32
  }
}

module attributes {stable_mosaic.version = 11 : i64} {
  func.func @_bnrelu_rowdot_kernel(%arg0: i32, %arg1: memref<256x512xf32, #tpu.memory_space<vmem>>, %arg2: memref<1x512xf32, #tpu.memory_space<vmem>>, %arg3: memref<1x512xf32, #tpu.memory_space<vmem>>, %arg4: memref<1x512xf32, #tpu.memory_space<vmem>>, %arg5: memref<1x1xf32, #tpu.memory_space<vmem>>, %arg6: memref<256x1xf32, #tpu.memory_space<vmem>>) attributes {dimension_semantics = [#tpu.dimension_semantics<parallel>], iteration_bounds = array<i64: 2>, scalar_prefetch = 0 : i64, scratch_operands = 0 : i64, tpu.core_type = #tpu.core_type<tc>, window_params = [{transform_indices = @transform_0, window_bounds = array<i64: 256, 512>}, {pipeline_mode = #tpu.pipeline_mode<synchronous>, transform_indices = @transform_1, window_bounds = array<i64: 1, 512>}, {pipeline_mode = #tpu.pipeline_mode<synchronous>, transform_indices = @transform_2, window_bounds = array<i64: 1, 512>}, {pipeline_mode = #tpu.pipeline_mode<synchronous>, transform_indices = @transform_3, window_bounds = array<i64: 1, 512>}, {pipeline_mode = #tpu.pipeline_mode<synchronous>, transform_indices = @transform_4, window_bounds = array<i64: 1, 1>}, {transform_indices = @transform_5, window_bounds = array<i64: 256, 1>}]} {
    %c0 = arith.constant 0 : index
    %c0_0 = arith.constant 0 : index
    %0 = vector.load %arg1[%c0, %c0_0] : memref<256x512xf32, #tpu.memory_space<vmem>>, vector<256x512xf32>
    %c0_1 = arith.constant 0 : index
    %c0_2 = arith.constant 0 : index
    %1 = vector.load %arg2[%c0_1, %c0_2] : memref<1x512xf32, #tpu.memory_space<vmem>>, vector<1x512xf32>
    %2 = vector.broadcast %1 : vector<1x512xf32> to vector<256x512xf32>
    %3 = arith.mulf %0, %2 : vector<256x512xf32>
    %c0_3 = arith.constant 0 : index
    %c0_4 = arith.constant 0 : index
    %4 = vector.load %arg3[%c0_3, %c0_4] : memref<1x512xf32, #tpu.memory_space<vmem>>, vector<1x512xf32>
    %5 = vector.broadcast %4 : vector<1x512xf32> to vector<256x512xf32>
    %6 = arith.addf %3, %5 : vector<256x512xf32>
    %cst = arith.constant 0.000000e+00 : f32
    %7 = vector.broadcast %cst : f32 to vector<256x512xf32>
    %8 = arith.maximumf %6, %7 : vector<256x512xf32>
    %c0_5 = arith.constant 0 : index
    %c0_6 = arith.constant 0 : index
    %9 = vector.load %arg4[%c0_5, %c0_6] : memref<1x512xf32, #tpu.memory_space<vmem>>, vector<1x512xf32>
    %10 = vector.broadcast %9 : vector<1x512xf32> to vector<256x512xf32>
    %11 = arith.mulf %8, %10 : vector<256x512xf32>
    %cst_7 = arith.constant dense<0.000000e+00> : vector<256xf32>
    %12 = vector.multi_reduction <add>, %11, %cst_7 [1] : vector<256x512xf32> to vector<256xf32>
    %13 = vector.shape_cast %12 : vector<256xf32> to vector<256x1xf32>
    %c0_8 = arith.constant 0 : index
    %c0_9 = arith.constant 0 : index
    %14 = vector.load %arg5[%c0_8, %c0_9] : memref<1x1xf32, #tpu.memory_space<vmem>>, vector<1x1xf32>
    %15 = vector.broadcast %14 : vector<1x1xf32> to vector<256x1xf32>
    %16 = arith.addf %13, %15 : vector<256x1xf32>
    %c0_10 = arith.constant 0 : index
    %c0_11 = arith.constant 0 : index
    %17 = vector.load %arg6[%c0_10, %c0_11] : memref<256x1xf32, #tpu.memory_space<vmem>>, vector<256x1xf32>
    tpu.vector_store %arg6[%c0_10, %c0_11], %16 {strides = array<i32>} : memref<256x1xf32, #tpu.memory_space<vmem>>, vector<256x1xf32>,
    return
  }
  func.func @transform_0(%arg0: i32) -> (i32, i32) {
    %c0_i32 = arith.constant 0 : i32
    %c0_i32_0 = arith.constant 0 : i32
    return %arg0, %c0_i32 : i32, i32
  }
  func.func @transform_1(%arg0: i32) -> (i32, i32) {
    %c0_i32 = arith.constant 0 : i32
    %c0_i32_0 = arith.constant 0 : i32
    %c0_i32_1 = arith.constant 0 : i32
    return %c0_i32, %c0_i32_0 : i32, i32
  }
  func.func @transform_2(%arg0: i32) -> (i32, i32) {
    %c0_i32 = arith.constant 0 : i32
    %c0_i32_0 = arith.constant 0 : i32
    %c0_i32_1 = arith.constant 0 : i32
    return %c0_i32, %c0_i32_0 : i32, i32
  }
  func.func @transform_3(%arg0: i32) -> (i32, i32) {
    %c0_i32 = arith.constant 0 : i32
    %c0_i32_0 = arith.constant 0 : i32
    %c0_i32_1 = arith.constant 0 : i32
    return %c0_i32, %c0_i32_0 : i32, i32
  }
  func.func @transform_4(%arg0: i32) -> (i32, i32) {
    %c0_i32 = arith.constant 0 : i32
    %c0_i32_0 = arith.constant 0 : i32
    %c0_i32_1 = arith.constant 0 : i32
    return %c0_i32, %c0_i32_0 : i32, i32
  }
  func.func @transform_5(%arg0: i32) -> (i32, i32) {
    %c0_i32 = arith.constant 0 : i32
    %c0_i32_0 = arith.constant 0 : i32
    return %arg0, %c0_i32 : i32, i32
  }
}

</mosaic_0001>

<llo_original>
// kernel: refinenet_forward.13
$region0: #{refinenet_forward.13}
  #allocation0 [shape = 'u32[]', space=smem, size = 0x4, offset = 0x4, fixed_abs, tag = 'smem constant byte address 0x4 - core index']
  #allocation1 [shape = 'u32[72,128]{1,0:T(1,128)}', space=vmem, size = 0x9000, scoped, tag = 'internal scratch']
  %s0 = inlined_call_operand.vmem [shape: f32[512,64], index: 0, kind: input, shape index: {}]
  %s1 = inlined_call_operand.vmem [shape: f32[1,64], index: 1, kind: input, shape index: {}]
  %s2 = inlined_call_operand.vmem [shape: f32[1,64], index: 2, kind: input, shape index: {}]
  %s3 = inlined_call_operand.vmem [shape: f32[512,64], index: 3, kind: output, shape index: {}]
  %s4 = sld [smem:[#allocation0]]
  $region45: #{refinenet_forward.13} parent=0
    _
  %s6 = ssub.s32 1, %s4
  %s7 = scalar_select 0, %s6, %s4
  loop: start=0, step=1, limit=4
  $region2: #{refinenet_forward.13} parent=0 // loop_pre_header
    _
  $region3: #{refinenet_forward.13} parent=0 // loop_header
    %s9 = sphi 0, %s13
    %p10 = scmp.ge.s32.totalorder %s9, 4
    %s19 = sphi 0, %s21
    %s22 = sphi 0, %s19
    %s23 = sphi 0, %s22
    %s39 = sphi 0, %s23
    %s43 = sphi 0, %s43
    %s45 = sphi 0, %s43
    %s46 = sphi 0, %s45
    %s60 = sphi 0, %s46
    %s64 = sphi 0, %s64
    %s66 = sphi 0, %s64
    %s67 = sphi 0, %s66
    %s81 = sphi 0, %s67
    %s87 = sphi 0, %s89
    %s90 = sphi 0, %s87
    %s91 = sphi 0, %s90
    %s107 = sphi 0, %s91
  $region4: #{refinenet_forward.13} parent=0 // loop_header_branch
    %12 = sbr.rel (%p10) target = $region8
  $region5: #{refinenet_forward.13} parent=0 // loop_body
    %s14 = ssub.s32 %s9, 1
    %s15 = ssub.s32 %s9, 2
    %s16 = sadd.s32 %s9, 1
    %s17 = ssub.s32 %s9, %s16
    %p18 = scmp.eq.s32.totalorder %s17, 0
    %s20 = sadd.s32 %s19, 1
    %s21 = scalar_select %p18, %s19, %s20
    %p24 = pneg %p18
    %p25 = scmp.eq.s32.totalorder %s9, 1
    %p26 = por %p24, %p25
    %p27 = scmp.ne.s32.totalorder %s19, %s22
    %p28 = scmp.eq.s32.totalorder %s9, 0
    %p29 = por %p27, %p28
    %p30 = scmp.ne.s32.totalorder %s19, %s22
    %p31 = scmp.eq.s32.totalorder %s14, 1
    %p32 = por %p30, %p31
    %p33 = scmp.ne.s32.totalorder %s22, %s23
    %p34 = scmp.eq.s32.totalorder %s14, 0
    %p35 = por %p33, %p34
    %p36 = scmp.ne.s32.totalorder %s22, %s23
    %p37 = scmp.eq.s32.totalorder %s15, 1
    %p38 = por %p36, %p37
    %p40 = scmp.ne.s32.totalorder %s23, %s39
    %p41 = scmp.eq.s32.totalorder %s15, 0
    %p42 = por %p40, %p41
    %s44 = sadd.s32 %s43, 1
    %p47 = scmp.eq.s32.totalorder %s9, 1
    %p48 = scmp.ne.s32.totalorder %s43, %s45
    %p49 = scmp.eq.s32.totalorder %s9, 0
    %p50 = por %p48, %p49
    %p51 = scmp.ne.s32.totalorder %s43, %s45
    %p52 = scmp.eq.s32.totalorder %s14, 1
    %p53 = por %p51, %p52
    %p54 = scmp.ne.s32.totalorder %s45, %s46
    %p55 = scmp.eq.s32.totalorder %s14, 0
    %p56 = por %p54, %p55
    %p57 = scmp.ne.s32.totalorder %s45, %s46
    %p58 = scmp.eq.s32.totalorder %s15, 1
    %p59 = por %p57, %p58
    %p61 = scmp.ne.s32.totalorder %s46, %s60
    %p62 = scmp.eq.s32.totalorder %s15, 0
    %p63 = por %p61, %p62
    %s65 = sadd.s32 %s64, 1
    %p68 = scmp.eq.s32.totalorder %s9, 1
    %p69 = scmp.ne.s32.totalorder %s64, %s66
    %p70 = scmp.eq.s32.totalorder %s9, 0
    %p71 = por %p69, %p70
    %p72 = scmp.ne.s32.totalorder %s64, %s66
    %p73 = scmp.eq.s32.totalorder %s14, 1
    %p74 = por %p72, %p73
    %p75 = scmp.ne.s32.totalorder %s66, %s67
    %p76 = scmp.eq.s32.totalorder %s14, 0
    %p77 = por %p75, %p76
    %p78 = scmp.ne.s32.totalorder %s66, %s67
    %p79 = scmp.eq.s32.totalorder %s15, 1
    %p80 = por %p78, %p79
    %p82 = scmp.ne.s32.totalorder %s67, %s81
    %p83 = scmp.eq.s32.totalorder %s15, 0
    %p84 = por %p82, %p83
    %s85 = ssub.s32 %s9, %s16
    %p86 = scmp.eq.s32.totalorder %s85, 0
    %s88 = sadd.s32 %s87, 1
    %s89 = scalar_select %p86, %s87, %s88
    %p92 = pneg %p86
    %p93 = scmp.eq.s32.totalorder %s9, 1
    %p94 = por %p92, %p93
    %p95 = scmp.ne.s32.totalorder %s87, %s90
    %p96 = scmp.eq.s32.totalorder %s9, 0
    %p97 = por %p95, %p96
    %p98 = scmp.ne.s32.totalorder %s87, %s90
    %p99 = scmp.eq.s32.totalorder %s14, 1
    %p100 = por %p98, %p99
    %p101 = scmp.ne.s32.totalorder %s90, %s91
    %p102 = scmp.eq.s32.totalorder %s14, 0
    %p103 = por %p101, %p102
    %p104 = scmp.ne.s32.totalorder %s90, %s91
    %p105 = scmp.eq.s32.totalorder %s15, 1
    %p106 = por %p104, %p105
    %p108 = scmp.ne.s32.totalorder %s91, %s107
    %p109 = scmp.eq.s32.totalorder %s15, 0
    %p110 = por %p108, %p109
    %p111 = scmp.le.s32.totalorder 1, %s9
    %p112 = scmp.lt.s32.totalorder %s9, 3
    %p113 = pnand %p111, %p112
    %p114 = pneg %p113
    // Predicated region
    $region9: #{refinenet_forward.13} parent=5 // pred_check
      _
    $region10: #{refinenet_forward.13} parent=5 // pred_check_branch
      %116 = sbr.rel (%p113) target = $region12
    $region11: #{refinenet_forward.13} parent=5 // pred_region
      %s117 = ssub.s32 %s9, 1
      // Predicated region
      $region13: #{refinenet_forward.13} parent=11 // pred_check
        %p118 = pneg %p56
      $region14: #{refinenet_forward.13} parent=11 // pred_check_branch
        %120 = sbr.rel (%p118) target = $region16
      $region15: #{refinenet_forward.13} parent=11 // pred_region
        _
      $region16: #{refinenet_forward.13} parent=11 // pred_fallthru
        _
      // Predicated region
      $region17: #{refinenet_forward.13} parent=11 // pred_check
        %p121 = pneg %p77
      $region18: #{refinenet_forward.13} parent=11 // pred_check_branch
        %123 = sbr.rel (%p121) target = $region20
      $region19: #{refinenet_forward.13} parent=11 // pred_region
        _
      $region20: #{refinenet_forward.13} parent=11 // pred_fallthru
        _
    $region12: #{refinenet_forward.13} parent=5 // pred_fallthru
      _
    %p124 = scmp.lt.s32.totalorder %s9, 2
    // Predicated region
    $region21: #{refinenet_forward.13} parent=5 // pred_check
      %p125 = pneg %p124
    $region22: #{refinenet_forward.13} parent=5 // pred_check_branch
      %127 = sbr.rel (%p125) target = $region24
    $region23: #{refinenet_forward.13} parent=5 // pred_region
      // Predicated region
      $region25: #{refinenet_forward.13} parent=23 // pred_check
        %p128 = pneg %p29
      $region26: #{refinenet_forward.13} parent=23 // pred_check_branch
        %130 = sbr.rel (%p128) target = $region28
      $region27: #{refinenet_forward.13} parent=23 // pred_region
        %s131 = smul.u32 32, %s9
        %p132 = scmp.lt.s32.totalorder %s131, 63
        %s133 = scalar_select %p132, %s131, 63
        %s134 = smul.addr %s133, 8
        %s135 = scalar_lea.vmem %s0, %s134
        %s136 = smul.u32 32, %s9
      $region28: #{refinenet_forward.13} parent=23 // pred_fallthru
        _
    $region24: #{refinenet_forward.13} parent=5 // pred_fallthru
      _
    %p137 = scmp.le.s32.totalorder 1, %s9
    %p138 = scmp.lt.s32.totalorder %s9, 3
    %p139 = pnand %p137, %p138
    %p140 = pneg %p139
    // Predicated region
    $region29: #{refinenet_forward.13} parent=5 // pred_check
      _
    $region30: #{refinenet_forward.13} parent=5 // pred_check_branch
      %142 = sbr.rel (%p139) target = $region32
    $region31: #{refinenet_forward.13} parent=5 // pred_region
      %s143 = ssub.s32 %s9, 1
      %s144 = smul.u32 32, %s14
      %p145 = scmp.lt.s32.totalorder %s144, 63
      %s146 = scalar_select %p145, %s144, 63
      %s147 = smul.addr %s146, 8
      %s148 = scalar_lea.vmem %s0, %s147
      %p149 = pneg %p35
      %p150 = pneg %p32
      %p151 = pneg %p56
      %p152 = pneg %p53
      %p153 = pneg %p77
      %p154 = pneg %p74
      %p155 = pneg %p103
      %p156 = pneg %p100
      %s157 = smul.u32 32, %s14
      %p158 = scmp.lt.s32.totalorder %s157, 63
      %s159 = scalar_select %p158, %s157, 63
      %s160 = smul.addr %s159, 8
      %s161 = scalar_lea.vmem %s3, %s160
      %s162 = smul.u32 32, %s14
      %p163 = scmp.lt.s32.totalorder %s162, 63
      %s164 = scalar_select %p163, %s162, 63
      %s165 = smul.addr %s164, 8
      %s166 = scalar_lea.vmem %s0, %s165
      %s167 = smul.u32 32, %s14
      %s168 = smul.u32 32, %s14
      %p169 = scmp.lt.s32.totalorder %s168, 63
      %s170 = scalar_select %p169, %s168, 63
      %s171 = smul.addr %s170, 8
      %s172 = scalar_lea.vmem %s3, %s171
      %s173 = smul.u32 32, %s14
      %v174 = vld [vmem:[%s166] sm:$0xff]
      %v175 = vld [vmem:[%s166 + $0x8] sm:$0xff]
      %v176 = vld [vmem:[%s166 + $0x10] sm:$0xff]
      %v177 = vld [vmem:[%s166 + $0x18] sm:$0xff]
      %v178 = vld [vmem:[%s166 + $0x20] sm:$0xff]
      %v179 = vld [vmem:[%s166 + $0x28] sm:$0xff]
      %v180 = vld [vmem:[%s166 + $0x30] sm:$0xff]
      %v181 = vld [vmem:[%s166 + $0x38] sm:$0xff]
      %v182 = vld [vmem:[%s166 + $0x40] sm:$0xff]
      %v183 = vld [vmem:[%s166 + $0x48] sm:$0xff]
      %v184 = vld [vmem:[%s166 + $0x50] sm:$0xff]
      %v185 = vld [vmem:[%s166 + $0x58] sm:$0xff]
      %v186 = vld [vmem:[%s166 + $0x60] sm:$0xff]
      %v187 = vld [vmem:[%s166 + $0x68] sm:$0xff]
      %v188 = vld [vmem:[%s166 + $0x70] sm:$0xff]
      %v189 = vld [vmem:[%s166 + $0x78] sm:$0xff]
      %v190 = vld [vmem:[%s166 + $0x80] sm:$0xff]
      %v191 = vld [vmem:[%s166 + $0x88] sm:$0xff]
      %v192 = vld [vmem:[%s166 + $0x90] sm:$0xff]
      %v193 = vld [vmem:[%s166 + $0x98] sm:$0xff]
      %v194 = vld [vmem:[%s166 + $0xa0] sm:$0xff]
      %v195 = vld [vmem:[%s166 + $0xa8] sm:$0xff]
      %v196 = vld [vmem:[%s166 + $0xb0] sm:$0xff]
      %v197 = vld [vmem:[%s166 + $0xb8] sm:$0xff]
      %v198 = vld [vmem:[%s166 + $0xc0] sm:$0xff]
      %v199 = vld [vmem:[%s166 + $0xc8] sm:$0xff]
      %v200 = vld [vmem:[%s166 + $0xd0] sm:$0xff]
      %v201 = vld [vmem:[%s166 + $0xd8] sm:$0xff]
      %v202 = vld [vmem:[%s166 + $0xe0] sm:$0xff]
      %v203 = vld [vmem:[%s166 + $0xe8] sm:$0xff]
      %v204 = vld [vmem:[%s166 + $0xf0] sm:$0xff]
      %v205 = vld [vmem:[%s166 + $0xf8] sm:$0xff]
      %v206 = vld [vmem:[%s1] sm:$0x1]
      %v208 = vperm.slane %v206, 0
      %v210 = vmul.f32 %v174, %v208
      %v211 = vmul.f32 %v175, %v208
      %v212 = vmul.f32 %v176, %v208
      %v213 = vmul.f32 %v177, %v208
      %v214 = vmul.f32 %v178, %v208
      %v215 = vmul.f32 %v179, %v208
      %v216 = vmul.f32 %v180, %v208
      %v217 = vmul.f32 %v181, %v208
      %v218 = vmul.f32 %v182, %v208
      %v219 = vmul.f32 %v183, %v208
      %v220 = vmul.f32 %v184, %v208
      %v221 = vmul.f32 %v185, %v208
      %v222 = vmul.f32 %v186, %v208
      %v223 = vmul.f32 %v187, %v208
      %v224 = vmul.f32 %v188, %v208
      %v225 = vmul.f32 %v189, %v208
      %v226 = vmul.f32 %v190, %v208
      %v227 = vmul.f32 %v191, %v208
      %v228 = vmul.f32 %v192, %v208
      %v229 = vmul.f32 %v193, %v208
      %v230 = vmul.f32 %v194, %v208
      %v231 = vmul.f32 %v195, %v208
      %v232 = vmul.f32 %v196, %v208
      %v233 = vmul.f32 %v197, %v208
      %v234 = vmul.f32 %v198, %v208
      %v235 = vmul.f32 %v199, %v208
      %v236 = vmul.f32 %v200, %v208
      %v237 = vmul.f32 %v201, %v208
      %v238 = vmul.f32 %v202, %v208
      %v239 = vmul.f32 %v203, %v208
      %v240 = vmul.f32 %v204, %v208
      %v241 = vmul.f32 %v205, %v208
      %v242 = vld [vmem:[%s2] sm:$0x1]
      %v244 = vperm.slane %v242, 0
      %v246 = vadd.f32 %v210, %v244
      %v247 = vadd.f32 %v211, %v244
      %v248 = vadd.f32 %v212, %v244
      %v249 = vadd.f32 %v213, %v244
      %v250 = vadd.f32 %v214, %v244
      %v251 = vadd.f32 %v215, %v244
      %v252 = vadd.f32 %v216, %v244
      %v253 = vadd.f32 %v217, %v244
      %v254 = vadd.f32 %v218, %v244
      %v255 = vadd.f32 %v219, %v244
      %v256 = vadd.f32 %v220, %v244
      %v257 = vadd.f32 %v221, %v244
      %v258 = vadd.f32 %v222, %v244
      %v259 = vadd.f32 %v223, %v244
      %v260 = vadd.f32 %v224, %v244
      %v261 = vadd.f32 %v225, %v244
      %v262 = vadd.f32 %v226, %v244
      %v263 = vadd.f32 %v227, %v244
      %v264 = vadd.f32 %v228, %v244
      %v265 = vadd.f32 %v229, %v244
      %v266 = vadd.f32 %v230, %v244
      %v267 = vadd.f32 %v231, %v244
      %v268 = vadd.f32 %v232, %v244
      %v269 = vadd.f32 %v233, %v244
      %v270 = vadd.f32 %v234, %v244
      %v271 = vadd.f32 %v235, %v244
      %v272 = vadd.f32 %v236, %v244
      %v273 = vadd.f32 %v237, %v244
      %v274 = vadd.f32 %v238, %v244
      %v275 = vadd.f32 %v239, %v244
      %v276 = vadd.f32 %v240, %v244
      %v277 = vadd.f32 %v241, %v244
      %v278 = vmax.f32 %v246, 0.0
      %v279 = vmax.f32 %v247, 0.0
      %v280 = vmax.f32 %v248, 0.0
      %v281 = vmax.f32 %v249, 0.0
      %v282 = vmax.f32 %v250, 0.0
      %v283 = vmax.f32 %v251, 0.0
      %v284 = vmax.f32 %v252, 0.0
      %v285 = vmax.f32 %v253, 0.0
      %v286 = vmax.f32 %v254, 0.0
      %v287 = vmax.f32 %v255, 0.0
      %v288 = vmax.f32 %v256, 0.0
      %v289 = vmax.f32 %v257, 0.0
      %v290 = vmax.f32 %v258, 0.0
      %v291 = vmax.f32 %v259, 0.0
      %v292 = vmax.f32 %v260, 0.0
      %v293 = vmax.f32 %v261, 0.0
      %v294 = vmax.f32 %v262, 0.0
      %v295 = vmax.f32 %v263, 0.0
      %v296 = vmax.f32 %v264, 0.0
      %v297 = vmax.f32 %v265, 0.0
      %v298 = vmax.f32 %v266, 0.0
      %v299 = vmax.f32 %v267, 0.0
      %v300 = vmax.f32 %v268, 0.0
      %v301 = vmax.f32 %v269, 0.0
      %v302 = vmax.f32 %v270, 0.0
      %v303 = vmax.f32 %v271, 0.0
      %v304 = vmax.f32 %v272, 0.0
      %v305 = vmax.f32 %v273, 0.0
      %v306 = vmax.f32 %v274, 0.0
      %v307 = vmax.f32 %v275, 0.0
      %v308 = vmax.f32 %v276, 0.0
      %v309 = vmax.f32 %v277, 0.0
      %vm310 = vcmask 523264
      %311 = vst.msk [vmem:[%s172] sm:$0xff] %vm310, %v278
      %312 = vst.msk [vmem:[%s172 + $0x8] sm:$0xff] %vm310, %v279
      %313 = vst.msk [vmem:[%s172 + $0x10] sm:$0xff] %vm310, %v280
      %314 = vst.msk [vmem:[%s172 + $0x18] sm:$0xff] %vm310, %v281
      %315 = vst.msk [vmem:[%s172 + $0x20] sm:$0xff] %vm310, %v282
      %316 = vst.msk [vmem:[%s172 + $0x28] sm:$0xff] %vm310, %v283
      %317 = vst.msk [vmem:[%s172 + $0x30] sm:$0xff] %vm310, %v284
      %318 = vst.msk [vmem:[%s172 + $0x38] sm:$0xff] %vm310, %v285
      %319 = vst.msk [vmem:[%s172 + $0x40] sm:$0xff] %vm310, %v286
      %320 = vst.msk [vmem:[%s172 + $0x48] sm:$0xff] %vm310, %v287
      %321 = vst.msk [vmem:[%s172 + $0x50] sm:$0xff] %vm310, %v288
      %322 = vst.msk [vmem:[%s172 + $0x58] sm:$0xff] %vm310, %v289
      %323 = vst.msk [vmem:[%s172 + $0x60] sm:$0xff] %vm310, %v290
      %324 = vst.msk [vmem:[%s172 + $0x68] sm:$0xff] %vm310, %v291
      %325 = vst.msk [vmem:[%s172 + $0x70] sm:$0xff] %vm310, %v292
      %326 = vst.msk [vmem:[%s172 + $0x78] sm:$0xff] %vm310, %v293
      %327 = vst.msk [vmem:[%s172 + $0x80] sm:$0xff] %vm310, %v294
      %328 = vst.msk [vmem:[%s172 + $0x88] sm:$0xff] %vm310, %v295
      %329 = vst.msk [vmem:[%s172 + $0x90] sm:$0xff] %vm310, %v296
      %330 = vst.msk [vmem:[%s172 + $0x98] sm:$0xff] %vm310, %v297
      %331 = vst.msk [vmem:[%s172 + $0xa0] sm:$0xff] %vm310, %v298
      %332 = vst.msk [vmem:[%s172 + $0xa8] sm:$0xff] %vm310, %v299
      %333 = vst.msk [vmem:[%s172 + $0xb0] sm:$0xff] %vm310, %v300
      %334 = vst.msk [vmem:[%s172 + $0xb8] sm:$0xff] %vm310, %v301
      %335 = vst.msk [vmem:[%s172 + $0xc0] sm:$0xff] %vm310, %v302
      %336 = vst.msk [vmem:[%s172 + $0xc8] sm:$0xff] %vm310, %v303
      %337 = vst.msk [vmem:[%s172 + $0xd0] sm:$0xff] %vm310, %v304
      %338 = vst.msk [vmem:[%s172 + $0xd8] sm:$0xff] %vm310, %v305
      %339 = vst.msk [vmem:[%s172 + $0xe0] sm:$0xff] %vm310, %v306
      %340 = vst.msk [vmem:[%s172 + $0xe8] sm:$0xff] %vm310, %v307
      %341 = vst.msk [vmem:[%s172 + $0xf0] sm:$0xff] %vm310, %v308
      %342 = vst.msk [vmem:[%s172 + $0xf8] sm:$0xff] %vm310, %v309
      %s343 = smul.u32 32, %s14
      %p344 = scmp.lt.s32.totalorder %s343, 63
      %s345 = scalar_select %p344, %s343, 63
      %s346 = smul.addr %s345, 8
      %s347 = scalar_lea.vmem %s3, %s346
      // Predicated region
      $region33: #{refinenet_forward.13} parent=31 // pred_check
        %p348 = pneg %p100
      $region34: #{refinenet_forward.13} parent=31 // pred_check_branch
        %350 = sbr.rel (%p348) target = $region36
      $region35: #{refinenet_forward.13} parent=31 // pred_region
        %s351 = smul.u32 32, %s14
      $region36: #{refinenet_forward.13} parent=31 // pred_fallthru
        _
    $region32: #{refinenet_forward.13} parent=5 // pred_fallthru
      _
    %p352 = scmp.le.s32.totalorder 2, %s9
    // Predicated region
    $region37: #{refinenet_forward.13} parent=5 // pred_check
      %p353 = pneg %p352
    $region38: #{refinenet_forward.13} parent=5 // pred_check_branch
      %355 = sbr.rel (%p353) target = $region40
    $region39: #{refinenet_forward.13} parent=5 // pred_region
      %s356 = ssub.s32 %s9, 2
      // Predicated region
      $region41: #{refinenet_forward.13} parent=39 // pred_check
        %p357 = pneg %p106
      $region42: #{refinenet_forward.13} parent=39 // pred_check_branch
        %359 = sbr.rel (%p357) target = $region44
      $region43: #{refinenet_forward.13} parent=39 // pred_region
        %s360 = smul.u32 32, %s15
        %p361 = scmp.lt.s32.totalorder %s360, 63
        %s362 = scalar_select %p361, %s360, 63
        %s363 = smul.addr %s362, 8
        %s364 = scalar_lea.vmem %s3, %s363
      $region44: #{refinenet_forward.13} parent=39 // pred_fallthru
        _
    $region40: #{refinenet_forward.13} parent=5 // pred_fallthru
      _
  $region6: #{refinenet_forward.13} parent=0 // loop_footer
    %s13 = sadd.s32 1, %s9
  $region7: #{refinenet_forward.13} parent=0 // loop_footer_branch
    %8 = sbr.rel target = $region3
  $region8: #{refinenet_forward.13} parent=0 // loop_exit
    _

// kernel: refinenet_forward.12
$region0: #{refinenet_forward.12}
  #allocation0 [shape = 'u32[]', space=smem, size = 0x4, offset = 0x4, fixed_abs, tag = 'smem constant byte address 0x4 - core index']
  #allocation1 [shape = 'u32[72,128]{1,0:T(1,128)}', space=vmem, size = 0x9000, scoped, tag = 'internal scratch']
  %s0 = inlined_call_operand.vmem [shape: f32[512,306], index: 0, kind: input, shape index: {}]
  %s1 = inlined_call_operand.vmem [shape: f32[306,64], index: 1, kind: input, shape index: {}]
  %s2 = inlined_call_operand.vmem [shape: f32[1,64], index: 2, kind: input, shape index: {}]
  %s3 = inlined_call_operand.vmem [shape: f32[512,64], index: 3, kind: output, shape index: {0}]
  %s4 = inlined_call_operand.vmem [shape: f32[2,2,64], index: 4, kind: output, shape index: {1}]
  %5 = xla_tuple %s3, %s4
  %s6 = sld [smem:[#allocation0]]
  $region53: #{refinenet_forward.12} parent=0
    _
  %s8 = ssub.s32 1, %s6
  %s9 = scalar_select 0, %s8, %s6
  loop: start=0, step=1, limit=4
  $region2: #{refinenet_forward.12} parent=0 // loop_pre_header
    _
  $region3: #{refinenet_forward.12} parent=0 // loop_header
    %s11 = sphi 0, %s15
    %p12 = scmp.ge.s32.totalorder %s11, 4
    %s21 = sphi 0, %s23
    %s24 = sphi 0, %s21
    %s25 = sphi 0, %s24
    %s41 = sphi 0, %s25
    %s45 = sphi 0, %s45
    %s47 = sphi 0, %s45
    %s48 = sphi 0, %s47
    %s62 = sphi 0, %s48
    %s66 = sphi 0, %s66
    %s68 = sphi 0, %s66
    %s69 = sphi 0, %s68
    %s83 = sphi 0, %s69
    %s89 = sphi 0, %s91
    %s92 = sphi 0, %s89
    %s93 = sphi 0, %s92
    %s109 = sphi 0, %s93
    %s115 = sphi 0, %s117
    %s118 = sphi 0, %s115
    %s119 = sphi 0, %s118
    %s135 = sphi 0, %s119
  $region4: #{refinenet_forward.12} parent=0 // loop_header_branch
    %14 = sbr.rel (%p12) target = $region8
  $region5: #{refinenet_forward.12} parent=0 // loop_body
    %s16 = ssub.s32 %s11, 1
    %s17 = ssub.s32 %s11, 2
    %s18 = sadd.s32 %s11, 1
    %s19 = ssub.s32 %s11, %s18
    %p20 = scmp.eq.s32.totalorder %s19, 0
    %s22 = sadd.s32 %s21, 1
    %s23 = scalar_select %p20, %s21, %s22
    %p26 = pneg %p20
    %p27 = scmp.eq.s32.totalorder %s11, 1
    %p28 = por %p26, %p27
    %p29 = scmp.ne.s32.totalorder %s21, %s24
    %p30 = scmp.eq.s32.totalorder %s11, 0
    %p31 = por %p29, %p30
    %p32 = scmp.ne.s32.totalorder %s21, %s24
    %p33 = scmp.eq.s32.totalorder %s16, 1
    %p34 = por %p32, %p33
    %p35 = scmp.ne.s32.totalorder %s24, %s25
    %p36 = scmp.eq.s32.totalorder %s16, 0
    %p37 = por %p35, %p36
    %p38 = scmp.ne.s32.totalorder %s24, %s25
    %p39 = scmp.eq.s32.totalorder %s17, 1
    %p40 = por %p38, %p39
    %p42 = scmp.ne.s32.totalorder %s25, %s41
    %p43 = scmp.eq.s32.totalorder %s17, 0
    %p44 = por %p42, %p43
    %s46 = sadd.s32 %s45, 1
    %p49 = scmp.eq.s32.totalorder %s11, 1
    %p50 = scmp.ne.s32.totalorder %s45, %s47
    %p51 = scmp.eq.s32.totalorder %s11, 0
    %p52 = por %p50, %p51
    %p53 = scmp.ne.s32.totalorder %s45, %s47
    %p54 = scmp.eq.s32.totalorder %s16, 1
    %p55 = por %p53, %p54
    %p56 = scmp.ne.s32.totalorder %s47, %s48
    %p57 = scmp.eq.s32.totalorder %s16, 0
    %p58 = por %p56, %p57
    %p59 = scmp.ne.s32.totalorder %s47, %s48
    %p60 = scmp.eq.s32.totalorder %s17, 1
    %p61 = por %p59, %p60
    %p63 = scmp.ne.s32.totalorder %s48, %s62
    %p64 = scmp.eq.s32.totalorder %s17, 0
    %p65 = por %p63, %p64
    %s67 = sadd.s32 %s66, 1
    %p70 = scmp.eq.s32.totalorder %s11, 1
    %p71 = scmp.ne.s32.totalorder %s66, %s68
    %p72 = scmp.eq.s32.totalorder %s11, 0
    %p73 = por %p71, %p72
    %p74 = scmp.ne.s32.totalorder %s66, %s68
    %p75 = scmp.eq.s32.totalorder %s16, 1
    %p76 = por %p74, %p75
    %p77 = scmp.ne.s32.totalorder %s68, %s69
    %p78 = scmp.eq.s32.totalorder %s16, 0
    %p79 = por %p77, %p78
    %p80 = scmp.ne.s32.totalorder %s68, %s69
    %p81 = scmp.eq.s32.totalorder %s17, 1
    %p82 = por %p80, %p81
    %p84 = scmp.ne.s32.totalorder %s69, %s83
    %p85 = scmp.eq.s32.totalorder %s17, 0
    %p86 = por %p84, %p85
    %s87 = ssub.s32 %s11, %s18
    %p88 = scmp.eq.s32.totalorder %s87, 0
    %s90 = sadd.s32 %s89, 1
    %s91 = scalar_select %p88, %s89, %s90
    %p94 = pneg %p88
    %p95 = scmp.eq.s32.totalorder %s11, 1
    %p96 = por %p94, %p95
    %p97 = scmp.ne.s32.totalorder %s89, %s92
    %p98 = scmp.eq.s32.totalorder %s11, 0
    %p99 = por %p97, %p98
    %p100 = scmp.ne.s32.totalorder %s89, %s92
    %p101 = scmp.eq.s32.totalorder %s16, 1
    %p102 = por %p100, %p101
    %p103 = scmp.ne.s32.totalorder %s92, %s93
    %p104 = scmp.eq.s32.totalorder %s16, 0
    %p105 = por %p103, %p104
    %p106 = scmp.ne.s32.totalorder %s92, %s93
    %p107 = scmp.eq.s32.totalorder %s17, 1
    %p108 = por %p106, %p107
    %p110 = scmp.ne.s32.totalorder %s93, %s109
    %p111 = scmp.eq.s32.totalorder %s17, 0
    %p112 = por %p110, %p111
    %s113 = ssub.s32 %s11, %s18
    %p114 = scmp.eq.s32.totalorder %s113, 0
    %s116 = sadd.s32 %s115, 1
    %s117 = scalar_select %p114, %s115, %s116
    %p120 = pneg %p114
    %p121 = scmp.eq.s32.totalorder %s11, 1
    %p122 = por %p120, %p121
    %p123 = scmp.ne.s32.totalorder %s115, %s118
    %p124 = scmp.eq.s32.totalorder %s11, 0
    %p125 = por %p123, %p124
    %p126 = scmp.ne.s32.totalorder %s115, %s118
    %p127 = scmp.eq.s32.totalorder %s16, 1
    %p128 = por %p126, %p127
    %p129 = scmp.ne.s32.totalorder %s118, %s119
    %p130 = scmp.eq.s32.totalorder %s16, 0
    %p131 = por %p129, %p130
    %p132 = scmp.ne.s32.totalorder %s118, %s119
    %p133 = scmp.eq.s32.totalorder %s17, 1
    %p134 = por %p132, %p133
    %p136 = scmp.ne.s32.totalorder %s119, %s135
    %p137 = scmp.eq.s32.totalorder %s17, 0
    %p138 = por %p136, %p137
    %p139 = scmp.le.s32.totalorder 1, %s11
    %p140 = scmp.lt.s32.totalorder %s11, 3
    %p141 = pnand %p139, %p140
    %p142 = pneg %p141
    // Predicated region
    $region9: #{refinenet_forward.12} parent=5 // pred_check
      _
    $region10: #{refinenet_forward.12} parent=5 // pred_check_branch
      %144 = sbr.rel (%p141) target = $region12
    $region11: #{refinenet_forward.12} parent=5 // pred_region
      %s145 = ssub.s32 %s11, 1
      // Predicated region
      $region13: #{refinenet_forward.12} parent=11 // pred_check
        %p146 = pneg %p58
      $region14: #{refinenet_forward.12} parent=11 // pred_check_branch
        %148 = sbr.rel (%p146) target = $region16
      $region15: #{refinenet_forward.12} parent=11 // pred_region
        _
      $region16: #{refinenet_forward.12} parent=11 // pred_fallthru
        _
      // Predicated region
      $region17: #{refinenet_forward.12} parent=11 // pred_check
        %p149 = pneg %p79
      $region18: #{refinenet_forward.12} parent=11 // pred_check_branch
        %151 = sbr.rel (%p149) target = $region20
      $region19: #{refinenet_forward.12} parent=11 // pred_region
        _
      $region20: #{refinenet_forward.12} parent=11 // pred_fallthru
        _
    $region12: #{refinenet_forward.12} parent=5 // pred_fallthru
      _
    %p152 = scmp.lt.s32.totalorder %s11, 2
    // Predicated region
    $region21: #{refinenet_forward.12} parent=5 // pred_check
      %p153 = pneg %p152
    $region22: #{refinenet_forward.12} parent=5 // pred_check_branch
      %155 = sbr.rel (%p153) target = $region24
    $region23: #{refinenet_forward.12} parent=5 // pred_region
      // Predicated region
      $region25: #{refinenet_forward.12} parent=23 // pred_check
        %p156 = pneg %p31
      $region26: #{refinenet_forward.12} parent=23 // pred_check_branch
        %158 = sbr.rel (%p156) target = $region28
      $region27: #{refinenet_forward.12} parent=23 // pred_region
        %s159 = smul.u32 32, %s11
        %p160 = scmp.lt.s32.totalorder %s159, 63
        %s161 = scalar_select %p160, %s159, 63
        %s162 = smul.addr %s161, 3
        %s163 = smul.addr %s162, 8
        %s164 = scalar_lea.vmem %s0, %s163
        %s165 = smul.u32 32, %s11
      $region28: #{refinenet_forward.12} parent=23 // pred_fallthru
        _
    $region24: #{refinenet_forward.12} parent=5 // pred_fallthru
      _
    %p166 = scmp.le.s32.totalorder 1, %s11
    %p167 = scmp.lt.s32.totalorder %s11, 3
    %p168 = pnand %p166, %p167
    %p169 = pneg %p168
    // Predicated region
    $region29: #{refinenet_forward.12} parent=5 // pred_check
      _
    $region30: #{refinenet_forward.12} parent=5 // pred_check_branch
      %171 = sbr.rel (%p168) target = $region32
    $region31: #{refinenet_forward.12} parent=5 // pred_region
      %s172 = ssub.s32 %s11, 1
      %s173 = smul.u32 32, %s16
      %p174 = scmp.lt.s32.totalorder %s173, 63
      %s175 = scalar_select %p174, %s173, 63
      %s176 = smul.addr %s175, 3
      %s177 = smul.addr %s176, 8
      %s178 = scalar_lea.vmem %s0, %s177
      %p179 = pneg %p37
      %p180 = pneg %p34
      %p181 = pneg %p58
      %p182 = pneg %p55
      %p183 = pneg %p79
      %p184 = pneg %p76
      %p185 = pneg %p105
      %p186 = pneg %p102
      %s187 = smul.u32 32, %s16
      %p188 = scmp.lt.s32.totalorder %s187, 63
      %s189 = scalar_select %p188, %s187, 63
      %s190 = smul.addr %s189, 8
      %s191 = scalar_lea.vmem %s3, %s190
      %p192 = pneg %p131
      %p193 = pneg %p128
      %p194 = scmp.lt.s32.totalorder %s16, 1
      %s195 = scalar_select %p194, %s16, 1
      %s196 = smul.addr %s195, 2
      %s197 = scalar_lea.vmem %s4, %s196
      %s198 = smul.u32 32, %s16
      %p199 = scmp.lt.s32.totalorder %s198, 63
      %s200 = scalar_select %p199, %s198, 63
      %s201 = smul.addr %s200, 3
      %s202 = smul.addr %s201, 8
      %s203 = scalar_lea.vmem %s0, %s202
      %s204 = smul.u32 32, %s16
      %s205 = smul.u32 32, %s16
      %p206 = scmp.lt.s32.totalorder %s205, 63
      %s207 = scalar_select %p206, %s205, 63
      %s208 = smul.addr %s207, 8
      %s209 = scalar_lea.vmem %s3, %s208
      %s210 = smul.u32 32, %s16
      %p211 = scmp.lt.s32.totalorder %s16, 1
      %s212 = scalar_select %p211, %s16, 1
      %s213 = smul.addr %s212, 2
      %s214 = scalar_lea.vmem %s4, %s213
      %v215 = vld [vmem:[%s203] sm:$0xff]
      %v216 = vld [vmem:[%s203 + $0x8] sm:$0xff]
      %v217 = vld [vmem:[%s203 + $0x10] sm:$0xff]
      %v218 = vld [vmem:[%s203 + $0x18] sm:$0xff]
      %v219 = vld [vmem:[%s203 + $0x20] sm:$0xff]
      %v220 = vld [vmem:[%s203 + $0x28] sm:$0xff]
      %v221 = vld [vmem:[%s203 + $0x30] sm:$0xff]
      %v222 = vld [vmem:[%s203 + $0x38] sm:$0xff]
      %v223 = vld [vmem:[%s203 + $0x40] sm:$0xff]
      %v224 = vld [vmem:[%s203 + $0x48] sm:$0xff]
      %v225 = vld [vmem:[%s203 + $0x50] sm:$0xff]
      %v226 = vld [vmem:[%s203 + $0x58] sm:$0xff]
      %v227 = vld [vmem:[%s203 + $0x60] sm:$0xff]
      %v228 = vld [vmem:[%s203 + $0x68] sm:$0xff]
      %v229 = vld [vmem:[%s203 + $0x70] sm:$0xff]
      %v230 = vld [vmem:[%s203 + $0x78] sm:$0xff]
      %v231 = vld [vmem:[%s203 + $0x80] sm:$0xff]
      %v232 = vld [vmem:[%s203 + $0x88] sm:$0xff]
      %v233 = vld [vmem:[%s203 + $0x90] sm:$0xff]
      %v234 = vld [vmem:[%s203 + $0x98] sm:$0xff]
      %v235 = vld [vmem:[%s203 + $0xa0] sm:$0xff]
      %v236 = vld [vmem:[%s203 + $0xa8] sm:$0xff]
      %v237 = vld [vmem:[%s203 + $0xb0] sm:$0xff]
      %v238 = vld [vmem:[%s203 + $0xb8] sm:$0xff]
      %v239 = vld [vmem:[%s203 + $0xc0] sm:$0xff]
      %v240 = vld [vmem:[%s203 + $0xc8] sm:$0xff]
      %v241 = vld [vmem:[%s203 + $0xd0] sm:$0xff]
      %v242 = vld [vmem:[%s203 + $0xd8] sm:$0xff]
      %v243 = vld [vmem:[%s203 + $0xe0] sm:$0xff]
      %v244 = vld [vmem:[%s203 + $0xe8] sm:$0xff]
      %v245 = vld [vmem:[%s203 + $0xf0] sm:$0xff]
      %v246 = vld [vmem:[%s203 + $0xf8] sm:$0xff]
      %v247 = vld [vmem:[%s203 + $0x100] sm:$0xff]
      %v248 = vld [vmem:[%s203 + $0x108] sm:$0xff]
      %v249 = vld [vmem:[%s203 + $0x110] sm:$0xff]
      %v250 = vld [vmem:[%s203 + $0x118] sm:$0xff]
      %v251 = vld [vmem:[%s203 + $0x120] sm:$0xff]
      %v252 = vld [vmem:[%s203 + $0x128] sm:$0xff]
      %v253 = vld [vmem:[%s203 + $0x130] sm:$0xff]
      %v254 = vld [vmem:[%s203 + $0x138] sm:$0xff]
      %v255 = vld [vmem:[%s203 + $0x140] sm:$0xff]
      %v256 = vld [vmem:[%s203 + $0x148] sm:$0xff]
      %v257 = vld [vmem:[%s203 + $0x150] sm:$0xff]
      %v258 = vld [vmem:[%s203 + $0x158] sm:$0xff]
      %v259 = vld [vmem:[%s203 + $0x160] sm:$0xff]
      %v260 = vld [vmem:[%s203 + $0x168] sm:$0xff]
      %v261 = vld [vmem:[%s203 + $0x170] sm:$0xff]
      %v262 = vld [vmem:[%s203 + $0x178] sm:$0xff]
      %v263 = vld [vmem:[%s203 + $0x180] sm:$0xff]
      %v264 = vld [vmem:[%s203 + $0x188] sm:$0xff]
      %v265 = vld [vmem:[%s203 + $0x190] sm:$0xff]
      %v266 = vld [vmem:[%s203 + $0x198] sm:$0xff]
      %v267 = vld [vmem:[%s203 + $0x1a0] sm:$0xff]
      %v268 = vld [vmem:[%s203 + $0x1a8] sm:$0xff]
      %v269 = vld [vmem:[%s203 + $0x1b0] sm:$0xff]
      %v270 = vld [vmem:[%s203 + $0x1b8] sm:$0xff]
      %v271 = vld [vmem:[%s203 + $0x1c0] sm:$0xff]
      %v272 = vld [vmem:[%s203 + $0x1c8] sm:$0xff]
      %v273 = vld [vmem:[%s203 + $0x1d0] sm:$0xff]
      %v274 = vld [vmem:[%s203 + $0x1d8] sm:$0xff]
      %v275 = vld [vmem:[%s203 + $0x1e0] sm:$0xff]
      %v276 = vld [vmem:[%s203 + $0x1e8] sm:$0xff]
      %v277 = vld [vmem:[%s203 + $0x1f0] sm:$0xff]
      %v278 = vld [vmem:[%s203 + $0x1f8] sm:$0xff]
      %v279 = vld [vmem:[%s203 + $0x200] sm:$0xff]
      %v280 = vld [vmem:[%s203 + $0x208] sm:$0xff]
      %v281 = vld [vmem:[%s203 + $0x210] sm:$0xff]
      %v282 = vld [vmem:[%s203 + $0x218] sm:$0xff]
      %v283 = vld [vmem:[%s203 + $0x220] sm:$0xff]
      %v284 = vld [vmem:[%s203 + $0x228] sm:$0xff]
      %v285 = vld [vmem:[%s203 + $0x230] sm:$0xff]
      %v286 = vld [vmem:[%s203 + $0x238] sm:$0xff]
      %v287 = vld [vmem:[%s203 + $0x240] sm:$0xff]
      %v288 = vld [vmem:[%s203 + $0x248] sm:$0xff]
      %v289 = vld [vmem:[%s203 + $0x250] sm:$0xff]
      %v290 = vld [vmem:[%s203 + $0x258] sm:$0xff]
      %v291 = vld [vmem:[%s203 + $0x260] sm:$0xff]
      %v292 = vld [vmem:[%s203 + $0x268] sm:$0xff]
      %v293 = vld [vmem:[%s203 + $0x270] sm:$0xff]
      %v294 = vld [vmem:[%s203 + $0x278] sm:$0xff]
      %v295 = vld [vmem:[%s203 + $0x280] sm:$0xff]
      %v296 = vld [vmem:[%s203 + $0x288] sm:$0xff]
      %v297 = vld [vmem:[%s203 + $0x290] sm:$0xff]
      %v298 = vld [vmem:[%s203 + $0x298] sm:$0xff]
      %v299 = vld [vmem:[%s203 + $0x2a0] sm:$0xff]
      %v300 = vld [vmem:[%s203 + $0x2a8] sm:$0xff]
      %v301 = vld [vmem:[%s203 + $0x2b0] sm:$0xff]
      %v302 = vld [vmem:[%s203 + $0x2b8] sm:$0xff]
      %v303 = vld [vmem:[%s203 + $0x2c0] sm:$0xff]
      %v304 = vld [vmem:[%s203 + $0x2c8] sm:$0xff]
      %v305 = vld [vmem:[%s203 + $0x2d0] sm:$0xff]
      %v306 = vld [vmem:[%s203 + $0x2d8] sm:$0xff]
      %v307 = vld [vmem:[%s203 + $0x2e0] sm:$0xff]
      %v308 = vld [vmem:[%s203 + $0x2e8] sm:$0xff]
      %v309 = vld [vmem:[%s203 + $0x2f0] sm:$0xff]
      %v310 = vld [vmem:[%s203 + $0x2f8] sm:$0xff]
      %v311 = vld [vmem:[%s1] sm:$0xff]
      %v312 = vld [vmem:[%s1 + $0x8] sm:$0xff]
      %v313 = vld [vmem:[%s1 + $0x10] sm:$0xff]
      %v314 = vld [vmem:[%s1 + $0x18] sm:$0xff]
      %v315 = vld [vmem:[%s1 + $0x20] sm:$0xff]
      %v316 = vld [vmem:[%s1 + $0x28] sm:$0xff]
      %v317 = vld [vmem:[%s1 + $0x30] sm:$0xff]
      %v318 = vld [vmem:[%s1 + $0x38] sm:$0xff]
      %v319 = vld [vmem:[%s1 + $0x40] sm:$0xff]
      %v320 = vld [vmem:[%s1 + $0x48] sm:$0xff]
      %v321 = vld [vmem:[%s1 + $0x50] sm:$0xff]
      %v322 = vld [vmem:[%s1 + $0x58] sm:$0xff]
      %v323 = vld [vmem:[%s1 + $0x60] sm:$0xff]
      %v324 = vld [vmem:[%s1 + $0x68] sm:$0xff]
      %v325 = vld [vmem:[%s1 + $0x70] sm:$0xff]
      %v326 = vld [vmem:[%s1 + $0x78] sm:$0xff]
      %v327 = vld [vmem:[%s1 + $0x80] sm:$0xff]
      %v328 = vld [vmem:[%s1 + $0x88] sm:$0xff]
      %v329 = vld [vmem:[%s1 + $0x90] sm:$0xff]
      %v330 = vld [vmem:[%s1 + $0x98] sm:$0xff]
      %v331 = vld [vmem:[%s1 + $0xa0] sm:$0xff]
      %v332 = vld [vmem:[%s1 + $0xa8] sm:$0xff]
      %v333 = vld [vmem:[%s1 + $0xb0] sm:$0xff]
      %v334 = vld [vmem:[%s1 + $0xb8] sm:$0xff]
      %v335 = vld [vmem:[%s1 + $0xc0] sm:$0xff]
      %v336 = vld [vmem:[%s1 + $0xc8] sm:$0xff]
      %v337 = vld [vmem:[%s1 + $0xd0] sm:$0xff]
      %v338 = vld [vmem:[%s1 + $0xd8] sm:$0xff]
      %v339 = vld [vmem:[%s1 + $0xe0] sm:$0xff]
      %v340 = vld [vmem:[%s1 + $0xe8] sm:$0xff]
      %v341 = vld [vmem:[%s1 + $0xf0] sm:$0xff]
      %v342 = vld [vmem:[%s1 + $0xf8] sm:$0xff]
      %v343 = vld [vmem:[%s1 + $0x100] sm:$0xff]
      %v344 = vld [vmem:[%s1 + $0x108] sm:$0xff]
      %v345 = vld [vmem:[%s1 + $0x110] sm:$0xff]
      %v346 = vld [vmem:[%s1 + $0x118] sm:$0xff]
      %v347 = vld [vmem:[%s1 + $0x120] sm:$0xff]
      %v348 = vld [vmem:[%s1 + $0x128] sm:$0xff]
      %v349 = vld [vmem:[%s1 + $0x130] sm:$0x3]
      %v350 = vld [vmem:[%s2] sm:$0x1]
      %v352 = vperm.slane %v350, 0
      %vm354 = vcmask 408576
      %v356 = vsel %vm354, %v217, 0
      %v359 = vsel %vm354, %v220, 0
      %v362 = vsel %vm354, %v223, 0
      %v365 = vsel %vm354, %v226, 0
      %v368 = vsel %vm354, %v229, 0
      %v371 = vsel %vm354, %v232, 0
      %v374 = vsel %vm354, %v235, 0
      %v377 = vsel %vm354, %v238, 0
      %v380 = vsel %vm354, %v241, 0
      %v383 = vsel %vm354, %v244, 0
      %v386 = vsel %vm354, %v247, 0
      %v389 = vsel %vm354, %v250, 0
      %v392 = vsel %vm354, %v253, 0
      %v395 = vsel %vm354, %v256, 0
      %v398 = vsel %vm354, %v259, 0
      %v401 = vsel %vm354, %v262, 0
      %v404 = vsel %vm354, %v265, 0
      %v407 = vsel %vm354, %v268, 0
      %v410 = vsel %vm354, %v271, 0
      %v413 = vsel %vm354, %v274, 0
      %v416 = vsel %vm354, %v277, 0
      %v419 = vsel %vm354, %v280, 0
      %v422 = vsel %vm354, %v283, 0
      %v425 = vsel %vm354, %v286, 0
      %v428 = vsel %vm354, %v289, 0
      %v431 = vsel %vm354, %v292, 0
      %v434 = vsel %vm354, %v295, 0
      %v437 = vsel %vm354, %v298, 0
      %v440 = vsel %vm354, %v301, 0
      %v443 = vsel %vm354, %v304, 0
      %v446 = vsel %vm354, %v307, 0
      %v449 = vsel %vm354, %v310, 0
      %vm451 = vcmask 1041408
      %v453 = vsel %vm451, %v349, 0
      %455 = vmatpush.msra.mxu0 %v326
      %456 = vmatpush.msra.mxu0 %v325
      %457 = vmatpush.msra.mxu0 %v324
      %458 = vmatpush.msra.mxu0 %v323
      %459 = vmatpush.msra.mxu0 %v322
      %460 = vmatpush.msra.mxu0 %v321
      %461 = vmatpush.msra.mxu0 %v320
      %462 = vmatpush.msra.mxu0 %v319
      %463 = vmatpush.msra.mxu0 %v318
      %464 = vmatpush.msra.mxu0 %v317
      %465 = vmatpush.msra.mxu0 %v316
      %466 = vmatpush.msra.mxu0 %v315
      %467 = vmatpush.msra.mxu0 %v314
      %468 = vmatpush.msra.mxu0 %v313
      %469 = vmatpush.msra.mxu0 %v312
      %470 = vmatpush.msra.mxu0 %v311
      %471 = vmatmul.f32.gmra.mxu0 %v215
      %v472 = vpop.f32.mrf.mxu0
      %v473 = vadd.f32 %v352, %v472
      %474 = vmatmul.f32.gmra.mxu0 %v218
      %v475 = vpop.f32.mrf.mxu0
      %v476 = vadd.f32 %v352, %v475
      %477 = vmatmul.f32.gmra.mxu0 %v221
      %v478 = vpop.f32.mrf.mxu0
      %v479 = vadd.f32 %v352, %v478
      %480 = vmatmul.f32.gmra.mxu0 %v224
      %v481 = vpop.f32.mrf.mxu0
      %v482 = vadd.f32 %v352, %v481
      %483 = vmatmul.f32.gmra.mxu0 %v227
      %v484 = vpop.f32.mrf.mxu0
      %v485 = vadd.f32 %v352, %v484
      %486 = vmatmul.f32.gmra.mxu0 %v230
      %v487 = vpop.f32.mrf.mxu0
      %v488 = vadd.f32 %v352, %v487
      %489 = vmatmul.f32.gmra.mxu0 %v233
      %v490 = vpop.f32.mrf.mxu0
      %v491 = vadd.f32 %v352, %v490
      %492 = vmatmul.f32.gmra.mxu0 %v236
      %v493 = vpop.f32.mrf.mxu0
      %v494 = vadd.f32 %v352, %v493
      %495 = vmatmul.f32.gmra.mxu0 %v239
      %v496 = vpop.f32.mrf.mxu0
      %v497 = vadd.f32 %v352, %v496
      %498 = vmatmul.f32.gmra.mxu0 %v242
      %v499 = vpop.f32.mrf.mxu0
      %v500 = vadd.f32 %v352, %v499
      %501 = vmatmul.f32.gmra.mxu0 %v245
      %v502 = vpop.f32.mrf.mxu0
      %v503 = vadd.f32 %v352, %v502
      %504 = vmatmul.f32.gmra.mxu0 %v248
      %v505 = vpop.f32.mrf.mxu0
      %v506 = vadd.f32 %v352, %v505
      %507 = vmatmul.f32.gmra.mxu0 %v251
      %v508 = vpop.f32.mrf.mxu0
      %v509 = vadd.f32 %v352, %v508
      %510 = vmatmul.f32.gmra.mxu0 %v254
      %v511 = vpop.f32.mrf.mxu0
      %v512 = vadd.f32 %v352, %v511
      %513 = vmatmul.f32.gmra.mxu0 %v257
      %v514 = vpop.f32.mrf.mxu0
      %v515 = vadd.f32 %v352, %v514
      %516 = vmatmul.f32.gmra.mxu0 %v260
      %v517 = vpop.f32.mrf.mxu0
      %v518 = vadd.f32 %v352, %v517
      %519 = vmatmul.f32.gmra.mxu0 %v263
      %v520 = vpop.f32.mrf.mxu0
      %v521 = vadd.f32 %v352, %v520
      %522 = vmatmul.f32.gmra.mxu0 %v266
      %v523 = vpop.f32.mrf.mxu0
      %v524 = vadd.f32 %v352, %v523
      %525 = vmatmul.f32.gmra.mxu0 %v269
      %v526 = vpop.f32.mrf.mxu0
      %v527 = vadd.f32 %v352, %v526
      %528 = vmatmul.f32.gmra.mxu0 %v272
      %v529 = vpop.f32.mrf.mxu0
      %v530 = vadd.f32 %v352, %v529
      %531 = vmatmul.f32.gmra.mxu0 %v275
      %v532 = vpop.f32.mrf.mxu0
      %v533 = vadd.f32 %v352, %v532
      %534 = vmatmul.f32.gmra.mxu0 %v278
      %v535 = vpop.f32.mrf.mxu0
      %v536 = vadd.f32 %v352, %v535
      %537 = vmatmul.f32.gmra.mxu0 %v281
      %v538 = vpop.f32.mrf.mxu0
      %v539 = vadd.f32 %v352, %v538
      %540 = vmatmul.f32.gmra.mxu0 %v284
      %v541 = vpop.f32.mrf.mxu0
      %v542 = vadd.f32 %v352, %v541
      %543 = vmatmul.f32.gmra.mxu0 %v287
      %v544 = vpop.f32.mrf.mxu0
      %v545 = vadd.f32 %v352, %v544
      %546 = vmatmul.f32.gmra.mxu0 %v290
      %v547 = vpop.f32.mrf.mxu0
      %v548 = vadd.f32 %v352, %v547
      %549 = vmatmul.f32.gmra.mxu0 %v293
      %v550 = vpop.f32.mrf.mxu0
      %v551 = vadd.f32 %v352, %v550
      %552 = vmatmul.f32.gmra.mxu0 %v296
      %v553 = vpop.f32.mrf.mxu0
      %v554 = vadd.f32 %v352, %v553
      %555 = vmatmul.f32.gmra.mxu0 %v299
      %v556 = vpop.f32.mrf.mxu0
      %v557 = vadd.f32 %v352, %v556
      %558 = vmatmul.f32.gmra.mxu0 %v302
      %v559 = vpop.f32.mrf.mxu0
      %v560 = vadd.f32 %v352, %v559
      %561 = vmatmul.f32.gmra.mxu0 %v305
      %v562 = vpop.f32.mrf.mxu0
      %v563 = vadd.f32 %v352, %v562
      %564 = vmatmul.f32.gmra.mxu0 %v308
      %v565 = vpop.f32.mrf.mxu0
      %v566 = vadd.f32 %v352, %v565
      %567 = vdwg.mxu0
      %568 = vmatpush.msra.mxu0 %v342
      %569 = vmatpush.msra.mxu0 %v341
      %570 = vmatpush.msra.mxu0 %v340
      %571 = vmatpush.msra.mxu0 %v339
      %572 = vmatpush.msra.mxu0 %v338
      %573 = vmatpush.msra.mxu0 %v337
      %574 = vmatpush.msra.mxu0 %v336
      %575 = vmatpush.msra.mxu0 %v335
      %576 = vmatpush.msra.mxu0 %v334
      %577 = vmatpush.msra.mxu0 %v333
      %578 = vmatpush.msra.mxu0 %v332
      %579 = vmatpush.msra.mxu0 %v331
      %580 = vmatpush.msra.mxu0 %v330
      %581 = vmatpush.msra.mxu0 %v329
      %582 = vmatpush.msra.mxu0 %v328
      %583 = vmatpush.msra.mxu0 %v327
      %584 = vmatmul.f32.gmra.mxu0 %v216
      %v585 = vpop.f32.mrf.mxu0
      %v586 = vadd.f32 %v473, %v585
      %587 = vmatmul.f32.gmra.mxu0 %v219
      %v588 = vpop.f32.mrf.mxu0
      %v589 = vadd.f32 %v476, %v588
      %590 = vmatmul.f32.gmra.mxu0 %v222
      %v591 = vpop.f32.mrf.mxu0
      %v592 = vadd.f32 %v479, %v591
      %593 = vmatmul.f32.gmra.mxu0 %v225
      %v594 = vpop.f32.mrf.mxu0
      %v595 = vadd.f32 %v482, %v594
      %596 = vmatmul.f32.gmra.mxu0 %v228
      %v597 = vpop.f32.mrf.mxu0
      %v598 = vadd.f32 %v485, %v597
      %599 = vmatmul.f32.gmra.mxu0 %v231
      %v600 = vpop.f32.mrf.mxu0
      %v601 = vadd.f32 %v488, %v600
      %602 = vmatmul.f32.gmra.mxu0 %v234
      %v603 = vpop.f32.mrf.mxu0
      %v604 = vadd.f32 %v491, %v603
      %605 = vmatmul.f32.gmra.mxu0 %v237
      %v606 = vpop.f32.mrf.mxu0
      %v607 = vadd.f32 %v494, %v606
      %608 = vmatmul.f32.gmra.mxu0 %v240
      %v609 = vpop.f32.mrf.mxu0
      %v610 = vadd.f32 %v497, %v609
      %611 = vmatmul.f32.gmra.mxu0 %v243
      %v612 = vpop.f32.mrf.mxu0
      %v613 = vadd.f32 %v500, %v612
      %614 = vmatmul.f32.gmra.mxu0 %v246
      %v615 = vpop.f32.mrf.mxu0
      %v616 = vadd.f32 %v503, %v615
      %617 = vmatmul.f32.gmra.mxu0 %v249
      %v618 = vpop.f32.mrf.mxu0
      %v619 = vadd.f32 %v506, %v618
      %620 = vmatmul.f32.gmra.mxu0 %v252
      %v621 = vpop.f32.mrf.mxu0
      %v622 = vadd.f32 %v509, %v621
      %623 = vmatmul.f32.gmra.mxu0 %v255
      %v624 = vpop.f32.mrf.mxu0
      %v625 = vadd.f32 %v512, %v624
      %626 = vmatmul.f32.gmra.mxu0 %v258
      %v627 = vpop.f32.mrf.mxu0
      %v628 = vadd.f32 %v515, %v627
      %629 = vmatmul.f32.gmra.mxu0 %v261
      %v630 = vpop.f32.mrf.mxu0
      %v631 = vadd.f32 %v518, %v630
      %632 = vmatmul.f32.gmra.mxu0 %v264
      %v633 = vpop.f32.mrf.mxu0
      %v634 = vadd.f32 %v521, %v633
      %635 = vmatmul.f32.gmra.mxu0 %v267
      %v636 = vpop.f32.mrf.mxu0
      %v637 = vadd.f32 %v524, %v636
      %638 = vmatmul.f32.gmra.mxu0 %v270
      %v639 = vpop.f32.mrf.mxu0
      %v640 = vadd.f32 %v527, %v639
      %641 = vmatmul.f32.gmra.mxu0 %v273
      %v642 = vpop.f32.mrf.mxu0
      %v643 = vadd.f32 %v530, %v642
      %644 = vmatmul.f32.gmra.mxu0 %v276
      %v645 = vpop.f32.mrf.mxu0
      %v646 = vadd.f32 %v533, %v645
      %647 = vmatmul.f32.gmra.mxu0 %v279
      %v648 = vpop.f32.mrf.mxu0
      %v649 = vadd.f32 %v536, %v648
      %650 = vmatmul.f32.gmra.mxu0 %v282
      %v651 = vpop.f32.mrf.mxu0
      %v652 = vadd.f32 %v539, %v651
      %653 = vmatmul.f32.gmra.mxu0 %v285
      %v654 = vpop.f32.mrf.mxu0
      %v655 = vadd.f32 %v542, %v654
      %656 = vmatmul.f32.gmra.mxu0 %v288
      %v657 = vpop.f32.mrf.mxu0
      %v658 = vadd.f32 %v545, %v657
      %659 = vmatmul.f32.gmra.mxu0 %v291
      %v660 = vpop.f32.mrf.mxu0
      %v661 = vadd.f32 %v548, %v660
      %662 = vmatmul.f32.gmra.mxu0 %v294
      %v663 = vpop.f32.mrf.mxu0
      %v664 = vadd.f32 %v551, %v663
      %665 = vmatmul.f32.gmra.mxu0 %v297
      %v666 = vpop.f32.mrf.mxu0
      %v667 = vadd.f32 %v554, %v666
      %668 = vmatmul.f32.gmra.mxu0 %v300
      %v669 = vpop.f32.mrf.mxu0
      %v670 = vadd.f32 %v557, %v669
      %671 = vmatmul.f32.gmra.mxu0 %v303
      %v672 = vpop.f32.mrf.mxu0
      %v673 = vadd.f32 %v560, %v672
      %674 = vmatmul.f32.gmra.mxu0 %v306
      %v675 = vpop.f32.mrf.mxu0
      %v676 = vadd.f32 %v563, %v675
      %677 = vmatmul.f32.gmra.mxu0 %v309
      %v678 = vpop.f32.mrf.mxu0
      %v679 = vadd.f32 %v566, %v678
      %680 = vdwg.mxu0
      %681 = vmatpush.msra.mxu0 0.0
      %682 = vmatpush.msra.mxu0 0.0
      %683 = vmatpush.msra.mxu0 0.0
      %684 = vmatpush.msra.mxu0 0.0
      %685 = vmatpush.msra.mxu0 0.0
      %686 = vmatpush.msra.mxu0 0.0
      %687 = vmatpush.msra.mxu0 0.0
      %688 = vmatpush.msra.mxu0 0.0
      %689 = vmatpush.msra.mxu0 0.0
      %690 = vmatpush.msra.mxu0 %v453
      %691 = vmatpush.msra.mxu0 %v348
      %692 = vmatpush.msra.mxu0 %v347
      %693 = vmatpush.msra.mxu0 %v346
      %694 = vmatpush.msra.mxu0 %v345
      %695 = vmatpush.msra.mxu0 %v344
      %696 = vmatpush.msra.mxu0 %v343
      %697 = vmatmul.f32.gmra.mxu0 %v356
      %v698 = vpop.f32.mrf.mxu0
      %v699 = vadd.f32 %v586, %v698
      %700 = vmatmul.f32.gmra.mxu0 %v359
      %v701 = vpop.f32.mrf.mxu0
      %v702 = vadd.f32 %v589, %v701
      %703 = vmatmul.f32.gmra.mxu0 %v362
      %v704 = vpop.f32.mrf.mxu0
      %v705 = vadd.f32 %v592, %v704
      %706 = vmatmul.f32.gmra.mxu0 %v365
      %v707 = vpop.f32.mrf.mxu0
      %v708 = vadd.f32 %v595, %v707
      %709 = vmatmul.f32.gmra.mxu0 %v368
      %v710 = vpop.f32.mrf.mxu0
      %v711 = vadd.f32 %v598, %v710
      %712 = vmatmul.f32.gmra.mxu0 %v371
      %v713 = vpop.f32.mrf.mxu0
      %v714 = vadd.f32 %v601, %v713
      %715 = vmatmul.f32.gmra.mxu0 %v374
      %v716 = vpop.f32.mrf.mxu0
      %v717 = vadd.f32 %v604, %v716
      %718 = vmatmul.f32.gmra.mxu0 %v377
      %v719 = vpop.f32.mrf.mxu0
      %v720 = vadd.f32 %v607, %v719
      %721 = vmatmul.f32.gmra.mxu0 %v380
      %v722 = vpop.f32.mrf.mxu0
      %v723 = vadd.f32 %v610, %v722
      %724 = vmatmul.f32.gmra.mxu0 %v383
      %v725 = vpop.f32.mrf.mxu0
      %v726 = vadd.f32 %v613, %v725
      %727 = vmatmul.f32.gmra.mxu0 %v386
      %v728 = vpop.f32.mrf.mxu0
      %v729 = vadd.f32 %v616, %v728
      %730 = vmatmul.f32.gmra.mxu0 %v389
      %v731 = vpop.f32.mrf.mxu0
      %v732 = vadd.f32 %v619, %v731
      %733 = vmatmul.f32.gmra.mxu0 %v392
      %v734 = vpop.f32.mrf.mxu0
      %v735 = vadd.f32 %v622, %v734
      %736 = vmatmul.f32.gmra.mxu0 %v395
      %v737 = vpop.f32.mrf.mxu0
      %v738 = vadd.f32 %v625, %v737
      %739 = vmatmul.f32.gmra.mxu0 %v398
      %v740 = vpop.f32.mrf.mxu0
      %v741 = vadd.f32 %v628, %v740
      %742 = vmatmul.f32.gmra.mxu0 %v401
      %v743 = vpop.f32.mrf.mxu0
      %v744 = vadd.f32 %v631, %v743
      %745 = vmatmul.f32.gmra.mxu0 %v404
      %v746 = vpop.f32.mrf.mxu0
      %v747 = vadd.f32 %v634, %v746
      %748 = vmatmul.f32.gmra.mxu0 %v407
      %v749 = vpop.f32.mrf.mxu0
      %v750 = vadd.f32 %v637, %v749
      %751 = vmatmul.f32.gmra.mxu0 %v410
      %v752 = vpop.f32.mrf.mxu0
      %v753 = vadd.f32 %v640, %v752
      %754 = vmatmul.f32.gmra.mxu0 %v413
      %v755 = vpop.f32.mrf.mxu0
      %v756 = vadd.f32 %v643, %v755
      %757 = vmatmul.f32.gmra.mxu0 %v416
      %v758 = vpop.f32.mrf.mxu0
      %v759 = vadd.f32 %v646, %v758
      %760 = vmatmul.f32.gmra.mxu0 %v419
      %v761 = vpop.f32.mrf.mxu0
      %v762 = vadd.f32 %v649, %v761
      %763 = vmatmul.f32.gmra.mxu0 %v422
      %v764 = vpop.f32.mrf.mxu0
      %v765 = vadd.f32 %v652, %v764
      %766 = vmatmul.f32.gmra.mxu0 %v425
      %v767 = vpop.f32.mrf.mxu0
      %v768 = vadd.f32 %v655, %v767
      %769 = vmatmul.f32.gmra.mxu0 %v428
      %v770 = vpop.f32.mrf.mxu0
      %v771 = vadd.f32 %v658, %v770
      %772 = vmatmul.f32.gmra.mxu0 %v431
      %v773 = vpop.f32.mrf.mxu0
      %v774 = vadd.f32 %v661, %v773
      %775 = vmatmul.f32.gmra.mxu0 %v434
      %v776 = vpop.f32.mrf.mxu0
      %v777 = vadd.f32 %v664, %v776
      %778 = vmatmul.f32.gmra.mxu0 %v437
      %v779 = vpop.f32.mrf.mxu0
      %v780 = vadd.f32 %v667, %v779
      %781 = vmatmul.f32.gmra.mxu0 %v440
      %v782 = vpop.f32.mrf.mxu0
      %v783 = vadd.f32 %v670, %v782
      %784 = vmatmul.f32.gmra.mxu0 %v443
      %v785 = vpop.f32.mrf.mxu0
      %v786 = vadd.f32 %v673, %v785
      %787 = vmatmul.f32.gmra.mxu0 %v446
      %v788 = vpop.f32.mrf.mxu0
      %v789 = vadd.f32 %v676, %v788
      %790 = vmatmul.f32.gmra.mxu0 %v449
      %v791 = vpop.f32.mrf.mxu0
      %v792 = vadd.f32 %v679, %v791
      %793 = vdwg.mxu0
      %vm794 = vcmask 523264
      %795 = vst.msk [vmem:[%s209] sm:$0xff] %vm794, %v699
      %796 = vst.msk [vmem:[%s209 + $0x8] sm:$0xff] %vm794, %v702
      %797 = vst.msk [vmem:[%s209 + $0x10] sm:$0xff] %vm794, %v705
      %798 = vst.msk [vmem:[%s209 + $0x18] sm:$0xff] %vm794, %v708
      %799 = vst.msk [vmem:[%s209 + $0x20] sm:$0xff] %vm794, %v711
      %800 = vst.msk [vmem:[%s209 + $0x28] sm:$0xff] %vm794, %v714
      %801 = vst.msk [vmem:[%s209 + $0x30] sm:$0xff] %vm794, %v717
      %802 = vst.msk [vmem:[%s209 + $0x38] sm:$0xff] %vm794, %v720
      %803 = vst.msk [vmem:[%s209 + $0x40] sm:$0xff] %vm794, %v723
      %804 = vst.msk [vmem:[%s209 + $0x48] sm:$0xff] %vm794, %v726
      %805 = vst.msk [vmem:[%s209 + $0x50] sm:$0xff] %vm794, %v729
      %806 = vst.msk [vmem:[%s209 + $0x58] sm:$0xff] %vm794, %v732
      %807 = vst.msk [vmem:[%s209 + $0x60] sm:$0xff] %vm794, %v735
      %808 = vst.msk [vmem:[%s209 + $0x68] sm:$0xff] %vm794, %v738
      %809 = vst.msk [vmem:[%s209 + $0x70] sm:$0xff] %vm794, %v741
      %810 = vst.msk [vmem:[%s209 + $0x78] sm:$0xff] %vm794, %v744
      %811 = vst.msk [vmem:[%s209 + $0x80] sm:$0xff] %vm794, %v747
      %812 = vst.msk [vmem:[%s209 + $0x88] sm:$0xff] %vm794, %v750
      %813 = vst.msk [vmem:[%s209 + $0x90] sm:$0xff] %vm794, %v753
      %814 = vst.msk [vmem:[%s209 + $0x98] sm:$0xff] %vm794, %v756
      %815 = vst.msk [vmem:[%s209 + $0xa0] sm:$0xff] %vm794, %v759
      %816 = vst.msk [vmem:[%s209 + $0xa8] sm:$0xff] %vm794, %v762
      %817 = vst.msk [vmem:[%s209 + $0xb0] sm:$0xff] %vm794, %v765
      %818 = vst.msk [vmem:[%s209 + $0xb8] sm:$0xff] %vm794, %v768
      %819 = vst.msk [vmem:[%s209 + $0xc0] sm:$0xff] %vm794, %v771
      %820 = vst.msk [vmem:[%s209 + $0xc8] sm:$0xff] %vm794, %v774
      %821 = vst.msk [vmem:[%s209 + $0xd0] sm:$0xff] %vm794, %v777
      %822 = vst.msk [vmem:[%s209 + $0xd8] sm:$0xff] %vm794, %v780
      %823 = vst.msk [vmem:[%s209 + $0xe0] sm:$0xff] %vm794, %v783
      %824 = vst.msk [vmem:[%s209 + $0xe8] sm:$0xff] %vm794, %v786
      %825 = vst.msk [vmem:[%s209 + $0xf0] sm:$0xff] %vm794, %v789
      %826 = vst.msk [vmem:[%s209 + $0xf8] sm:$0xff] %vm794, %v792
      %v827 = vsel %vm794, %v699, 0.0
      %v828 = vsel %vm794, %v702, 0.0
      %v829 = vadd.f32 %v827, %v828
      %v830 = vsel %vm794, %v705, 0.0
      %v831 = vadd.f32 %v829, %v830
      %v832 = vsel %vm794, %v708, 0.0
      %v833 = vadd.f32 %v831, %v832
      %v834 = vsel %vm794, %v711, 0.0
      %v835 = vadd.f32 %v833, %v834
      %v836 = vsel %vm794, %v714, 0.0
      %v837 = vadd.f32 %v835, %v836
      %v838 = vsel %vm794, %v717, 0.0
      %v839 = vadd.f32 %v837, %v838
      %v840 = vsel %vm794, %v720, 0.0
      %v841 = vadd.f32 %v839, %v840
      %v842 = vsel %vm794, %v723, 0.0
      %v843 = vadd.f32 %v841, %v842
      %v844 = vsel %vm794, %v726, 0.0
      %v845 = vadd.f32 %v843, %v844
      %v846 = vsel %vm794, %v729, 0.0
      %v847 = vadd.f32 %v845, %v846
      %v848 = vsel %vm794, %v732, 0.0
      %v849 = vadd.f32 %v847, %v848
      %v850 = vsel %vm794, %v735, 0.0
      %v851 = vadd.f32 %v849, %v850
      %v852 = vsel %vm794, %v738, 0.0
      %v853 = vadd.f32 %v851, %v852
      %v854 = vsel %vm794, %v741, 0.0
      %v855 = vadd.f32 %v853, %v854
      %v856 = vsel %vm794, %v744, 0.0
      %v857 = vadd.f32 %v855, %v856
      %v858 = vsel %vm794, %v747, 0.0
      %v859 = vadd.f32 %v857, %v858
      %v860 = vsel %vm794, %v750, 0.0
      %v861 = vadd.f32 %v859, %v860
      %v862 = vsel %vm794, %v753, 0.0
      %v863 = vadd.f32 %v861, %v862
      %v864 = vsel %vm794, %v756, 0.0
      %v865 = vadd.f32 %v863, %v864
      %v866 = vsel %vm794, %v759, 0.0
      %v867 = vadd.f32 %v865, %v866
      %v868 = vsel %vm794, %v762, 0.0
      %v869 = vadd.f32 %v867, %v868
      %v870 = vsel %vm794, %v765, 0.0
      %v871 = vadd.f32 %v869, %v870
      %v872 = vsel %vm794, %v768, 0.0
      %v873 = vadd.f32 %v871, %v872
      %v874 = vsel %vm794, %v771, 0.0
      %v875 = vadd.f32 %v873, %v874
      %v876 = vsel %vm794, %v774, 0.0
      %v877 = vadd.f32 %v875, %v876
      %v878 = vsel %vm794, %v777, 0.0
      %v879 = vadd.f32 %v877, %v878
      %v880 = vsel %vm794, %v780, 0.0
      %v881 = vadd.f32 %v879, %v880
      %v882 = vsel %vm794, %v783, 0.0
      %v883 = vadd.f32 %v881, %v882
      %v884 = vsel %vm794, %v786, 0.0
      %v885 = vadd.f32 %v883, %v884
      %v886 = vsel %vm794, %v789, 0.0
      %v887 = vadd.f32 %v885, %v886
      %v888 = vsel %vm794, %v792, 0.0
      %v889 = vadd.f32 %v887, %v888
      %v890 = vrot.slane %v889, 4
      %v891 = vadd.f32 %v889, %v890
      %v892 = vrot.slane %v891, 2
      %v893 = vadd.f32 %v891, %v892
      %v894 = vrot.slane %v893, 1
      %v895 = vadd.f32 %v893, %v894
      %v896 = vmul.f32 %v699, %v699
      %v897 = vmul.f32 %v702, %v702
      %v898 = vmul.f32 %v705, %v705
      %v899 = vmul.f32 %v708, %v708
      %v900 = vmul.f32 %v711, %v711
      %v901 = vmul.f32 %v714, %v714
      %v902 = vmul.f32 %v717, %v717
      %v903 = vmul.f32 %v720, %v720
      %v904 = vmul.f32 %v723, %v723
      %v905 = vmul.f32 %v726, %v726
      %v906 = vmul.f32 %v729, %v729
      %v907 = vmul.f32 %v732, %v732
      %v908 = vmul.f32 %v735, %v735
      %v909 = vmul.f32 %v738, %v738
      %v910 = vmul.f32 %v741, %v741
      %v911 = vmul.f32 %v744, %v744
      %v912 = vmul.f32 %v747, %v747
      %v913 = vmul.f32 %v750, %v750
      %v914 = vmul.f32 %v753, %v753
      %v915 = vmul.f32 %v756, %v756
      %v916 = vmul.f32 %v759, %v759
      %v917 = vmul.f32 %v762, %v762
      %v918 = vmul.f32 %v765, %v765
      %v919 = vmul.f32 %v768, %v768
      %v920 = vmul.f32 %v771, %v771
      %v921 = vmul.f32 %v774, %v774
      %v922 = vmul.f32 %v777, %v777
      %v923 = vmul.f32 %v780, %v780
      %v924 = vmul.f32 %v783, %v783
      %v925 = vmul.f32 %v786, %v786
      %v926 = vmul.f32 %v789, %v789
      %v927 = vmul.f32 %v792, %v792
      %v928 = vsel %vm794, %v896, 0.0
      %v929 = vsel %vm794, %v897, 0.0
      %v930 = vadd.f32 %v928, %v929
      %v931 = vsel %vm794, %v898, 0.0
      %v932 = vadd.f32 %v930, %v931
      %v933 = vsel %vm794, %v899, 0.0
      %v934 = vadd.f32 %v932, %v933
      %v935 = vsel %vm794, %v900, 0.0
      %v936 = vadd.f32 %v934, %v935
      %v937 = vsel %vm794, %v901, 0.0
      %v938 = vadd.f32 %v936, %v937
      %v939 = vsel %vm794, %v902, 0.0
      %v940 = vadd.f32 %v938, %v939
      %v941 = vsel %vm794, %v903, 0.0
      %v942 = vadd.f32 %v940, %v941
      %v943 = vsel %vm794, %v904, 0.0
      %v944 = vadd.f32 %v942, %v943
      %v945 = vsel %vm794, %v905, 0.0
      %v946 = vadd.f32 %v944, %v945
      %v947 = vsel %vm794, %v906, 0.0
      %v948 = vadd.f32 %v946, %v947
      %v949 = vsel %vm794, %v907, 0.0
      %v950 = vadd.f32 %v948, %v949
      %v951 = vsel %vm794, %v908, 0.0
      %v952 = vadd.f32 %v950, %v951
      %v953 = vsel %vm794, %v909, 0.0
      %v954 = vadd.f32 %v952, %v953
      %v955 = vsel %vm794, %v910, 0.0
      %v956 = vadd.f32 %v954, %v955
      %v957 = vsel %vm794, %v911, 0.0
      %v958 = vadd.f32 %v956, %v957
      %v959 = vsel %vm794, %v912, 0.0
      %v960 = vadd.f32 %v958, %v959
      %v961 = vsel %vm794, %v913, 0.0
      %v962 = vadd.f32 %v960, %v961
      %v963 = vsel %vm794, %v914, 0.0
      %v964 = vadd.f32 %v962, %v963
      %v965 = vsel %vm794, %v915, 0.0
      %v966 = vadd.f32 %v964, %v965
      %v967 = vsel %vm794, %v916, 0.0
      %v968 = vadd.f32 %v966, %v967
      %v969 = vsel %vm794, %v917, 0.0
      %v970 = vadd.f32 %v968, %v969
      %v971 = vsel %vm794, %v918, 0.0
      %v972 = vadd.f32 %v970, %v971
      %v973 = vsel %vm794, %v919, 0.0
      %v974 = vadd.f32 %v972, %v973
      %v975 = vsel %vm794, %v920, 0.0
      %v976 = vadd.f32 %v974, %v975
      %v977 = vsel %vm794, %v921, 0.0
      %v978 = vadd.f32 %v976, %v977
      %v979 = vsel %vm794, %v922, 0.0
      %v980 = vadd.f32 %v978, %v979
      %v981 = vsel %vm794, %v923, 0.0
      %v982 = vadd.f32 %v980, %v981
      %v983 = vsel %vm794, %v924, 0.0
      %v984 = vadd.f32 %v982, %v983
      %v985 = vsel %vm794, %v925, 0.0
      %v986 = vadd.f32 %v984, %v985
      %v987 = vsel %vm794, %v926, 0.0
      %v988 = vadd.f32 %v986, %v987
      %v989 = vsel %vm794, %v927, 0.0
      %v990 = vadd.f32 %v988, %v989
      %v991 = vrot.slane %v990, 4
      %v992 = vadd.f32 %v990, %v991
      %v993 = vrot.slane %v992, 2
      %v994 = vadd.f32 %v992, %v993
      %v995 = vrot.slane %v994, 1
      %v996 = vadd.f32 %v994, %v995
      %vm997 = vcmask 1040384
      %v998 = vsel %vm997, %v895, %v996
      %vm999 = vcmask 517120
      %1000 = vst.msk [vmem:[%s214] sm:$0x3] %vm999, %v998
      %s1001 = smul.u32 32, %s16
      %p1002 = scmp.lt.s32.totalorder %s1001, 63
      %s1003 = scalar_select %p1002, %s1001, 63
      %s1004 = smul.addr %s1003, 8
      %s1005 = scalar_lea.vmem %s3, %s1004
      %p1006 = scmp.lt.s32.totalorder %s16, 1
      %s1007 = scalar_select %p1006, %s16, 1
      %s1008 = smul.addr %s1007, 2
      %s1009 = scalar_lea.vmem %s4, %s1008
      // Predicated region
      $region33: #{refinenet_forward.12} parent=31 // pred_check
        %p1010 = pneg %p102
      $region34: #{refinenet_forward.12} parent=31 // pred_check_branch
        %1012 = sbr.rel (%p1010) target = $region36
      $region35: #{refinenet_forward.12} parent=31 // pred_region
        %s1013 = smul.u32 32, %s16
      $region36: #{refinenet_forward.12} parent=31 // pred_fallthru
        _
      // Predicated region
      $region37: #{refinenet_forward.12} parent=31 // pred_check
        %p1014 = pneg %p128
      $region38: #{refinenet_forward.12} parent=31 // pred_check_branch
        %1016 = sbr.rel (%p1014) target = $region40
      $region39: #{refinenet_forward.12} parent=31 // pred_region
        _
      $region40: #{refinenet_forward.12} parent=31 // pred_fallthru
        _
    $region32: #{refinenet_forward.12} parent=5 // pred_fallthru
      _
    %p1017 = scmp.le.s32.totalorder 2, %s11
    // Predicated region
    $region41: #{refinenet_forward.12} parent=5 // pred_check
      %p1018 = pneg %p1017
    $region42: #{refinenet_forward.12} parent=5 // pred_check_branch
      %1020 = sbr.rel (%p1018) target = $region44
    $region43: #{refinenet_forward.12} parent=5 // pred_region
      %s1021 = ssub.s32 %s11, 2
      // Predicated region
      $region45: #{refinenet_forward.12} parent=43 // pred_check
        %p1022 = pneg %p108
      $region46: #{refinenet_forward.12} parent=43 // pred_check_branch
        %1024 = sbr.rel (%p1022) target = $region48
      $region47: #{refinenet_forward.12} parent=43 // pred_region
        %s1025 = smul.u32 32, %s17
        %p1026 = scmp.lt.s32.totalorder %s1025, 63
        %s1027 = scalar_select %p1026, %s1025, 63
        %s1028 = smul.addr %s1027, 8
        %s1029 = scalar_lea.vmem %s3, %s1028
      $region48: #{refinenet_forward.12} parent=43 // pred_fallthru
        _
      // Predicated region
      $region49: #{refinenet_forward.12} parent=43 // pred_check
        %p1030 = pneg %p134
      $region50: #{refinenet_forward.12} parent=43 // pred_check_branch
        %1032 = sbr.rel (%p1030) target = $region52
      $region51: #{refinenet_forward.12} parent=43 // pred_region
        %p1033 = scmp.lt.s32.totalorder %s17, 1
        %s1034 = scalar_select %p1033, %s17, 1
        %s1035 = smul.addr %s1034, 2
        %s1036 = scalar_lea.vmem %s4, %s1035
      $region52: #{refinenet_forward.12} parent=43 // pred_fallthru
        _
    $region44: #{refinenet_forward.12} parent=5 // pred_fallthru
      _
  $region6: #{refinenet_forward.12} parent=0 // loop_footer
    %s15 = sadd.s32 1, %s11
  $region7: #{refinenet_forward.12} parent=0 // loop_footer_branch
    %10 = sbr.rel target = $region3
  $region8: #{refinenet_forward.12} parent=0 // loop_exit
    _

// kernel: refinenet_forward.14
$region0: #{refinenet_forward.14}
  #allocation0 [shape = 'u32[]', space=smem, size = 0x4, offset = 0x4, fixed_abs, tag = 'smem constant byte address 0x4 - core index']
  #allocation1 [shape = 'u32[72,128]{1,0:T(1,128)}', space=vmem, size = 0x9000, scoped, tag = 'internal scratch']
  %s0 = inlined_call_operand.vmem [shape: f32[512,576], index: 0, kind: input, shape index: {}]
  %s1 = inlined_call_operand.vmem [shape: f32[576,64], index: 1, kind: input, shape index: {}]
  %s2 = inlined_call_operand.vmem [shape: f32[1,64], index: 2, kind: input, shape index: {}]
  %s3 = inlined_call_operand.vmem [shape: f32[512,64], index: 3, kind: output, shape index: {0}]
  %s4 = inlined_call_operand.vmem [shape: f32[2,2,64], index: 4, kind: output, shape index: {1}]
  %5 = xla_tuple %s3, %s4
  %s6 = sld [smem:[#allocation0]]
  $region53: #{refinenet_forward.14} parent=0
    _
  %s8 = ssub.s32 1, %s6
  %s9 = scalar_select 0, %s8, %s6
  loop: start=0, step=1, limit=4
  $region2: #{refinenet_forward.14} parent=0 // loop_pre_header
    _
  $region3: #{refinenet_forward.14} parent=0 // loop_header
    %s11 = sphi 0, %s15
    %p12 = scmp.ge.s32.totalorder %s11, 4
    %s21 = sphi 0, %s23
    %s24 = sphi 0, %s21
    %s25 = sphi 0, %s24
    %s41 = sphi 0, %s25
    %s45 = sphi 0, %s45
    %s47 = sphi 0, %s45
    %s48 = sphi 0, %s47
    %s62 = sphi 0, %s48
    %s66 = sphi 0, %s66
    %s68 = sphi 0, %s66
    %s69 = sphi 0, %s68
    %s83 = sphi 0, %s69
    %s89 = sphi 0, %s91
    %s92 = sphi 0, %s89
    %s93 = sphi 0, %s92
    %s109 = sphi 0, %s93
    %s115 = sphi 0, %s117
    %s118 = sphi 0, %s115
    %s119 = sphi 0, %s118
    %s135 = sphi 0, %s119
  $region4: #{refinenet_forward.14} parent=0 // loop_header_branch
    %14 = sbr.rel (%p12) target = $region8
  $region5: #{refinenet_forward.14} parent=0 // loop_body
    %s16 = ssub.s32 %s11, 1
    %s17 = ssub.s32 %s11, 2
    %s18 = sadd.s32 %s11, 1
    %s19 = ssub.s32 %s11, %s18
    %p20 = scmp.eq.s32.totalorder %s19, 0
    %s22 = sadd.s32 %s21, 1
    %s23 = scalar_select %p20, %s21, %s22
    %p26 = pneg %p20
    %p27 = scmp.eq.s32.totalorder %s11, 1
    %p28 = por %p26, %p27
    %p29 = scmp.ne.s32.totalorder %s21, %s24
    %p30 = scmp.eq.s32.totalorder %s11, 0
    %p31 = por %p29, %p30
    %p32 = scmp.ne.s32.totalorder %s21, %s24
    %p33 = scmp.eq.s32.totalorder %s16, 1
    %p34 = por %p32, %p33
    %p35 = scmp.ne.s32.totalorder %s24, %s25
    %p36 = scmp.eq.s32.totalorder %s16, 0
    %p37 = por %p35, %p36
    %p38 = scmp.ne.s32.totalorder %s24, %s25
    %p39 = scmp.eq.s32.totalorder %s17, 1
    %p40 = por %p38, %p39
    %p42 = scmp.ne.s32.totalorder %s25, %s41
    %p43 = scmp.eq.s32.totalorder %s17, 0
    %p44 = por %p42, %p43
    %s46 = sadd.s32 %s45, 1
    %p49 = scmp.eq.s32.totalorder %s11, 1
    %p50 = scmp.ne.s32.totalorder %s45, %s47
    %p51 = scmp.eq.s32.totalorder %s11, 0
    %p52 = por %p50, %p51
    %p53 = scmp.ne.s32.totalorder %s45, %s47
    %p54 = scmp.eq.s32.totalorder %s16, 1
    %p55 = por %p53, %p54
    %p56 = scmp.ne.s32.totalorder %s47, %s48
    %p57 = scmp.eq.s32.totalorder %s16, 0
    %p58 = por %p56, %p57
    %p59 = scmp.ne.s32.totalorder %s47, %s48
    %p60 = scmp.eq.s32.totalorder %s17, 1
    %p61 = por %p59, %p60
    %p63 = scmp.ne.s32.totalorder %s48, %s62
    %p64 = scmp.eq.s32.totalorder %s17, 0
    %p65 = por %p63, %p64
    %s67 = sadd.s32 %s66, 1
    %p70 = scmp.eq.s32.totalorder %s11, 1
    %p71 = scmp.ne.s32.totalorder %s66, %s68
    %p72 = scmp.eq.s32.totalorder %s11, 0
    %p73 = por %p71, %p72
    %p74 = scmp.ne.s32.totalorder %s66, %s68
    %p75 = scmp.eq.s32.totalorder %s16, 1
    %p76 = por %p74, %p75
    %p77 = scmp.ne.s32.totalorder %s68, %s69
    %p78 = scmp.eq.s32.totalorder %s16, 0
    %p79 = por %p77, %p78
    %p80 = scmp.ne.s32.totalorder %s68, %s69
    %p81 = scmp.eq.s32.totalorder %s17, 1
    %p82 = por %p80, %p81
    %p84 = scmp.ne.s32.totalorder %s69, %s83
    %p85 = scmp.eq.s32.totalorder %s17, 0
    %p86 = por %p84, %p85
    %s87 = ssub.s32 %s11, %s18
    %p88 = scmp.eq.s32.totalorder %s87, 0
    %s90 = sadd.s32 %s89, 1
    %s91 = scalar_select %p88, %s89, %s90
    %p94 = pneg %p88
    %p95 = scmp.eq.s32.totalorder %s11, 1
    %p96 = por %p94, %p95
    %p97 = scmp.ne.s32.totalorder %s89, %s92
    %p98 = scmp.eq.s32.totalorder %s11, 0
    %p99 = por %p97, %p98
    %p100 = scmp.ne.s32.totalorder %s89, %s92
    %p101 = scmp.eq.s32.totalorder %s16, 1
    %p102 = por %p100, %p101
    %p103 = scmp.ne.s32.totalorder %s92, %s93
    %p104 = scmp.eq.s32.totalorder %s16, 0
    %p105 = por %p103, %p104
    %p106 = scmp.ne.s32.totalorder %s92, %s93
    %p107 = scmp.eq.s32.totalorder %s17, 1
    %p108 = por %p106, %p107
    %p110 = scmp.ne.s32.totalorder %s93, %s109
    %p111 = scmp.eq.s32.totalorder %s17, 0
    %p112 = por %p110, %p111
    %s113 = ssub.s32 %s11, %s18
    %p114 = scmp.eq.s32.totalorder %s113, 0
    %s116 = sadd.s32 %s115, 1
    %s117 = scalar_select %p114, %s115, %s116
    %p120 = pneg %p114
    %p121 = scmp.eq.s32.totalorder %s11, 1
    %p122 = por %p120, %p121
    %p123 = scmp.ne.s32.totalorder %s115, %s118
    %p124 = scmp.eq.s32.totalorder %s11, 0
    %p125 = por %p123, %p124
    %p126 = scmp.ne.s32.totalorder %s115, %s118
    %p127 = scmp.eq.s32.totalorder %s16, 1
    %p128 = por %p126, %p127
    %p129 = scmp.ne.s32.totalorder %s118, %s119
    %p130 = scmp.eq.s32.totalorder %s16, 0
    %p131 = por %p129, %p130
    %p132 = scmp.ne.s32.totalorder %s118, %s119
    %p133 = scmp.eq.s32.totalorder %s17, 1
    %p134 = por %p132, %p133
    %p136 = scmp.ne.s32.totalorder %s119, %s135
    %p137 = scmp.eq.s32.totalorder %s17, 0
    %p138 = por %p136, %p137
    %p139 = scmp.le.s32.totalorder 1, %s11
    %p140 = scmp.lt.s32.totalorder %s11, 3
    %p141 = pnand %p139, %p140
    %p142 = pneg %p141
    // Predicated region
    $region9: #{refinenet_forward.14} parent=5 // pred_check
      _
    $region10: #{refinenet_forward.14} parent=5 // pred_check_branch
      %144 = sbr.rel (%p141) target = $region12
    $region11: #{refinenet_forward.14} parent=5 // pred_region
      %s145 = ssub.s32 %s11, 1
      // Predicated region
      $region13: #{refinenet_forward.14} parent=11 // pred_check
        %p146 = pneg %p58
      $region14: #{refinenet_forward.14} parent=11 // pred_check_branch
        %148 = sbr.rel (%p146) target = $region16
      $region15: #{refinenet_forward.14} parent=11 // pred_region
        _
      $region16: #{refinenet_forward.14} parent=11 // pred_fallthru
        _
      // Predicated region
      $region17: #{refinenet_forward.14} parent=11 // pred_check
        %p149 = pneg %p79
      $region18: #{refinenet_forward.14} parent=11 // pred_check_branch
        %151 = sbr.rel (%p149) target = $region20
      $region19: #{refinenet_forward.14} parent=11 // pred_region
        _
      $region20: #{refinenet_forward.14} parent=11 // pred_fallthru
        _
    $region12: #{refinenet_forward.14} parent=5 // pred_fallthru
      _
    %p152 = scmp.lt.s32.totalorder %s11, 2
    // Predicated region
    $region21: #{refinenet_forward.14} parent=5 // pred_check
      %p153 = pneg %p152
    $region22: #{refinenet_forward.14} parent=5 // pred_check_branch
      %155 = sbr.rel (%p153) target = $region24
    $region23: #{refinenet_forward.14} parent=5 // pred_region
      // Predicated region
      $region25: #{refinenet_forward.14} parent=23 // pred_check
        %p156 = pneg %p31
      $region26: #{refinenet_forward.14} parent=23 // pred_check_branch
        %158 = sbr.rel (%p156) target = $region28
      $region27: #{refinenet_forward.14} parent=23 // pred_region
        %s159 = smul.u32 32, %s11
        %p160 = scmp.lt.s32.totalorder %s159, 63
        %s161 = scalar_select %p160, %s159, 63
        %s162 = smul.addr %s161, 5
        %s163 = smul.addr %s162, 8
        %s164 = scalar_lea.vmem %s0, %s163
        %s165 = smul.u32 32, %s11
      $region28: #{refinenet_forward.14} parent=23 // pred_fallthru
        _
    $region24: #{refinenet_forward.14} parent=5 // pred_fallthru
      _
    %p166 = scmp.le.s32.totalorder 1, %s11
    %p167 = scmp.lt.s32.totalorder %s11, 3
    %p168 = pnand %p166, %p167
    %p169 = pneg %p168
    // Predicated region
    $region29: #{refinenet_forward.14} parent=5 // pred_check
      _
    $region30: #{refinenet_forward.14} parent=5 // pred_check_branch
      %171 = sbr.rel (%p168) target = $region32
    $region31: #{refinenet_forward.14} parent=5 // pred_region
      %s172 = ssub.s32 %s11, 1
      %s173 = smul.u32 32, %s16
      %p174 = scmp.lt.s32.totalorder %s173, 63
      %s175 = scalar_select %p174, %s173, 63
      %s176 = smul.addr %s175, 5
      %s177 = smul.addr %s176, 8
      %s178 = scalar_lea.vmem %s0, %s177
      %p179 = pneg %p37
      %p180 = pneg %p34
      %p181 = pneg %p58
      %p182 = pneg %p55
      %p183 = pneg %p79
      %p184 = pneg %p76
      %p185 = pneg %p105
      %p186 = pneg %p102
      %s187 = smul.u32 32, %s16
      %p188 = scmp.lt.s32.totalorder %s187, 63
      %s189 = scalar_select %p188, %s187, 63
      %s190 = smul.addr %s189, 8
      %s191 = scalar_lea.vmem %s3, %s190
      %p192 = pneg %p131
      %p193 = pneg %p128
      %p194 = scmp.lt.s32.totalorder %s16, 1
      %s195 = scalar_select %p194, %s16, 1
      %s196 = smul.addr %s195, 2
      %s197 = scalar_lea.vmem %s4, %s196
      %s198 = smul.u32 32, %s16
      %p199 = scmp.lt.s32.totalorder %s198, 63
      %s200 = scalar_select %p199, %s198, 63
      %s201 = smul.addr %s200, 5
      %s202 = smul.addr %s201, 8
      %s203 = scalar_lea.vmem %s0, %s202
      %s204 = smul.u32 32, %s16
      %s205 = smul.u32 32, %s16
      %p206 = scmp.lt.s32.totalorder %s205, 63
      %s207 = scalar_select %p206, %s205, 63
      %s208 = smul.addr %s207, 8
      %s209 = scalar_lea.vmem %s3, %s208
      %s210 = smul.u32 32, %s16
      %p211 = scmp.lt.s32.totalorder %s16, 1
      %s212 = scalar_select %p211, %s16, 1
      %s213 = smul.addr %s212, 2
      %s214 = scalar_lea.vmem %s4, %s213
      %v215 = vld [vmem:[%s203] sm:$0xff]
      %v216 = vld [vmem:[%s203 + $0x8] sm:$0xff]
      %v217 = vld [vmem:[%s203 + $0x10] sm:$0xff]
      %v218 = vld [vmem:[%s203 + $0x18] sm:$0xff]
      %v219 = vld [vmem:[%s203 + $0x20] sm:$0xff]
      %v220 = vld [vmem:[%s203 + $0x28] sm:$0xff]
      %v221 = vld [vmem:[%s203 + $0x30] sm:$0xff]
      %v222 = vld [vmem:[%s203 + $0x38] sm:$0xff]
      %v223 = vld [vmem:[%s203 + $0x40] sm:$0xff]
      %v224 = vld [vmem:[%s203 + $0x48] sm:$0xff]
      %v225 = vld [vmem:[%s203 + $0x50] sm:$0xff]
      %v226 = vld [vmem:[%s203 + $0x58] sm:$0xff]
      %v227 = vld [vmem:[%s203 + $0x60] sm:$0xff]
      %v228 = vld [vmem:[%s203 + $0x68] sm:$0xff]
      %v229 = vld [vmem:[%s203 + $0x70] sm:$0xff]
      %v230 = vld [vmem:[%s203 + $0x78] sm:$0xff]
      %v231 = vld [vmem:[%s203 + $0x80] sm:$0xff]
      %v232 = vld [vmem:[%s203 + $0x88] sm:$0xff]
      %v233 = vld [vmem:[%s203 + $0x90] sm:$0xff]
      %v234 = vld [vmem:[%s203 + $0x98] sm:$0xff]
      %v235 = vld [vmem:[%s203 + $0xa0] sm:$0xff]
      %v236 = vld [vmem:[%s203 + $0xa8] sm:$0xff]
      %v237 = vld [vmem:[%s203 + $0xb0] sm:$0xff]
      %v238 = vld [vmem:[%s203 + $0xb8] sm:$0xff]
      %v239 = vld [vmem:[%s203 + $0xc0] sm:$0xff]
      %v240 = vld [vmem:[%s203 + $0xc8] sm:$0xff]
      %v241 = vld [vmem:[%s203 + $0xd0] sm:$0xff]
      %v242 = vld [vmem:[%s203 + $0xd8] sm:$0xff]
      %v243 = vld [vmem:[%s203 + $0xe0] sm:$0xff]
      %v244 = vld [vmem:[%s203 + $0xe8] sm:$0xff]
      %v245 = vld [vmem:[%s203 + $0xf0] sm:$0xff]
      %v246 = vld [vmem:[%s203 + $0xf8] sm:$0xff]
      %v247 = vld [vmem:[%s203 + $0x100] sm:$0xff]
      %v248 = vld [vmem:[%s203 + $0x108] sm:$0xff]
      %v249 = vld [vmem:[%s203 + $0x110] sm:$0xff]
      %v250 = vld [vmem:[%s203 + $0x118] sm:$0xff]
      %v251 = vld [vmem:[%s203 + $0x120] sm:$0xff]
      %v252 = vld [vmem:[%s203 + $0x128] sm:$0xff]
      %v253 = vld [vmem:[%s203 + $0x130] sm:$0xff]
      %v254 = vld [vmem:[%s203 + $0x138] sm:$0xff]
      %v255 = vld [vmem:[%s203 + $0x140] sm:$0xff]
      %v256 = vld [vmem:[%s203 + $0x148] sm:$0xff]
      %v257 = vld [vmem:[%s203 + $0x150] sm:$0xff]
      %v258 = vld [vmem:[%s203 + $0x158] sm:$0xff]
      %v259 = vld [vmem:[%s203 + $0x160] sm:$0xff]
      %v260 = vld [vmem:[%s203 + $0x168] sm:$0xff]
      %v261 = vld [vmem:[%s203 + $0x170] sm:$0xff]
      %v262 = vld [vmem:[%s203 + $0x178] sm:$0xff]
      %v263 = vld [vmem:[%s203 + $0x180] sm:$0xff]
      %v264 = vld [vmem:[%s203 + $0x188] sm:$0xff]
      %v265 = vld [vmem:[%s203 + $0x190] sm:$0xff]
      %v266 = vld [vmem:[%s203 + $0x198] sm:$0xff]
      %v267 = vld [vmem:[%s203 + $0x1a0] sm:$0xff]
      %v268 = vld [vmem:[%s203 + $0x1a8] sm:$0xff]
      %v269 = vld [vmem:[%s203 + $0x1b0] sm:$0xff]
      %v270 = vld [vmem:[%s203 + $0x1b8] sm:$0xff]
      %v271 = vld [vmem:[%s203 + $0x1c0] sm:$0xff]
      %v272 = vld [vmem:[%s203 + $0x1c8] sm:$0xff]
      %v273 = vld [vmem:[%s203 + $0x1d0] sm:$0xff]
      %v274 = vld [vmem:[%s203 + $0x1d8] sm:$0xff]
      %v275 = vld [vmem:[%s203 + $0x1e0] sm:$0xff]
      %v276 = vld [vmem:[%s203 + $0x1e8] sm:$0xff]
      %v277 = vld [vmem:[%s203 + $0x1f0] sm:$0xff]
      %v278 = vld [vmem:[%s203 + $0x1f8] sm:$0xff]
      %v279 = vld [vmem:[%s203 + $0x200] sm:$0xff]
      %v280 = vld [vmem:[%s203 + $0x208] sm:$0xff]
      %v281 = vld [vmem:[%s203 + $0x210] sm:$0xff]
      %v282 = vld [vmem:[%s203 + $0x218] sm:$0xff]
      %v283 = vld [vmem:[%s203 + $0x220] sm:$0xff]
      %v284 = vld [vmem:[%s203 + $0x228] sm:$0xff]
      %v285 = vld [vmem:[%s203 + $0x230] sm:$0xff]
      %v286 = vld [vmem:[%s203 + $0x238] sm:$0xff]
      %v287 = vld [vmem:[%s203 + $0x240] sm:$0xff]
      %v288 = vld [vmem:[%s203 + $0x248] sm:$0xff]
      %v289 = vld [vmem:[%s203 + $0x250] sm:$0xff]
      %v290 = vld [vmem:[%s203 + $0x258] sm:$0xff]
      %v291 = vld [vmem:[%s203 + $0x260] sm:$0xff]
      %v292 = vld [vmem:[%s203 + $0x268] sm:$0xff]
      %v293 = vld [vmem:[%s203 + $0x270] sm:$0xff]
      %v294 = vld [vmem:[%s203 + $0x278] sm:$0xff]
      %v295 = vld [vmem:[%s203 + $0x280] sm:$0xff]
      %v296 = vld [vmem:[%s203 + $0x288] sm:$0xff]
      %v297 = vld [vmem:[%s203 + $0x290] sm:$0xff]
      %v298 = vld [vmem:[%s203 + $0x298] sm:$0xff]
      %v299 = vld [vmem:[%s203 + $0x2a0] sm:$0xff]
      %v300 = vld [vmem:[%s203 + $0x2a8] sm:$0xff]
      %v301 = vld [vmem:[%s203 + $0x2b0] sm:$0xff]
      %v302 = vld [vmem:[%s203 + $0x2b8] sm:$0xff]
      %v303 = vld [vmem:[%s203 + $0x2c0] sm:$0xff]
      %v304 = vld [vmem:[%s203 + $0x2c8] sm:$0xff]
      %v305 = vld [vmem:[%s203 + $0x2d0] sm:$0xff]
      %v306 = vld [vmem:[%s203 + $0x2d8] sm:$0xff]
      %v307 = vld [vmem:[%s203 + $0x2e0] sm:$0xff]
      %v308 = vld [vmem:[%s203 + $0x2e8] sm:$0xff]
      %v309 = vld [vmem:[%s203 + $0x2f0] sm:$0xff]
      %v310 = vld [vmem:[%s203 + $0x2f8] sm:$0xff]
      %v311 = vld [vmem:[%s203 + $0x300] sm:$0xff]
      %v312 = vld [vmem:[%s203 + $0x308] sm:$0xff]
      %v313 = vld [vmem:[%s203 + $0x310] sm:$0xff]
      %v314 = vld [vmem:[%s203 + $0x318] sm:$0xff]
      %v315 = vld [vmem:[%s203 + $0x320] sm:$0xff]
      %v316 = vld [vmem:[%s203 + $0x328] sm:$0xff]
      %v317 = vld [vmem:[%s203 + $0x330] sm:$0xff]
      %v318 = vld [vmem:[%s203 + $0x338] sm:$0xff]
      %v319 = vld [vmem:[%s203 + $0x340] sm:$0xff]
      %v320 = vld [vmem:[%s203 + $0x348] sm:$0xff]
      %v321 = vld [vmem:[%s203 + $0x350] sm:$0xff]
      %v322 = vld [vmem:[%s203 + $0x358] sm:$0xff]
      %v323 = vld [vmem:[%s203 + $0x360] sm:$0xff]
      %v324 = vld [vmem:[%s203 + $0x368] sm:$0xff]
      %v325 = vld [vmem:[%s203 + $0x370] sm:$0xff]
      %v326 = vld [vmem:[%s203 + $0x378] sm:$0xff]
      %v327 = vld [vmem:[%s203 + $0x380] sm:$0xff]
      %v328 = vld [vmem:[%s203 + $0x388] sm:$0xff]
      %v329 = vld [vmem:[%s203 + $0x390] sm:$0xff]
      %v330 = vld [vmem:[%s203 + $0x398] sm:$0xff]
      %v331 = vld [vmem:[%s203 + $0x3a0] sm:$0xff]
      %v332 = vld [vmem:[%s203 + $0x3a8] sm:$0xff]
      %v333 = vld [vmem:[%s203 + $0x3b0] sm:$0xff]
      %v334 = vld [vmem:[%s203 + $0x3b8] sm:$0xff]
      %v335 = vld [vmem:[%s203 + $0x3c0] sm:$0xff]
      %v336 = vld [vmem:[%s203 + $0x3c8] sm:$0xff]
      %v337 = vld [vmem:[%s203 + $0x3d0] sm:$0xff]
      %v338 = vld [vmem:[%s203 + $0x3d8] sm:$0xff]
      %v339 = vld [vmem:[%s203 + $0x3e0] sm:$0xff]
      %v340 = vld [vmem:[%s203 + $0x3e8] sm:$0xff]
      %v341 = vld [vmem:[%s203 + $0x3f0] sm:$0xff]
      %v342 = vld [vmem:[%s203 + $0x3f8] sm:$0xff]
      %v343 = vld [vmem:[%s203 + $0x400] sm:$0xff]
      %v344 = vld [vmem:[%s203 + $0x408] sm:$0xff]
      %v345 = vld [vmem:[%s203 + $0x410] sm:$0xff]
      %v346 = vld [vmem:[%s203 + $0x418] sm:$0xff]
      %v347 = vld [vmem:[%s203 + $0x420] sm:$0xff]
      %v348 = vld [vmem:[%s203 + $0x428] sm:$0xff]
      %v349 = vld [vmem:[%s203 + $0x430] sm:$0xff]
      %v350 = vld [vmem:[%s203 + $0x438] sm:$0xff]
      %v351 = vld [vmem:[%s203 + $0x440] sm:$0xff]
      %v352 = vld [vmem:[%s203 + $0x448] sm:$0xff]
      %v353 = vld [vmem:[%s203 + $0x450] sm:$0xff]
      %v354 = vld [vmem:[%s203 + $0x458] sm:$0xff]
      %v355 = vld [vmem:[%s203 + $0x460] sm:$0xff]
      %v356 = vld [vmem:[%s203 + $0x468] sm:$0xff]
      %v357 = vld [vmem:[%s203 + $0x470] sm:$0xff]
      %v358 = vld [vmem:[%s203 + $0x478] sm:$0xff]
      %v359 = vld [vmem:[%s203 + $0x480] sm:$0xff]
      %v360 = vld [vmem:[%s203 + $0x488] sm:$0xff]
      %v361 = vld [vmem:[%s203 + $0x490] sm:$0xff]
      %v362 = vld [vmem:[%s203 + $0x498] sm:$0xff]
      %v363 = vld [vmem:[%s203 + $0x4a0] sm:$0xff]
      %v364 = vld [vmem:[%s203 + $0x4a8] sm:$0xff]
      %v365 = vld [vmem:[%s203 + $0x4b0] sm:$0xff]
      %v366 = vld [vmem:[%s203 + $0x4b8] sm:$0xff]
      %v367 = vld [vmem:[%s203 + $0x4c0] sm:$0xff]
      %v368 = vld [vmem:[%s203 + $0x4c8] sm:$0xff]
      %v369 = vld [vmem:[%s203 + $0x4d0] sm:$0xff]
      %v370 = vld [vmem:[%s203 + $0x4d8] sm:$0xff]
      %v371 = vld [vmem:[%s203 + $0x4e0] sm:$0xff]
      %v372 = vld [vmem:[%s203 + $0x4e8] sm:$0xff]
      %v373 = vld [vmem:[%s203 + $0x4f0] sm:$0xff]
      %v374 = vld [vmem:[%s203 + $0x4f8] sm:$0xff]
      %v375 = vld [vmem:[%s1] sm:$0xff]
      %v376 = vld [vmem:[%s1 + $0x8] sm:$0xff]
      %v377 = vld [vmem:[%s1 + $0x10] sm:$0xff]
      %v378 = vld [vmem:[%s1 + $0x18] sm:$0xff]
      %v379 = vld [vmem:[%s1 + $0x20] sm:$0xff]
      %v380 = vld [vmem:[%s1 + $0x28] sm:$0xff]
      %v381 = vld [vmem:[%s1 + $0x30] sm:$0xff]
      %v382 = vld [vmem:[%s1 + $0x38] sm:$0xff]
      %v383 = vld [vmem:[%s1 + $0x40] sm:$0xff]
      %v384 = vld [vmem:[%s1 + $0x48] sm:$0xff]
      %v385 = vld [vmem:[%s1 + $0x50] sm:$0xff]
      %v386 = vld [vmem:[%s1 + $0x58] sm:$0xff]
      %v387 = vld [vmem:[%s1 + $0x60] sm:$0xff]
      %v388 = vld [vmem:[%s1 + $0x68] sm:$0xff]
      %v389 = vld [vmem:[%s1 + $0x70] sm:$0xff]
      %v390 = vld [vmem:[%s1 + $0x78] sm:$0xff]
      %v391 = vld [vmem:[%s1 + $0x80] sm:$0xff]
      %v392 = vld [vmem:[%s1 + $0x88] sm:$0xff]
      %v393 = vld [vmem:[%s1 + $0x90] sm:$0xff]
      %v394 = vld [vmem:[%s1 + $0x98] sm:$0xff]
      %v395 = vld [vmem:[%s1 + $0xa0] sm:$0xff]
      %v396 = vld [vmem:[%s1 + $0xa8] sm:$0xff]
      %v397 = vld [vmem:[%s1 + $0xb0] sm:$0xff]
      %v398 = vld [vmem:[%s1 + $0xb8] sm:$0xff]
      %v399 = vld [vmem:[%s1 + $0xc0] sm:$0xff]
      %v400 = vld [vmem:[%s1 + $0xc8] sm:$0xff]
      %v401 = vld [vmem:[%s1 + $0xd0] sm:$0xff]
      %v402 = vld [vmem:[%s1 + $0xd8] sm:$0xff]
      %v403 = vld [vmem:[%s1 + $0xe0] sm:$0xff]
      %v404 = vld [vmem:[%s1 + $0xe8] sm:$0xff]
      %v405 = vld [vmem:[%s1 + $0xf0] sm:$0xff]
      %v406 = vld [vmem:[%s1 + $0xf8] sm:$0xff]
      %v407 = vld [vmem:[%s1 + $0x100] sm:$0xff]
      %v408 = vld [vmem:[%s1 + $0x108] sm:$0xff]
      %v409 = vld [vmem:[%s1 + $0x110] sm:$0xff]
      %v410 = vld [vmem:[%s1 + $0x118] sm:$0xff]
      %v411 = vld [vmem:[%s1 + $0x120] sm:$0xff]
      %v412 = vld [vmem:[%s1 + $0x128] sm:$0xff]
      %v413 = vld [vmem:[%s1 + $0x130] sm:$0xff]
      %v414 = vld [vmem:[%s1 + $0x138] sm:$0xff]
      %v415 = vld [vmem:[%s1 + $0x140] sm:$0xff]
      %v416 = vld [vmem:[%s1 + $0x148] sm:$0xff]
      %v417 = vld [vmem:[%s1 + $0x150] sm:$0xff]
      %v418 = vld [vmem:[%s1 + $0x158] sm:$0xff]
      %v419 = vld [vmem:[%s1 + $0x160] sm:$0xff]
      %v420 = vld [vmem:[%s1 + $0x168] sm:$0xff]
      %v421 = vld [vmem:[%s1 + $0x170] sm:$0xff]
      %v422 = vld [vmem:[%s1 + $0x178] sm:$0xff]
      %v423 = vld [vmem:[%s1 + $0x180] sm:$0xff]
      %v424 = vld [vmem:[%s1 + $0x188] sm:$0xff]
      %v425 = vld [vmem:[%s1 + $0x190] sm:$0xff]
      %v426 = vld [vmem:[%s1 + $0x198] sm:$0xff]
      %v427 = vld [vmem:[%s1 + $0x1a0] sm:$0xff]
      %v428 = vld [vmem:[%s1 + $0x1a8] sm:$0xff]
      %v429 = vld [vmem:[%s1 + $0x1b0] sm:$0xff]
      %v430 = vld [vmem:[%s1 + $0x1b8] sm:$0xff]
      %v431 = vld [vmem:[%s1 + $0x1c0] sm:$0xff]
      %v432 = vld [vmem:[%s1 + $0x1c8] sm:$0xff]
      %v433 = vld [vmem:[%s1 + $0x1d0] sm:$0xff]
      %v434 = vld [vmem:[%s1 + $0x1d8] sm:$0xff]
      %v435 = vld [vmem:[%s1 + $0x1e0] sm:$0xff]
      %v436 = vld [vmem:[%s1 + $0x1e8] sm:$0xff]
      %v437 = vld [vmem:[%s1 + $0x1f0] sm:$0xff]
      %v438 = vld [vmem:[%s1 + $0x1f8] sm:$0xff]
      %v439 = vld [vmem:[%s1 + $0x200] sm:$0xff]
      %v440 = vld [vmem:[%s1 + $0x208] sm:$0xff]
      %v441 = vld [vmem:[%s1 + $0x210] sm:$0xff]
      %v442 = vld [vmem:[%s1 + $0x218] sm:$0xff]
      %v443 = vld [vmem:[%s1 + $0x220] sm:$0xff]
      %v444 = vld [vmem:[%s1 + $0x228] sm:$0xff]
      %v445 = vld [vmem:[%s1 + $0x230] sm:$0xff]
      %v446 = vld [vmem:[%s1 + $0x238] sm:$0xff]
      %v447 = vld [vmem:[%s2] sm:$0x1]
      %v449 = vperm.slane %v447, 0
      %vm451 = vcmask 523264
      %v453 = vsel %vm451, %v219, 0
      %v456 = vsel %vm451, %v224, 0
      %v459 = vsel %vm451, %v229, 0
      %v462 = vsel %vm451, %v234, 0
      %v465 = vsel %vm451, %v239, 0
      %v468 = vsel %vm451, %v244, 0
      %v471 = vsel %vm451, %v249, 0
      %v474 = vsel %vm451, %v254, 0
      %v477 = vsel %vm451, %v259, 0
      %v480 = vsel %vm451, %v264, 0
      %v483 = vsel %vm451, %v269, 0
      %v486 = vsel %vm451, %v274, 0
      %v489 = vsel %vm451, %v279, 0
      %v492 = vsel %vm451, %v284, 0
      %v495 = vsel %vm451, %v289, 0
      %v498 = vsel %vm451, %v294, 0
      %v501 = vsel %vm451, %v299, 0
      %v504 = vsel %vm451, %v304, 0
      %v507 = vsel %vm451, %v309, 0
      %v510 = vsel %vm451, %v314, 0
      %v513 = vsel %vm451, %v319, 0
      %v516 = vsel %vm451, %v324, 0
      %v519 = vsel %vm451, %v329, 0
      %v522 = vsel %vm451, %v334, 0
      %v525 = vsel %vm451, %v339, 0
      %v528 = vsel %vm451, %v344, 0
      %v531 = vsel %vm451, %v349, 0
      %v534 = vsel %vm451, %v354, 0
      %v537 = vsel %vm451, %v359, 0
      %v540 = vsel %vm451, %v364, 0
      %v543 = vsel %vm451, %v369, 0
      %v546 = vsel %vm451, %v374, 0
      %548 = vmatpush.msra.mxu0 %v390
      %549 = vmatpush.msra.mxu0 %v389
      %550 = vmatpush.msra.mxu0 %v388
      %551 = vmatpush.msra.mxu0 %v387
      %552 = vmatpush.msra.mxu0 %v386
      %553 = vmatpush.msra.mxu0 %v385
      %554 = vmatpush.msra.mxu0 %v384
      %555 = vmatpush.msra.mxu0 %v383
      %556 = vmatpush.msra.mxu0 %v382
      %557 = vmatpush.msra.mxu0 %v381
      %558 = vmatpush.msra.mxu0 %v380
      %559 = vmatpush.msra.mxu0 %v379
      %560 = vmatpush.msra.mxu0 %v378
      %561 = vmatpush.msra.mxu0 %v377
      %562 = vmatpush.msra.mxu0 %v376
      %563 = vmatpush.msra.mxu0 %v375
      %564 = vmatmul.f32.gmra.mxu0 %v215
      %v565 = vpop.f32.mrf.mxu0
      %v566 = vadd.f32 %v449, %v565
      %567 = vmatmul.f32.gmra.mxu0 %v220
      %v568 = vpop.f32.mrf.mxu0
      %v569 = vadd.f32 %v449, %v568
      %570 = vmatmul.f32.gmra.mxu0 %v225
      %v571 = vpop.f32.mrf.mxu0
      %v572 = vadd.f32 %v449, %v571
      %573 = vmatmul.f32.gmra.mxu0 %v230
      %v574 = vpop.f32.mrf.mxu0
      %v575 = vadd.f32 %v449, %v574
      %576 = vmatmul.f32.gmra.mxu0 %v235
      %v577 = vpop.f32.mrf.mxu0
      %v578 = vadd.f32 %v449, %v577
      %579 = vmatmul.f32.gmra.mxu0 %v240
      %v580 = vpop.f32.mrf.mxu0
      %v581 = vadd.f32 %v449, %v580
      %582 = vmatmul.f32.gmra.mxu0 %v245
      %v583 = vpop.f32.mrf.mxu0
      %v584 = vadd.f32 %v449, %v583
      %585 = vmatmul.f32.gmra.mxu0 %v250
      %v586 = vpop.f32.mrf.mxu0
      %v587 = vadd.f32 %v449, %v586
      %588 = vmatmul.f32.gmra.mxu0 %v255
      %v589 = vpop.f32.mrf.mxu0
      %v590 = vadd.f32 %v449, %v589
      %591 = vmatmul.f32.gmra.mxu0 %v260
      %v592 = vpop.f32.mrf.mxu0
      %v593 = vadd.f32 %v449, %v592
      %594 = vmatmul.f32.gmra.mxu0 %v265
      %v595 = vpop.f32.mrf.mxu0
      %v596 = vadd.f32 %v449, %v595
      %597 = vmatmul.f32.gmra.mxu0 %v270
      %v598 = vpop.f32.mrf.mxu0
      %v599 = vadd.f32 %v449, %v598
      %600 = vmatmul.f32.gmra.mxu0 %v275
      %v601 = vpop.f32.mrf.mxu0
      %v602 = vadd.f32 %v449, %v601
      %603 = vmatmul.f32.gmra.mxu0 %v280
      %v604 = vpop.f32.mrf.mxu0
      %v605 = vadd.f32 %v449, %v604
      %606 = vmatmul.f32.gmra.mxu0 %v285
      %v607 = vpop.f32.mrf.mxu0
      %v608 = vadd.f32 %v449, %v607
      %609 = vmatmul.f32.gmra.mxu0 %v290
      %v610 = vpop.f32.mrf.mxu0
      %v611 = vadd.f32 %v449, %v610
      %612 = vmatmul.f32.gmra.mxu0 %v295
      %v613 = vpop.f32.mrf.mxu0
      %v614 = vadd.f32 %v449, %v613
      %615 = vmatmul.f32.gmra.mxu0 %v300
      %v616 = vpop.f32.mrf.mxu0
      %v617 = vadd.f32 %v449, %v616
      %618 = vmatmul.f32.gmra.mxu0 %v305
      %v619 = vpop.f32.mrf.mxu0
      %v620 = vadd.f32 %v449, %v619
      %621 = vmatmul.f32.gmra.mxu0 %v310
      %v622 = vpop.f32.mrf.mxu0
      %v623 = vadd.f32 %v449, %v622
      %624 = vmatmul.f32.gmra.mxu0 %v315
      %v625 = vpop.f32.mrf.mxu0
      %v626 = vadd.f32 %v449, %v625
      %627 = vmatmul.f32.gmra.mxu0 %v320
      %v628 = vpop.f32.mrf.mxu0
      %v629 = vadd.f32 %v449, %v628
      %630 = vmatmul.f32.gmra.mxu0 %v325
      %v631 = vpop.f32.mrf.mxu0
      %v632 = vadd.f32 %v449, %v631
      %633 = vmatmul.f32.gmra.mxu0 %v330
      %v634 = vpop.f32.mrf.mxu0
      %v635 = vadd.f32 %v449, %v634
      %636 = vmatmul.f32.gmra.mxu0 %v335
      %v637 = vpop.f32.mrf.mxu0
      %v638 = vadd.f32 %v449, %v637
      %639 = vmatmul.f32.gmra.mxu0 %v340
      %v640 = vpop.f32.mrf.mxu0
      %v641 = vadd.f32 %v449, %v640
      %642 = vmatmul.f32.gmra.mxu0 %v345
      %v643 = vpop.f32.mrf.mxu0
      %v644 = vadd.f32 %v449, %v643
      %645 = vmatmul.f32.gmra.mxu0 %v350
      %v646 = vpop.f32.mrf.mxu0
      %v647 = vadd.f32 %v449, %v646
      %648 = vmatmul.f32.gmra.mxu0 %v355
      %v649 = vpop.f32.mrf.mxu0
      %v650 = vadd.f32 %v449, %v649
      %651 = vmatmul.f32.gmra.mxu0 %v360
      %v652 = vpop.f32.mrf.mxu0
      %v653 = vadd.f32 %v449, %v652
      %654 = vmatmul.f32.gmra.mxu0 %v365
      %v655 = vpop.f32.mrf.mxu0
      %v656 = vadd.f32 %v449, %v655
      %657 = vmatmul.f32.gmra.mxu0 %v370
      %v658 = vpop.f32.mrf.mxu0
      %v659 = vadd.f32 %v449, %v658
      %660 = vdwg.mxu0
      %661 = vmatpush.msra.mxu0 %v406
      %662 = vmatpush.msra.mxu0 %v405
      %663 = vmatpush.msra.mxu0 %v404
      %664 = vmatpush.msra.mxu0 %v403
      %665 = vmatpush.msra.mxu0 %v402
      %666 = vmatpush.msra.mxu0 %v401
      %667 = vmatpush.msra.mxu0 %v400
      %668 = vmatpush.msra.mxu0 %v399
      %669 = vmatpush.msra.mxu0 %v398
      %670 = vmatpush.msra.mxu0 %v397
      %671 = vmatpush.msra.mxu0 %v396
      %672 = vmatpush.msra.mxu0 %v395
      %673 = vmatpush.msra.mxu0 %v394
      %674 = vmatpush.msra.mxu0 %v393
      %675 = vmatpush.msra.mxu0 %v392
      %676 = vmatpush.msra.mxu0 %v391
      %677 = vmatmul.f32.gmra.mxu0 %v216
      %v678 = vpop.f32.mrf.mxu0
      %v679 = vadd.f32 %v566, %v678
      %680 = vmatmul.f32.gmra.mxu0 %v221
      %v681 = vpop.f32.mrf.mxu0
      %v682 = vadd.f32 %v569, %v681
      %683 = vmatmul.f32.gmra.mxu0 %v226
      %v684 = vpop.f32.mrf.mxu0
      %v685 = vadd.f32 %v572, %v684
      %686 = vmatmul.f32.gmra.mxu0 %v231
      %v687 = vpop.f32.mrf.mxu0
      %v688 = vadd.f32 %v575, %v687
      %689 = vmatmul.f32.gmra.mxu0 %v236
      %v690 = vpop.f32.mrf.mxu0
      %v691 = vadd.f32 %v578, %v690
      %692 = vmatmul.f32.gmra.mxu0 %v241
      %v693 = vpop.f32.mrf.mxu0
      %v694 = vadd.f32 %v581, %v693
      %695 = vmatmul.f32.gmra.mxu0 %v246
      %v696 = vpop.f32.mrf.mxu0
      %v697 = vadd.f32 %v584, %v696
      %698 = vmatmul.f32.gmra.mxu0 %v251
      %v699 = vpop.f32.mrf.mxu0
      %v700 = vadd.f32 %v587, %v699
      %701 = vmatmul.f32.gmra.mxu0 %v256
      %v702 = vpop.f32.mrf.mxu0
      %v703 = vadd.f32 %v590, %v702
      %704 = vmatmul.f32.gmra.mxu0 %v261
      %v705 = vpop.f32.mrf.mxu0
      %v706 = vadd.f32 %v593, %v705
      %707 = vmatmul.f32.gmra.mxu0 %v266
      %v708 = vpop.f32.mrf.mxu0
      %v709 = vadd.f32 %v596, %v708
      %710 = vmatmul.f32.gmra.mxu0 %v271
      %v711 = vpop.f32.mrf.mxu0
      %v712 = vadd.f32 %v599, %v711
      %713 = vmatmul.f32.gmra.mxu0 %v276
      %v714 = vpop.f32.mrf.mxu0
      %v715 = vadd.f32 %v602, %v714
      %716 = vmatmul.f32.gmra.mxu0 %v281
      %v717 = vpop.f32.mrf.mxu0
      %v718 = vadd.f32 %v605, %v717
      %719 = vmatmul.f32.gmra.mxu0 %v286
      %v720 = vpop.f32.mrf.mxu0
      %v721 = vadd.f32 %v608, %v720
      %722 = vmatmul.f32.gmra.mxu0 %v291
      %v723 = vpop.f32.mrf.mxu0
      %v724 = vadd.f32 %v611, %v723
      %725 = vmatmul.f32.gmra.mxu0 %v296
      %v726 = vpop.f32.mrf.mxu0
      %v727 = vadd.f32 %v614, %v726
      %728 = vmatmul.f32.gmra.mxu0 %v301
      %v729 = vpop.f32.mrf.mxu0
      %v730 = vadd.f32 %v617, %v729
      %731 = vmatmul.f32.gmra.mxu0 %v306
      %v732 = vpop.f32.mrf.mxu0
      %v733 = vadd.f32 %v620, %v732
      %734 = vmatmul.f32.gmra.mxu0 %v311
      %v735 = vpop.f32.mrf.mxu0
      %v736 = vadd.f32 %v623, %v735
      %737 = vmatmul.f32.gmra.mxu0 %v316
      %v738 = vpop.f32.mrf.mxu0
      %v739 = vadd.f32 %v626, %v738
      %740 = vmatmul.f32.gmra.mxu0 %v321
      %v741 = vpop.f32.mrf.mxu0
      %v742 = vadd.f32 %v629, %v741
      %743 = vmatmul.f32.gmra.mxu0 %v326
      %v744 = vpop.f32.mrf.mxu0
      %v745 = vadd.f32 %v632, %v744
      %746 = vmatmul.f32.gmra.mxu0 %v331
      %v747 = vpop.f32.mrf.mxu0
      %v748 = vadd.f32 %v635, %v747
      %749 = vmatmul.f32.gmra.mxu0 %v336
      %v750 = vpop.f32.mrf.mxu0
      %v751 = vadd.f32 %v638, %v750
      %752 = vmatmul.f32.gmra.mxu0 %v341
      %v753 = vpop.f32.mrf.mxu0
      %v754 = vadd.f32 %v641, %v753
      %755 = vmatmul.f32.gmra.mxu0 %v346
      %v756 = vpop.f32.mrf.mxu0
      %v757 = vadd.f32 %v644, %v756
      %758 = vmatmul.f32.gmra.mxu0 %v351
      %v759 = vpop.f32.mrf.mxu0
      %v760 = vadd.f32 %v647, %v759
      %761 = vmatmul.f32.gmra.mxu0 %v356
      %v762 = vpop.f32.mrf.mxu0
      %v763 = vadd.f32 %v650, %v762
      %764 = vmatmul.f32.gmra.mxu0 %v361
      %v765 = vpop.f32.mrf.mxu0
      %v766 = vadd.f32 %v653, %v765
      %767 = vmatmul.f32.gmra.mxu0 %v366
      %v768 = vpop.f32.mrf.mxu0
      %v769 = vadd.f32 %v656, %v768
      %770 = vmatmul.f32.gmra.mxu0 %v371
      %v771 = vpop.f32.mrf.mxu0
      %v772 = vadd.f32 %v659, %v771
      %773 = vdwg.mxu0
      %774 = vmatpush.msra.mxu0 %v422
      %775 = vmatpush.msra.mxu0 %v421
      %776 = vmatpush.msra.mxu0 %v420
      %777 = vmatpush.msra.mxu0 %v419
      %778 = vmatpush.msra.mxu0 %v418
      %779 = vmatpush.msra.mxu0 %v417
      %780 = vmatpush.msra.mxu0 %v416
      %781 = vmatpush.msra.mxu0 %v415
      %782 = vmatpush.msra.mxu0 %v414
      %783 = vmatpush.msra.mxu0 %v413
      %784 = vmatpush.msra.mxu0 %v412
      %785 = vmatpush.msra.mxu0 %v411
      %786 = vmatpush.msra.mxu0 %v410
      %787 = vmatpush.msra.mxu0 %v409
      %788 = vmatpush.msra.mxu0 %v408
      %789 = vmatpush.msra.mxu0 %v407
      %790 = vmatmul.f32.gmra.mxu0 %v217
      %v791 = vpop.f32.mrf.mxu0
      %v792 = vadd.f32 %v679, %v791
      %793 = vmatmul.f32.gmra.mxu0 %v222
      %v794 = vpop.f32.mrf.mxu0
      %v795 = vadd.f32 %v682, %v794
      %796 = vmatmul.f32.gmra.mxu0 %v227
      %v797 = vpop.f32.mrf.mxu0
      %v798 = vadd.f32 %v685, %v797
      %799 = vmatmul.f32.gmra.mxu0 %v232
      %v800 = vpop.f32.mrf.mxu0
      %v801 = vadd.f32 %v688, %v800
      %802 = vmatmul.f32.gmra.mxu0 %v237
      %v803 = vpop.f32.mrf.mxu0
      %v804 = vadd.f32 %v691, %v803
      %805 = vmatmul.f32.gmra.mxu0 %v242
      %v806 = vpop.f32.mrf.mxu0
      %v807 = vadd.f32 %v694, %v806
      %808 = vmatmul.f32.gmra.mxu0 %v247
      %v809 = vpop.f32.mrf.mxu0
      %v810 = vadd.f32 %v697, %v809
      %811 = vmatmul.f32.gmra.mxu0 %v252
      %v812 = vpop.f32.mrf.mxu0
      %v813 = vadd.f32 %v700, %v812
      %814 = vmatmul.f32.gmra.mxu0 %v257
      %v815 = vpop.f32.mrf.mxu0
      %v816 = vadd.f32 %v703, %v815
      %817 = vmatmul.f32.gmra.mxu0 %v262
      %v818 = vpop.f32.mrf.mxu0
      %v819 = vadd.f32 %v706, %v818
      %820 = vmatmul.f32.gmra.mxu0 %v267
      %v821 = vpop.f32.mrf.mxu0
      %v822 = vadd.f32 %v709, %v821
      %823 = vmatmul.f32.gmra.mxu0 %v272
      %v824 = vpop.f32.mrf.mxu0
      %v825 = vadd.f32 %v712, %v824
      %826 = vmatmul.f32.gmra.mxu0 %v277
      %v827 = vpop.f32.mrf.mxu0
      %v828 = vadd.f32 %v715, %v827
      %829 = vmatmul.f32.gmra.mxu0 %v282
      %v830 = vpop.f32.mrf.mxu0
      %v831 = vadd.f32 %v718, %v830
      %832 = vmatmul.f32.gmra.mxu0 %v287
      %v833 = vpop.f32.mrf.mxu0
      %v834 = vadd.f32 %v721, %v833
      %835 = vmatmul.f32.gmra.mxu0 %v292
      %v836 = vpop.f32.mrf.mxu0
      %v837 = vadd.f32 %v724, %v836
      %838 = vmatmul.f32.gmra.mxu0 %v297
      %v839 = vpop.f32.mrf.mxu0
      %v840 = vadd.f32 %v727, %v839
      %841 = vmatmul.f32.gmra.mxu0 %v302
      %v842 = vpop.f32.mrf.mxu0
      %v843 = vadd.f32 %v730, %v842
      %844 = vmatmul.f32.gmra.mxu0 %v307
      %v845 = vpop.f32.mrf.mxu0
      %v846 = vadd.f32 %v733, %v845
      %847 = vmatmul.f32.gmra.mxu0 %v312
      %v848 = vpop.f32.mrf.mxu0
      %v849 = vadd.f32 %v736, %v848
      %850 = vmatmul.f32.gmra.mxu0 %v317
      %v851 = vpop.f32.mrf.mxu0
      %v852 = vadd.f32 %v739, %v851
      %853 = vmatmul.f32.gmra.mxu0 %v322
      %v854 = vpop.f32.mrf.mxu0
      %v855 = vadd.f32 %v742, %v854
      %856 = vmatmul.f32.gmra.mxu0 %v327
      %v857 = vpop.f32.mrf.mxu0
      %v858 = vadd.f32 %v745, %v857
      %859 = vmatmul.f32.gmra.mxu0 %v332
      %v860 = vpop.f32.mrf.mxu0
      %v861 = vadd.f32 %v748, %v860
      %862 = vmatmul.f32.gmra.mxu0 %v337
      %v863 = vpop.f32.mrf.mxu0
      %v864 = vadd.f32 %v751, %v863
      %865 = vmatmul.f32.gmra.mxu0 %v342
      %v866 = vpop.f32.mrf.mxu0
      %v867 = vadd.f32 %v754, %v866
      %868 = vmatmul.f32.gmra.mxu0 %v347
      %v869 = vpop.f32.mrf.mxu0
      %v870 = vadd.f32 %v757, %v869
      %871 = vmatmul.f32.gmra.mxu0 %v352
      %v872 = vpop.f32.mrf.mxu0
      %v873 = vadd.f32 %v760, %v872
      %874 = vmatmul.f32.gmra.mxu0 %v357
      %v875 = vpop.f32.mrf.mxu0
      %v876 = vadd.f32 %v763, %v875
      %877 = vmatmul.f32.gmra.mxu0 %v362
      %v878 = vpop.f32.mrf.mxu0
      %v879 = vadd.f32 %v766, %v878
      %880 = vmatmul.f32.gmra.mxu0 %v367
      %v881 = vpop.f32.mrf.mxu0
      %v882 = vadd.f32 %v769, %v881
      %883 = vmatmul.f32.gmra.mxu0 %v372
      %v884 = vpop.f32.mrf.mxu0
      %v885 = vadd.f32 %v772, %v884
      %886 = vdwg.mxu0
      %887 = vmatpush.msra.mxu0 %v438
      %888 = vmatpush.msra.mxu0 %v437
      %889 = vmatpush.msra.mxu0 %v436
      %890 = vmatpush.msra.mxu0 %v435
      %891 = vmatpush.msra.mxu0 %v434
      %892 = vmatpush.msra.mxu0 %v433
      %893 = vmatpush.msra.mxu0 %v432
      %894 = vmatpush.msra.mxu0 %v431
      %895 = vmatpush.msra.mxu0 %v430
      %896 = vmatpush.msra.mxu0 %v429
      %897 = vmatpush.msra.mxu0 %v428
      %898 = vmatpush.msra.mxu0 %v427
      %899 = vmatpush.msra.mxu0 %v426
      %900 = vmatpush.msra.mxu0 %v425
      %901 = vmatpush.msra.mxu0 %v424
      %902 = vmatpush.msra.mxu0 %v423
      %903 = vmatmul.f32.gmra.mxu0 %v218
      %v904 = vpop.f32.mrf.mxu0
      %v905 = vadd.f32 %v792, %v904
      %906 = vmatmul.f32.gmra.mxu0 %v223
      %v907 = vpop.f32.mrf.mxu0
      %v908 = vadd.f32 %v795, %v907
      %909 = vmatmul.f32.gmra.mxu0 %v228
      %v910 = vpop.f32.mrf.mxu0
      %v911 = vadd.f32 %v798, %v910
      %912 = vmatmul.f32.gmra.mxu0 %v233
      %v913 = vpop.f32.mrf.mxu0
      %v914 = vadd.f32 %v801, %v913
      %915 = vmatmul.f32.gmra.mxu0 %v238
      %v916 = vpop.f32.mrf.mxu0
      %v917 = vadd.f32 %v804, %v916
      %918 = vmatmul.f32.gmra.mxu0 %v243
      %v919 = vpop.f32.mrf.mxu0
      %v920 = vadd.f32 %v807, %v919
      %921 = vmatmul.f32.gmra.mxu0 %v248
      %v922 = vpop.f32.mrf.mxu0
      %v923 = vadd.f32 %v810, %v922
      %924 = vmatmul.f32.gmra.mxu0 %v253
      %v925 = vpop.f32.mrf.mxu0
      %v926 = vadd.f32 %v813, %v925
      %927 = vmatmul.f32.gmra.mxu0 %v258
      %v928 = vpop.f32.mrf.mxu0
      %v929 = vadd.f32 %v816, %v928
      %930 = vmatmul.f32.gmra.mxu0 %v263
      %v931 = vpop.f32.mrf.mxu0
      %v932 = vadd.f32 %v819, %v931
      %933 = vmatmul.f32.gmra.mxu0 %v268
      %v934 = vpop.f32.mrf.mxu0
      %v935 = vadd.f32 %v822, %v934
      %936 = vmatmul.f32.gmra.mxu0 %v273
      %v937 = vpop.f32.mrf.mxu0
      %v938 = vadd.f32 %v825, %v937
      %939 = vmatmul.f32.gmra.mxu0 %v278
      %v940 = vpop.f32.mrf.mxu0
      %v941 = vadd.f32 %v828, %v940
      %942 = vmatmul.f32.gmra.mxu0 %v283
      %v943 = vpop.f32.mrf.mxu0
      %v944 = vadd.f32 %v831, %v943
      %945 = vmatmul.f32.gmra.mxu0 %v288
      %v946 = vpop.f32.mrf.mxu0
      %v947 = vadd.f32 %v834, %v946
      %948 = vmatmul.f32.gmra.mxu0 %v293
      %v949 = vpop.f32.mrf.mxu0
      %v950 = vadd.f32 %v837, %v949
      %951 = vmatmul.f32.gmra.mxu0 %v298
      %v952 = vpop.f32.mrf.mxu0
      %v953 = vadd.f32 %v840, %v952
      %954 = vmatmul.f32.gmra.mxu0 %v303
      %v955 = vpop.f32.mrf.mxu0
      %v956 = vadd.f32 %v843, %v955
      %957 = vmatmul.f32.gmra.mxu0 %v308
      %v958 = vpop.f32.mrf.mxu0
      %v959 = vadd.f32 %v846, %v958
      %960 = vmatmul.f32.gmra.mxu0 %v313
      %v961 = vpop.f32.mrf.mxu0
      %v962 = vadd.f32 %v849, %v961
      %963 = vmatmul.f32.gmra.mxu0 %v318
      %v964 = vpop.f32.mrf.mxu0
      %v965 = vadd.f32 %v852, %v964
      %966 = vmatmul.f32.gmra.mxu0 %v323
      %v967 = vpop.f32.mrf.mxu0
      %v968 = vadd.f32 %v855, %v967
      %969 = vmatmul.f32.gmra.mxu0 %v328
      %v970 = vpop.f32.mrf.mxu0
      %v971 = vadd.f32 %v858, %v970
      %972 = vmatmul.f32.gmra.mxu0 %v333
      %v973 = vpop.f32.mrf.mxu0
      %v974 = vadd.f32 %v861, %v973
      %975 = vmatmul.f32.gmra.mxu0 %v338
      %v976 = vpop.f32.mrf.mxu0
      %v977 = vadd.f32 %v864, %v976
      %978 = vmatmul.f32.gmra.mxu0 %v343
      %v979 = vpop.f32.mrf.mxu0
      %v980 = vadd.f32 %v867, %v979
      %981 = vmatmul.f32.gmra.mxu0 %v348
      %v982 = vpop.f32.mrf.mxu0
      %v983 = vadd.f32 %v870, %v982
      %984 = vmatmul.f32.gmra.mxu0 %v353
      %v985 = vpop.f32.mrf.mxu0
      %v986 = vadd.f32 %v873, %v985
      %987 = vmatmul.f32.gmra.mxu0 %v358
      %v988 = vpop.f32.mrf.mxu0
      %v989 = vadd.f32 %v876, %v988
      %990 = vmatmul.f32.gmra.mxu0 %v363
      %v991 = vpop.f32.mrf.mxu0
      %v992 = vadd.f32 %v879, %v991
      %993 = vmatmul.f32.gmra.mxu0 %v368
      %v994 = vpop.f32.mrf.mxu0
      %v995 = vadd.f32 %v882, %v994
      %996 = vmatmul.f32.gmra.mxu0 %v373
      %v997 = vpop.f32.mrf.mxu0
      %v998 = vadd.f32 %v885, %v997
      %999 = vdwg.mxu0
      %1000 = vmatpush.msra.mxu0 0.0
      %1001 = vmatpush.msra.mxu0 0.0
      %1002 = vmatpush.msra.mxu0 0.0
      %1003 = vmatpush.msra.mxu0 0.0
      %1004 = vmatpush.msra.mxu0 0.0
      %1005 = vmatpush.msra.mxu0 0.0
      %1006 = vmatpush.msra.mxu0 0.0
      %1007 = vmatpush.msra.mxu0 0.0
      %1008 = vmatpush.msra.mxu0 %v446
      %1009 = vmatpush.msra.mxu0 %v445
      %1010 = vmatpush.msra.mxu0 %v444
      %1011 = vmatpush.msra.mxu0 %v443
      %1012 = vmatpush.msra.mxu0 %v442
      %1013 = vmatpush.msra.mxu0 %v441
      %1014 = vmatpush.msra.mxu0 %v440
      %1015 = vmatpush.msra.mxu0 %v439
      %1016 = vmatmul.f32.gmra.mxu0 %v453
      %v1017 = vpop.f32.mrf.mxu0
      %v1018 = vadd.f32 %v905, %v1017
      %1019 = vmatmul.f32.gmra.mxu0 %v456
      %v1020 = vpop.f32.mrf.mxu0
      %v1021 = vadd.f32 %v908, %v1020
      %1022 = vmatmul.f32.gmra.mxu0 %v459
      %v1023 = vpop.f32.mrf.mxu0
      %v1024 = vadd.f32 %v911, %v1023
      %1025 = vmatmul.f32.gmra.mxu0 %v462
      %v1026 = vpop.f32.mrf.mxu0
      %v1027 = vadd.f32 %v914, %v1026
      %1028 = vmatmul.f32.gmra.mxu0 %v465
      %v1029 = vpop.f32.mrf.mxu0
      %v1030 = vadd.f32 %v917, %v1029
      %1031 = vmatmul.f32.gmra.mxu0 %v468
      %v1032 = vpop.f32.mrf.mxu0
      %v1033 = vadd.f32 %v920, %v1032
      %1034 = vmatmul.f32.gmra.mxu0 %v471
      %v1035 = vpop.f32.mrf.mxu0
      %v1036 = vadd.f32 %v923, %v1035
      %1037 = vmatmul.f32.gmra.mxu0 %v474
      %v1038 = vpop.f32.mrf.mxu0
      %v1039 = vadd.f32 %v926, %v1038
      %1040 = vmatmul.f32.gmra.mxu0 %v477
      %v1041 = vpop.f32.mrf.mxu0
      %v1042 = vadd.f32 %v929, %v1041
      %1043 = vmatmul.f32.gmra.mxu0 %v480
      %v1044 = vpop.f32.mrf.mxu0
      %v1045 = vadd.f32 %v932, %v1044
      %1046 = vmatmul.f32.gmra.mxu0 %v483
      %v1047 = vpop.f32.mrf.mxu0
      %v1048 = vadd.f32 %v935, %v1047
      %1049 = vmatmul.f32.gmra.mxu0 %v486
      %v1050 = vpop.f32.mrf.mxu0
      %v1051 = vadd.f32 %v938, %v1050
      %1052 = vmatmul.f32.gmra.mxu0 %v489
      %v1053 = vpop.f32.mrf.mxu0
      %v1054 = vadd.f32 %v941, %v1053
      %1055 = vmatmul.f32.gmra.mxu0 %v492
      %v1056 = vpop.f32.mrf.mxu0
      %v1057 = vadd.f32 %v944, %v1056
      %1058 = vmatmul.f32.gmra.mxu0 %v495
      %v1059 = vpop.f32.mrf.mxu0
      %v1060 = vadd.f32 %v947, %v1059
      %1061 = vmatmul.f32.gmra.mxu0 %v498
      %v1062 = vpop.f32.mrf.mxu0
      %v1063 = vadd.f32 %v950, %v1062
      %1064 = vmatmul.f32.gmra.mxu0 %v501
      %v1065 = vpop.f32.mrf.mxu0
      %v1066 = vadd.f32 %v953, %v1065
      %1067 = vmatmul.f32.gmra.mxu0 %v504
      %v1068 = vpop.f32.mrf.mxu0
      %v1069 = vadd.f32 %v956, %v1068
      %1070 = vmatmul.f32.gmra.mxu0 %v507
      %v1071 = vpop.f32.mrf.mxu0
      %v1072 = vadd.f32 %v959, %v1071
      %1073 = vmatmul.f32.gmra.mxu0 %v510
      %v1074 = vpop.f32.mrf.mxu0
      %v1075 = vadd.f32 %v962, %v1074
      %1076 = vmatmul.f32.gmra.mxu0 %v513
      %v1077 = vpop.f32.mrf.mxu0
      %v1078 = vadd.f32 %v965, %v1077
      %1079 = vmatmul.f32.gmra.mxu0 %v516
      %v1080 = vpop.f32.mrf.mxu0
      %v1081 = vadd.f32 %v968, %v1080
      %1082 = vmatmul.f32.gmra.mxu0 %v519
      %v1083 = vpop.f32.mrf.mxu0
      %v1084 = vadd.f32 %v971, %v1083
      %1085 = vmatmul.f32.gmra.mxu0 %v522
      %v1086 = vpop.f32.mrf.mxu0
      %v1087 = vadd.f32 %v974, %v1086
      %1088 = vmatmul.f32.gmra.mxu0 %v525
      %v1089 = vpop.f32.mrf.mxu0
      %v1090 = vadd.f32 %v977, %v1089
      %1091 = vmatmul.f32.gmra.mxu0 %v528
      %v1092 = vpop.f32.mrf.mxu0
      %v1093 = vadd.f32 %v980, %v1092
      %1094 = vmatmul.f32.gmra.mxu0 %v531
      %v1095 = vpop.f32.mrf.mxu0
      %v1096 = vadd.f32 %v983, %v1095
      %1097 = vmatmul.f32.gmra.mxu0 %v534
      %v1098 = vpop.f32.mrf.mxu0
      %v1099 = vadd.f32 %v986, %v1098
      %1100 = vmatmul.f32.gmra.mxu0 %v537
      %v1101 = vpop.f32.mrf.mxu0
      %v1102 = vadd.f32 %v989, %v1101
      %1103 = vmatmul.f32.gmra.mxu0 %v540
      %v1104 = vpop.f32.mrf.mxu0
      %v1105 = vadd.f32 %v992, %v1104
      %1106 = vmatmul.f32.gmra.mxu0 %v543
      %v1107 = vpop.f32.mrf.mxu0
      %v1108 = vadd.f32 %v995, %v1107
      %1109 = vmatmul.f32.gmra.mxu0 %v546
      %v1110 = vpop.f32.mrf.mxu0
      %v1111 = vadd.f32 %v998, %v1110
      %1112 = vdwg.mxu0
      %1113 = vst.msk [vmem:[%s209] sm:$0xff] %vm451, %v1018
      %1114 = vst.msk [vmem:[%s209 + $0x8] sm:$0xff] %vm451, %v1021
      %1115 = vst.msk [vmem:[%s209 + $0x10] sm:$0xff] %vm451, %v1024
      %1116 = vst.msk [vmem:[%s209 + $0x18] sm:$0xff] %vm451, %v1027
      %1117 = vst.msk [vmem:[%s209 + $0x20] sm:$0xff] %vm451, %v1030
      %1118 = vst.msk [vmem:[%s209 + $0x28] sm:$0xff] %vm451, %v1033
      %1119 = vst.msk [vmem:[%s209 + $0x30] sm:$0xff] %vm451, %v1036
      %1120 = vst.msk [vmem:[%s209 + $0x38] sm:$0xff] %vm451, %v1039
      %1121 = vst.msk [vmem:[%s209 + $0x40] sm:$0xff] %vm451, %v1042
      %1122 = vst.msk [vmem:[%s209 + $0x48] sm:$0xff] %vm451, %v1045
      %1123 = vst.msk [vmem:[%s209 + $0x50] sm:$0xff] %vm451, %v1048
      %1124 = vst.msk [vmem:[%s209 + $0x58] sm:$0xff] %vm451, %v1051
      %1125 = vst.msk [vmem:[%s209 + $0x60] sm:$0xff] %vm451, %v1054
      %1126 = vst.msk [vmem:[%s209 + $0x68] sm:$0xff] %vm451, %v1057
      %1127 = vst.msk [vmem:[%s209 + $0x70] sm:$0xff] %vm451, %v1060
      %1128 = vst.msk [vmem:[%s209 + $0x78] sm:$0xff] %vm451, %v1063
      %1129 = vst.msk [vmem:[%s209 + $0x80] sm:$0xff] %vm451, %v1066
      %1130 = vst.msk [vmem:[%s209 + $0x88] sm:$0xff] %vm451, %v1069
      %1131 = vst.msk [vmem:[%s209 + $0x90] sm:$0xff] %vm451, %v1072
      %1132 = vst.msk [vmem:[%s209 + $0x98] sm:$0xff] %vm451, %v1075
      %1133 = vst.msk [vmem:[%s209 + $0xa0] sm:$0xff] %vm451, %v1078
      %1134 = vst.msk [vmem:[%s209 + $0xa8] sm:$0xff] %vm451, %v1081
      %1135 = vst.msk [vmem:[%s209 + $0xb0] sm:$0xff] %vm451, %v1084
      %1136 = vst.msk [vmem:[%s209 + $0xb8] sm:$0xff] %vm451, %v1087
      %1137 = vst.msk [vmem:[%s209 + $0xc0] sm:$0xff] %vm451, %v1090
      %1138 = vst.msk [vmem:[%s209 + $0xc8] sm:$0xff] %vm451, %v1093
      %1139 = vst.msk [vmem:[%s209 + $0xd0] sm:$0xff] %vm451, %v1096
      %1140 = vst.msk [vmem:[%s209 + $0xd8] sm:$0xff] %vm451, %v1099
      %1141 = vst.msk [vmem:[%s209 + $0xe0] sm:$0xff] %vm451, %v1102
      %1142 = vst.msk [vmem:[%s209 + $0xe8] sm:$0xff] %vm451, %v1105
      %1143 = vst.msk [vmem:[%s209 + $0xf0] sm:$0xff] %vm451, %v1108
      %1144 = vst.msk [vmem:[%s209 + $0xf8] sm:$0xff] %vm451, %v1111
      %v1145 = vsel %vm451, %v1018, 0.0
      %v1146 = vsel %vm451, %v1021, 0.0
      %v1147 = vadd.f32 %v1145, %v1146
      %v1148 = vsel %vm451, %v1024, 0.0
      %v1149 = vadd.f32 %v1147, %v1148
      %v1150 = vsel %vm451, %v1027, 0.0
      %v1151 = vadd.f32 %v1149, %v1150
      %v1152 = vsel %vm451, %v1030, 0.0
      %v1153 = vadd.f32 %v1151, %v1152
      %v1154 = vsel %vm451, %v1033, 0.0
      %v1155 = vadd.f32 %v1153, %v1154
      %v1156 = vsel %vm451, %v1036, 0.0
      %v1157 = vadd.f32 %v1155, %v1156
      %v1158 = vsel %vm451, %v1039, 0.0
      %v1159 = vadd.f32 %v1157, %v1158
      %v1160 = vsel %vm451, %v1042, 0.0
      %v1161 = vadd.f32 %v1159, %v1160
      %v1162 = vsel %vm451, %v1045, 0.0
      %v1163 = vadd.f32 %v1161, %v1162
      %v1164 = vsel %vm451, %v1048, 0.0
      %v1165 = vadd.f32 %v1163, %v1164
      %v1166 = vsel %vm451, %v1051, 0.0
      %v1167 = vadd.f32 %v1165, %v1166
      %v1168 = vsel %vm451, %v1054, 0.0
      %v1169 = vadd.f32 %v1167, %v1168
      %v1170 = vsel %vm451, %v1057, 0.0
      %v1171 = vadd.f32 %v1169, %v1170
      %v1172 = vsel %vm451, %v1060, 0.0
      %v1173 = vadd.f32 %v1171, %v1172
      %v1174 = vsel %vm451, %v1063, 0.0
      %v1175 = vadd.f32 %v1173, %v1174
      %v1176 = vsel %vm451, %v1066, 0.0
      %v1177 = vadd.f32 %v1175, %v1176
      %v1178 = vsel %vm451, %v1069, 0.0
      %v1179 = vadd.f32 %v1177, %v1178
      %v1180 = vsel %vm451, %v1072, 0.0
      %v1181 = vadd.f32 %v1179, %v1180
      %v1182 = vsel %vm451, %v1075, 0.0
      %v1183 = vadd.f32 %v1181, %v1182
      %v1184 = vsel %vm451, %v1078, 0.0
      %v1185 = vadd.f32 %v1183, %v1184
      %v1186 = vsel %vm451, %v1081, 0.0
      %v1187 = vadd.f32 %v1185, %v1186
      %v1188 = vsel %vm451, %v1084, 0.0
      %v1189 = vadd.f32 %v1187, %v1188
      %v1190 = vsel %vm451, %v1087, 0.0
      %v1191 = vadd.f32 %v1189, %v1190
      %v1192 = vsel %vm451, %v1090, 0.0
      %v1193 = vadd.f32 %v1191, %v1192
      %v1194 = vsel %vm451, %v1093, 0.0
      %v1195 = vadd.f32 %v1193, %v1194
      %v1196 = vsel %vm451, %v1096, 0.0
      %v1197 = vadd.f32 %v1195, %v1196
      %v1198 = vsel %vm451, %v1099, 0.0
      %v1199 = vadd.f32 %v1197, %v1198
      %v1200 = vsel %vm451, %v1102, 0.0
      %v1201 = vadd.f32 %v1199, %v1200
      %v1202 = vsel %vm451, %v1105, 0.0
      %v1203 = vadd.f32 %v1201, %v1202
      %v1204 = vsel %vm451, %v1108, 0.0
      %v1205 = vadd.f32 %v1203, %v1204
      %v1206 = vsel %vm451, %v1111, 0.0
      %v1207 = vadd.f32 %v1205, %v1206
      %v1208 = vrot.slane %v1207, 4
      %v1209 = vadd.f32 %v1207, %v1208
      %v1210 = vrot.slane %v1209, 2
      %v1211 = vadd.f32 %v1209, %v1210
      %v1212 = vrot.slane %v1211, 1
      %v1213 = vadd.f32 %v1211, %v1212
      %v1214 = vmul.f32 %v1018, %v1018
      %v1215 = vmul.f32 %v1021, %v1021
      %v1216 = vmul.f32 %v1024, %v1024
      %v1217 = vmul.f32 %v1027, %v1027
      %v1218 = vmul.f32 %v1030, %v1030
      %v1219 = vmul.f32 %v1033, %v1033
      %v1220 = vmul.f32 %v1036, %v1036
      %v1221 = vmul.f32 %v1039, %v1039
      %v1222 = vmul.f32 %v1042, %v1042
      %v1223 = vmul.f32 %v1045, %v1045
      %v1224 = vmul.f32 %v1048, %v1048
      %v1225 = vmul.f32 %v1051, %v1051
      %v1226 = vmul.f32 %v1054, %v1054
      %v1227 = vmul.f32 %v1057, %v1057
      %v1228 = vmul.f32 %v1060, %v1060
      %v1229 = vmul.f32 %v1063, %v1063
      %v1230 = vmul.f32 %v1066, %v1066
      %v1231 = vmul.f32 %v1069, %v1069
      %v1232 = vmul.f32 %v1072, %v1072
      %v1233 = vmul.f32 %v1075, %v1075
      %v1234 = vmul.f32 %v1078, %v1078
      %v1235 = vmul.f32 %v1081, %v1081
      %v1236 = vmul.f32 %v1084, %v1084
      %v1237 = vmul.f32 %v1087, %v1087
      %v1238 = vmul.f32 %v1090, %v1090
      %v1239 = vmul.f32 %v1093, %v1093
      %v1240 = vmul.f32 %v1096, %v1096
      %v1241 = vmul.f32 %v1099, %v1099
      %v1242 = vmul.f32 %v1102, %v1102
      %v1243 = vmul.f32 %v1105, %v1105
      %v1244 = vmul.f32 %v1108, %v1108
      %v1245 = vmul.f32 %v1111, %v1111
      %v1246 = vsel %vm451, %v1214, 0.0
      %v1247 = vsel %vm451, %v1215, 0.0
      %v1248 = vadd.f32 %v1246, %v1247
      %v1249 = vsel %vm451, %v1216, 0.0
      %v1250 = vadd.f32 %v1248, %v1249
      %v1251 = vsel %vm451, %v1217, 0.0
      %v1252 = vadd.f32 %v1250, %v1251
      %v1253 = vsel %vm451, %v1218, 0.0
      %v1254 = vadd.f32 %v1252, %v1253
      %v1255 = vsel %vm451, %v1219, 0.0
      %v1256 = vadd.f32 %v1254, %v1255
      %v1257 = vsel %vm451, %v1220, 0.0
      %v1258 = vadd.f32 %v1256, %v1257
      %v1259 = vsel %vm451, %v1221, 0.0
      %v1260 = vadd.f32 %v1258, %v1259
      %v1261 = vsel %vm451, %v1222, 0.0
      %v1262 = vadd.f32 %v1260, %v1261
      %v1263 = vsel %vm451, %v1223, 0.0
      %v1264 = vadd.f32 %v1262, %v1263
      %v1265 = vsel %vm451, %v1224, 0.0
      %v1266 = vadd.f32 %v1264, %v1265
      %v1267 = vsel %vm451, %v1225, 0.0
      %v1268 = vadd.f32 %v1266, %v1267
      %v1269 = vsel %vm451, %v1226, 0.0
      %v1270 = vadd.f32 %v1268, %v1269
      %v1271 = vsel %vm451, %v1227, 0.0
      %v1272 = vadd.f32 %v1270, %v1271
      %v1273 = vsel %vm451, %v1228, 0.0
      %v1274 = vadd.f32 %v1272, %v1273
      %v1275 = vsel %vm451, %v1229, 0.0
      %v1276 = vadd.f32 %v1274, %v1275
      %v1277 = vsel %vm451, %v1230, 0.0
      %v1278 = vadd.f32 %v1276, %v1277
      %v1279 = vsel %vm451, %v1231, 0.0
      %v1280 = vadd.f32 %v1278, %v1279
      %v1281 = vsel %vm451, %v1232, 0.0
      %v1282 = vadd.f32 %v1280, %v1281
      %v1283 = vsel %vm451, %v1233, 0.0
      %v1284 = vadd.f32 %v1282, %v1283
      %v1285 = vsel %vm451, %v1234, 0.0
      %v1286 = vadd.f32 %v1284, %v1285
      %v1287 = vsel %vm451, %v1235, 0.0
      %v1288 = vadd.f32 %v1286, %v1287
      %v1289 = vsel %vm451, %v1236, 0.0
      %v1290 = vadd.f32 %v1288, %v1289
      %v1291 = vsel %vm451, %v1237, 0.0
      %v1292 = vadd.f32 %v1290, %v1291
      %v1293 = vsel %vm451, %v1238, 0.0
      %v1294 = vadd.f32 %v1292, %v1293
      %v1295 = vsel %vm451, %v1239, 0.0
      %v1296 = vadd.f32 %v1294, %v1295
      %v1297 = vsel %vm451, %v1240, 0.0
      %v1298 = vadd.f32 %v1296, %v1297
      %v1299 = vsel %vm451, %v1241, 0.0
      %v1300 = vadd.f32 %v1298, %v1299
      %v1301 = vsel %vm451, %v1242, 0.0
      %v1302 = vadd.f32 %v1300, %v1301
      %v1303 = vsel %vm451, %v1243, 0.0
      %v1304 = vadd.f32 %v1302, %v1303
      %v1305 = vsel %vm451, %v1244, 0.0
      %v1306 = vadd.f32 %v1304, %v1305
      %v1307 = vsel %vm451, %v1245, 0.0
      %v1308 = vadd.f32 %v1306, %v1307
      %v1309 = vrot.slane %v1308, 4
      %v1310 = vadd.f32 %v1308, %v1309
      %v1311 = vrot.slane %v1310, 2
      %v1312 = vadd.f32 %v1310, %v1311
      %v1313 = vrot.slane %v1312, 1
      %v1314 = vadd.f32 %v1312, %v1313
      %vm1315 = vcmask 1040384
      %v1316 = vsel %vm1315, %v1213, %v1314
      %vm1317 = vcmask 517120
      %1318 = vst.msk [vmem:[%s214] sm:$0x3] %vm1317, %v1316
      %s1319 = smul.u32 32, %s16
      %p1320 = scmp.lt.s32.totalorder %s1319, 63
      %s1321 = scalar_select %p1320, %s1319, 63
      %s1322 = smul.addr %s1321, 8
      %s1323 = scalar_lea.vmem %s3, %s1322
      %p1324 = scmp.lt.s32.totalorder %s16, 1
      %s1325 = scalar_select %p1324, %s16, 1
      %s1326 = smul.addr %s1325, 2
      %s1327 = scalar_lea.vmem %s4, %s1326
      // Predicated region
      $region33: #{refinenet_forward.14} parent=31 // pred_check
        %p1328 = pneg %p102
      $region34: #{refinenet_forward.14} parent=31 // pred_check_branch
        %1330 = sbr.rel (%p1328) target = $region36
      $region35: #{refinenet_forward.14} parent=31 // pred_region
        %s1331 = smul.u32 32, %s16
      $region36: #{refinenet_forward.14} parent=31 // pred_fallthru
        _
      // Predicated region
      $region37: #{refinenet_forward.14} parent=31 // pred_check
        %p1332 = pneg %p128
      $region38: #{refinenet_forward.14} parent=31 // pred_check_branch
        %1334 = sbr.rel (%p1332) target = $region40
      $region39: #{refinenet_forward.14} parent=31 // pred_region
        _
      $region40: #{refinenet_forward.14} parent=31 // pred_fallthru
        _
    $region32: #{refinenet_forward.14} parent=5 // pred_fallthru
      _
    %p1335 = scmp.le.s32.totalorder 2, %s11
    // Predicated region
    $region41: #{refinenet_forward.14} parent=5 // pred_check
      %p1336 = pneg %p1335
    $region42: #{refinenet_forward.14} parent=5 // pred_check_branch
      %1338 = sbr.rel (%p1336) target = $region44
    $region43: #{refinenet_forward.14} parent=5 // pred_region
      %s1339 = ssub.s32 %s11, 2
      // Predicated region
      $region45: #{refinenet_forward.14} parent=43 // pred_check
        %p1340 = pneg %p108
      $region46: #{refinenet_forward.14} parent=43 // pred_check_branch
        %1342 = sbr.rel (%p1340) target = $region48
      $region47: #{refinenet_forward.14} parent=43 // pred_region
        %s1343 = smul.u32 32, %s17
        %p1344 = scmp.lt.s32.totalorder %s1343, 63
        %s1345 = scalar_select %p1344, %s1343, 63
        %s1346 = smul.addr %s1345, 8
        %s1347 = scalar_lea.vmem %s3, %s1346
      $region48: #{refinenet_forward.14} parent=43 // pred_fallthru
        _
      // Predicated region
      $region49: #{refinenet_forward.14} parent=43 // pred_check
        %p1348 = pneg %p134
      $region50: #{refinenet_forward.14} parent=43 // pred_check_branch
        %1350 = sbr.rel (%p1348) target = $region52
      $region51: #{refinenet_forward.14} parent=43 // pred_region
        %p1351 = scmp.lt.s32.totalorder %s17, 1
        %s1352 = scalar_select %p1351, %s17, 1
        %s1353 = smul.addr %s1352, 2
        %s1354 = scalar_lea.vmem %s4, %s1353
      $region52: #{refinenet_forward.14} parent=43 // pred_fallthru
        _
    $region44: #{refinenet_forward.14} parent=5 // pred_fallthru
      _
  $region6: #{refinenet_forward.14} parent=0 // loop_footer
    %s15 = sadd.s32 1, %s11
  $region7: #{refinenet_forward.14} parent=0 // loop_footer_branch
    %10 = sbr.rel target = $region3
  $region8: #{refinenet_forward.14} parent=0 // loop_exit
    _

// kernel: refinenet_forward.18
$region0: #{refinenet_forward.18}
  #allocation0 [shape = 'u32[]', space=smem, size = 0x4, offset = 0x4, fixed_abs, tag = 'smem constant byte address 0x4 - core index']
  #allocation1 [shape = 'u32[72,128]{1,0:T(1,128)}', space=vmem, size = 0x9000, scoped, tag = 'internal scratch']
  %s0 = inlined_call_operand.vmem [shape: f32[512,576], index: 0, kind: input, shape index: {}]
  %s1 = inlined_call_operand.vmem [shape: f32[576,128], index: 1, kind: input, shape index: {}]
  %s2 = inlined_call_operand.vmem [shape: f32[1,128], index: 2, kind: input, shape index: {}]
  %s3 = inlined_call_operand.vmem [shape: f32[512,128], index: 3, kind: output, shape index: {0}]
  %s4 = inlined_call_operand.vmem [shape: f32[2,2,128], index: 4, kind: output, shape index: {1}]
  %5 = xla_tuple %s3, %s4
  %s6 = sld [smem:[#allocation0]]
  $region53: #{refinenet_forward.18} parent=0
    _
  %s8 = ssub.s32 1, %s6
  %s9 = scalar_select 0, %s8, %s6
  loop: start=0, step=1, limit=4
  $region2: #{refinenet_forward.18} parent=0 // loop_pre_header
    _
  $region3: #{refinenet_forward.18} parent=0 // loop_header
    %s11 = sphi 0, %s15
    %p12 = scmp.ge.s32.totalorder %s11, 4
    %s21 = sphi 0, %s23
    %s24 = sphi 0, %s21
    %s25 = sphi 0, %s24
    %s41 = sphi 0, %s25
    %s45 = sphi 0, %s45
    %s47 = sphi 0, %s45
    %s48 = sphi 0, %s47
    %s62 = sphi 0, %s48
    %s66 = sphi 0, %s66
    %s68 = sphi 0, %s66
    %s69 = sphi 0, %s68
    %s83 = sphi 0, %s69
    %s89 = sphi 0, %s91
    %s92 = sphi 0, %s89
    %s93 = sphi 0, %s92
    %s109 = sphi 0, %s93
    %s115 = sphi 0, %s117
    %s118 = sphi 0, %s115
    %s119 = sphi 0, %s118
    %s135 = sphi 0, %s119
  $region4: #{refinenet_forward.18} parent=0 // loop_header_branch
    %14 = sbr.rel (%p12) target = $region8
  $region5: #{refinenet_forward.18} parent=0 // loop_body
    %s16 = ssub.s32 %s11, 1
    %s17 = ssub.s32 %s11, 2
    %s18 = sadd.s32 %s11, 1
    %s19 = ssub.s32 %s11, %s18
    %p20 = scmp.eq.s32.totalorder %s19, 0
    %s22 = sadd.s32 %s21, 1
    %s23 = scalar_select %p20, %s21, %s22
    %p26 = pneg %p20
    %p27 = scmp.eq.s32.totalorder %s11, 1
    %p28 = por %p26, %p27
    %p29 = scmp.ne.s32.totalorder %s21, %s24
    %p30 = scmp.eq.s32.totalorder %s11, 0
    %p31 = por %p29, %p30
    %p32 = scmp.ne.s32.totalorder %s21, %s24
    %p33 = scmp.eq.s32.totalorder %s16, 1
    %p34 = por %p32, %p33
    %p35 = scmp.ne.s32.totalorder %s24, %s25
    %p36 = scmp.eq.s32.totalorder %s16, 0
    %p37 = por %p35, %p36
    %p38 = scmp.ne.s32.totalorder %s24, %s25
    %p39 = scmp.eq.s32.totalorder %s17, 1
    %p40 = por %p38, %p39
    %p42 = scmp.ne.s32.totalorder %s25, %s41
    %p43 = scmp.eq.s32.totalorder %s17, 0
    %p44 = por %p42, %p43
    %s46 = sadd.s32 %s45, 1
    %p49 = scmp.eq.s32.totalorder %s11, 1
    %p50 = scmp.ne.s32.totalorder %s45, %s47
    %p51 = scmp.eq.s32.totalorder %s11, 0
    %p52 = por %p50, %p51
    %p53 = scmp.ne.s32.totalorder %s45, %s47
    %p54 = scmp.eq.s32.totalorder %s16, 1
    %p55 = por %p53, %p54
    %p56 = scmp.ne.s32.totalorder %s47, %s48
    %p57 = scmp.eq.s32.totalorder %s16, 0
    %p58 = por %p56, %p57
    %p59 = scmp.ne.s32.totalorder %s47, %s48
    %p60 = scmp.eq.s32.totalorder %s17, 1
    %p61 = por %p59, %p60
    %p63 = scmp.ne.s32.totalorder %s48, %s62
    %p64 = scmp.eq.s32.totalorder %s17, 0
    %p65 = por %p63, %p64
    %s67 = sadd.s32 %s66, 1
    %p70 = scmp.eq.s32.totalorder %s11, 1
    %p71 = scmp.ne.s32.totalorder %s66, %s68
    %p72 = scmp.eq.s32.totalorder %s11, 0
    %p73 = por %p71, %p72
    %p74 = scmp.ne.s32.totalorder %s66, %s68
    %p75 = scmp.eq.s32.totalorder %s16, 1
    %p76 = por %p74, %p75
    %p77 = scmp.ne.s32.totalorder %s68, %s69
    %p78 = scmp.eq.s32.totalorder %s16, 0
    %p79 = por %p77, %p78
    %p80 = scmp.ne.s32.totalorder %s68, %s69
    %p81 = scmp.eq.s32.totalorder %s17, 1
    %p82 = por %p80, %p81
    %p84 = scmp.ne.s32.totalorder %s69, %s83
    %p85 = scmp.eq.s32.totalorder %s17, 0
    %p86 = por %p84, %p85
    %s87 = ssub.s32 %s11, %s18
    %p88 = scmp.eq.s32.totalorder %s87, 0
    %s90 = sadd.s32 %s89, 1
    %s91 = scalar_select %p88, %s89, %s90
    %p94 = pneg %p88
    %p95 = scmp.eq.s32.totalorder %s11, 1
    %p96 = por %p94, %p95
    %p97 = scmp.ne.s32.totalorder %s89, %s92
    %p98 = scmp.eq.s32.totalorder %s11, 0
    %p99 = por %p97, %p98
    %p100 = scmp.ne.s32.totalorder %s89, %s92
    %p101 = scmp.eq.s32.totalorder %s16, 1
    %p102 = por %p100, %p101
    %p103 = scmp.ne.s32.totalorder %s92, %s93
    %p104 = scmp.eq.s32.totalorder %s16, 0
    %p105 = por %p103, %p104
    %p106 = scmp.ne.s32.totalorder %s92, %s93
    %p107 = scmp.eq.s32.totalorder %s17, 1
    %p108 = por %p106, %p107
    %p110 = scmp.ne.s32.totalorder %s93, %s109
    %p111 = scmp.eq.s32.totalorder %s17, 0
    %p112 = por %p110, %p111
    %s113 = ssub.s32 %s11, %s18
    %p114 = scmp.eq.s32.totalorder %s113, 0
    %s116 = sadd.s32 %s115, 1
    %s117 = scalar_select %p114, %s115, %s116
    %p120 = pneg %p114
    %p121 = scmp.eq.s32.totalorder %s11, 1
    %p122 = por %p120, %p121
    %p123 = scmp.ne.s32.totalorder %s115, %s118
    %p124 = scmp.eq.s32.totalorder %s11, 0
    %p125 = por %p123, %p124
    %p126 = scmp.ne.s32.totalorder %s115, %s118
    %p127 = scmp.eq.s32.totalorder %s16, 1
    %p128 = por %p126, %p127
    %p129 = scmp.ne.s32.totalorder %s118, %s119
    %p130 = scmp.eq.s32.totalorder %s16, 0
    %p131 = por %p129, %p130
    %p132 = scmp.ne.s32.totalorder %s118, %s119
    %p133 = scmp.eq.s32.totalorder %s17, 1
    %p134 = por %p132, %p133
    %p136 = scmp.ne.s32.totalorder %s119, %s135
    %p137 = scmp.eq.s32.totalorder %s17, 0
    %p138 = por %p136, %p137
    %p139 = scmp.le.s32.totalorder 1, %s11
    %p140 = scmp.lt.s32.totalorder %s11, 3
    %p141 = pnand %p139, %p140
    %p142 = pneg %p141
    // Predicated region
    $region9: #{refinenet_forward.18} parent=5 // pred_check
      _
    $region10: #{refinenet_forward.18} parent=5 // pred_check_branch
      %144 = sbr.rel (%p141) target = $region12
    $region11: #{refinenet_forward.18} parent=5 // pred_region
      %s145 = ssub.s32 %s11, 1
      // Predicated region
      $region13: #{refinenet_forward.18} parent=11 // pred_check
        %p146 = pneg %p58
      $region14: #{refinenet_forward.18} parent=11 // pred_check_branch
        %148 = sbr.rel (%p146) target = $region16
      $region15: #{refinenet_forward.18} parent=11 // pred_region
        _
      $region16: #{refinenet_forward.18} parent=11 // pred_fallthru
        _
      // Predicated region
      $region17: #{refinenet_forward.18} parent=11 // pred_check
        %p149 = pneg %p79
      $region18: #{refinenet_forward.18} parent=11 // pred_check_branch
        %151 = sbr.rel (%p149) target = $region20
      $region19: #{refinenet_forward.18} parent=11 // pred_region
        _
      $region20: #{refinenet_forward.18} parent=11 // pred_fallthru
        _
    $region12: #{refinenet_forward.18} parent=5 // pred_fallthru
      _
    %p152 = scmp.lt.s32.totalorder %s11, 2
    // Predicated region
    $region21: #{refinenet_forward.18} parent=5 // pred_check
      %p153 = pneg %p152
    $region22: #{refinenet_forward.18} parent=5 // pred_check_branch
      %155 = sbr.rel (%p153) target = $region24
    $region23: #{refinenet_forward.18} parent=5 // pred_region
      // Predicated region
      $region25: #{refinenet_forward.18} parent=23 // pred_check
        %p156 = pneg %p31
      $region26: #{refinenet_forward.18} parent=23 // pred_check_branch
        %158 = sbr.rel (%p156) target = $region28
      $region27: #{refinenet_forward.18} parent=23 // pred_region
        %s159 = smul.u32 32, %s11
        %p160 = scmp.lt.s32.totalorder %s159, 63
        %s161 = scalar_select %p160, %s159, 63
        %s162 = smul.addr %s161, 5
        %s163 = smul.addr %s162, 8
        %s164 = scalar_lea.vmem %s0, %s163
        %s165 = smul.u32 32, %s11
      $region28: #{refinenet_forward.18} parent=23 // pred_fallthru
        _
    $region24: #{refinenet_forward.18} parent=5 // pred_fallthru
      _
    %p166 = scmp.le.s32.totalorder 1, %s11
    %p167 = scmp.lt.s32.totalorder %s11, 3
    %p168 = pnand %p166, %p167
    %p169 = pneg %p168
    // Predicated region
    $region29: #{refinenet_forward.18} parent=5 // pred_check
      _
    $region30: #{refinenet_forward.18} parent=5 // pred_check_branch
      %171 = sbr.rel (%p168) target = $region32
    $region31: #{refinenet_forward.18} parent=5 // pred_region
      %s172 = ssub.s32 %s11, 1
      %s173 = smul.u32 32, %s16
      %p174 = scmp.lt.s32.totalorder %s173, 63
      %s175 = scalar_select %p174, %s173, 63
      %s176 = smul.addr %s175, 5
      %s177 = smul.addr %s176, 8
      %s178 = scalar_lea.vmem %s0, %s177
      %p179 = pneg %p37
      %p180 = pneg %p34
      %p181 = pneg %p58
      %p182 = pneg %p55
      %p183 = pneg %p79
      %p184 = pneg %p76
      %p185 = pneg %p105
      %p186 = pneg %p102
      %s187 = smul.u32 32, %s16
      %p188 = scmp.lt.s32.totalorder %s187, 63
      %s189 = scalar_select %p188, %s187, 63
      %s190 = smul.addr %s189, 8
      %s191 = scalar_lea.vmem %s3, %s190
      %p192 = pneg %p131
      %p193 = pneg %p128
      %p194 = scmp.lt.s32.totalorder %s16, 1
      %s195 = scalar_select %p194, %s16, 1
      %s196 = smul.addr %s195, 2
      %s197 = scalar_lea.vmem %s4, %s196
      %s198 = smul.u32 32, %s16
      %p199 = scmp.lt.s32.totalorder %s198, 63
      %s200 = scalar_select %p199, %s198, 63
      %s201 = smul.addr %s200, 5
      %s202 = smul.addr %s201, 8
      %s203 = scalar_lea.vmem %s0, %s202
      %s204 = smul.u32 32, %s16
      %s205 = smul.u32 32, %s16
      %p206 = scmp.lt.s32.totalorder %s205, 63
      %s207 = scalar_select %p206, %s205, 63
      %s208 = smul.addr %s207, 8
      %s209 = scalar_lea.vmem %s3, %s208
      %s210 = smul.u32 32, %s16
      %p211 = scmp.lt.s32.totalorder %s16, 1
      %s212 = scalar_select %p211, %s16, 1
      %s213 = smul.addr %s212, 2
      %s214 = scalar_lea.vmem %s4, %s213
      %v215 = vld [vmem:[%s203] sm:$0xff]
      %v216 = vld [vmem:[%s203 + $0x8] sm:$0xff]
      %v217 = vld [vmem:[%s203 + $0x10] sm:$0xff]
      %v218 = vld [vmem:[%s203 + $0x18] sm:$0xff]
      %v219 = vld [vmem:[%s203 + $0x20] sm:$0xff]
      %v220 = vld [vmem:[%s203 + $0x28] sm:$0xff]
      %v221 = vld [vmem:[%s203 + $0x30] sm:$0xff]
      %v222 = vld [vmem:[%s203 + $0x38] sm:$0xff]
      %v223 = vld [vmem:[%s203 + $0x40] sm:$0xff]
      %v224 = vld [vmem:[%s203 + $0x48] sm:$0xff]
      %v225 = vld [vmem:[%s203 + $0x50] sm:$0xff]
      %v226 = vld [vmem:[%s203 + $0x58] sm:$0xff]
      %v227 = vld [vmem:[%s203 + $0x60] sm:$0xff]
      %v228 = vld [vmem:[%s203 + $0x68] sm:$0xff]
      %v229 = vld [vmem:[%s203 + $0x70] sm:$0xff]
      %v230 = vld [vmem:[%s203 + $0x78] sm:$0xff]
      %v231 = vld [vmem:[%s203 + $0x80] sm:$0xff]
      %v232 = vld [vmem:[%s203 + $0x88] sm:$0xff]
      %v233 = vld [vmem:[%s203 + $0x90] sm:$0xff]
      %v234 = vld [vmem:[%s203 + $0x98] sm:$0xff]
      %v235 = vld [vmem:[%s203 + $0xa0] sm:$0xff]
      %v236 = vld [vmem:[%s203 + $0xa8] sm:$0xff]
      %v237 = vld [vmem:[%s203 + $0xb0] sm:$0xff]
      %v238 = vld [vmem:[%s203 + $0xb8] sm:$0xff]
      %v239 = vld [vmem:[%s203 + $0xc0] sm:$0xff]
      %v240 = vld [vmem:[%s203 + $0xc8] sm:$0xff]
      %v241 = vld [vmem:[%s203 + $0xd0] sm:$0xff]
      %v242 = vld [vmem:[%s203 + $0xd8] sm:$0xff]
      %v243 = vld [vmem:[%s203 + $0xe0] sm:$0xff]
      %v244 = vld [vmem:[%s203 + $0xe8] sm:$0xff]
      %v245 = vld [vmem:[%s203 + $0xf0] sm:$0xff]
      %v246 = vld [vmem:[%s203 + $0xf8] sm:$0xff]
      %v247 = vld [vmem:[%s203 + $0x100] sm:$0xff]
      %v248 = vld [vmem:[%s203 + $0x108] sm:$0xff]
      %v249 = vld [vmem:[%s203 + $0x110] sm:$0xff]
      %v250 = vld [vmem:[%s203 + $0x118] sm:$0xff]
      %v251 = vld [vmem:[%s203 + $0x120] sm:$0xff]
      %v252 = vld [vmem:[%s203 + $0x128] sm:$0xff]
      %v253 = vld [vmem:[%s203 + $0x130] sm:$0xff]
      %v254 = vld [vmem:[%s203 + $0x138] sm:$0xff]
      %v255 = vld [vmem:[%s203 + $0x140] sm:$0xff]
      %v256 = vld [vmem:[%s203 + $0x148] sm:$0xff]
      %v257 = vld [vmem:[%s203 + $0x150] sm:$0xff]
      %v258 = vld [vmem:[%s203 + $0x158] sm:$0xff]
      %v259 = vld [vmem:[%s203 + $0x160] sm:$0xff]
      %v260 = vld [vmem:[%s203 + $0x168] sm:$0xff]
      %v261 = vld [vmem:[%s203 + $0x170] sm:$0xff]
      %v262 = vld [vmem:[%s203 + $0x178] sm:$0xff]
      %v263 = vld [vmem:[%s203 + $0x180] sm:$0xff]
      %v264 = vld [vmem:[%s203 + $0x188] sm:$0xff]
      %v265 = vld [vmem:[%s203 + $0x190] sm:$0xff]
      %v266 = vld [vmem:[%s203 + $0x198] sm:$0xff]
      %v267 = vld [vmem:[%s203 + $0x1a0] sm:$0xff]
      %v268 = vld [vmem:[%s203 + $0x1a8] sm:$0xff]
      %v269 = vld [vmem:[%s203 + $0x1b0] sm:$0xff]
      %v270 = vld [vmem:[%s203 + $0x1b8] sm:$0xff]
      %v271 = vld [vmem:[%s203 + $0x1c0] sm:$0xff]
      %v272 = vld [vmem:[%s203 + $0x1c8] sm:$0xff]
      %v273 = vld [vmem:[%s203 + $0x1d0] sm:$0xff]
      %v274 = vld [vmem:[%s203 + $0x1d8] sm:$0xff]
      %v275 = vld [vmem:[%s203 + $0x1e0] sm:$0xff]
      %v276 = vld [vmem:[%s203 + $0x1e8] sm:$0xff]
      %v277 = vld [vmem:[%s203 + $0x1f0] sm:$0xff]
      %v278 = vld [vmem:[%s203 + $0x1f8] sm:$0xff]
      %v279 = vld [vmem:[%s203 + $0x200] sm:$0xff]
      %v280 = vld [vmem:[%s203 + $0x208] sm:$0xff]
      %v281 = vld [vmem:[%s203 + $0x210] sm:$0xff]
      %v282 = vld [vmem:[%s203 + $0x218] sm:$0xff]
      %v283 = vld [vmem:[%s203 + $0x220] sm:$0xff]
      %v284 = vld [vmem:[%s203 + $0x228] sm:$0xff]
      %v285 = vld [vmem:[%s203 + $0x230] sm:$0xff]
      %v286 = vld [vmem:[%s203 + $0x238] sm:$0xff]
      %v287 = vld [vmem:[%s203 + $0x240] sm:$0xff]
      %v288 = vld [vmem:[%s203 + $0x248] sm:$0xff]
      %v289 = vld [vmem:[%s203 + $0x250] sm:$0xff]
      %v290 = vld [vmem:[%s203 + $0x258] sm:$0xff]
      %v291 = vld [vmem:[%s203 + $0x260] sm:$0xff]
      %v292 = vld [vmem:[%s203 + $0x268] sm:$0xff]
      %v293 = vld [vmem:[%s203 + $0x270] sm:$0xff]
      %v294 = vld [vmem:[%s203 + $0x278] sm:$0xff]
      %v295 = vld [vmem:[%s203 + $0x280] sm:$0xff]
      %v296 = vld [vmem:[%s203 + $0x288] sm:$0xff]
      %v297 = vld [vmem:[%s203 + $0x290] sm:$0xff]
      %v298 = vld [vmem:[%s203 + $0x298] sm:$0xff]
      %v299 = vld [vmem:[%s203 + $0x2a0] sm:$0xff]
      %v300 = vld [vmem:[%s203 + $0x2a8] sm:$0xff]
      %v301 = vld [vmem:[%s203 + $0x2b0] sm:$0xff]
      %v302 = vld [vmem:[%s203 + $0x2b8] sm:$0xff]
      %v303 = vld [vmem:[%s203 + $0x2c0] sm:$0xff]
      %v304 = vld [vmem:[%s203 + $0x2c8] sm:$0xff]
      %v305 = vld [vmem:[%s203 + $0x2d0] sm:$0xff]
      %v306 = vld [vmem:[%s203 + $0x2d8] sm:$0xff]
      %v307 = vld [vmem:[%s203 + $0x2e0] sm:$0xff]
      %v308 = vld [vmem:[%s203 + $0x2e8] sm:$0xff]
      %v309 = vld [vmem:[%s203 + $0x2f0] sm:$0xff]
      %v310 = vld [vmem:[%s203 + $0x2f8] sm:$0xff]
      %v311 = vld [vmem:[%s203 + $0x300] sm:$0xff]
      %v312 = vld [vmem:[%s203 + $0x308] sm:$0xff]
      %v313 = vld [vmem:[%s203 + $0x310] sm:$0xff]
      %v314 = vld [vmem:[%s203 + $0x318] sm:$0xff]
      %v315 = vld [vmem:[%s203 + $0x320] sm:$0xff]
      %v316 = vld [vmem:[%s203 + $0x328] sm:$0xff]
      %v317 = vld [vmem:[%s203 + $0x330] sm:$0xff]
      %v318 = vld [vmem:[%s203 + $0x338] sm:$0xff]
      %v319 = vld [vmem:[%s203 + $0x340] sm:$0xff]
      %v320 = vld [vmem:[%s203 + $0x348] sm:$0xff]
      %v321 = vld [vmem:[%s203 + $0x350] sm:$0xff]
      %v322 = vld [vmem:[%s203 + $0x358] sm:$0xff]
      %v323 = vld [vmem:[%s203 + $0x360] sm:$0xff]
      %v324 = vld [vmem:[%s203 + $0x368] sm:$0xff]
      %v325 = vld [vmem:[%s203 + $0x370] sm:$0xff]
      %v326 = vld [vmem:[%s203 + $0x378] sm:$0xff]
      %v327 = vld [vmem:[%s203 + $0x380] sm:$0xff]
      %v328 = vld [vmem:[%s203 + $0x388] sm:$0xff]
      %v329 = vld [vmem:[%s203 + $0x390] sm:$0xff]
      %v330 = vld [vmem:[%s203 + $0x398] sm:$0xff]
      %v331 = vld [vmem:[%s203 + $0x3a0] sm:$0xff]
      %v332 = vld [vmem:[%s203 + $0x3a8] sm:$0xff]
      %v333 = vld [vmem:[%s203 + $0x3b0] sm:$0xff]
      %v334 = vld [vmem:[%s203 + $0x3b8] sm:$0xff]
      %v335 = vld [vmem:[%s203 + $0x3c0] sm:$0xff]
      %v336 = vld [vmem:[%s203 + $0x3c8] sm:$0xff]
      %v337 = vld [vmem:[%s203 + $0x3d0] sm:$0xff]
      %v338 = vld [vmem:[%s203 + $0x3d8] sm:$0xff]
      %v339 = vld [vmem:[%s203 + $0x3e0] sm:$0xff]
      %v340 = vld [vmem:[%s203 + $0x3e8] sm:$0xff]
      %v341 = vld [vmem:[%s203 + $0x3f0] sm:$0xff]
      %v342 = vld [vmem:[%s203 + $0x3f8] sm:$0xff]
      %v343 = vld [vmem:[%s203 + $0x400] sm:$0xff]
      %v344 = vld [vmem:[%s203 + $0x408] sm:$0xff]
      %v345 = vld [vmem:[%s203 + $0x410] sm:$0xff]
      %v346 = vld [vmem:[%s203 + $0x418] sm:$0xff]
      %v347 = vld [vmem:[%s203 + $0x420] sm:$0xff]
      %v348 = vld [vmem:[%s203 + $0x428] sm:$0xff]
      %v349 = vld [vmem:[%s203 + $0x430] sm:$0xff]
      %v350 = vld [vmem:[%s203 + $0x438] sm:$0xff]
      %v351 = vld [vmem:[%s203 + $0x440] sm:$0xff]
      %v352 = vld [vmem:[%s203 + $0x448] sm:$0xff]
      %v353 = vld [vmem:[%s203 + $0x450] sm:$0xff]
      %v354 = vld [vmem:[%s203 + $0x458] sm:$0xff]
      %v355 = vld [vmem:[%s203 + $0x460] sm:$0xff]
      %v356 = vld [vmem:[%s203 + $0x468] sm:$0xff]
      %v357 = vld [vmem:[%s203 + $0x470] sm:$0xff]
      %v358 = vld [vmem:[%s203 + $0x478] sm:$0xff]
      %v359 = vld [vmem:[%s203 + $0x480] sm:$0xff]
      %v360 = vld [vmem:[%s203 + $0x488] sm:$0xff]
      %v361 = vld [vmem:[%s203 + $0x490] sm:$0xff]
      %v362 = vld [vmem:[%s203 + $0x498] sm:$0xff]
      %v363 = vld [vmem:[%s203 + $0x4a0] sm:$0xff]
      %v364 = vld [vmem:[%s203 + $0x4a8] sm:$0xff]
      %v365 = vld [vmem:[%s203 + $0x4b0] sm:$0xff]
      %v366 = vld [vmem:[%s203 + $0x4b8] sm:$0xff]
      %v367 = vld [vmem:[%s203 + $0x4c0] sm:$0xff]
      %v368 = vld [vmem:[%s203 + $0x4c8] sm:$0xff]
      %v369 = vld [vmem:[%s203 + $0x4d0] sm:$0xff]
      %v370 = vld [vmem:[%s203 + $0x4d8] sm:$0xff]
      %v371 = vld [vmem:[%s203 + $0x4e0] sm:$0xff]
      %v372 = vld [vmem:[%s203 + $0x4e8] sm:$0xff]
      %v373 = vld [vmem:[%s203 + $0x4f0] sm:$0xff]
      %v374 = vld [vmem:[%s203 + $0x4f8] sm:$0xff]
      %v375 = vld [vmem:[%s1] sm:$0xff]
      %v376 = vld [vmem:[%s1 + $0x8] sm:$0xff]
      %v377 = vld [vmem:[%s1 + $0x10] sm:$0xff]
      %v378 = vld [vmem:[%s1 + $0x18] sm:$0xff]
      %v379 = vld [vmem:[%s1 + $0x20] sm:$0xff]
      %v380 = vld [vmem:[%s1 + $0x28] sm:$0xff]
      %v381 = vld [vmem:[%s1 + $0x30] sm:$0xff]
      %v382 = vld [vmem:[%s1 + $0x38] sm:$0xff]
      %v383 = vld [vmem:[%s1 + $0x40] sm:$0xff]
      %v384 = vld [vmem:[%s1 + $0x48] sm:$0xff]
      %v385 = vld [vmem:[%s1 + $0x50] sm:$0xff]
      %v386 = vld [vmem:[%s1 + $0x58] sm:$0xff]
      %v387 = vld [vmem:[%s1 + $0x60] sm:$0xff]
      %v388 = vld [vmem:[%s1 + $0x68] sm:$0xff]
      %v389 = vld [vmem:[%s1 + $0x70] sm:$0xff]
      %v390 = vld [vmem:[%s1 + $0x78] sm:$0xff]
      %v391 = vld [vmem:[%s1 + $0x80] sm:$0xff]
      %v392 = vld [vmem:[%s1 + $0x88] sm:$0xff]
      %v393 = vld [vmem:[%s1 + $0x90] sm:$0xff]
      %v394 = vld [vmem:[%s1 + $0x98] sm:$0xff]
      %v395 = vld [vmem:[%s1 + $0xa0] sm:$0xff]
      %v396 = vld [vmem:[%s1 + $0xa8] sm:$0xff]
      %v397 = vld [vmem:[%s1 + $0xb0] sm:$0xff]
      %v398 = vld [vmem:[%s1 + $0xb8] sm:$0xff]
      %v399 = vld [vmem:[%s1 + $0xc0] sm:$0xff]
      %v400 = vld [vmem:[%s1 + $0xc8] sm:$0xff]
      %v401 = vld [vmem:[%s1 + $0xd0] sm:$0xff]
      %v402 = vld [vmem:[%s1 + $0xd8] sm:$0xff]
      %v403 = vld [vmem:[%s1 + $0xe0] sm:$0xff]
      %v404 = vld [vmem:[%s1 + $0xe8] sm:$0xff]
      %v405 = vld [vmem:[%s1 + $0xf0] sm:$0xff]
      %v406 = vld [vmem:[%s1 + $0xf8] sm:$0xff]
      %v407 = vld [vmem:[%s1 + $0x100] sm:$0xff]
      %v408 = vld [vmem:[%s1 + $0x108] sm:$0xff]
      %v409 = vld [vmem:[%s1 + $0x110] sm:$0xff]
      %v410 = vld [vmem:[%s1 + $0x118] sm:$0xff]
      %v411 = vld [vmem:[%s1 + $0x120] sm:$0xff]
      %v412 = vld [vmem:[%s1 + $0x128] sm:$0xff]
      %v413 = vld [vmem:[%s1 + $0x130] sm:$0xff]
      %v414 = vld [vmem:[%s1 + $0x138] sm:$0xff]
      %v415 = vld [vmem:[%s1 + $0x140] sm:$0xff]
      %v416 = vld [vmem:[%s1 + $0x148] sm:$0xff]
      %v417 = vld [vmem:[%s1 + $0x150] sm:$0xff]
      %v418 = vld [vmem:[%s1 + $0x158] sm:$0xff]
      %v419 = vld [vmem:[%s1 + $0x160] sm:$0xff]
      %v420 = vld [vmem:[%s1 + $0x168] sm:$0xff]
      %v421 = vld [vmem:[%s1 + $0x170] sm:$0xff]
      %v422 = vld [vmem:[%s1 + $0x178] sm:$0xff]
      %v423 = vld [vmem:[%s1 + $0x180] sm:$0xff]
      %v424 = vld [vmem:[%s1 + $0x188] sm:$0xff]
      %v425 = vld [vmem:[%s1 + $0x190] sm:$0xff]
      %v426 = vld [vmem:[%s1 + $0x198] sm:$0xff]
      %v427 = vld [vmem:[%s1 + $0x1a0] sm:$0xff]
      %v428 = vld [vmem:[%s1 + $0x1a8] sm:$0xff]
      %v429 = vld [vmem:[%s1 + $0x1b0] sm:$0xff]
      %v430 = vld [vmem:[%s1 + $0x1b8] sm:$0xff]
      %v431 = vld [vmem:[%s1 + $0x1c0] sm:$0xff]
      %v432 = vld [vmem:[%s1 + $0x1c8] sm:$0xff]
      %v433 = vld [vmem:[%s1 + $0x1d0] sm:$0xff]
      %v434 = vld [vmem:[%s1 + $0x1d8] sm:$0xff]
      %v435 = vld [vmem:[%s1 + $0x1e0] sm:$0xff]
      %v436 = vld [vmem:[%s1 + $0x1e8] sm:$0xff]
      %v437 = vld [vmem:[%s1 + $0x1f0] sm:$0xff]
      %v438 = vld [vmem:[%s1 + $0x1f8] sm:$0xff]
      %v439 = vld [vmem:[%s1 + $0x200] sm:$0xff]
      %v440 = vld [vmem:[%s1 + $0x208] sm:$0xff]
      %v441 = vld [vmem:[%s1 + $0x210] sm:$0xff]
      %v442 = vld [vmem:[%s1 + $0x218] sm:$0xff]
      %v443 = vld [vmem:[%s1 + $0x220] sm:$0xff]
      %v444 = vld [vmem:[%s1 + $0x228] sm:$0xff]
      %v445 = vld [vmem:[%s1 + $0x230] sm:$0xff]
      %v446 = vld [vmem:[%s1 + $0x238] sm:$0xff]
      %v447 = vld [vmem:[%s2] sm:$0x1]
      %v449 = vperm.slane %v447, 0
      %vm451 = vcmask 523264
      %v453 = vsel %vm451, %v219, 0
      %v456 = vsel %vm451, %v224, 0
      %v459 = vsel %vm451, %v229, 0
      %v462 = vsel %vm451, %v234, 0
      %v465 = vsel %vm451, %v239, 0
      %v468 = vsel %vm451, %v244, 0
      %v471 = vsel %vm451, %v249, 0
      %v474 = vsel %vm451, %v254, 0
      %v477 = vsel %vm451, %v259, 0
      %v480 = vsel %vm451, %v264, 0
      %v483 = vsel %vm451, %v269, 0
      %v486 = vsel %vm451, %v274, 0
      %v489 = vsel %vm451, %v279, 0
      %v492 = vsel %vm451, %v284, 0
      %v495 = vsel %vm451, %v289, 0
      %v498 = vsel %vm451, %v294, 0
      %v501 = vsel %vm451, %v299, 0
      %v504 = vsel %vm451, %v304, 0
      %v507 = vsel %vm451, %v309, 0
      %v510 = vsel %vm451, %v314, 0
      %v513 = vsel %vm451, %v319, 0
      %v516 = vsel %vm451, %v324, 0
      %v519 = vsel %vm451, %v329, 0
      %v522 = vsel %vm451, %v334, 0
      %v525 = vsel %vm451, %v339, 0
      %v528 = vsel %vm451, %v344, 0
      %v531 = vsel %vm451, %v349, 0
      %v534 = vsel %vm451, %v354, 0
      %v537 = vsel %vm451, %v359, 0
      %v540 = vsel %vm451, %v364, 0
      %v543 = vsel %vm451, %v369, 0
      %v546 = vsel %vm451, %v374, 0
      %548 = vmatpush.msra.mxu0 %v390
      %549 = vmatpush.msra.mxu0 %v389
      %550 = vmatpush.msra.mxu0 %v388
      %551 = vmatpush.msra.mxu0 %v387
      %552 = vmatpush.msra.mxu0 %v386
      %553 = vmatpush.msra.mxu0 %v385
      %554 = vmatpush.msra.mxu0 %v384
      %555 = vmatpush.msra.mxu0 %v383
      %556 = vmatpush.msra.mxu0 %v382
      %557 = vmatpush.msra.mxu0 %v381
      %558 = vmatpush.msra.mxu0 %v380
      %559 = vmatpush.msra.mxu0 %v379
      %560 = vmatpush.msra.mxu0 %v378
      %561 = vmatpush.msra.mxu0 %v377
      %562 = vmatpush.msra.mxu0 %v376
      %563 = vmatpush.msra.mxu0 %v375
      %564 = vmatmul.f32.gmra.mxu0 %v215
      %v565 = vpop.f32.mrf.mxu0
      %v566 = vadd.f32 %v449, %v565
      %567 = vmatmul.f32.gmra.mxu0 %v220
      %v568 = vpop.f32.mrf.mxu0
      %v569 = vadd.f32 %v449, %v568
      %570 = vmatmul.f32.gmra.mxu0 %v225
      %v571 = vpop.f32.mrf.mxu0
      %v572 = vadd.f32 %v449, %v571
      %573 = vmatmul.f32.gmra.mxu0 %v230
      %v574 = vpop.f32.mrf.mxu0
      %v575 = vadd.f32 %v449, %v574
      %576 = vmatmul.f32.gmra.mxu0 %v235
      %v577 = vpop.f32.mrf.mxu0
      %v578 = vadd.f32 %v449, %v577
      %579 = vmatmul.f32.gmra.mxu0 %v240
      %v580 = vpop.f32.mrf.mxu0
      %v581 = vadd.f32 %v449, %v580
      %582 = vmatmul.f32.gmra.mxu0 %v245
      %v583 = vpop.f32.mrf.mxu0
      %v584 = vadd.f32 %v449, %v583
      %585 = vmatmul.f32.gmra.mxu0 %v250
      %v586 = vpop.f32.mrf.mxu0
      %v587 = vadd.f32 %v449, %v586
      %588 = vmatmul.f32.gmra.mxu0 %v255
      %v589 = vpop.f32.mrf.mxu0
      %v590 = vadd.f32 %v449, %v589
      %591 = vmatmul.f32.gmra.mxu0 %v260
      %v592 = vpop.f32.mrf.mxu0
      %v593 = vadd.f32 %v449, %v592
      %594 = vmatmul.f32.gmra.mxu0 %v265
      %v595 = vpop.f32.mrf.mxu0
      %v596 = vadd.f32 %v449, %v595
      %597 = vmatmul.f32.gmra.mxu0 %v270
      %v598 = vpop.f32.mrf.mxu0
      %v599 = vadd.f32 %v449, %v598
      %600 = vmatmul.f32.gmra.mxu0 %v275
      %v601 = vpop.f32.mrf.mxu0
      %v602 = vadd.f32 %v449, %v601
      %603 = vmatmul.f32.gmra.mxu0 %v280
      %v604 = vpop.f32.mrf.mxu0
      %v605 = vadd.f32 %v449, %v604
      %606 = vmatmul.f32.gmra.mxu0 %v285
      %v607 = vpop.f32.mrf.mxu0
      %v608 = vadd.f32 %v449, %v607
      %609 = vmatmul.f32.gmra.mxu0 %v290
      %v610 = vpop.f32.mrf.mxu0
      %v611 = vadd.f32 %v449, %v610
      %612 = vmatmul.f32.gmra.mxu0 %v295
      %v613 = vpop.f32.mrf.mxu0
      %v614 = vadd.f32 %v449, %v613
      %615 = vmatmul.f32.gmra.mxu0 %v300
      %v616 = vpop.f32.mrf.mxu0
      %v617 = vadd.f32 %v449, %v616
      %618 = vmatmul.f32.gmra.mxu0 %v305
      %v619 = vpop.f32.mrf.mxu0
      %v620 = vadd.f32 %v449, %v619
      %621 = vmatmul.f32.gmra.mxu0 %v310
      %v622 = vpop.f32.mrf.mxu0
      %v623 = vadd.f32 %v449, %v622
      %624 = vmatmul.f32.gmra.mxu0 %v315
      %v625 = vpop.f32.mrf.mxu0
      %v626 = vadd.f32 %v449, %v625
      %627 = vmatmul.f32.gmra.mxu0 %v320
      %v628 = vpop.f32.mrf.mxu0
      %v629 = vadd.f32 %v449, %v628
      %630 = vmatmul.f32.gmra.mxu0 %v325
      %v631 = vpop.f32.mrf.mxu0
      %v632 = vadd.f32 %v449, %v631
      %633 = vmatmul.f32.gmra.mxu0 %v330
      %v634 = vpop.f32.mrf.mxu0
      %v635 = vadd.f32 %v449, %v634
      %636 = vmatmul.f32.gmra.mxu0 %v335
      %v637 = vpop.f32.mrf.mxu0
      %v638 = vadd.f32 %v449, %v637
      %639 = vmatmul.f32.gmra.mxu0 %v340
      %v640 = vpop.f32.mrf.mxu0
      %v641 = vadd.f32 %v449, %v640
      %642 = vmatmul.f32.gmra.mxu0 %v345
      %v643 = vpop.f32.mrf.mxu0
      %v644 = vadd.f32 %v449, %v643
      %645 = vmatmul.f32.gmra.mxu0 %v350
      %v646 = vpop.f32.mrf.mxu0
      %v647 = vadd.f32 %v449, %v646
      %648 = vmatmul.f32.gmra.mxu0 %v355
      %v649 = vpop.f32.mrf.mxu0
      %v650 = vadd.f32 %v449, %v649
      %651 = vmatmul.f32.gmra.mxu0 %v360
      %v652 = vpop.f32.mrf.mxu0
      %v653 = vadd.f32 %v449, %v652
      %654 = vmatmul.f32.gmra.mxu0 %v365
      %v655 = vpop.f32.mrf.mxu0
      %v656 = vadd.f32 %v449, %v655
      %657 = vmatmul.f32.gmra.mxu0 %v370
      %v658 = vpop.f32.mrf.mxu0
      %v659 = vadd.f32 %v449, %v658
      %660 = vdwg.mxu0
      %661 = vmatpush.msra.mxu0 %v406
      %662 = vmatpush.msra.mxu0 %v405
      %663 = vmatpush.msra.mxu0 %v404
      %664 = vmatpush.msra.mxu0 %v403
      %665 = vmatpush.msra.mxu0 %v402
      %666 = vmatpush.msra.mxu0 %v401
      %667 = vmatpush.msra.mxu0 %v400
      %668 = vmatpush.msra.mxu0 %v399
      %669 = vmatpush.msra.mxu0 %v398
      %670 = vmatpush.msra.mxu0 %v397
      %671 = vmatpush.msra.mxu0 %v396
      %672 = vmatpush.msra.mxu0 %v395
      %673 = vmatpush.msra.mxu0 %v394
      %674 = vmatpush.msra.mxu0 %v393
      %675 = vmatpush.msra.mxu0 %v392
      %676 = vmatpush.msra.mxu0 %v391
      %677 = vmatmul.f32.gmra.mxu0 %v216
      %v678 = vpop.f32.mrf.mxu0
      %v679 = vadd.f32 %v566, %v678
      %680 = vmatmul.f32.gmra.mxu0 %v221
      %v681 = vpop.f32.mrf.mxu0
      %v682 = vadd.f32 %v569, %v681
      %683 = vmatmul.f32.gmra.mxu0 %v226
      %v684 = vpop.f32.mrf.mxu0
      %v685 = vadd.f32 %v572, %v684
      %686 = vmatmul.f32.gmra.mxu0 %v231
      %v687 = vpop.f32.mrf.mxu0
      %v688 = vadd.f32 %v575, %v687
      %689 = vmatmul.f32.gmra.mxu0 %v236
      %v690 = vpop.f32.mrf.mxu0
      %v691 = vadd.f32 %v578, %v690
      %692 = vmatmul.f32.gmra.mxu0 %v241
      %v693 = vpop.f32.mrf.mxu0
      %v694 = vadd.f32 %v581, %v693
      %695 = vmatmul.f32.gmra.mxu0 %v246
      %v696 = vpop.f32.mrf.mxu0
      %v697 = vadd.f32 %v584, %v696
      %698 = vmatmul.f32.gmra.mxu0 %v251
      %v699 = vpop.f32.mrf.mxu0
      %v700 = vadd.f32 %v587, %v699
      %701 = vmatmul.f32.gmra.mxu0 %v256
      %v702 = vpop.f32.mrf.mxu0
      %v703 = vadd.f32 %v590, %v702
      %704 = vmatmul.f32.gmra.mxu0 %v261
      %v705 = vpop.f32.mrf.mxu0
      %v706 = vadd.f32 %v593, %v705
      %707 = vmatmul.f32.gmra.mxu0 %v266
      %v708 = vpop.f32.mrf.mxu0
      %v709 = vadd.f32 %v596, %v708
      %710 = vmatmul.f32.gmra.mxu0 %v271
      %v711 = vpop.f32.mrf.mxu0
      %v712 = vadd.f32 %v599, %v711
      %713 = vmatmul.f32.gmra.mxu0 %v276
      %v714 = vpop.f32.mrf.mxu0
      %v715 = vadd.f32 %v602, %v714
      %716 = vmatmul.f32.gmra.mxu0 %v281
      %v717 = vpop.f32.mrf.mxu0
      %v718 = vadd.f32 %v605, %v717
      %719 = vmatmul.f32.gmra.mxu0 %v286
      %v720 = vpop.f32.mrf.mxu0
      %v721 = vadd.f32 %v608, %v720
      %722 = vmatmul.f32.gmra.mxu0 %v291
      %v723 = vpop.f32.mrf.mxu0
      %v724 = vadd.f32 %v611, %v723
      %725 = vmatmul.f32.gmra.mxu0 %v296
      %v726 = vpop.f32.mrf.mxu0
      %v727 = vadd.f32 %v614, %v726
      %728 = vmatmul.f32.gmra.mxu0 %v301
      %v729 = vpop.f32.mrf.mxu0
      %v730 = vadd.f32 %v617, %v729
      %731 = vmatmul.f32.gmra.mxu0 %v306
      %v732 = vpop.f32.mrf.mxu0
      %v733 = vadd.f32 %v620, %v732
      %734 = vmatmul.f32.gmra.mxu0 %v311
      %v735 = vpop.f32.mrf.mxu0
      %v736 = vadd.f32 %v623, %v735
      %737 = vmatmul.f32.gmra.mxu0 %v316
      %v738 = vpop.f32.mrf.mxu0
      %v739 = vadd.f32 %v626, %v738
      %740 = vmatmul.f32.gmra.mxu0 %v321
      %v741 = vpop.f32.mrf.mxu0
      %v742 = vadd.f32 %v629, %v741
      %743 = vmatmul.f32.gmra.mxu0 %v326
      %v744 = vpop.f32.mrf.mxu0
      %v745 = vadd.f32 %v632, %v744
      %746 = vmatmul.f32.gmra.mxu0 %v331
      %v747 = vpop.f32.mrf.mxu0
      %v748 = vadd.f32 %v635, %v747
      %749 = vmatmul.f32.gmra.mxu0 %v336
      %v750 = vpop.f32.mrf.mxu0
      %v751 = vadd.f32 %v638, %v750
      %752 = vmatmul.f32.gmra.mxu0 %v341
      %v753 = vpop.f32.mrf.mxu0
      %v754 = vadd.f32 %v641, %v753
      %755 = vmatmul.f32.gmra.mxu0 %v346
      %v756 = vpop.f32.mrf.mxu0
      %v757 = vadd.f32 %v644, %v756
      %758 = vmatmul.f32.gmra.mxu0 %v351
      %v759 = vpop.f32.mrf.mxu0
      %v760 = vadd.f32 %v647, %v759
      %761 = vmatmul.f32.gmra.mxu0 %v356
      %v762 = vpop.f32.mrf.mxu0
      %v763 = vadd.f32 %v650, %v762
      %764 = vmatmul.f32.gmra.mxu0 %v361
      %v765 = vpop.f32.mrf.mxu0
      %v766 = vadd.f32 %v653, %v765
      %767 = vmatmul.f32.gmra.mxu0 %v366
      %v768 = vpop.f32.mrf.mxu0
      %v769 = vadd.f32 %v656, %v768
      %770 = vmatmul.f32.gmra.mxu0 %v371
      %v771 = vpop.f32.mrf.mxu0
      %v772 = vadd.f32 %v659, %v771
      %773 = vdwg.mxu0
      %774 = vmatpush.msra.mxu0 %v422
      %775 = vmatpush.msra.mxu0 %v421
      %776 = vmatpush.msra.mxu0 %v420
      %777 = vmatpush.msra.mxu0 %v419
      %778 = vmatpush.msra.mxu0 %v418
      %779 = vmatpush.msra.mxu0 %v417
      %780 = vmatpush.msra.mxu0 %v416
      %781 = vmatpush.msra.mxu0 %v415
      %782 = vmatpush.msra.mxu0 %v414
      %783 = vmatpush.msra.mxu0 %v413
      %784 = vmatpush.msra.mxu0 %v412
      %785 = vmatpush.msra.mxu0 %v411
      %786 = vmatpush.msra.mxu0 %v410
      %787 = vmatpush.msra.mxu0 %v409
      %788 = vmatpush.msra.mxu0 %v408
      %789 = vmatpush.msra.mxu0 %v407
      %790 = vmatmul.f32.gmra.mxu0 %v217
      %v791 = vpop.f32.mrf.mxu0
      %v792 = vadd.f32 %v679, %v791
      %793 = vmatmul.f32.gmra.mxu0 %v222
      %v794 = vpop.f32.mrf.mxu0
      %v795 = vadd.f32 %v682, %v794
      %796 = vmatmul.f32.gmra.mxu0 %v227
      %v797 = vpop.f32.mrf.mxu0
      %v798 = vadd.f32 %v685, %v797
      %799 = vmatmul.f32.gmra.mxu0 %v232
      %v800 = vpop.f32.mrf.mxu0
      %v801 = vadd.f32 %v688, %v800
      %802 = vmatmul.f32.gmra.mxu0 %v237
      %v803 = vpop.f32.mrf.mxu0
      %v804 = vadd.f32 %v691, %v803
      %805 = vmatmul.f32.gmra.mxu0 %v242
      %v806 = vpop.f32.mrf.mxu0
      %v807 = vadd.f32 %v694, %v806
      %808 = vmatmul.f32.gmra.mxu0 %v247
      %v809 = vpop.f32.mrf.mxu0
      %v810 = vadd.f32 %v697, %v809
      %811 = vmatmul.f32.gmra.mxu0 %v252
      %v812 = vpop.f32.mrf.mxu0
      %v813 = vadd.f32 %v700, %v812
      %814 = vmatmul.f32.gmra.mxu0 %v257
      %v815 = vpop.f32.mrf.mxu0
      %v816 = vadd.f32 %v703, %v815
      %817 = vmatmul.f32.gmra.mxu0 %v262
      %v818 = vpop.f32.mrf.mxu0
      %v819 = vadd.f32 %v706, %v818
      %820 = vmatmul.f32.gmra.mxu0 %v267
      %v821 = vpop.f32.mrf.mxu0
      %v822 = vadd.f32 %v709, %v821
      %823 = vmatmul.f32.gmra.mxu0 %v272
      %v824 = vpop.f32.mrf.mxu0
      %v825 = vadd.f32 %v712, %v824
      %826 = vmatmul.f32.gmra.mxu0 %v277
      %v827 = vpop.f32.mrf.mxu0
      %v828 = vadd.f32 %v715, %v827
      %829 = vmatmul.f32.gmra.mxu0 %v282
      %v830 = vpop.f32.mrf.mxu0
      %v831 = vadd.f32 %v718, %v830
      %832 = vmatmul.f32.gmra.mxu0 %v287
      %v833 = vpop.f32.mrf.mxu0
      %v834 = vadd.f32 %v721, %v833
      %835 = vmatmul.f32.gmra.mxu0 %v292
      %v836 = vpop.f32.mrf.mxu0
      %v837 = vadd.f32 %v724, %v836
      %838 = vmatmul.f32.gmra.mxu0 %v297
      %v839 = vpop.f32.mrf.mxu0
      %v840 = vadd.f32 %v727, %v839
      %841 = vmatmul.f32.gmra.mxu0 %v302
      %v842 = vpop.f32.mrf.mxu0
      %v843 = vadd.f32 %v730, %v842
      %844 = vmatmul.f32.gmra.mxu0 %v307
      %v845 = vpop.f32.mrf.mxu0
      %v846 = vadd.f32 %v733, %v845
      %847 = vmatmul.f32.gmra.mxu0 %v312
      %v848 = vpop.f32.mrf.mxu0
      %v849 = vadd.f32 %v736, %v848
      %850 = vmatmul.f32.gmra.mxu0 %v317
      %v851 = vpop.f32.mrf.mxu0
      %v852 = vadd.f32 %v739, %v851
      %853 = vmatmul.f32.gmra.mxu0 %v322
      %v854 = vpop.f32.mrf.mxu0
      %v855 = vadd.f32 %v742, %v854
      %856 = vmatmul.f32.gmra.mxu0 %v327
      %v857 = vpop.f32.mrf.mxu0
      %v858 = vadd.f32 %v745, %v857
      %859 = vmatmul.f32.gmra.mxu0 %v332
      %v860 = vpop.f32.mrf.mxu0
      %v861 = vadd.f32 %v748, %v860
      %862 = vmatmul.f32.gmra.mxu0 %v337
      %v863 = vpop.f32.mrf.mxu0
      %v864 = vadd.f32 %v751, %v863
      %865 = vmatmul.f32.gmra.mxu0 %v342
      %v866 = vpop.f32.mrf.mxu0
      %v867 = vadd.f32 %v754, %v866
      %868 = vmatmul.f32.gmra.mxu0 %v347
      %v869 = vpop.f32.mrf.mxu0
      %v870 = vadd.f32 %v757, %v869
      %871 = vmatmul.f32.gmra.mxu0 %v352
      %v872 = vpop.f32.mrf.mxu0
      %v873 = vadd.f32 %v760, %v872
      %874 = vmatmul.f32.gmra.mxu0 %v357
      %v875 = vpop.f32.mrf.mxu0
      %v876 = vadd.f32 %v763, %v875
      %877 = vmatmul.f32.gmra.mxu0 %v362
      %v878 = vpop.f32.mrf.mxu0
      %v879 = vadd.f32 %v766, %v878
      %880 = vmatmul.f32.gmra.mxu0 %v367
      %v881 = vpop.f32.mrf.mxu0
      %v882 = vadd.f32 %v769, %v881
      %883 = vmatmul.f32.gmra.mxu0 %v372
      %v884 = vpop.f32.mrf.mxu0
      %v885 = vadd.f32 %v772, %v884
      %886 = vdwg.mxu0
      %887 = vmatpush.msra.mxu0 %v438
      %888 = vmatpush.msra.mxu0 %v437
      %889 = vmatpush.msra.mxu0 %v436
      %890 = vmatpush.msra.mxu0 %v435
      %891 = vmatpush.msra.mxu0 %v434
      %892 = vmatpush.msra.mxu0 %v433
      %893 = vmatpush.msra.mxu0 %v432
      %894 = vmatpush.msra.mxu0 %v431
      %895 = vmatpush.msra.mxu0 %v430
      %896 = vmatpush.msra.mxu0 %v429
      %897 = vmatpush.msra.mxu0 %v428
      %898 = vmatpush.msra.mxu0 %v427
      %899 = vmatpush.msra.mxu0 %v426
      %900 = vmatpush.msra.mxu0 %v425
      %901 = vmatpush.msra.mxu0 %v424
      %902 = vmatpush.msra.mxu0 %v423
      %903 = vmatmul.f32.gmra.mxu0 %v218
      %v904 = vpop.f32.mrf.mxu0
      %v905 = vadd.f32 %v792, %v904
      %906 = vmatmul.f32.gmra.mxu0 %v223
      %v907 = vpop.f32.mrf.mxu0
      %v908 = vadd.f32 %v795, %v907
      %909 = vmatmul.f32.gmra.mxu0 %v228
      %v910 = vpop.f32.mrf.mxu0
      %v911 = vadd.f32 %v798, %v910
      %912 = vmatmul.f32.gmra.mxu0 %v233
      %v913 = vpop.f32.mrf.mxu0
      %v914 = vadd.f32 %v801, %v913
      %915 = vmatmul.f32.gmra.mxu0 %v238
      %v916 = vpop.f32.mrf.mxu0
      %v917 = vadd.f32 %v804, %v916
      %918 = vmatmul.f32.gmra.mxu0 %v243
      %v919 = vpop.f32.mrf.mxu0
      %v920 = vadd.f32 %v807, %v919
      %921 = vmatmul.f32.gmra.mxu0 %v248
      %v922 = vpop.f32.mrf.mxu0
      %v923 = vadd.f32 %v810, %v922
      %924 = vmatmul.f32.gmra.mxu0 %v253
      %v925 = vpop.f32.mrf.mxu0
      %v926 = vadd.f32 %v813, %v925
      %927 = vmatmul.f32.gmra.mxu0 %v258
      %v928 = vpop.f32.mrf.mxu0
      %v929 = vadd.f32 %v816, %v928
      %930 = vmatmul.f32.gmra.mxu0 %v263
      %v931 = vpop.f32.mrf.mxu0
      %v932 = vadd.f32 %v819, %v931
      %933 = vmatmul.f32.gmra.mxu0 %v268
      %v934 = vpop.f32.mrf.mxu0
      %v935 = vadd.f32 %v822, %v934
      %936 = vmatmul.f32.gmra.mxu0 %v273
      %v937 = vpop.f32.mrf.mxu0
      %v938 = vadd.f32 %v825, %v937
      %939 = vmatmul.f32.gmra.mxu0 %v278
      %v940 = vpop.f32.mrf.mxu0
      %v941 = vadd.f32 %v828, %v940
      %942 = vmatmul.f32.gmra.mxu0 %v283
      %v943 = vpop.f32.mrf.mxu0
      %v944 = vadd.f32 %v831, %v943
      %945 = vmatmul.f32.gmra.mxu0 %v288
      %v946 = vpop.f32.mrf.mxu0
      %v947 = vadd.f32 %v834, %v946
      %948 = vmatmul.f32.gmra.mxu0 %v293
      %v949 = vpop.f32.mrf.mxu0
      %v950 = vadd.f32 %v837, %v949
      %951 = vmatmul.f32.gmra.mxu0 %v298
      %v952 = vpop.f32.mrf.mxu0
      %v953 = vadd.f32 %v840, %v952
      %954 = vmatmul.f32.gmra.mxu0 %v303
      %v955 = vpop.f32.mrf.mxu0
      %v956 = vadd.f32 %v843, %v955
      %957 = vmatmul.f32.gmra.mxu0 %v308
      %v958 = vpop.f32.mrf.mxu0
      %v959 = vadd.f32 %v846, %v958
      %960 = vmatmul.f32.gmra.mxu0 %v313
      %v961 = vpop.f32.mrf.mxu0
      %v962 = vadd.f32 %v849, %v961
      %963 = vmatmul.f32.gmra.mxu0 %v318
      %v964 = vpop.f32.mrf.mxu0
      %v965 = vadd.f32 %v852, %v964
      %966 = vmatmul.f32.gmra.mxu0 %v323
      %v967 = vpop.f32.mrf.mxu0
      %v968 = vadd.f32 %v855, %v967
      %969 = vmatmul.f32.gmra.mxu0 %v328
      %v970 = vpop.f32.mrf.mxu0
      %v971 = vadd.f32 %v858, %v970
      %972 = vmatmul.f32.gmra.mxu0 %v333
      %v973 = vpop.f32.mrf.mxu0
      %v974 = vadd.f32 %v861, %v973
      %975 = vmatmul.f32.gmra.mxu0 %v338
      %v976 = vpop.f32.mrf.mxu0
      %v977 = vadd.f32 %v864, %v976
      %978 = vmatmul.f32.gmra.mxu0 %v343
      %v979 = vpop.f32.mrf.mxu0
      %v980 = vadd.f32 %v867, %v979
      %981 = vmatmul.f32.gmra.mxu0 %v348
      %v982 = vpop.f32.mrf.mxu0
      %v983 = vadd.f32 %v870, %v982
      %984 = vmatmul.f32.gmra.mxu0 %v353
      %v985 = vpop.f32.mrf.mxu0
      %v986 = vadd.f32 %v873, %v985
      %987 = vmatmul.f32.gmra.mxu0 %v358
      %v988 = vpop.f32.mrf.mxu0
      %v989 = vadd.f32 %v876, %v988
      %990 = vmatmul.f32.gmra.mxu0 %v363
      %v991 = vpop.f32.mrf.mxu0
      %v992 = vadd.f32 %v879, %v991
      %993 = vmatmul.f32.gmra.mxu0 %v368
      %v994 = vpop.f32.mrf.mxu0
      %v995 = vadd.f32 %v882, %v994
      %996 = vmatmul.f32.gmra.mxu0 %v373
      %v997 = vpop.f32.mrf.mxu0
      %v998 = vadd.f32 %v885, %v997
      %999 = vdwg.mxu0
      %1000 = vmatpush.msra.mxu0 0.0
      %1001 = vmatpush.msra.mxu0 0.0
      %1002 = vmatpush.msra.mxu0 0.0
      %1003 = vmatpush.msra.mxu0 0.0
      %1004 = vmatpush.msra.mxu0 0.0
      %1005 = vmatpush.msra.mxu0 0.0
      %1006 = vmatpush.msra.mxu0 0.0
      %1007 = vmatpush.msra.mxu0 0.0
      %1008 = vmatpush.msra.mxu0 %v446
      %1009 = vmatpush.msra.mxu0 %v445
      %1010 = vmatpush.msra.mxu0 %v444
      %1011 = vmatpush.msra.mxu0 %v443
      %1012 = vmatpush.msra.mxu0 %v442
      %1013 = vmatpush.msra.mxu0 %v441
      %1014 = vmatpush.msra.mxu0 %v440
      %1015 = vmatpush.msra.mxu0 %v439
      %1016 = vmatmul.f32.gmra.mxu0 %v453
      %v1017 = vpop.f32.mrf.mxu0
      %v1018 = vadd.f32 %v905, %v1017
      %1019 = vmatmul.f32.gmra.mxu0 %v456
      %v1020 = vpop.f32.mrf.mxu0
      %v1021 = vadd.f32 %v908, %v1020
      %1022 = vmatmul.f32.gmra.mxu0 %v459
      %v1023 = vpop.f32.mrf.mxu0
      %v1024 = vadd.f32 %v911, %v1023
      %1025 = vmatmul.f32.gmra.mxu0 %v462
      %v1026 = vpop.f32.mrf.mxu0
      %v1027 = vadd.f32 %v914, %v1026
      %1028 = vmatmul.f32.gmra.mxu0 %v465
      %v1029 = vpop.f32.mrf.mxu0
      %v1030 = vadd.f32 %v917, %v1029
      %1031 = vmatmul.f32.gmra.mxu0 %v468
      %v1032 = vpop.f32.mrf.mxu0
      %v1033 = vadd.f32 %v920, %v1032
      %1034 = vmatmul.f32.gmra.mxu0 %v471
      %v1035 = vpop.f32.mrf.mxu0
      %v1036 = vadd.f32 %v923, %v1035
      %1037 = vmatmul.f32.gmra.mxu0 %v474
      %v1038 = vpop.f32.mrf.mxu0
      %v1039 = vadd.f32 %v926, %v1038
      %1040 = vmatmul.f32.gmra.mxu0 %v477
      %v1041 = vpop.f32.mrf.mxu0
      %v1042 = vadd.f32 %v929, %v1041
      %1043 = vmatmul.f32.gmra.mxu0 %v480
      %v1044 = vpop.f32.mrf.mxu0
      %v1045 = vadd.f32 %v932, %v1044
      %1046 = vmatmul.f32.gmra.mxu0 %v483
      %v1047 = vpop.f32.mrf.mxu0
      %v1048 = vadd.f32 %v935, %v1047
      %1049 = vmatmul.f32.gmra.mxu0 %v486
      %v1050 = vpop.f32.mrf.mxu0
      %v1051 = vadd.f32 %v938, %v1050
      %1052 = vmatmul.f32.gmra.mxu0 %v489
      %v1053 = vpop.f32.mrf.mxu0
      %v1054 = vadd.f32 %v941, %v1053
      %1055 = vmatmul.f32.gmra.mxu0 %v492
      %v1056 = vpop.f32.mrf.mxu0
      %v1057 = vadd.f32 %v944, %v1056
      %1058 = vmatmul.f32.gmra.mxu0 %v495
      %v1059 = vpop.f32.mrf.mxu0
      %v1060 = vadd.f32 %v947, %v1059
      %1061 = vmatmul.f32.gmra.mxu0 %v498
      %v1062 = vpop.f32.mrf.mxu0
      %v1063 = vadd.f32 %v950, %v1062
      %1064 = vmatmul.f32.gmra.mxu0 %v501
      %v1065 = vpop.f32.mrf.mxu0
      %v1066 = vadd.f32 %v953, %v1065
      %1067 = vmatmul.f32.gmra.mxu0 %v504
      %v1068 = vpop.f32.mrf.mxu0
      %v1069 = vadd.f32 %v956, %v1068
      %1070 = vmatmul.f32.gmra.mxu0 %v507
      %v1071 = vpop.f32.mrf.mxu0
      %v1072 = vadd.f32 %v959, %v1071
      %1073 = vmatmul.f32.gmra.mxu0 %v510
      %v1074 = vpop.f32.mrf.mxu0
      %v1075 = vadd.f32 %v962, %v1074
      %1076 = vmatmul.f32.gmra.mxu0 %v513
      %v1077 = vpop.f32.mrf.mxu0
      %v1078 = vadd.f32 %v965, %v1077
      %1079 = vmatmul.f32.gmra.mxu0 %v516
      %v1080 = vpop.f32.mrf.mxu0
      %v1081 = vadd.f32 %v968, %v1080
      %1082 = vmatmul.f32.gmra.mxu0 %v519
      %v1083 = vpop.f32.mrf.mxu0
      %v1084 = vadd.f32 %v971, %v1083
      %1085 = vmatmul.f32.gmra.mxu0 %v522
      %v1086 = vpop.f32.mrf.mxu0
      %v1087 = vadd.f32 %v974, %v1086
      %1088 = vmatmul.f32.gmra.mxu0 %v525
      %v1089 = vpop.f32.mrf.mxu0
      %v1090 = vadd.f32 %v977, %v1089
      %1091 = vmatmul.f32.gmra.mxu0 %v528
      %v1092 = vpop.f32.mrf.mxu0
      %v1093 = vadd.f32 %v980, %v1092
      %1094 = vmatmul.f32.gmra.mxu0 %v531
      %v1095 = vpop.f32.mrf.mxu0
      %v1096 = vadd.f32 %v983, %v1095
      %1097 = vmatmul.f32.gmra.mxu0 %v534
      %v1098 = vpop.f32.mrf.mxu0
      %v1099 = vadd.f32 %v986, %v1098
      %1100 = vmatmul.f32.gmra.mxu0 %v537
      %v1101 = vpop.f32.mrf.mxu0
      %v1102 = vadd.f32 %v989, %v1101
      %1103 = vmatmul.f32.gmra.mxu0 %v540
      %v1104 = vpop.f32.mrf.mxu0
      %v1105 = vadd.f32 %v992, %v1104
      %1106 = vmatmul.f32.gmra.mxu0 %v543
      %v1107 = vpop.f32.mrf.mxu0
      %v1108 = vadd.f32 %v995, %v1107
      %1109 = vmatmul.f32.gmra.mxu0 %v546
      %v1110 = vpop.f32.mrf.mxu0
      %v1111 = vadd.f32 %v998, %v1110
      %1112 = vdwg.mxu0
      %1113 = vst [vmem:[%s209] sm:$0xff] %v1018
      %1114 = vst [vmem:[%s209 + $0x8] sm:$0xff] %v1021
      %1115 = vst [vmem:[%s209 + $0x10] sm:$0xff] %v1024
      %1116 = vst [vmem:[%s209 + $0x18] sm:$0xff] %v1027
      %1117 = vst [vmem:[%s209 + $0x20] sm:$0xff] %v1030
      %1118 = vst [vmem:[%s209 + $0x28] sm:$0xff] %v1033
      %1119 = vst [vmem:[%s209 + $0x30] sm:$0xff] %v1036
      %1120 = vst [vmem:[%s209 + $0x38] sm:$0xff] %v1039
      %1121 = vst [vmem:[%s209 + $0x40] sm:$0xff] %v1042
      %1122 = vst [vmem:[%s209 + $0x48] sm:$0xff] %v1045
      %1123 = vst [vmem:[%s209 + $0x50] sm:$0xff] %v1048
      %1124 = vst [vmem:[%s209 + $0x58] sm:$0xff] %v1051
      %1125 = vst [vmem:[%s209 + $0x60] sm:$0xff] %v1054
      %1126 = vst [vmem:[%s209 + $0x68] sm:$0xff] %v1057
      %1127 = vst [vmem:[%s209 + $0x70] sm:$0xff] %v1060
      %1128 = vst [vmem:[%s209 + $0x78] sm:$0xff] %v1063
      %1129 = vst [vmem:[%s209 + $0x80] sm:$0xff] %v1066
      %1130 = vst [vmem:[%s209 + $0x88] sm:$0xff] %v1069
      %1131 = vst [vmem:[%s209 + $0x90] sm:$0xff] %v1072
      %1132 = vst [vmem:[%s209 + $0x98] sm:$0xff] %v1075
      %1133 = vst [vmem:[%s209 + $0xa0] sm:$0xff] %v1078
      %1134 = vst [vmem:[%s209 + $0xa8] sm:$0xff] %v1081
      %1135 = vst [vmem:[%s209 + $0xb0] sm:$0xff] %v1084
      %1136 = vst [vmem:[%s209 + $0xb8] sm:$0xff] %v1087
      %1137 = vst [vmem:[%s209 + $0xc0] sm:$0xff] %v1090
      %1138 = vst [vmem:[%s209 + $0xc8] sm:$0xff] %v1093
      %1139 = vst [vmem:[%s209 + $0xd0] sm:$0xff] %v1096
      %1140 = vst [vmem:[%s209 + $0xd8] sm:$0xff] %v1099
      %1141 = vst [vmem:[%s209 + $0xe0] sm:$0xff] %v1102
      %1142 = vst [vmem:[%s209 + $0xe8] sm:$0xff] %v1105
      %1143 = vst [vmem:[%s209 + $0xf0] sm:$0xff] %v1108
      %1144 = vst [vmem:[%s209 + $0xf8] sm:$0xff] %v1111
      %v1145 = vadd.f32 %v1018, %v1021
      %v1146 = vadd.f32 %v1145, %v1024
      %v1147 = vadd.f32 %v1146, %v1027
      %v1148 = vadd.f32 %v1147, %v1030
      %v1149 = vadd.f32 %v1148, %v1033
      %v1150 = vadd.f32 %v1149, %v1036
      %v1151 = vadd.f32 %v1150, %v1039
      %v1152 = vadd.f32 %v1151, %v1042
      %v1153 = vadd.f32 %v1152, %v1045
      %v1154 = vadd.f32 %v1153, %v1048
      %v1155 = vadd.f32 %v1154, %v1051
      %v1156 = vadd.f32 %v1155, %v1054
      %v1157 = vadd.f32 %v1156, %v1057
      %v1158 = vadd.f32 %v1157, %v1060
      %v1159 = vadd.f32 %v1158, %v1063
      %v1160 = vadd.f32 %v1159, %v1066
      %v1161 = vadd.f32 %v1160, %v1069
      %v1162 = vadd.f32 %v1161, %v1072
      %v1163 = vadd.f32 %v1162, %v1075
      %v1164 = vadd.f32 %v1163, %v1078
      %v1165 = vadd.f32 %v1164, %v1081
      %v1166 = vadd.f32 %v1165, %v1084
      %v1167 = vadd.f32 %v1166, %v1087
      %v1168 = vadd.f32 %v1167, %v1090
      %v1169 = vadd.f32 %v1168, %v1093
      %v1170 = vadd.f32 %v1169, %v1096
      %v1171 = vadd.f32 %v1170, %v1099
      %v1172 = vadd.f32 %v1171, %v1102
      %v1173 = vadd.f32 %v1172, %v1105
      %v1174 = vadd.f32 %v1173, %v1108
      %v1175 = vadd.f32 %v1174, %v1111
      %v1176 = vrot.slane %v1175, 4
      %v1177 = vadd.f32 %v1175, %v1176
      %v1178 = vrot.slane %v1177, 2
      %v1179 = vadd.f32 %v1177, %v1178
      %v1180 = vrot.slane %v1179, 1
      %v1181 = vadd.f32 %v1179, %v1180
      %v1182 = vmul.f32 %v1018, %v1018
      %v1183 = vmul.f32 %v1021, %v1021
      %v1184 = vmul.f32 %v1024, %v1024
      %v1185 = vmul.f32 %v1027, %v1027
      %v1186 = vmul.f32 %v1030, %v1030
      %v1187 = vmul.f32 %v1033, %v1033
      %v1188 = vmul.f32 %v1036, %v1036
      %v1189 = vmul.f32 %v1039, %v1039
      %v1190 = vmul.f32 %v1042, %v1042
      %v1191 = vmul.f32 %v1045, %v1045
      %v1192 = vmul.f32 %v1048, %v1048
      %v1193 = vmul.f32 %v1051, %v1051
      %v1194 = vmul.f32 %v1054, %v1054
      %v1195 = vmul.f32 %v1057, %v1057
      %v1196 = vmul.f32 %v1060, %v1060
      %v1197 = vmul.f32 %v1063, %v1063
      %v1198 = vmul.f32 %v1066, %v1066
      %v1199 = vmul.f32 %v1069, %v1069
      %v1200 = vmul.f32 %v1072, %v1072
      %v1201 = vmul.f32 %v1075, %v1075
      %v1202 = vmul.f32 %v1078, %v1078
      %v1203 = vmul.f32 %v1081, %v1081
      %v1204 = vmul.f32 %v1084, %v1084
      %v1205 = vmul.f32 %v1087, %v1087
      %v1206 = vmul.f32 %v1090, %v1090
      %v1207 = vmul.f32 %v1093, %v1093
      %v1208 = vmul.f32 %v1096, %v1096
      %v1209 = vmul.f32 %v1099, %v1099
      %v1210 = vmul.f32 %v1102, %v1102
      %v1211 = vmul.f32 %v1105, %v1105
      %v1212 = vmul.f32 %v1108, %v1108
      %v1213 = vmul.f32 %v1111, %v1111
      %v1214 = vadd.f32 %v1182, %v1183
      %v1215 = vadd.f32 %v1214, %v1184
      %v1216 = vadd.f32 %v1215, %v1185
      %v1217 = vadd.f32 %v1216, %v1186
      %v1218 = vadd.f32 %v1217, %v1187
      %v1219 = vadd.f32 %v1218, %v1188
      %v1220 = vadd.f32 %v1219, %v1189
      %v1221 = vadd.f32 %v1220, %v1190
      %v1222 = vadd.f32 %v1221, %v1191
      %v1223 = vadd.f32 %v1222, %v1192
      %v1224 = vadd.f32 %v1223, %v1193
      %v1225 = vadd.f32 %v1224, %v1194
      %v1226 = vadd.f32 %v1225, %v1195
      %v1227 = vadd.f32 %v1226, %v1196
      %v1228 = vadd.f32 %v1227, %v1197
      %v1229 = vadd.f32 %v1228, %v1198
      %v1230 = vadd.f32 %v1229, %v1199
      %v1231 = vadd.f32 %v1230, %v1200
      %v1232 = vadd.f32 %v1231, %v1201
      %v1233 = vadd.f32 %v1232, %v1202
      %v1234 = vadd.f32 %v1233, %v1203
      %v1235 = vadd.f32 %v1234, %v1204
      %v1236 = vadd.f32 %v1235, %v1205
      %v1237 = vadd.f32 %v1236, %v1206
      %v1238 = vadd.f32 %v1237, %v1207
      %v1239 = vadd.f32 %v1238, %v1208
      %v1240 = vadd.f32 %v1239, %v1209
      %v1241 = vadd.f32 %v1240, %v1210
      %v1242 = vadd.f32 %v1241, %v1211
      %v1243 = vadd.f32 %v1242, %v1212
      %v1244 = vadd.f32 %v1243, %v1213
      %v1245 = vrot.slane %v1244, 4
      %v1246 = vadd.f32 %v1244, %v1245
      %v1247 = vrot.slane %v1246, 2
      %v1248 = vadd.f32 %v1246, %v1247
      %v1249 = vrot.slane %v1248, 1
      %v1250 = vadd.f32 %v1248, %v1249
      %vm1251 = vcmask 1040384
      %v1252 = vsel %vm1251, %v1181, %v1250
      %1253 = vst [vmem:[%s214] sm:$0x3] %v1252
      %s1254 = smul.u32 32, %s16
      %p1255 = scmp.lt.s32.totalorder %s1254, 63
      %s1256 = scalar_select %p1255, %s1254, 63
      %s1257 = smul.addr %s1256, 8
      %s1258 = scalar_lea.vmem %s3, %s1257
      %p1259 = scmp.lt.s32.totalorder %s16, 1
      %s1260 = scalar_select %p1259, %s16, 1
      %s1261 = smul.addr %s1260, 2
      %s1262 = scalar_lea.vmem %s4, %s1261
      // Predicated region
      $region33: #{refinenet_forward.18} parent=31 // pred_check
        %p1263 = pneg %p102
      $region34: #{refinenet_forward.18} parent=31 // pred_check_branch
        %1265 = sbr.rel (%p1263) target = $region36
      $region35: #{refinenet_forward.18} parent=31 // pred_region
        %s1266 = smul.u32 32, %s16
      $region36: #{refinenet_forward.18} parent=31 // pred_fallthru
        _
      // Predicated region
      $region37: #{refinenet_forward.18} parent=31 // pred_check
        %p1267 = pneg %p128
      $region38: #{refinenet_forward.18} parent=31 // pred_check_branch
        %1269 = sbr.rel (%p1267) target = $region40
      $region39: #{refinenet_forward.18} parent=31 // pred_region
        _
      $region40: #{refinenet_forward.18} parent=31 // pred_fallthru
        _
    $region32: #{refinenet_forward.18} parent=5 // pred_fallthru
      _
    %p1270 = scmp.le.s32.totalorder 2, %s11
    // Predicated region
    $region41: #{refinenet_forward.18} parent=5 // pred_check
      %p1271 = pneg %p1270
    $region42: #{refinenet_forward.18} parent=5 // pred_check_branch
      %1273 = sbr.rel (%p1271) target = $region44
    $region43: #{refinenet_forward.18} parent=5 // pred_region
      %s1274 = ssub.s32 %s11, 2
      // Predicated region
      $region45: #{refinenet_forward.18} parent=43 // pred_check
        %p1275 = pneg %p108
      $region46: #{refinenet_forward.18} parent=43 // pred_check_branch
        %1277 = sbr.rel (%p1275) target = $region48
      $region47: #{refinenet_forward.18} parent=43 // pred_region
        %s1278 = smul.u32 32, %s17
        %p1279 = scmp.lt.s32.totalorder %s1278, 63
        %s1280 = scalar_select %p1279, %s1278, 63
        %s1281 = smul.addr %s1280, 8
        %s1282 = scalar_lea.vmem %s3, %s1281
      $region48: #{refinenet_forward.18} parent=43 // pred_fallthru
        _
      // Predicated region
      $region49: #{refinenet_forward.18} parent=43 // pred_check
        %p1283 = pneg %p134
      $region50: #{refinenet_forward.18} parent=43 // pred_check_branch
        %1285 = sbr.rel (%p1283) target = $region52
      $region51: #{refinenet_forward.18} parent=43 // pred_region
        %p1286 = scmp.lt.s32.totalorder %s17, 1
        %s1287 = scalar_select %p1286, %s17, 1
        %s1288 = smul.addr %s1287, 2
        %s1289 = scalar_lea.vmem %s4, %s1288
      $region52: #{refinenet_forward.18} parent=43 // pred_fallthru
        _
    $region44: #{refinenet_forward.18} parent=5 // pred_fallthru
      _
  $region6: #{refinenet_forward.18} parent=0 // loop_footer
    %s15 = sadd.s32 1, %s11
  $region7: #{refinenet_forward.18} parent=0 // loop_footer_branch
    %10 = sbr.rel target = $region3
  $region8: #{refinenet_forward.18} parent=0 // loop_exit
    _

// kernel: refinenet_forward.23
$region0: #{refinenet_forward.23}
  #allocation0 [shape = 'u32[]', space=smem, size = 0x4, offset = 0x4, fixed_abs, tag = 'smem constant byte address 0x4 - core index']
  #allocation1 [shape = 'u32[72,128]{1,0:T(1,128)}', space=vmem, size = 0x9000, scoped, tag = 'internal scratch']
  #allocation2 [shape = 'f32[1,1]{1,0:T(1,128)S(1)}', space=vmem, size = 0x200, scoped, tag = 'scoped memory for refinenet_forward.23']
  %s0 = inlined_call_operand.vmem [shape: f32[512,512], index: 0, kind: input, shape index: {}]
  %s1 = inlined_call_operand.vmem [shape: f32[1,512], index: 1, kind: input, shape index: {}]
  %s2 = inlined_call_operand.vmem [shape: f32[1,512], index: 2, kind: input, shape index: {}]
  %s3 = inlined_call_operand.vmem [shape: f32[1,512], index: 3, kind: input, shape index: {}]
  %s4 = inlined_call_operand.<no memory space> [shape: f32[1,1], index: 4, kind: input, shape index: {}]
  %s5 = inlined_call_operand.vmem [shape: f32[512,1], index: 5, kind: output, shape index: {}]
  %s6 = sld [smem:[#allocation0]]
  $region53: #{refinenet_forward.23} parent=0
    _
  %s8 = ssub.s32 1, %s6
  %s9 = scalar_select 0, %s8, %s6
  %v10 = vstv %s4
  %11 = vst [vmem:[#allocation2] sm:$0x1] %v10
  loop: start=0, step=1, limit=4
  $region2: #{refinenet_forward.23} parent=0 // loop_pre_header
    _
  $region3: #{refinenet_forward.23} parent=0 // loop_header
    %s13 = sphi 0, %s17
    %p14 = scmp.ge.s32.totalorder %s13, 4
    %s23 = sphi 0, %s25
    %s26 = sphi 0, %s23
    %s27 = sphi 0, %s26
    %s43 = sphi 0, %s27
    %s47 = sphi 0, %s47
    %s49 = sphi 0, %s47
    %s50 = sphi 0, %s49
    %s64 = sphi 0, %s50
    %s68 = sphi 0, %s68
    %s70 = sphi 0, %s68
    %s71 = sphi 0, %s70
    %s85 = sphi 0, %s71
    %s89 = sphi 0, %s89
    %s91 = sphi 0, %s89
    %s92 = sphi 0, %s91
    %s106 = sphi 0, %s92
    %s110 = sphi 0, %s110
    %s112 = sphi 0, %s110
    %s113 = sphi 0, %s112
    %s127 = sphi 0, %s113
    %s133 = sphi 0, %s135
    %s136 = sphi 0, %s133
    %s137 = sphi 0, %s136
    %s153 = sphi 0, %s137
  $region4: #{refinenet_forward.23} parent=0 // loop_header_branch
    %16 = sbr.rel (%p14) target = $region8
  $region5: #{refinenet_forward.23} parent=0 // loop_body
    %s18 = ssub.s32 %s13, 1
    %s19 = ssub.s32 %s13, 2
    %s20 = sadd.s32 %s13, 1
    %s21 = ssub.s32 %s13, %s20
    %p22 = scmp.eq.s32.totalorder %s21, 0
    %s24 = sadd.s32 %s23, 1
    %s25 = scalar_select %p22, %s23, %s24
    %p28 = pneg %p22
    %p29 = scmp.eq.s32.totalorder %s13, 1
    %p30 = por %p28, %p29
    %p31 = scmp.ne.s32.totalorder %s23, %s26
    %p32 = scmp.eq.s32.totalorder %s13, 0
    %p33 = por %p31, %p32
    %p34 = scmp.ne.s32.totalorder %s23, %s26
    %p35 = scmp.eq.s32.totalorder %s18, 1
    %p36 = por %p34, %p35
    %p37 = scmp.ne.s32.totalorder %s26, %s27
    %p38 = scmp.eq.s32.totalorder %s18, 0
    %p39 = por %p37, %p38
    %p40 = scmp.ne.s32.totalorder %s26, %s27
    %p41 = scmp.eq.s32.totalorder %s19, 1
    %p42 = por %p40, %p41
    %p44 = scmp.ne.s32.totalorder %s27, %s43
    %p45 = scmp.eq.s32.totalorder %s19, 0
    %p46 = por %p44, %p45
    %s48 = sadd.s32 %s47, 1
    %p51 = scmp.eq.s32.totalorder %s13, 1
    %p52 = scmp.ne.s32.totalorder %s47, %s49
    %p53 = scmp.eq.s32.totalorder %s13, 0
    %p54 = por %p52, %p53
    %p55 = scmp.ne.s32.totalorder %s47, %s49
    %p56 = scmp.eq.s32.totalorder %s18, 1
    %p57 = por %p55, %p56
    %p58 = scmp.ne.s32.totalorder %s49, %s50
    %p59 = scmp.eq.s32.totalorder %s18, 0
    %p60 = por %p58, %p59
    %p61 = scmp.ne.s32.totalorder %s49, %s50
    %p62 = scmp.eq.s32.totalorder %s19, 1
    %p63 = por %p61, %p62
    %p65 = scmp.ne.s32.totalorder %s50, %s64
    %p66 = scmp.eq.s32.totalorder %s19, 0
    %p67 = por %p65, %p66
    %s69 = sadd.s32 %s68, 1
    %p72 = scmp.eq.s32.totalorder %s13, 1
    %p73 = scmp.ne.s32.totalorder %s68, %s70
    %p74 = scmp.eq.s32.totalorder %s13, 0
    %p75 = por %p73, %p74
    %p76 = scmp.ne.s32.totalorder %s68, %s70
    %p77 = scmp.eq.s32.totalorder %s18, 1
    %p78 = por %p76, %p77
    %p79 = scmp.ne.s32.totalorder %s70, %s71
    %p80 = scmp.eq.s32.totalorder %s18, 0
    %p81 = por %p79, %p80
    %p82 = scmp.ne.s32.totalorder %s70, %s71
    %p83 = scmp.eq.s32.totalorder %s19, 1
    %p84 = por %p82, %p83
    %p86 = scmp.ne.s32.totalorder %s71, %s85
    %p87 = scmp.eq.s32.totalorder %s19, 0
    %p88 = por %p86, %p87
    %s90 = sadd.s32 %s89, 1
    %p93 = scmp.eq.s32.totalorder %s13, 1
    %p94 = scmp.ne.s32.totalorder %s89, %s91
    %p95 = scmp.eq.s32.totalorder %s13, 0
    %p96 = por %p94, %p95
    %p97 = scmp.ne.s32.totalorder %s89, %s91
    %p98 = scmp.eq.s32.totalorder %s18, 1
    %p99 = por %p97, %p98
    %p100 = scmp.ne.s32.totalorder %s91, %s92
    %p101 = scmp.eq.s32.totalorder %s18, 0
    %p102 = por %p100, %p101
    %p103 = scmp.ne.s32.totalorder %s91, %s92
    %p104 = scmp.eq.s32.totalorder %s19, 1
    %p105 = por %p103, %p104
    %p107 = scmp.ne.s32.totalorder %s92, %s106
    %p108 = scmp.eq.s32.totalorder %s19, 0
    %p109 = por %p107, %p108
    %s111 = sadd.s32 %s110, 1
    %p114 = scmp.eq.s32.totalorder %s13, 1
    %p115 = scmp.ne.s32.totalorder %s110, %s112
    %p116 = scmp.eq.s32.totalorder %s13, 0
    %p117 = por %p115, %p116
    %p118 = scmp.ne.s32.totalorder %s110, %s112
    %p119 = scmp.eq.s32.totalorder %s18, 1
    %p120 = por %p118, %p119
    %p121 = scmp.ne.s32.totalorder %s112, %s113
    %p122 = scmp.eq.s32.totalorder %s18, 0
    %p123 = por %p121, %p122
    %p124 = scmp.ne.s32.totalorder %s112, %s113
    %p125 = scmp.eq.s32.totalorder %s19, 1
    %p126 = por %p124, %p125
    %p128 = scmp.ne.s32.totalorder %s113, %s127
    %p129 = scmp.eq.s32.totalorder %s19, 0
    %p130 = por %p128, %p129
    %s131 = ssub.s32 %s13, %s20
    %p132 = scmp.eq.s32.totalorder %s131, 0
    %s134 = sadd.s32 %s133, 1
    %s135 = scalar_select %p132, %s133, %s134
    %p138 = pneg %p132
    %p139 = scmp.eq.s32.totalorder %s13, 1
    %p140 = por %p138, %p139
    %p141 = scmp.ne.s32.totalorder %s133, %s136
    %p142 = scmp.eq.s32.totalorder %s13, 0
    %p143 = por %p141, %p142
    %p144 = scmp.ne.s32.totalorder %s133, %s136
    %p145 = scmp.eq.s32.totalorder %s18, 1
    %p146 = por %p144, %p145
    %p147 = scmp.ne.s32.totalorder %s136, %s137
    %p148 = scmp.eq.s32.totalorder %s18, 0
    %p149 = por %p147, %p148
    %p150 = scmp.ne.s32.totalorder %s136, %s137
    %p151 = scmp.eq.s32.totalorder %s19, 1
    %p152 = por %p150, %p151
    %p154 = scmp.ne.s32.totalorder %s137, %s153
    %p155 = scmp.eq.s32.totalorder %s19, 0
    %p156 = por %p154, %p155
    %p157 = scmp.le.s32.totalorder 1, %s13
    %p158 = scmp.lt.s32.totalorder %s13, 3
    %p159 = pnand %p157, %p158
    %p160 = pneg %p159
    // Predicated region
    $region9: #{refinenet_forward.23} parent=5 // pred_check
      _
    $region10: #{refinenet_forward.23} parent=5 // pred_check_branch
      %162 = sbr.rel (%p159) target = $region12
    $region11: #{refinenet_forward.23} parent=5 // pred_region
      %s163 = ssub.s32 %s13, 1
      // Predicated region
      $region13: #{refinenet_forward.23} parent=11 // pred_check
        %p164 = pneg %p60
      $region14: #{refinenet_forward.23} parent=11 // pred_check_branch
        %166 = sbr.rel (%p164) target = $region16
      $region15: #{refinenet_forward.23} parent=11 // pred_region
        _
      $region16: #{refinenet_forward.23} parent=11 // pred_fallthru
        _
      // Predicated region
      $region17: #{refinenet_forward.23} parent=11 // pred_check
        %p167 = pneg %p81
      $region18: #{refinenet_forward.23} parent=11 // pred_check_branch
        %169 = sbr.rel (%p167) target = $region20
      $region19: #{refinenet_forward.23} parent=11 // pred_region
        _
      $region20: #{refinenet_forward.23} parent=11 // pred_fallthru
        _
      // Predicated region
      $region21: #{refinenet_forward.23} parent=11 // pred_check
        %p170 = pneg %p102
      $region22: #{refinenet_forward.23} parent=11 // pred_check_branch
        %172 = sbr.rel (%p170) target = $region24
      $region23: #{refinenet_forward.23} parent=11 // pred_region
        _
      $region24: #{refinenet_forward.23} parent=11 // pred_fallthru
        _
      // Predicated region
      $region25: #{refinenet_forward.23} parent=11 // pred_check
        %p173 = pneg %p123
      $region26: #{refinenet_forward.23} parent=11 // pred_check_branch
        %175 = sbr.rel (%p173) target = $region28
      $region27: #{refinenet_forward.23} parent=11 // pred_region
        _
      $region28: #{refinenet_forward.23} parent=11 // pred_fallthru
        _
    $region12: #{refinenet_forward.23} parent=5 // pred_fallthru
      _
    %p176 = scmp.lt.s32.totalorder %s13, 2
    // Predicated region
    $region29: #{refinenet_forward.23} parent=5 // pred_check
      %p177 = pneg %p176
    $region30: #{refinenet_forward.23} parent=5 // pred_check_branch
      %179 = sbr.rel (%p177) target = $region32
    $region31: #{refinenet_forward.23} parent=5 // pred_region
      // Predicated region
      $region33: #{refinenet_forward.23} parent=31 // pred_check
        %p180 = pneg %p33
      $region34: #{refinenet_forward.23} parent=31 // pred_check_branch
        %182 = sbr.rel (%p180) target = $region36
      $region35: #{refinenet_forward.23} parent=31 // pred_region
        %s183 = smul.u32 32, %s13
        %p184 = scmp.lt.s32.totalorder %s183, 63
        %s185 = scalar_select %p184, %s183, 63
        %s186 = smul.addr %s185, 4
        %s187 = smul.addr %s186, 8
        %s188 = scalar_lea.vmem %s0, %s187
        %s189 = smul.u32 32, %s13
      $region36: #{refinenet_forward.23} parent=31 // pred_fallthru
        _
    $region32: #{refinenet_forward.23} parent=5 // pred_fallthru
      _
    %p190 = scmp.le.s32.totalorder 1, %s13
    %p191 = scmp.lt.s32.totalorder %s13, 3
    %p192 = pnand %p190, %p191
    %p193 = pneg %p192
    // Predicated region
    $region37: #{refinenet_forward.23} parent=5 // pred_check
      _
    $region38: #{refinenet_forward.23} parent=5 // pred_check_branch
      %195 = sbr.rel (%p192) target = $region40
    $region39: #{refinenet_forward.23} parent=5 // pred_region
      %s196 = ssub.s32 %s13, 1
      %s197 = smul.u32 32, %s18
      %p198 = scmp.lt.s32.totalorder %s197, 63
      %s199 = scalar_select %p198, %s197, 63
      %s200 = smul.addr %s199, 4
      %s201 = smul.addr %s200, 8
      %s202 = scalar_lea.vmem %s0, %s201
      %p203 = pneg %p39
      %p204 = pneg %p36
      %p205 = pneg %p60
      %p206 = pneg %p57
      %p207 = pneg %p81
      %p208 = pneg %p78
      %p209 = pneg %p102
      %p210 = pneg %p99
      %p211 = pneg %p123
      %p212 = pneg %p120
      %p213 = pneg %p149
      %p214 = pneg %p146
      %s215 = smul.u32 32, %s18
      %p216 = scmp.lt.s32.totalorder %s215, 63
      %s217 = scalar_select %p216, %s215, 63
      %s218 = smul.addr %s217, 8
      %s219 = scalar_lea.vmem %s5, %s218
      %s220 = smul.u32 32, %s18
      %p221 = scmp.lt.s32.totalorder %s220, 63
      %s222 = scalar_select %p221, %s220, 63
      %s223 = smul.addr %s222, 4
      %s224 = smul.addr %s223, 8
      %s225 = scalar_lea.vmem %s0, %s224
      %s226 = smul.u32 32, %s18
      %s227 = smul.u32 32, %s18
      %p228 = scmp.lt.s32.totalorder %s227, 63
      %s229 = scalar_select %p228, %s227, 63
      %s230 = smul.addr %s229, 8
      %s231 = scalar_lea.vmem %s5, %s230
      %s232 = smul.u32 32, %s18
      %v233 = vld [vmem:[%s225] sm:$0xff]
      %v234 = vld [vmem:[%s225 + $0x8] sm:$0xff]
      %v235 = vld [vmem:[%s225 + $0x10] sm:$0xff]
      %v236 = vld [vmem:[%s225 + $0x18] sm:$0xff]
      %v237 = vld [vmem:[%s225 + $0x20] sm:$0xff]
      %v238 = vld [vmem:[%s225 + $0x28] sm:$0xff]
      %v239 = vld [vmem:[%s225 + $0x30] sm:$0xff]
      %v240 = vld [vmem:[%s225 + $0x38] sm:$0xff]
      %v241 = vld [vmem:[%s225 + $0x40] sm:$0xff]
      %v242 = vld [vmem:[%s225 + $0x48] sm:$0xff]
      %v243 = vld [vmem:[%s225 + $0x50] sm:$0xff]
      %v244 = vld [vmem:[%s225 + $0x58] sm:$0xff]
      %v245 = vld [vmem:[%s225 + $0x60] sm:$0xff]
      %v246 = vld [vmem:[%s225 + $0x68] sm:$0xff]
      %v247 = vld [vmem:[%s225 + $0x70] sm:$0xff]
      %v248 = vld [vmem:[%s225 + $0x78] sm:$0xff]
      %v249 = vld [vmem:[%s225 + $0x80] sm:$0xff]
      %v250 = vld [vmem:[%s225 + $0x88] sm:$0xff]
      %v251 = vld [vmem:[%s225 + $0x90] sm:$0xff]
      %v252 = vld [vmem:[%s225 + $0x98] sm:$0xff]
      %v253 = vld [vmem:[%s225 + $0xa0] sm:$0xff]
      %v254 = vld [vmem:[%s225 + $0xa8] sm:$0xff]
      %v255 = vld [vmem:[%s225 + $0xb0] sm:$0xff]
      %v256 = vld [vmem:[%s225 + $0xb8] sm:$0xff]
      %v257 = vld [vmem:[%s225 + $0xc0] sm:$0xff]
      %v258 = vld [vmem:[%s225 + $0xc8] sm:$0xff]
      %v259 = vld [vmem:[%s225 + $0xd0] sm:$0xff]
      %v260 = vld [vmem:[%s225 + $0xd8] sm:$0xff]
      %v261 = vld [vmem:[%s225 + $0xe0] sm:$0xff]
      %v262 = vld [vmem:[%s225 + $0xe8] sm:$0xff]
      %v263 = vld [vmem:[%s225 + $0xf0] sm:$0xff]
      %v264 = vld [vmem:[%s225 + $0xf8] sm:$0xff]
      %v265 = vld [vmem:[%s225 + $0x100] sm:$0xff]
      %v266 = vld [vmem:[%s225 + $0x108] sm:$0xff]
      %v267 = vld [vmem:[%s225 + $0x110] sm:$0xff]
      %v268 = vld [vmem:[%s225 + $0x118] sm:$0xff]
      %v269 = vld [vmem:[%s225 + $0x120] sm:$0xff]
      %v270 = vld [vmem:[%s225 + $0x128] sm:$0xff]
      %v271 = vld [vmem:[%s225 + $0x130] sm:$0xff]
      %v272 = vld [vmem:[%s225 + $0x138] sm:$0xff]
      %v273 = vld [vmem:[%s225 + $0x140] sm:$0xff]
      %v274 = vld [vmem:[%s225 + $0x148] sm:$0xff]
      %v275 = vld [vmem:[%s225 + $0x150] sm:$0xff]
      %v276 = vld [vmem:[%s225 + $0x158] sm:$0xff]
      %v277 = vld [vmem:[%s225 + $0x160] sm:$0xff]
      %v278 = vld [vmem:[%s225 + $0x168] sm:$0xff]
      %v279 = vld [vmem:[%s225 + $0x170] sm:$0xff]
      %v280 = vld [vmem:[%s225 + $0x178] sm:$0xff]
      %v281 = vld [vmem:[%s225 + $0x180] sm:$0xff]
      %v282 = vld [vmem:[%s225 + $0x188] sm:$0xff]
      %v283 = vld [vmem:[%s225 + $0x190] sm:$0xff]
      %v284 = vld [vmem:[%s225 + $0x198] sm:$0xff]
      %v285 = vld [vmem:[%s225 + $0x1a0] sm:$0xff]
      %v286 = vld [vmem:[%s225 + $0x1a8] sm:$0xff]
      %v287 = vld [vmem:[%s225 + $0x1b0] sm:$0xff]
      %v288 = vld [vmem:[%s225 + $0x1b8] sm:$0xff]
      %v289 = vld [vmem:[%s225 + $0x1c0] sm:$0xff]
      %v290 = vld [vmem:[%s225 + $0x1c8] sm:$0xff]
      %v291 = vld [vmem:[%s225 + $0x1d0] sm:$0xff]
      %v292 = vld [vmem:[%s225 + $0x1d8] sm:$0xff]
      %v293 = vld [vmem:[%s225 + $0x1e0] sm:$0xff]
      %v294 = vld [vmem:[%s225 + $0x1e8] sm:$0xff]
      %v295 = vld [vmem:[%s225 + $0x1f0] sm:$0xff]
      %v296 = vld [vmem:[%s225 + $0x1f8] sm:$0xff]
      %v297 = vld [vmem:[%s225 + $0x200] sm:$0xff]
      %v298 = vld [vmem:[%s225 + $0x208] sm:$0xff]
      %v299 = vld [vmem:[%s225 + $0x210] sm:$0xff]
      %v300 = vld [vmem:[%s225 + $0x218] sm:$0xff]
      %v301 = vld [vmem:[%s225 + $0x220] sm:$0xff]
      %v302 = vld [vmem:[%s225 + $0x228] sm:$0xff]
      %v303 = vld [vmem:[%s225 + $0x230] sm:$0xff]
      %v304 = vld [vmem:[%s225 + $0x238] sm:$0xff]
      %v305 = vld [vmem:[%s225 + $0x240] sm:$0xff]
      %v306 = vld [vmem:[%s225 + $0x248] sm:$0xff]
      %v307 = vld [vmem:[%s225 + $0x250] sm:$0xff]
      %v308 = vld [vmem:[%s225 + $0x258] sm:$0xff]
      %v309 = vld [vmem:[%s225 + $0x260] sm:$0xff]
      %v310 = vld [vmem:[%s225 + $0x268] sm:$0xff]
      %v311 = vld [vmem:[%s225 + $0x270] sm:$0xff]
      %v312 = vld [vmem:[%s225 + $0x278] sm:$0xff]
      %v313 = vld [vmem:[%s225 + $0x280] sm:$0xff]
      %v314 = vld [vmem:[%s225 + $0x288] sm:$0xff]
      %v315 = vld [vmem:[%s225 + $0x290] sm:$0xff]
      %v316 = vld [vmem:[%s225 + $0x298] sm:$0xff]
      %v317 = vld [vmem:[%s225 + $0x2a0] sm:$0xff]
      %v318 = vld [vmem:[%s225 + $0x2a8] sm:$0xff]
      %v319 = vld [vmem:[%s225 + $0x2b0] sm:$0xff]
      %v320 = vld [vmem:[%s225 + $0x2b8] sm:$0xff]
      %v321 = vld [vmem:[%s225 + $0x2c0] sm:$0xff]
      %v322 = vld [vmem:[%s225 + $0x2c8] sm:$0xff]
      %v323 = vld [vmem:[%s225 + $0x2d0] sm:$0xff]
      %v324 = vld [vmem:[%s225 + $0x2d8] sm:$0xff]
      %v325 = vld [vmem:[%s225 + $0x2e0] sm:$0xff]
      %v326 = vld [vmem:[%s225 + $0x2e8] sm:$0xff]
      %v327 = vld [vmem:[%s225 + $0x2f0] sm:$0xff]
      %v328 = vld [vmem:[%s225 + $0x2f8] sm:$0xff]
      %v329 = vld [vmem:[%s225 + $0x300] sm:$0xff]
      %v330 = vld [vmem:[%s225 + $0x308] sm:$0xff]
      %v331 = vld [vmem:[%s225 + $0x310] sm:$0xff]
      %v332 = vld [vmem:[%s225 + $0x318] sm:$0xff]
      %v333 = vld [vmem:[%s225 + $0x320] sm:$0xff]
      %v334 = vld [vmem:[%s225 + $0x328] sm:$0xff]
      %v335 = vld [vmem:[%s225 + $0x330] sm:$0xff]
      %v336 = vld [vmem:[%s225 + $0x338] sm:$0xff]
      %v337 = vld [vmem:[%s225 + $0x340] sm:$0xff]
      %v338 = vld [vmem:[%s225 + $0x348] sm:$0xff]
      %v339 = vld [vmem:[%s225 + $0x350] sm:$0xff]
      %v340 = vld [vmem:[%s225 + $0x358] sm:$0xff]
      %v341 = vld [vmem:[%s225 + $0x360] sm:$0xff]
      %v342 = vld [vmem:[%s225 + $0x368] sm:$0xff]
      %v343 = vld [vmem:[%s225 + $0x370] sm:$0xff]
      %v344 = vld [vmem:[%s225 + $0x378] sm:$0xff]
      %v345 = vld [vmem:[%s225 + $0x380] sm:$0xff]
      %v346 = vld [vmem:[%s225 + $0x388] sm:$0xff]
      %v347 = vld [vmem:[%s225 + $0x390] sm:$0xff]
      %v348 = vld [vmem:[%s225 + $0x398] sm:$0xff]
      %v349 = vld [vmem:[%s225 + $0x3a0] sm:$0xff]
      %v350 = vld [vmem:[%s225 + $0x3a8] sm:$0xff]
      %v351 = vld [vmem:[%s225 + $0x3b0] sm:$0xff]
      %v352 = vld [vmem:[%s225 + $0x3b8] sm:$0xff]
      %v353 = vld [vmem:[%s225 + $0x3c0] sm:$0xff]
      %v354 = vld [vmem:[%s225 + $0x3c8] sm:$0xff]
      %v355 = vld [vmem:[%s225 + $0x3d0] sm:$0xff]
      %v356 = vld [vmem:[%s225 + $0x3d8] sm:$0xff]
      %v357 = vld [vmem:[%s225 + $0x3e0] sm:$0xff]
      %v358 = vld [vmem:[%s225 + $0x3e8] sm:$0xff]
      %v359 = vld [vmem:[%s225 + $0x3f0] sm:$0xff]
      %v360 = vld [vmem:[%s225 + $0x3f8] sm:$0xff]
      %v361 = vld [vmem:[%s1] sm:$0xf]
      %v363 = vperm.slane %v361, 0
      %v364 = vperm.slane %v361, 1
      %v365 = vperm.slane %v361, 2
      %v366 = vperm.slane %v361, 3
      %v371 = vmul.f32 %v233, %v363
      %v372 = vmul.f32 %v234, %v364
      %v373 = vmul.f32 %v235, %v365
      %v374 = vmul.f32 %v236, %v366
      %v375 = vmul.f32 %v237, %v363
      %v376 = vmul.f32 %v238, %v364
      %v377 = vmul.f32 %v239, %v365
      %v378 = vmul.f32 %v240, %v366
      %v379 = vmul.f32 %v241, %v363
      %v380 = vmul.f32 %v242, %v364
      %v381 = vmul.f32 %v243, %v365
      %v382 = vmul.f32 %v244, %v366
      %v383 = vmul.f32 %v245, %v363
      %v384 = vmul.f32 %v246, %v364
      %v385 = vmul.f32 %v247, %v365
      %v386 = vmul.f32 %v248, %v366
      %v387 = vmul.f32 %v249, %v363
      %v388 = vmul.f32 %v250, %v364
      %v389 = vmul.f32 %v251, %v365
      %v390 = vmul.f32 %v252, %v366
      %v391 = vmul.f32 %v253, %v363
      %v392 = vmul.f32 %v254, %v364
      %v393 = vmul.f32 %v255, %v365
      %v394 = vmul.f32 %v256, %v366
      %v395 = vmul.f32 %v257, %v363
      %v396 = vmul.f32 %v258, %v364
      %v397 = vmul.f32 %v259, %v365
      %v398 = vmul.f32 %v260, %v366
      %v399 = vmul.f32 %v261, %v363
      %v400 = vmul.f32 %v262, %v364
      %v401 = vmul.f32 %v263, %v365
      %v402 = vmul.f32 %v264, %v366
      %v403 = vmul.f32 %v265, %v363
      %v404 = vmul.f32 %v266, %v364
      %v405 = vmul.f32 %v267, %v365
      %v406 = vmul.f32 %v268, %v366
      %v407 = vmul.f32 %v269, %v363
      %v408 = vmul.f32 %v270, %v364
      %v409 = vmul.f32 %v271, %v365
      %v410 = vmul.f32 %v272, %v366
      %v411 = vmul.f32 %v273, %v363
      %v412 = vmul.f32 %v274, %v364
      %v413 = vmul.f32 %v275, %v365
      %v414 = vmul.f32 %v276, %v366
      %v415 = vmul.f32 %v277, %v363
      %v416 = vmul.f32 %v278, %v364
      %v417 = vmul.f32 %v279, %v365
      %v418 = vmul.f32 %v280, %v366
      %v419 = vmul.f32 %v281, %v363
      %v420 = vmul.f32 %v282, %v364
      %v421 = vmul.f32 %v283, %v365
      %v422 = vmul.f32 %v284, %v366
      %v423 = vmul.f32 %v285, %v363
      %v424 = vmul.f32 %v286, %v364
      %v425 = vmul.f32 %v287, %v365
      %v426 = vmul.f32 %v288, %v366
      %v427 = vmul.f32 %v289, %v363
      %v428 = vmul.f32 %v290, %v364
      %v429 = vmul.f32 %v291, %v365
      %v430 = vmul.f32 %v292, %v366
      %v431 = vmul.f32 %v293, %v363
      %v432 = vmul.f32 %v294, %v364
      %v433 = vmul.f32 %v295, %v365
      %v434 = vmul.f32 %v296, %v366
      %v435 = vmul.f32 %v297, %v363
      %v436 = vmul.f32 %v298, %v364
      %v437 = vmul.f32 %v299, %v365
      %v438 = vmul.f32 %v300, %v366
      %v439 = vmul.f32 %v301, %v363
      %v440 = vmul.f32 %v302, %v364
      %v441 = vmul.f32 %v303, %v365
      %v442 = vmul.f32 %v304, %v366
      %v443 = vmul.f32 %v305, %v363
      %v444 = vmul.f32 %v306, %v364
      %v445 = vmul.f32 %v307, %v365
      %v446 = vmul.f32 %v308, %v366
      %v447 = vmul.f32 %v309, %v363
      %v448 = vmul.f32 %v310, %v364
      %v449 = vmul.f32 %v311, %v365
      %v450 = vmul.f32 %v312, %v366
      %v451 = vmul.f32 %v313, %v363
      %v452 = vmul.f32 %v314, %v364
      %v453 = vmul.f32 %v315, %v365
      %v454 = vmul.f32 %v316, %v366
      %v455 = vmul.f32 %v317, %v363
      %v456 = vmul.f32 %v318, %v364
      %v457 = vmul.f32 %v319, %v365
      %v458 = vmul.f32 %v320, %v366
      %v459 = vmul.f32 %v321, %v363
      %v460 = vmul.f32 %v322, %v364
      %v461 = vmul.f32 %v323, %v365
      %v462 = vmul.f32 %v324, %v366
      %v463 = vmul.f32 %v325, %v363
      %v464 = vmul.f32 %v326, %v364
      %v465 = vmul.f32 %v327, %v365
      %v466 = vmul.f32 %v328, %v366
      %v467 = vmul.f32 %v329, %v363
      %v468 = vmul.f32 %v330, %v364
      %v469 = vmul.f32 %v331, %v365
      %v470 = vmul.f32 %v332, %v366
      %v471 = vmul.f32 %v333, %v363
      %v472 = vmul.f32 %v334, %v364
      %v473 = vmul.f32 %v335, %v365
      %v474 = vmul.f32 %v336, %v366
      %v475 = vmul.f32 %v337, %v363
      %v476 = vmul.f32 %v338, %v364
      %v477 = vmul.f32 %v339, %v365
      %v478 = vmul.f32 %v340, %v366
      %v479 = vmul.f32 %v341, %v363
      %v480 = vmul.f32 %v342, %v364
      %v481 = vmul.f32 %v343, %v365
      %v482 = vmul.f32 %v344, %v366
      %v483 = vmul.f32 %v345, %v363
      %v484 = vmul.f32 %v346, %v364
      %v485 = vmul.f32 %v347, %v365
      %v486 = vmul.f32 %v348, %v366
      %v487 = vmul.f32 %v349, %v363
      %v488 = vmul.f32 %v350, %v364
      %v489 = vmul.f32 %v351, %v365
      %v490 = vmul.f32 %v352, %v366
      %v491 = vmul.f32 %v353, %v363
      %v492 = vmul.f32 %v354, %v364
      %v493 = vmul.f32 %v355, %v365
      %v494 = vmul.f32 %v356, %v366
      %v495 = vmul.f32 %v357, %v363
      %v496 = vmul.f32 %v358, %v364
      %v497 = vmul.f32 %v359, %v365
      %v498 = vmul.f32 %v360, %v366
      %v499 = vld [vmem:[%s2] sm:$0xf]
      %v501 = vperm.slane %v499, 0
      %v502 = vperm.slane %v499, 1
      %v503 = vperm.slane %v499, 2
      %v504 = vperm.slane %v499, 3
      %v509 = vadd.f32 %v371, %v501
      %v510 = vadd.f32 %v372, %v502
      %v511 = vadd.f32 %v373, %v503
      %v512 = vadd.f32 %v374, %v504
      %v513 = vadd.f32 %v375, %v501
      %v514 = vadd.f32 %v376, %v502
      %v515 = vadd.f32 %v377, %v503
      %v516 = vadd.f32 %v378, %v504
      %v517 = vadd.f32 %v379, %v501
      %v518 = vadd.f32 %v380, %v502
      %v519 = vadd.f32 %v381, %v503
      %v520 = vadd.f32 %v382, %v504
      %v521 = vadd.f32 %v383, %v501
      %v522 = vadd.f32 %v384, %v502
      %v523 = vadd.f32 %v385, %v503
      %v524 = vadd.f32 %v386, %v504
      %v525 = vadd.f32 %v387, %v501
      %v526 = vadd.f32 %v388, %v502
      %v527 = vadd.f32 %v389, %v503
      %v528 = vadd.f32 %v390, %v504
      %v529 = vadd.f32 %v391, %v501
      %v530 = vadd.f32 %v392, %v502
      %v531 = vadd.f32 %v393, %v503
      %v532 = vadd.f32 %v394, %v504
      %v533 = vadd.f32 %v395, %v501
      %v534 = vadd.f32 %v396, %v502
      %v535 = vadd.f32 %v397, %v503
      %v536 = vadd.f32 %v398, %v504
      %v537 = vadd.f32 %v399, %v501
      %v538 = vadd.f32 %v400, %v502
      %v539 = vadd.f32 %v401, %v503
      %v540 = vadd.f32 %v402, %v504
      %v541 = vadd.f32 %v403, %v501
      %v542 = vadd.f32 %v404, %v502
      %v543 = vadd.f32 %v405, %v503
      %v544 = vadd.f32 %v406, %v504
      %v545 = vadd.f32 %v407, %v501
      %v546 = vadd.f32 %v408, %v502
      %v547 = vadd.f32 %v409, %v503
      %v548 = vadd.f32 %v410, %v504
      %v549 = vadd.f32 %v411, %v501
      %v550 = vadd.f32 %v412, %v502
      %v551 = vadd.f32 %v413, %v503
      %v552 = vadd.f32 %v414, %v504
      %v553 = vadd.f32 %v415, %v501
      %v554 = vadd.f32 %v416, %v502
      %v555 = vadd.f32 %v417, %v503
      %v556 = vadd.f32 %v418, %v504
      %v557 = vadd.f32 %v419, %v501
      %v558 = vadd.f32 %v420, %v502
      %v559 = vadd.f32 %v421, %v503
      %v560 = vadd.f32 %v422, %v504
      %v561 = vadd.f32 %v423, %v501
      %v562 = vadd.f32 %v424, %v502
      %v563 = vadd.f32 %v425, %v503
      %v564 = vadd.f32 %v426, %v504
      %v565 = vadd.f32 %v427, %v501
      %v566 = vadd.f32 %v428, %v502
      %v567 = vadd.f32 %v429, %v503
      %v568 = vadd.f32 %v430, %v504
      %v569 = vadd.f32 %v431, %v501
      %v570 = vadd.f32 %v432, %v502
      %v571 = vadd.f32 %v433, %v503
      %v572 = vadd.f32 %v434, %v504
      %v573 = vadd.f32 %v435, %v501
      %v574 = vadd.f32 %v436, %v502
      %v575 = vadd.f32 %v437, %v503
      %v576 = vadd.f32 %v438, %v504
      %v577 = vadd.f32 %v439, %v501
      %v578 = vadd.f32 %v440, %v502
      %v579 = vadd.f32 %v441, %v503
      %v580 = vadd.f32 %v442, %v504
      %v581 = vadd.f32 %v443, %v501
      %v582 = vadd.f32 %v444, %v502
      %v583 = vadd.f32 %v445, %v503
      %v584 = vadd.f32 %v446, %v504
      %v585 = vadd.f32 %v447, %v501
      %v586 = vadd.f32 %v448, %v502
      %v587 = vadd.f32 %v449, %v503
      %v588 = vadd.f32 %v450, %v504
      %v589 = vadd.f32 %v451, %v501
      %v590 = vadd.f32 %v452, %v502
      %v591 = vadd.f32 %v453, %v503
      %v592 = vadd.f32 %v454, %v504
      %v593 = vadd.f32 %v455, %v501
      %v594 = vadd.f32 %v456, %v502
      %v595 = vadd.f32 %v457, %v503
      %v596 = vadd.f32 %v458, %v504
      %v597 = vadd.f32 %v459, %v501
      %v598 = vadd.f32 %v460, %v502
      %v599 = vadd.f32 %v461, %v503
      %v600 = vadd.f32 %v462, %v504
      %v601 = vadd.f32 %v463, %v501
      %v602 = vadd.f32 %v464, %v502
      %v603 = vadd.f32 %v465, %v503
      %v604 = vadd.f32 %v466, %v504
      %v605 = vadd.f32 %v467, %v501
      %v606 = vadd.f32 %v468, %v502
      %v607 = vadd.f32 %v469, %v503
      %v608 = vadd.f32 %v470, %v504
      %v609 = vadd.f32 %v471, %v501
      %v610 = vadd.f32 %v472, %v502
      %v611 = vadd.f32 %v473, %v503
      %v612 = vadd.f32 %v474, %v504
      %v613 = vadd.f32 %v475, %v501
      %v614 = vadd.f32 %v476, %v502
      %v615 = vadd.f32 %v477, %v503
      %v616 = vadd.f32 %v478, %v504
      %v617 = vadd.f32 %v479, %v501
      %v618 = vadd.f32 %v480, %v502
      %v619 = vadd.f32 %v481, %v503
      %v620 = vadd.f32 %v482, %v504
      %v621 = vadd.f32 %v483, %v501
      %v622 = vadd.f32 %v484, %v502
      %v623 = vadd.f32 %v485, %v503
      %v624 = vadd.f32 %v486, %v504
      %v625 = vadd.f32 %v487, %v501
      %v626 = vadd.f32 %v488, %v502
      %v627 = vadd.f32 %v489, %v503
      %v628 = vadd.f32 %v490, %v504
      %v629 = vadd.f32 %v491, %v501
      %v630 = vadd.f32 %v492, %v502
      %v631 = vadd.f32 %v493, %v503
      %v632 = vadd.f32 %v494, %v504
      %v633 = vadd.f32 %v495, %v501
      %v634 = vadd.f32 %v496, %v502
      %v635 = vadd.f32 %v497, %v503
      %v636 = vadd.f32 %v498, %v504
      %v637 = vmax.f32 %v509, 0.0
      %v638 = vmax.f32 %v510, 0.0
      %v639 = vmax.f32 %v511, 0.0
      %v640 = vmax.f32 %v512, 0.0
      %v641 = vmax.f32 %v513, 0.0
      %v642 = vmax.f32 %v514, 0.0
      %v643 = vmax.f32 %v515, 0.0
      %v644 = vmax.f32 %v516, 0.0
      %v645 = vmax.f32 %v517, 0.0
      %v646 = vmax.f32 %v518, 0.0
      %v647 = vmax.f32 %v519, 0.0
      %v648 = vmax.f32 %v520, 0.0
      %v649 = vmax.f32 %v521, 0.0
      %v650 = vmax.f32 %v522, 0.0
      %v651 = vmax.f32 %v523, 0.0
      %v652 = vmax.f32 %v524, 0.0
      %v653 = vmax.f32 %v525, 0.0
      %v654 = vmax.f32 %v526, 0.0
      %v655 = vmax.f32 %v527, 0.0
      %v656 = vmax.f32 %v528, 0.0
      %v657 = vmax.f32 %v529, 0.0
      %v658 = vmax.f32 %v530, 0.0
      %v659 = vmax.f32 %v531, 0.0
      %v660 = vmax.f32 %v532, 0.0
      %v661 = vmax.f32 %v533, 0.0
      %v662 = vmax.f32 %v534, 0.0
      %v663 = vmax.f32 %v535, 0.0
      %v664 = vmax.f32 %v536, 0.0
      %v665 = vmax.f32 %v537, 0.0
      %v666 = vmax.f32 %v538, 0.0
      %v667 = vmax.f32 %v539, 0.0
      %v668 = vmax.f32 %v540, 0.0
      %v669 = vmax.f32 %v541, 0.0
      %v670 = vmax.f32 %v542, 0.0
      %v671 = vmax.f32 %v543, 0.0
      %v672 = vmax.f32 %v544, 0.0
      %v673 = vmax.f32 %v545, 0.0
      %v674 = vmax.f32 %v546, 0.0
      %v675 = vmax.f32 %v547, 0.0
      %v676 = vmax.f32 %v548, 0.0
      %v677 = vmax.f32 %v549, 0.0
      %v678 = vmax.f32 %v550, 0.0
      %v679 = vmax.f32 %v551, 0.0
      %v680 = vmax.f32 %v552, 0.0
      %v681 = vmax.f32 %v553, 0.0
      %v682 = vmax.f32 %v554, 0.0
      %v683 = vmax.f32 %v555, 0.0
      %v684 = vmax.f32 %v556, 0.0
      %v685 = vmax.f32 %v557, 0.0
      %v686 = vmax.f32 %v558, 0.0
      %v687 = vmax.f32 %v559, 0.0
      %v688 = vmax.f32 %v560, 0.0
      %v689 = vmax.f32 %v561, 0.0
      %v690 = vmax.f32 %v562, 0.0
      %v691 = vmax.f32 %v563, 0.0
      %v692 = vmax.f32 %v564, 0.0
      %v693 = vmax.f32 %v565, 0.0
      %v694 = vmax.f32 %v566, 0.0
      %v695 = vmax.f32 %v567, 0.0
      %v696 = vmax.f32 %v568, 0.0
      %v697 = vmax.f32 %v569, 0.0
      %v698 = vmax.f32 %v570, 0.0
      %v699 = vmax.f32 %v571, 0.0
      %v700 = vmax.f32 %v572, 0.0
      %v701 = vmax.f32 %v573, 0.0
      %v702 = vmax.f32 %v574, 0.0
      %v703 = vmax.f32 %v575, 0.0
      %v704 = vmax.f32 %v576, 0.0
      %v705 = vmax.f32 %v577, 0.0
      %v706 = vmax.f32 %v578, 0.0
      %v707 = vmax.f32 %v579, 0.0
      %v708 = vmax.f32 %v580, 0.0
      %v709 = vmax.f32 %v581, 0.0
      %v710 = vmax.f32 %v582, 0.0
      %v711 = vmax.f32 %v583, 0.0
      %v712 = vmax.f32 %v584, 0.0
      %v713 = vmax.f32 %v585, 0.0
      %v714 = vmax.f32 %v586, 0.0
      %v715 = vmax.f32 %v587, 0.0
      %v716 = vmax.f32 %v588, 0.0
      %v717 = vmax.f32 %v589, 0.0
      %v718 = vmax.f32 %v590, 0.0
      %v719 = vmax.f32 %v591, 0.0
      %v720 = vmax.f32 %v592, 0.0
      %v721 = vmax.f32 %v593, 0.0
      %v722 = vmax.f32 %v594, 0.0
      %v723 = vmax.f32 %v595, 0.0
      %v724 = vmax.f32 %v596, 0.0
      %v725 = vmax.f32 %v597, 0.0
      %v726 = vmax.f32 %v598, 0.0
      %v727 = vmax.f32 %v599, 0.0
      %v728 = vmax.f32 %v600, 0.0
      %v729 = vmax.f32 %v601, 0.0
      %v730 = vmax.f32 %v602, 0.0
      %v731 = vmax.f32 %v603, 0.0
      %v732 = vmax.f32 %v604, 0.0
      %v733 = vmax.f32 %v605, 0.0
      %v734 = vmax.f32 %v606, 0.0
      %v735 = vmax.f32 %v607, 0.0
      %v736 = vmax.f32 %v608, 0.0
      %v737 = vmax.f32 %v609, 0.0
      %v738 = vmax.f32 %v610, 0.0
      %v739 = vmax.f32 %v611, 0.0
      %v740 = vmax.f32 %v612, 0.0
      %v741 = vmax.f32 %v613, 0.0
      %v742 = vmax.f32 %v614, 0.0
      %v743 = vmax.f32 %v615, 0.0
      %v744 = vmax.f32 %v616, 0.0
      %v745 = vmax.f32 %v617, 0.0
      %v746 = vmax.f32 %v618, 0.0
      %v747 = vmax.f32 %v619, 0.0
      %v748 = vmax.f32 %v620, 0.0
      %v749 = vmax.f32 %v621, 0.0
      %v750 = vmax.f32 %v622, 0.0
      %v751 = vmax.f32 %v623, 0.0
      %v752 = vmax.f32 %v624, 0.0
      %v753 = vmax.f32 %v625, 0.0
      %v754 = vmax.f32 %v626, 0.0
      %v755 = vmax.f32 %v627, 0.0
      %v756 = vmax.f32 %v628, 0.0
      %v757 = vmax.f32 %v629, 0.0
      %v758 = vmax.f32 %v630, 0.0
      %v759 = vmax.f32 %v631, 0.0
      %v760 = vmax.f32 %v632, 0.0
      %v761 = vmax.f32 %v633, 0.0
      %v762 = vmax.f32 %v634, 0.0
      %v763 = vmax.f32 %v635, 0.0
      %v764 = vmax.f32 %v636, 0.0
      %v765 = vld [vmem:[%s3] sm:$0xf]
      %v767 = vperm.slane %v765, 0
      %v768 = vperm.slane %v765, 1
      %v769 = vperm.slane %v765, 2
      %v770 = vperm.slane %v765, 3
      %v775 = vmul.f32 %v637, %v767
      %v776 = vmul.f32 %v638, %v768
      %v777 = vmul.f32 %v639, %v769
      %v778 = vmul.f32 %v640, %v770
      %v779 = vmul.f32 %v641, %v767
      %v780 = vmul.f32 %v642, %v768
      %v781 = vmul.f32 %v643, %v769
      %v782 = vmul.f32 %v644, %v770
      %v783 = vmul.f32 %v645, %v767
      %v784 = vmul.f32 %v646, %v768
      %v785 = vmul.f32 %v647, %v769
      %v786 = vmul.f32 %v648, %v770
      %v787 = vmul.f32 %v649, %v767
      %v788 = vmul.f32 %v650, %v768
      %v789 = vmul.f32 %v651, %v769
      %v790 = vmul.f32 %v652, %v770
      %v791 = vmul.f32 %v653, %v767
      %v792 = vmul.f32 %v654, %v768
      %v793 = vmul.f32 %v655, %v769
      %v794 = vmul.f32 %v656, %v770
      %v795 = vmul.f32 %v657, %v767
      %v796 = vmul.f32 %v658, %v768
      %v797 = vmul.f32 %v659, %v769
      %v798 = vmul.f32 %v660, %v770
      %v799 = vmul.f32 %v661, %v767
      %v800 = vmul.f32 %v662, %v768
      %v801 = vmul.f32 %v663, %v769
      %v802 = vmul.f32 %v664, %v770
      %v803 = vmul.f32 %v665, %v767
      %v804 = vmul.f32 %v666, %v768
      %v805 = vmul.f32 %v667, %v769
      %v806 = vmul.f32 %v668, %v770
      %v807 = vmul.f32 %v669, %v767
      %v808 = vmul.f32 %v670, %v768
      %v809 = vmul.f32 %v671, %v769
      %v810 = vmul.f32 %v672, %v770
      %v811 = vmul.f32 %v673, %v767
      %v812 = vmul.f32 %v674, %v768
      %v813 = vmul.f32 %v675, %v769
      %v814 = vmul.f32 %v676, %v770
      %v815 = vmul.f32 %v677, %v767
      %v816 = vmul.f32 %v678, %v768
      %v817 = vmul.f32 %v679, %v769
      %v818 = vmul.f32 %v680, %v770
      %v819 = vmul.f32 %v681, %v767
      %v820 = vmul.f32 %v682, %v768
      %v821 = vmul.f32 %v683, %v769
      %v822 = vmul.f32 %v684, %v770
      %v823 = vmul.f32 %v685, %v767
      %v824 = vmul.f32 %v686, %v768
      %v825 = vmul.f32 %v687, %v769
      %v826 = vmul.f32 %v688, %v770
      %v827 = vmul.f32 %v689, %v767
      %v828 = vmul.f32 %v690, %v768
      %v829 = vmul.f32 %v691, %v769
      %v830 = vmul.f32 %v692, %v770
      %v831 = vmul.f32 %v693, %v767
      %v832 = vmul.f32 %v694, %v768
      %v833 = vmul.f32 %v695, %v769
      %v834 = vmul.f32 %v696, %v770
      %v835 = vmul.f32 %v697, %v767
      %v836 = vmul.f32 %v698, %v768
      %v837 = vmul.f32 %v699, %v769
      %v838 = vmul.f32 %v700, %v770
      %v839 = vmul.f32 %v701, %v767
      %v840 = vmul.f32 %v702, %v768
      %v841 = vmul.f32 %v703, %v769
      %v842 = vmul.f32 %v704, %v770
      %v843 = vmul.f32 %v705, %v767
      %v844 = vmul.f32 %v706, %v768
      %v845 = vmul.f32 %v707, %v769
      %v846 = vmul.f32 %v708, %v770
      %v847 = vmul.f32 %v709, %v767
      %v848 = vmul.f32 %v710, %v768
      %v849 = vmul.f32 %v711, %v769
      %v850 = vmul.f32 %v712, %v770
      %v851 = vmul.f32 %v713, %v767
      %v852 = vmul.f32 %v714, %v768
      %v853 = vmul.f32 %v715, %v769
      %v854 = vmul.f32 %v716, %v770
      %v855 = vmul.f32 %v717, %v767
      %v856 = vmul.f32 %v718, %v768
      %v857 = vmul.f32 %v719, %v769
      %v858 = vmul.f32 %v720, %v770
      %v859 = vmul.f32 %v721, %v767
      %v860 = vmul.f32 %v722, %v768
      %v861 = vmul.f32 %v723, %v769
      %v862 = vmul.f32 %v724, %v770
      %v863 = vmul.f32 %v725, %v767
      %v864 = vmul.f32 %v726, %v768
      %v865 = vmul.f32 %v727, %v769
      %v866 = vmul.f32 %v728, %v770
      %v867 = vmul.f32 %v729, %v767
      %v868 = vmul.f32 %v730, %v768
      %v869 = vmul.f32 %v731, %v769
      %v870 = vmul.f32 %v732, %v770
      %v871 = vmul.f32 %v733, %v767
      %v872 = vmul.f32 %v734, %v768
      %v873 = vmul.f32 %v735, %v769
      %v874 = vmul.f32 %v736, %v770
      %v875 = vmul.f32 %v737, %v767
      %v876 = vmul.f32 %v738, %v768
      %v877 = vmul.f32 %v739, %v769
      %v878 = vmul.f32 %v740, %v770
      %v879 = vmul.f32 %v741, %v767
      %v880 = vmul.f32 %v742, %v768
      %v881 = vmul.f32 %v743, %v769
      %v882 = vmul.f32 %v744, %v770
      %v883 = vmul.f32 %v745, %v767
      %v884 = vmul.f32 %v746, %v768
      %v885 = vmul.f32 %v747, %v769
      %v886 = vmul.f32 %v748, %v770
      %v887 = vmul.f32 %v749, %v767
      %v888 = vmul.f32 %v750, %v768
      %v889 = vmul.f32 %v751, %v769
      %v890 = vmul.f32 %v752, %v770
      %v891 = vmul.f32 %v753, %v767
      %v892 = vmul.f32 %v754, %v768
      %v893 = vmul.f32 %v755, %v769
      %v894 = vmul.f32 %v756, %v770
      %v895 = vmul.f32 %v757, %v767
      %v896 = vmul.f32 %v758, %v768
      %v897 = vmul.f32 %v759, %v769
      %v898 = vmul.f32 %v760, %v770
      %v899 = vmul.f32 %v761, %v767
      %v900 = vmul.f32 %v762, %v768
      %v901 = vmul.f32 %v763, %v769
      %v902 = vmul.f32 %v764, %v770
      %v903 = vadd.f32 %v775, %v776
      %v904 = vadd.f32 %v903, %v777
      %v905 = vadd.f32 %v904, %v778
      %906 = vadd.xlane.f32.xlu0 %v905
      %v907 = vpop.xlane.xlu0 %906
      %v908 = vadd.f32 %v779, %v780
      %v909 = vadd.f32 %v908, %v781
      %v910 = vadd.f32 %v909, %v782
      %911 = vadd.xlane.f32.xlu0 %v910
      %v912 = vpop.xlane.xlu0 %911
      %v913 = vadd.f32 %v783, %v784
      %v914 = vadd.f32 %v913, %v785
      %v915 = vadd.f32 %v914, %v786
      %916 = vadd.xlane.f32.xlu0 %v915
      %v917 = vpop.xlane.xlu0 %916
      %v918 = vadd.f32 %v787, %v788
      %v919 = vadd.f32 %v918, %v789
      %v920 = vadd.f32 %v919, %v790
      %921 = vadd.xlane.f32.xlu0 %v920
      %v922 = vpop.xlane.xlu0 %921
      %v923 = vadd.f32 %v791, %v792
      %v924 = vadd.f32 %v923, %v793
      %v925 = vadd.f32 %v924, %v794
      %926 = vadd.xlane.f32.xlu0 %v925
      %v927 = vpop.xlane.xlu0 %926
      %v928 = vadd.f32 %v795, %v796
      %v929 = vadd.f32 %v928, %v797
      %v930 = vadd.f32 %v929, %v798
      %931 = vadd.xlane.f32.xlu0 %v930
      %v932 = vpop.xlane.xlu0 %931
      %v933 = vadd.f32 %v799, %v800
      %v934 = vadd.f32 %v933, %v801
      %v935 = vadd.f32 %v934, %v802
      %936 = vadd.xlane.f32.xlu0 %v935
      %v937 = vpop.xlane.xlu0 %936
      %v938 = vadd.f32 %v803, %v804
      %v939 = vadd.f32 %v938, %v805
      %v940 = vadd.f32 %v939, %v806
      %941 = vadd.xlane.f32.xlu0 %v940
      %v942 = vpop.xlane.xlu0 %941
      %v943 = vadd.f32 %v807, %v808
      %v944 = vadd.f32 %v943, %v809
      %v945 = vadd.f32 %v944, %v810
      %946 = vadd.xlane.f32.xlu0 %v945
      %v947 = vpop.xlane.xlu0 %946
      %v948 = vadd.f32 %v811, %v812
      %v949 = vadd.f32 %v948, %v813
      %v950 = vadd.f32 %v949, %v814
      %951 = vadd.xlane.f32.xlu0 %v950
      %v952 = vpop.xlane.xlu0 %951
      %v953 = vadd.f32 %v815, %v816
      %v954 = vadd.f32 %v953, %v817
      %v955 = vadd.f32 %v954, %v818
      %956 = vadd.xlane.f32.xlu0 %v955
      %v957 = vpop.xlane.xlu0 %956
      %v958 = vadd.f32 %v819, %v820
      %v959 = vadd.f32 %v958, %v821
      %v960 = vadd.f32 %v959, %v822
      %961 = vadd.xlane.f32.xlu0 %v960
      %v962 = vpop.xlane.xlu0 %961
      %v963 = vadd.f32 %v823, %v824
      %v964 = vadd.f32 %v963, %v825
      %v965 = vadd.f32 %v964, %v826
      %966 = vadd.xlane.f32.xlu0 %v965
      %v967 = vpop.xlane.xlu0 %966
      %v968 = vadd.f32 %v827, %v828
      %v969 = vadd.f32 %v968, %v829
      %v970 = vadd.f32 %v969, %v830
      %971 = vadd.xlane.f32.xlu0 %v970
      %v972 = vpop.xlane.xlu0 %971
      %v973 = vadd.f32 %v831, %v832
      %v974 = vadd.f32 %v973, %v833
      %v975 = vadd.f32 %v974, %v834
      %976 = vadd.xlane.f32.xlu0 %v975
      %v977 = vpop.xlane.xlu0 %976
      %v978 = vadd.f32 %v835, %v836
      %v979 = vadd.f32 %v978, %v837
      %v980 = vadd.f32 %v979, %v838
      %981 = vadd.xlane.f32.xlu0 %v980
      %v982 = vpop.xlane.xlu0 %981
      %v983 = vadd.f32 %v839, %v840
      %v984 = vadd.f32 %v983, %v841
      %v985 = vadd.f32 %v984, %v842
      %986 = vadd.xlane.f32.xlu0 %v985
      %v987 = vpop.xlane.xlu0 %986
      %v988 = vadd.f32 %v843, %v844
      %v989 = vadd.f32 %v988, %v845
      %v990 = vadd.f32 %v989, %v846
      %991 = vadd.xlane.f32.xlu0 %v990
      %v992 = vpop.xlane.xlu0 %991
      %v993 = vadd.f32 %v847, %v848
      %v994 = vadd.f32 %v993, %v849
      %v995 = vadd.f32 %v994, %v850
      %996 = vadd.xlane.f32.xlu0 %v995
      %v997 = vpop.xlane.xlu0 %996
      %v998 = vadd.f32 %v851, %v852
      %v999 = vadd.f32 %v998, %v853
      %v1000 = vadd.f32 %v999, %v854
      %1001 = vadd.xlane.f32.xlu0 %v1000
      %v1002 = vpop.xlane.xlu0 %1001
      %v1003 = vadd.f32 %v855, %v856
      %v1004 = vadd.f32 %v1003, %v857
      %v1005 = vadd.f32 %v1004, %v858
      %1006 = vadd.xlane.f32.xlu0 %v1005
      %v1007 = vpop.xlane.xlu0 %1006
      %v1008 = vadd.f32 %v859, %v860
      %v1009 = vadd.f32 %v1008, %v861
      %v1010 = vadd.f32 %v1009, %v862
      %1011 = vadd.xlane.f32.xlu0 %v1010
      %v1012 = vpop.xlane.xlu0 %1011
      %v1013 = vadd.f32 %v863, %v864
      %v1014 = vadd.f32 %v1013, %v865
      %v1015 = vadd.f32 %v1014, %v866
      %1016 = vadd.xlane.f32.xlu0 %v1015
      %v1017 = vpop.xlane.xlu0 %1016
      %v1018 = vadd.f32 %v867, %v868
      %v1019 = vadd.f32 %v1018, %v869
      %v1020 = vadd.f32 %v1019, %v870
      %1021 = vadd.xlane.f32.xlu0 %v1020
      %v1022 = vpop.xlane.xlu0 %1021
      %v1023 = vadd.f32 %v871, %v872
      %v1024 = vadd.f32 %v1023, %v873
      %v1025 = vadd.f32 %v1024, %v874
      %1026 = vadd.xlane.f32.xlu0 %v1025
      %v1027 = vpop.xlane.xlu0 %1026
      %v1028 = vadd.f32 %v875, %v876
      %v1029 = vadd.f32 %v1028, %v877
      %v1030 = vadd.f32 %v1029, %v878
      %1031 = vadd.xlane.f32.xlu0 %v1030
      %v1032 = vpop.xlane.xlu0 %1031
      %v1033 = vadd.f32 %v879, %v880
      %v1034 = vadd.f32 %v1033, %v881
      %v1035 = vadd.f32 %v1034, %v882
      %1036 = vadd.xlane.f32.xlu0 %v1035
      %v1037 = vpop.xlane.xlu0 %1036
      %v1038 = vadd.f32 %v883, %v884
      %v1039 = vadd.f32 %v1038, %v885
      %v1040 = vadd.f32 %v1039, %v886
      %1041 = vadd.xlane.f32.xlu0 %v1040
      %v1042 = vpop.xlane.xlu0 %1041
      %v1043 = vadd.f32 %v887, %v888
      %v1044 = vadd.f32 %v1043, %v889
      %v1045 = vadd.f32 %v1044, %v890
      %1046 = vadd.xlane.f32.xlu0 %v1045
      %v1047 = vpop.xlane.xlu0 %1046
      %v1048 = vadd.f32 %v891, %v892
      %v1049 = vadd.f32 %v1048, %v893
      %v1050 = vadd.f32 %v1049, %v894
      %1051 = vadd.xlane.f32.xlu0 %v1050
      %v1052 = vpop.xlane.xlu0 %1051
      %v1053 = vadd.f32 %v895, %v896
      %v1054 = vadd.f32 %v1053, %v897
      %v1055 = vadd.f32 %v1054, %v898
      %1056 = vadd.xlane.f32.xlu0 %v1055
      %v1057 = vpop.xlane.xlu0 %1056
      %v1058 = vadd.f32 %v899, %v900
      %v1059 = vadd.f32 %v1058, %v901
      %v1060 = vadd.f32 %v1059, %v902
      %1061 = vadd.xlane.f32.xlu0 %v1060
      %v1062 = vpop.xlane.xlu0 %1061
      %v1063 = vld [vmem:[#allocation2] sm:$0x1]
      %v1065 = vperm.slane %v1063, 0
      %v1067 = vadd.f32 %v907, %v1065
      %v1068 = vadd.f32 %v912, %v1065
      %v1069 = vadd.f32 %v917, %v1065
      %v1070 = vadd.f32 %v922, %v1065
      %v1071 = vadd.f32 %v927, %v1065
      %v1072 = vadd.f32 %v932, %v1065
      %v1073 = vadd.f32 %v937, %v1065
      %v1074 = vadd.f32 %v942, %v1065
      %v1075 = vadd.f32 %v947, %v1065
      %v1076 = vadd.f32 %v952, %v1065
      %v1077 = vadd.f32 %v957, %v1065
      %v1078 = vadd.f32 %v962, %v1065
      %v1079 = vadd.f32 %v967, %v1065
      %v1080 = vadd.f32 %v972, %v1065
      %v1081 = vadd.f32 %v977, %v1065
      %v1082 = vadd.f32 %v982, %v1065
      %v1083 = vadd.f32 %v987, %v1065
      %v1084 = vadd.f32 %v992, %v1065
      %v1085 = vadd.f32 %v997, %v1065
      %v1086 = vadd.f32 %v1002, %v1065
      %v1087 = vadd.f32 %v1007, %v1065
      %v1088 = vadd.f32 %v1012, %v1065
      %v1089 = vadd.f32 %v1017, %v1065
      %v1090 = vadd.f32 %v1022, %v1065
      %v1091 = vadd.f32 %v1027, %v1065
      %v1092 = vadd.f32 %v1032, %v1065
      %v1093 = vadd.f32 %v1037, %v1065
      %v1094 = vadd.f32 %v1042, %v1065
      %v1095 = vadd.f32 %v1047, %v1065
      %v1096 = vadd.f32 %v1052, %v1065
      %v1097 = vadd.f32 %v1057, %v1065
      %v1098 = vadd.f32 %v1062, %v1065
      %vm1099 = vcmask 7168
      %1100 = vst.msk [vmem:[%s231] sm:$0xff] %vm1099, %v1067
      %1101 = vst.msk [vmem:[%s231 + $0x8] sm:$0xff] %vm1099, %v1068
      %1102 = vst.msk [vmem:[%s231 + $0x10] sm:$0xff] %vm1099, %v1069
      %1103 = vst.msk [vmem:[%s231 + $0x18] sm:$0xff] %vm1099, %v1070
      %1104 = vst.msk [vmem:[%s231 + $0x20] sm:$0xff] %vm1099, %v1071
      %1105 = vst.msk [vmem:[%s231 + $0x28] sm:$0xff] %vm1099, %v1072
      %1106 = vst.msk [vmem:[%s231 + $0x30] sm:$0xff] %vm1099, %v1073
      %1107 = vst.msk [vmem:[%s231 + $0x38] sm:$0xff] %vm1099, %v1074
      %1108 = vst.msk [vmem:[%s231 + $0x40] sm:$0xff] %vm1099, %v1075
      %1109 = vst.msk [vmem:[%s231 + $0x48] sm:$0xff] %vm1099, %v1076
      %1110 = vst.msk [vmem:[%s231 + $0x50] sm:$0xff] %vm1099, %v1077
      %1111 = vst.msk [vmem:[%s231 + $0x58] sm:$0xff] %vm1099, %v1078
      %1112 = vst.msk [vmem:[%s231 + $0x60] sm:$0xff] %vm1099, %v1079
      %1113 = vst.msk [vmem:[%s231 + $0x68] sm:$0xff] %vm1099, %v1080
      %1114 = vst.msk [vmem:[%s231 + $0x70] sm:$0xff] %vm1099, %v1081
      %1115 = vst.msk [vmem:[%s231 + $0x78] sm:$0xff] %vm1099, %v1082
      %1116 = vst.msk [vmem:[%s231 + $0x80] sm:$0xff] %vm1099, %v1083
      %1117 = vst.msk [vmem:[%s231 + $0x88] sm:$0xff] %vm1099, %v1084
      %1118 = vst.msk [vmem:[%s231 + $0x90] sm:$0xff] %vm1099, %v1085
      %1119 = vst.msk [vmem:[%s231 + $0x98] sm:$0xff] %vm1099, %v1086
      %1120 = vst.msk [vmem:[%s231 + $0xa0] sm:$0xff] %vm1099, %v1087
      %1121 = vst.msk [vmem:[%s231 + $0xa8] sm:$0xff] %vm1099, %v1088
      %1122 = vst.msk [vmem:[%s231 + $0xb0] sm:$0xff] %vm1099, %v1089
      %1123 = vst.msk [vmem:[%s231 + $0xb8] sm:$0xff] %vm1099, %v1090
      %1124 = vst.msk [vmem:[%s231 + $0xc0] sm:$0xff] %vm1099, %v1091
      %1125 = vst.msk [vmem:[%s231 + $0xc8] sm:$0xff] %vm1099, %v1092
      %1126 = vst.msk [vmem:[%s231 + $0xd0] sm:$0xff] %vm1099, %v1093
      %1127 = vst.msk [vmem:[%s231 + $0xd8] sm:$0xff] %vm1099, %v1094
      %1128 = vst.msk [vmem:[%s231 + $0xe0] sm:$0xff] %vm1099, %v1095
      %1129 = vst.msk [vmem:[%s231 + $0xe8] sm:$0xff] %vm1099, %v1096
      %1130 = vst.msk [vmem:[%s231 + $0xf0] sm:$0xff] %vm1099, %v1097
      %1131 = vst.msk [vmem:[%s231 + $0xf8] sm:$0xff] %vm1099, %v1098
      %s1132 = smul.u32 32, %s18
      %p1133 = scmp.lt.s32.totalorder %s1132, 63
      %s1134 = scalar_select %p1133, %s1132, 63
      %s1135 = smul.addr %s1134, 8
      %s1136 = scalar_lea.vmem %s5, %s1135
      // Predicated region
      $region41: #{refinenet_forward.23} parent=39 // pred_check
        %p1137 = pneg %p146
      $region42: #{refinenet_forward.23} parent=39 // pred_check_branch
        %1139 = sbr.rel (%p1137) target = $region44
      $region43: #{refinenet_forward.23} parent=39 // pred_region
        %s1140 = smul.u32 32, %s18
      $region44: #{refinenet_forward.23} parent=39 // pred_fallthru
        _
    $region40: #{refinenet_forward.23} parent=5 // pred_fallthru
      _
    %p1141 = scmp.le.s32.totalorder 2, %s13
    // Predicated region
    $region45: #{refinenet_forward.23} parent=5 // pred_check
      %p1142 = pneg %p1141
    $region46: #{refinenet_forward.23} parent=5 // pred_check_branch
      %1144 = sbr.rel (%p1142) target = $region48
    $region47: #{refinenet_forward.23} parent=5 // pred_region
      %s1145 = ssub.s32 %s13, 2
      // Predicated region
      $region49: #{refinenet_forward.23} parent=47 // pred_check
        %p1146 = pneg %p152
      $region50: #{refinenet_forward.23} parent=47 // pred_check_branch
        %1148 = sbr.rel (%p1146) target = $region52
      $region51: #{refinenet_forward.23} parent=47 // pred_region
        %s1149 = smul.u32 32, %s19
        %p1150 = scmp.lt.s32.totalorder %s1149, 63
        %s1151 = scalar_select %p1150, %s1149, 63
        %s1152 = smul.addr %s1151, 8
        %s1153 = scalar_lea.vmem %s5, %s1152
      $region52: #{refinenet_forward.23} parent=47 // pred_fallthru
        _
    $region48: #{refinenet_forward.23} parent=5 // pred_fallthru
      _
  $region6: #{refinenet_forward.23} parent=0 // loop_footer
    %s17 = sadd.s32 1, %s13
  $region7: #{refinenet_forward.23} parent=0 // loop_footer_branch
    %12 = sbr.rel target = $region3
  $region8: #{refinenet_forward.23} parent=0 // loop_exit
    _

// kernel: refinenet_forward.22
$region0: #{refinenet_forward.22}
  #allocation0 [shape = 'u32[]', space=smem, size = 0x4, offset = 0x4, fixed_abs, tag = 'smem constant byte address 0x4 - core index']
  #allocation1 [shape = 'u32[72,128]{1,0:T(1,128)}', space=vmem, size = 0x9000, scoped, tag = 'internal scratch']
  %s0 = inlined_call_operand.vmem [shape: f32[512,512], index: 0, kind: input, shape index: {}]
  %s1 = inlined_call_operand.vmem [shape: f32[1,512], index: 1, kind: input, shape index: {}]
  %s2 = inlined_call_operand.vmem [shape: f32[1,512], index: 2, kind: input, shape index: {}]
  %s3 = inlined_call_operand.vmem [shape: f32[512,128], index: 3, kind: input, shape index: {}]
  %s4 = inlined_call_operand.vmem [shape: f32[1,512], index: 4, kind: input, shape index: {}]
  %s5 = inlined_call_operand.vmem [shape: f32[512,512], index: 5, kind: output, shape index: {0}]
  %s6 = inlined_call_operand.vmem [shape: f32[2,2,512], index: 6, kind: output, shape index: {1}]
  %7 = xla_tuple %s5, %s6
  %s8 = sld [smem:[#allocation0]]
  $region61: #{refinenet_forward.22} parent=0
    _
  %s10 = ssub.s32 1, %s8
  %s11 = scalar_select 0, %s10, %s8
  loop: start=0, step=1, limit=4
  $region2: #{refinenet_forward.22} parent=0 // loop_pre_header
    _
  $region3: #{refinenet_forward.22} parent=0 // loop_header
    %s13 = sphi 0, %s17
    %p14 = scmp.ge.s32.totalorder %s13, 4
    %s23 = sphi 0, %s25
    %s26 = sphi 0, %s23
    %s27 = sphi 0, %s26
    %s43 = sphi 0, %s27
    %s47 = sphi 0, %s47
    %s49 = sphi 0, %s47
    %s50 = sphi 0, %s49
    %s64 = sphi 0, %s50
    %s68 = sphi 0, %s68
    %s70 = sphi 0, %s68
    %s71 = sphi 0, %s70
    %s85 = sphi 0, %s71
    %s89 = sphi 0, %s89
    %s91 = sphi 0, %s89
    %s92 = sphi 0, %s91
    %s106 = sphi 0, %s92
    %s110 = sphi 0, %s110
    %s112 = sphi 0, %s110
    %s113 = sphi 0, %s112
    %s127 = sphi 0, %s113
    %s133 = sphi 0, %s135
    %s136 = sphi 0, %s133
    %s137 = sphi 0, %s136
    %s153 = sphi 0, %s137
    %s159 = sphi 0, %s161
    %s162 = sphi 0, %s159
    %s163 = sphi 0, %s162
    %s179 = sphi 0, %s163
  $region4: #{refinenet_forward.22} parent=0 // loop_header_branch
    %16 = sbr.rel (%p14) target = $region8
  $region5: #{refinenet_forward.22} parent=0 // loop_body
    %s18 = ssub.s32 %s13, 1
    %s19 = ssub.s32 %s13, 2
    %s20 = sadd.s32 %s13, 1
    %s21 = ssub.s32 %s13, %s20
    %p22 = scmp.eq.s32.totalorder %s21, 0
    %s24 = sadd.s32 %s23, 1
    %s25 = scalar_select %p22, %s23, %s24
    %p28 = pneg %p22
    %p29 = scmp.eq.s32.totalorder %s13, 1
    %p30 = por %p28, %p29
    %p31 = scmp.ne.s32.totalorder %s23, %s26
    %p32 = scmp.eq.s32.totalorder %s13, 0
    %p33 = por %p31, %p32
    %p34 = scmp.ne.s32.totalorder %s23, %s26
    %p35 = scmp.eq.s32.totalorder %s18, 1
    %p36 = por %p34, %p35
    %p37 = scmp.ne.s32.totalorder %s26, %s27
    %p38 = scmp.eq.s32.totalorder %s18, 0
    %p39 = por %p37, %p38
    %p40 = scmp.ne.s32.totalorder %s26, %s27
    %p41 = scmp.eq.s32.totalorder %s19, 1
    %p42 = por %p40, %p41
    %p44 = scmp.ne.s32.totalorder %s27, %s43
    %p45 = scmp.eq.s32.totalorder %s19, 0
    %p46 = por %p44, %p45
    %s48 = sadd.s32 %s47, 1
    %p51 = scmp.eq.s32.totalorder %s13, 1
    %p52 = scmp.ne.s32.totalorder %s47, %s49
    %p53 = scmp.eq.s32.totalorder %s13, 0
    %p54 = por %p52, %p53
    %p55 = scmp.ne.s32.totalorder %s47, %s49
    %p56 = scmp.eq.s32.totalorder %s18, 1
    %p57 = por %p55, %p56
    %p58 = scmp.ne.s32.totalorder %s49, %s50
    %p59 = scmp.eq.s32.totalorder %s18, 0
    %p60 = por %p58, %p59
    %p61 = scmp.ne.s32.totalorder %s49, %s50
    %p62 = scmp.eq.s32.totalorder %s19, 1
    %p63 = por %p61, %p62
    %p65 = scmp.ne.s32.totalorder %s50, %s64
    %p66 = scmp.eq.s32.totalorder %s19, 0
    %p67 = por %p65, %p66
    %s69 = sadd.s32 %s68, 1
    %p72 = scmp.eq.s32.totalorder %s13, 1
    %p73 = scmp.ne.s32.totalorder %s68, %s70
    %p74 = scmp.eq.s32.totalorder %s13, 0
    %p75 = por %p73, %p74
    %p76 = scmp.ne.s32.totalorder %s68, %s70
    %p77 = scmp.eq.s32.totalorder %s18, 1
    %p78 = por %p76, %p77
    %p79 = scmp.ne.s32.totalorder %s70, %s71
    %p80 = scmp.eq.s32.totalorder %s18, 0
    %p81 = por %p79, %p80
    %p82 = scmp.ne.s32.totalorder %s70, %s71
    %p83 = scmp.eq.s32.totalorder %s19, 1
    %p84 = por %p82, %p83
    %p86 = scmp.ne.s32.totalorder %s71, %s85
    %p87 = scmp.eq.s32.totalorder %s19, 0
    %p88 = por %p86, %p87
    %s90 = sadd.s32 %s89, 1
    %p93 = scmp.eq.s32.totalorder %s13, 1
    %p94 = scmp.ne.s32.totalorder %s89, %s91
    %p95 = scmp.eq.s32.totalorder %s13, 0
    %p96 = por %p94, %p95
    %p97 = scmp.ne.s32.totalorder %s89, %s91
    %p98 = scmp.eq.s32.totalorder %s18, 1
    %p99 = por %p97, %p98
    %p100 = scmp.ne.s32.totalorder %s91, %s92
    %p101 = scmp.eq.s32.totalorder %s18, 0
    %p102 = por %p100, %p101
    %p103 = scmp.ne.s32.totalorder %s91, %s92
    %p104 = scmp.eq.s32.totalorder %s19, 1
    %p105 = por %p103, %p104
    %p107 = scmp.ne.s32.totalorder %s92, %s106
    %p108 = scmp.eq.s32.totalorder %s19, 0
    %p109 = por %p107, %p108
    %s111 = sadd.s32 %s110, 1
    %p114 = scmp.eq.s32.totalorder %s13, 1
    %p115 = scmp.ne.s32.totalorder %s110, %s112
    %p116 = scmp.eq.s32.totalorder %s13, 0
    %p117 = por %p115, %p116
    %p118 = scmp.ne.s32.totalorder %s110, %s112
    %p119 = scmp.eq.s32.totalorder %s18, 1
    %p120 = por %p118, %p119
    %p121 = scmp.ne.s32.totalorder %s112, %s113
    %p122 = scmp.eq.s32.totalorder %s18, 0
    %p123 = por %p121, %p122
    %p124 = scmp.ne.s32.totalorder %s112, %s113
    %p125 = scmp.eq.s32.totalorder %s19, 1
    %p126 = por %p124, %p125
    %p128 = scmp.ne.s32.totalorder %s113, %s127
    %p129 = scmp.eq.s32.totalorder %s19, 0
    %p130 = por %p128, %p129
    %s131 = ssub.s32 %s13, %s20
    %p132 = scmp.eq.s32.totalorder %s131, 0
    %s134 = sadd.s32 %s133, 1
    %s135 = scalar_select %p132, %s133, %s134
    %p138 = pneg %p132
    %p139 = scmp.eq.s32.totalorder %s13, 1
    %p140 = por %p138, %p139
    %p141 = scmp.ne.s32.totalorder %s133, %s136
    %p142 = scmp.eq.s32.totalorder %s13, 0
    %p143 = por %p141, %p142
    %p144 = scmp.ne.s32.totalorder %s133, %s136
    %p145 = scmp.eq.s32.totalorder %s18, 1
    %p146 = por %p144, %p145
    %p147 = scmp.ne.s32.totalorder %s136, %s137
    %p148 = scmp.eq.s32.totalorder %s18, 0
    %p149 = por %p147, %p148
    %p150 = scmp.ne.s32.totalorder %s136, %s137
    %p151 = scmp.eq.s32.totalorder %s19, 1
    %p152 = por %p150, %p151
    %p154 = scmp.ne.s32.totalorder %s137, %s153
    %p155 = scmp.eq.s32.totalorder %s19, 0
    %p156 = por %p154, %p155
    %s157 = ssub.s32 %s13, %s20
    %p158 = scmp.eq.s32.totalorder %s157, 0
    %s160 = sadd.s32 %s159, 1
    %s161 = scalar_select %p158, %s159, %s160
    %p164 = pneg %p158
    %p165 = scmp.eq.s32.totalorder %s13, 1
    %p166 = por %p164, %p165
    %p167 = scmp.ne.s32.totalorder %s159, %s162
    %p168 = scmp.eq.s32.totalorder %s13, 0
    %p169 = por %p167, %p168
    %p170 = scmp.ne.s32.totalorder %s159, %s162
    %p171 = scmp.eq.s32.totalorder %s18, 1
    %p172 = por %p170, %p171
    %p173 = scmp.ne.s32.totalorder %s162, %s163
    %p174 = scmp.eq.s32.totalorder %s18, 0
    %p175 = por %p173, %p174
    %p176 = scmp.ne.s32.totalorder %s162, %s163
    %p177 = scmp.eq.s32.totalorder %s19, 1
    %p178 = por %p176, %p177
    %p180 = scmp.ne.s32.totalorder %s163, %s179
    %p181 = scmp.eq.s32.totalorder %s19, 0
    %p182 = por %p180, %p181
    %p183 = scmp.le.s32.totalorder 1, %s13
    %p184 = scmp.lt.s32.totalorder %s13, 3
    %p185 = pnand %p183, %p184
    %p186 = pneg %p185
    // Predicated region
    $region9: #{refinenet_forward.22} parent=5 // pred_check
      _
    $region10: #{refinenet_forward.22} parent=5 // pred_check_branch
      %188 = sbr.rel (%p185) target = $region12
    $region11: #{refinenet_forward.22} parent=5 // pred_region
      %s189 = ssub.s32 %s13, 1
      // Predicated region
      $region13: #{refinenet_forward.22} parent=11 // pred_check
        %p190 = pneg %p60
      $region14: #{refinenet_forward.22} parent=11 // pred_check_branch
        %192 = sbr.rel (%p190) target = $region16
      $region15: #{refinenet_forward.22} parent=11 // pred_region
        _
      $region16: #{refinenet_forward.22} parent=11 // pred_fallthru
        _
      // Predicated region
      $region17: #{refinenet_forward.22} parent=11 // pred_check
        %p193 = pneg %p81
      $region18: #{refinenet_forward.22} parent=11 // pred_check_branch
        %195 = sbr.rel (%p193) target = $region20
      $region19: #{refinenet_forward.22} parent=11 // pred_region
        _
      $region20: #{refinenet_forward.22} parent=11 // pred_fallthru
        _
      // Predicated region
      $region21: #{refinenet_forward.22} parent=11 // pred_check
        %p196 = pneg %p102
      $region22: #{refinenet_forward.22} parent=11 // pred_check_branch
        %198 = sbr.rel (%p196) target = $region24
      $region23: #{refinenet_forward.22} parent=11 // pred_region
        _
      $region24: #{refinenet_forward.22} parent=11 // pred_fallthru
        _
      // Predicated region
      $region25: #{refinenet_forward.22} parent=11 // pred_check
        %p199 = pneg %p123
      $region26: #{refinenet_forward.22} parent=11 // pred_check_branch
        %201 = sbr.rel (%p199) target = $region28
      $region27: #{refinenet_forward.22} parent=11 // pred_region
        _
      $region28: #{refinenet_forward.22} parent=11 // pred_fallthru
        _
    $region12: #{refinenet_forward.22} parent=5 // pred_fallthru
      _
    %p202 = scmp.lt.s32.totalorder %s13, 2
    // Predicated region
    $region29: #{refinenet_forward.22} parent=5 // pred_check
      %p203 = pneg %p202
    $region30: #{refinenet_forward.22} parent=5 // pred_check_branch
      %205 = sbr.rel (%p203) target = $region32
    $region31: #{refinenet_forward.22} parent=5 // pred_region
      // Predicated region
      $region33: #{refinenet_forward.22} parent=31 // pred_check
        %p206 = pneg %p33
      $region34: #{refinenet_forward.22} parent=31 // pred_check_branch
        %208 = sbr.rel (%p206) target = $region36
      $region35: #{refinenet_forward.22} parent=31 // pred_region
        %s209 = smul.u32 32, %s13
        %p210 = scmp.lt.s32.totalorder %s209, 63
        %s211 = scalar_select %p210, %s209, 63
        %s212 = smul.addr %s211, 4
        %s213 = smul.addr %s212, 8
        %s214 = scalar_lea.vmem %s0, %s213
        %s215 = smul.u32 32, %s13
      $region36: #{refinenet_forward.22} parent=31 // pred_fallthru
        _
    $region32: #{refinenet_forward.22} parent=5 // pred_fallthru
      _
    %p216 = scmp.le.s32.totalorder 1, %s13
    %p217 = scmp.lt.s32.totalorder %s13, 3
    %p218 = pnand %p216, %p217
    %p219 = pneg %p218
    // Predicated region
    $region37: #{refinenet_forward.22} parent=5 // pred_check
      _
    $region38: #{refinenet_forward.22} parent=5 // pred_check_branch
      %221 = sbr.rel (%p218) target = $region40
    $region39: #{refinenet_forward.22} parent=5 // pred_region
      %s222 = ssub.s32 %s13, 1
      %s223 = smul.u32 32, %s18
      %p224 = scmp.lt.s32.totalorder %s223, 63
      %s225 = scalar_select %p224, %s223, 63
      %s226 = smul.addr %s225, 4
      %s227 = smul.addr %s226, 8
      %s228 = scalar_lea.vmem %s0, %s227
      %p229 = pneg %p39
      %p230 = pneg %p36
      %p231 = pneg %p60
      %p232 = pneg %p57
      %p233 = pneg %p81
      %p234 = pneg %p78
      %p235 = pneg %p102
      %p236 = pneg %p99
      %p237 = pneg %p123
      %p238 = pneg %p120
      %p239 = pneg %p149
      %p240 = pneg %p146
      %s241 = smul.u32 32, %s18
      %p242 = scmp.lt.s32.totalorder %s241, 63
      %s243 = scalar_select %p242, %s241, 63
      %s244 = smul.addr %s243, 4
      %s245 = smul.addr %s244, 8
      %s246 = scalar_lea.vmem %s5, %s245
      %p247 = pneg %p175
      %p248 = pneg %p172
      %p249 = scmp.lt.s32.totalorder %s18, 1
      %s250 = scalar_select %p249, %s18, 1
      %s251 = smul.addr %s250, 4
      %s252 = smul.addr %s251, 2
      %s253 = scalar_lea.vmem %s6, %s252
      %s254 = smul.u32 32, %s18
      %p255 = scmp.lt.s32.totalorder %s254, 63
      %s256 = scalar_select %p255, %s254, 63
      %s257 = smul.addr %s256, 4
      %s258 = smul.addr %s257, 8
      %s259 = scalar_lea.vmem %s0, %s258
      %s260 = smul.u32 32, %s18
      %s261 = smul.u32 32, %s18
      %p262 = scmp.lt.s32.totalorder %s261, 63
      %s263 = scalar_select %p262, %s261, 63
      %s264 = smul.addr %s263, 4
      %s265 = smul.addr %s264, 8
      %s266 = scalar_lea.vmem %s5, %s265
      %s267 = smul.u32 32, %s18
      %p268 = scmp.lt.s32.totalorder %s18, 1
      %s269 = scalar_select %p268, %s18, 1
      %s270 = smul.addr %s269, 4
      %s271 = smul.addr %s270, 2
      %s272 = scalar_lea.vmem %s6, %s271
      %v273 = vld [vmem:[%s259] sm:$0xff]
      %v274 = vld [vmem:[%s259 + $0x8] sm:$0xff]
      %v275 = vld [vmem:[%s259 + $0x10] sm:$0xff]
      %v276 = vld [vmem:[%s259 + $0x18] sm:$0xff]
      %v277 = vld [vmem:[%s259 + $0x20] sm:$0xff]
      %v278 = vld [vmem:[%s259 + $0x28] sm:$0xff]
      %v279 = vld [vmem:[%s259 + $0x30] sm:$0xff]
      %v280 = vld [vmem:[%s259 + $0x38] sm:$0xff]
      %v281 = vld [vmem:[%s259 + $0x40] sm:$0xff]
      %v282 = vld [vmem:[%s259 + $0x48] sm:$0xff]
      %v283 = vld [vmem:[%s259 + $0x50] sm:$0xff]
      %v284 = vld [vmem:[%s259 + $0x58] sm:$0xff]
      %v285 = vld [vmem:[%s259 + $0x60] sm:$0xff]
      %v286 = vld [vmem:[%s259 + $0x68] sm:$0xff]
      %v287 = vld [vmem:[%s259 + $0x70] sm:$0xff]
      %v288 = vld [vmem:[%s259 + $0x78] sm:$0xff]
      %v289 = vld [vmem:[%s259 + $0x80] sm:$0xff]
      %v290 = vld [vmem:[%s259 + $0x88] sm:$0xff]
      %v291 = vld [vmem:[%s259 + $0x90] sm:$0xff]
      %v292 = vld [vmem:[%s259 + $0x98] sm:$0xff]
      %v293 = vld [vmem:[%s259 + $0xa0] sm:$0xff]
      %v294 = vld [vmem:[%s259 + $0xa8] sm:$0xff]
      %v295 = vld [vmem:[%s259 + $0xb0] sm:$0xff]
      %v296 = vld [vmem:[%s259 + $0xb8] sm:$0xff]
      %v297 = vld [vmem:[%s259 + $0xc0] sm:$0xff]
      %v298 = vld [vmem:[%s259 + $0xc8] sm:$0xff]
      %v299 = vld [vmem:[%s259 + $0xd0] sm:$0xff]
      %v300 = vld [vmem:[%s259 + $0xd8] sm:$0xff]
      %v301 = vld [vmem:[%s259 + $0xe0] sm:$0xff]
      %v302 = vld [vmem:[%s259 + $0xe8] sm:$0xff]
      %v303 = vld [vmem:[%s259 + $0xf0] sm:$0xff]
      %v304 = vld [vmem:[%s259 + $0xf8] sm:$0xff]
      %v305 = vld [vmem:[%s259 + $0x100] sm:$0xff]
      %v306 = vld [vmem:[%s259 + $0x108] sm:$0xff]
      %v307 = vld [vmem:[%s259 + $0x110] sm:$0xff]
      %v308 = vld [vmem:[%s259 + $0x118] sm:$0xff]
      %v309 = vld [vmem:[%s259 + $0x120] sm:$0xff]
      %v310 = vld [vmem:[%s259 + $0x128] sm:$0xff]
      %v311 = vld [vmem:[%s259 + $0x130] sm:$0xff]
      %v312 = vld [vmem:[%s259 + $0x138] sm:$0xff]
      %v313 = vld [vmem:[%s259 + $0x140] sm:$0xff]
      %v314 = vld [vmem:[%s259 + $0x148] sm:$0xff]
      %v315 = vld [vmem:[%s259 + $0x150] sm:$0xff]
      %v316 = vld [vmem:[%s259 + $0x158] sm:$0xff]
      %v317 = vld [vmem:[%s259 + $0x160] sm:$0xff]
      %v318 = vld [vmem:[%s259 + $0x168] sm:$0xff]
      %v319 = vld [vmem:[%s259 + $0x170] sm:$0xff]
      %v320 = vld [vmem:[%s259 + $0x178] sm:$0xff]
      %v321 = vld [vmem:[%s259 + $0x180] sm:$0xff]
      %v322 = vld [vmem:[%s259 + $0x188] sm:$0xff]
      %v323 = vld [vmem:[%s259 + $0x190] sm:$0xff]
      %v324 = vld [vmem:[%s259 + $0x198] sm:$0xff]
      %v325 = vld [vmem:[%s259 + $0x1a0] sm:$0xff]
      %v326 = vld [vmem:[%s259 + $0x1a8] sm:$0xff]
      %v327 = vld [vmem:[%s259 + $0x1b0] sm:$0xff]
      %v328 = vld [vmem:[%s259 + $0x1b8] sm:$0xff]
      %v329 = vld [vmem:[%s259 + $0x1c0] sm:$0xff]
      %v330 = vld [vmem:[%s259 + $0x1c8] sm:$0xff]
      %v331 = vld [vmem:[%s259 + $0x1d0] sm:$0xff]
      %v332 = vld [vmem:[%s259 + $0x1d8] sm:$0xff]
      %v333 = vld [vmem:[%s259 + $0x1e0] sm:$0xff]
      %v334 = vld [vmem:[%s259 + $0x1e8] sm:$0xff]
      %v335 = vld [vmem:[%s259 + $0x1f0] sm:$0xff]
      %v336 = vld [vmem:[%s259 + $0x1f8] sm:$0xff]
      %v337 = vld [vmem:[%s259 + $0x200] sm:$0xff]
      %v338 = vld [vmem:[%s259 + $0x208] sm:$0xff]
      %v339 = vld [vmem:[%s259 + $0x210] sm:$0xff]
      %v340 = vld [vmem:[%s259 + $0x218] sm:$0xff]
      %v341 = vld [vmem:[%s259 + $0x220] sm:$0xff]
      %v342 = vld [vmem:[%s259 + $0x228] sm:$0xff]
      %v343 = vld [vmem:[%s259 + $0x230] sm:$0xff]
      %v344 = vld [vmem:[%s259 + $0x238] sm:$0xff]
      %v345 = vld [vmem:[%s259 + $0x240] sm:$0xff]
      %v346 = vld [vmem:[%s259 + $0x248] sm:$0xff]
      %v347 = vld [vmem:[%s259 + $0x250] sm:$0xff]
      %v348 = vld [vmem:[%s259 + $0x258] sm:$0xff]
      %v349 = vld [vmem:[%s259 + $0x260] sm:$0xff]
      %v350 = vld [vmem:[%s259 + $0x268] sm:$0xff]
      %v351 = vld [vmem:[%s259 + $0x270] sm:$0xff]
      %v352 = vld [vmem:[%s259 + $0x278] sm:$0xff]
      %v353 = vld [vmem:[%s259 + $0x280] sm:$0xff]
      %v354 = vld [vmem:[%s259 + $0x288] sm:$0xff]
      %v355 = vld [vmem:[%s259 + $0x290] sm:$0xff]
      %v356 = vld [vmem:[%s259 + $0x298] sm:$0xff]
      %v357 = vld [vmem:[%s259 + $0x2a0] sm:$0xff]
      %v358 = vld [vmem:[%s259 + $0x2a8] sm:$0xff]
      %v359 = vld [vmem:[%s259 + $0x2b0] sm:$0xff]
      %v360 = vld [vmem:[%s259 + $0x2b8] sm:$0xff]
      %v361 = vld [vmem:[%s259 + $0x2c0] sm:$0xff]
      %v362 = vld [vmem:[%s259 + $0x2c8] sm:$0xff]
      %v363 = vld [vmem:[%s259 + $0x2d0] sm:$0xff]
      %v364 = vld [vmem:[%s259 + $0x2d8] sm:$0xff]
      %v365 = vld [vmem:[%s259 + $0x2e0] sm:$0xff]
      %v366 = vld [vmem:[%s259 + $0x2e8] sm:$0xff]
      %v367 = vld [vmem:[%s259 + $0x2f0] sm:$0xff]
      %v368 = vld [vmem:[%s259 + $0x2f8] sm:$0xff]
      %v369 = vld [vmem:[%s259 + $0x300] sm:$0xff]
      %v370 = vld [vmem:[%s259 + $0x308] sm:$0xff]
      %v371 = vld [vmem:[%s259 + $0x310] sm:$0xff]
      %v372 = vld [vmem:[%s259 + $0x318] sm:$0xff]
      %v373 = vld [vmem:[%s259 + $0x320] sm:$0xff]
      %v374 = vld [vmem:[%s259 + $0x328] sm:$0xff]
      %v375 = vld [vmem:[%s259 + $0x330] sm:$0xff]
      %v376 = vld [vmem:[%s259 + $0x338] sm:$0xff]
      %v377 = vld [vmem:[%s259 + $0x340] sm:$0xff]
      %v378 = vld [vmem:[%s259 + $0x348] sm:$0xff]
      %v379 = vld [vmem:[%s259 + $0x350] sm:$0xff]
      %v380 = vld [vmem:[%s259 + $0x358] sm:$0xff]
      %v381 = vld [vmem:[%s259 + $0x360] sm:$0xff]
      %v382 = vld [vmem:[%s259 + $0x368] sm:$0xff]
      %v383 = vld [vmem:[%s259 + $0x370] sm:$0xff]
      %v384 = vld [vmem:[%s259 + $0x378] sm:$0xff]
      %v385 = vld [vmem:[%s259 + $0x380] sm:$0xff]
      %v386 = vld [vmem:[%s259 + $0x388] sm:$0xff]
      %v387 = vld [vmem:[%s259 + $0x390] sm:$0xff]
      %v388 = vld [vmem:[%s259 + $0x398] sm:$0xff]
      %v389 = vld [vmem:[%s259 + $0x3a0] sm:$0xff]
      %v390 = vld [vmem:[%s259 + $0x3a8] sm:$0xff]
      %v391 = vld [vmem:[%s259 + $0x3b0] sm:$0xff]
      %v392 = vld [vmem:[%s259 + $0x3b8] sm:$0xff]
      %v393 = vld [vmem:[%s259 + $0x3c0] sm:$0xff]
      %v394 = vld [vmem:[%s259 + $0x3c8] sm:$0xff]
      %v395 = vld [vmem:[%s259 + $0x3d0] sm:$0xff]
      %v396 = vld [vmem:[%s259 + $0x3d8] sm:$0xff]
      %v397 = vld [vmem:[%s259 + $0x3e0] sm:$0xff]
      %v398 = vld [vmem:[%s259 + $0x3e8] sm:$0xff]
      %v399 = vld [vmem:[%s259 + $0x3f0] sm:$0xff]
      %v400 = vld [vmem:[%s259 + $0x3f8] sm:$0xff]
      %v401 = vld [vmem:[%s1] sm:$0xf]
      %v403 = vperm.slane %v401, 0
      %v404 = vperm.slane %v401, 1
      %v405 = vperm.slane %v401, 2
      %v406 = vperm.slane %v401, 3
      %v411 = vmul.f32 %v273, %v403
      %v412 = vmul.f32 %v274, %v404
      %v413 = vmul.f32 %v275, %v405
      %v414 = vmul.f32 %v276, %v406
      %v415 = vmul.f32 %v277, %v403
      %v416 = vmul.f32 %v278, %v404
      %v417 = vmul.f32 %v279, %v405
      %v418 = vmul.f32 %v280, %v406
      %v419 = vmul.f32 %v281, %v403
      %v420 = vmul.f32 %v282, %v404
      %v421 = vmul.f32 %v283, %v405
      %v422 = vmul.f32 %v284, %v406
      %v423 = vmul.f32 %v285, %v403
      %v424 = vmul.f32 %v286, %v404
      %v425 = vmul.f32 %v287, %v405
      %v426 = vmul.f32 %v288, %v406
      %v427 = vmul.f32 %v289, %v403
      %v428 = vmul.f32 %v290, %v404
      %v429 = vmul.f32 %v291, %v405
      %v430 = vmul.f32 %v292, %v406
      %v431 = vmul.f32 %v293, %v403
      %v432 = vmul.f32 %v294, %v404
      %v433 = vmul.f32 %v295, %v405
      %v434 = vmul.f32 %v296, %v406
      %v435 = vmul.f32 %v297, %v403
      %v436 = vmul.f32 %v298, %v404
      %v437 = vmul.f32 %v299, %v405
      %v438 = vmul.f32 %v300, %v406
      %v439 = vmul.f32 %v301, %v403
      %v440 = vmul.f32 %v302, %v404
      %v441 = vmul.f32 %v303, %v405
      %v442 = vmul.f32 %v304, %v406
      %v443 = vmul.f32 %v305, %v403
      %v444 = vmul.f32 %v306, %v404
      %v445 = vmul.f32 %v307, %v405
      %v446 = vmul.f32 %v308, %v406
      %v447 = vmul.f32 %v309, %v403
      %v448 = vmul.f32 %v310, %v404
      %v449 = vmul.f32 %v311, %v405
      %v450 = vmul.f32 %v312, %v406
      %v451 = vmul.f32 %v313, %v403
      %v452 = vmul.f32 %v314, %v404
      %v453 = vmul.f32 %v315, %v405
      %v454 = vmul.f32 %v316, %v406
      %v455 = vmul.f32 %v317, %v403
      %v456 = vmul.f32 %v318, %v404
      %v457 = vmul.f32 %v319, %v405
      %v458 = vmul.f32 %v320, %v406
      %v459 = vmul.f32 %v321, %v403
      %v460 = vmul.f32 %v322, %v404
      %v461 = vmul.f32 %v323, %v405
      %v462 = vmul.f32 %v324, %v406
      %v463 = vmul.f32 %v325, %v403
      %v464 = vmul.f32 %v326, %v404
      %v465 = vmul.f32 %v327, %v405
      %v466 = vmul.f32 %v328, %v406
      %v467 = vmul.f32 %v329, %v403
      %v468 = vmul.f32 %v330, %v404
      %v469 = vmul.f32 %v331, %v405
      %v470 = vmul.f32 %v332, %v406
      %v471 = vmul.f32 %v333, %v403
      %v472 = vmul.f32 %v334, %v404
      %v473 = vmul.f32 %v335, %v405
      %v474 = vmul.f32 %v336, %v406
      %v475 = vmul.f32 %v337, %v403
      %v476 = vmul.f32 %v338, %v404
      %v477 = vmul.f32 %v339, %v405
      %v478 = vmul.f32 %v340, %v406
      %v479 = vmul.f32 %v341, %v403
      %v480 = vmul.f32 %v342, %v404
      %v481 = vmul.f32 %v343, %v405
      %v482 = vmul.f32 %v344, %v406
      %v483 = vmul.f32 %v345, %v403
      %v484 = vmul.f32 %v346, %v404
      %v485 = vmul.f32 %v347, %v405
      %v486 = vmul.f32 %v348, %v406
      %v487 = vmul.f32 %v349, %v403
      %v488 = vmul.f32 %v350, %v404
      %v489 = vmul.f32 %v351, %v405
      %v490 = vmul.f32 %v352, %v406
      %v491 = vmul.f32 %v353, %v403
      %v492 = vmul.f32 %v354, %v404
      %v493 = vmul.f32 %v355, %v405
      %v494 = vmul.f32 %v356, %v406
      %v495 = vmul.f32 %v357, %v403
      %v496 = vmul.f32 %v358, %v404
      %v497 = vmul.f32 %v359, %v405
      %v498 = vmul.f32 %v360, %v406
      %v499 = vmul.f32 %v361, %v403
      %v500 = vmul.f32 %v362, %v404
      %v501 = vmul.f32 %v363, %v405
      %v502 = vmul.f32 %v364, %v406
      %v503 = vmul.f32 %v365, %v403
      %v504 = vmul.f32 %v366, %v404
      %v505 = vmul.f32 %v367, %v405
      %v506 = vmul.f32 %v368, %v406
      %v507 = vmul.f32 %v369, %v403
      %v508 = vmul.f32 %v370, %v404
      %v509 = vmul.f32 %v371, %v405
      %v510 = vmul.f32 %v372, %v406
      %v511 = vmul.f32 %v373, %v403
      %v512 = vmul.f32 %v374, %v404
      %v513 = vmul.f32 %v375, %v405
      %v514 = vmul.f32 %v376, %v406
      %v515 = vmul.f32 %v377, %v403
      %v516 = vmul.f32 %v378, %v404
      %v517 = vmul.f32 %v379, %v405
      %v518 = vmul.f32 %v380, %v406
      %v519 = vmul.f32 %v381, %v403
      %v520 = vmul.f32 %v382, %v404
      %v521 = vmul.f32 %v383, %v405
      %v522 = vmul.f32 %v384, %v406
      %v523 = vmul.f32 %v385, %v403
      %v524 = vmul.f32 %v386, %v404
      %v525 = vmul.f32 %v387, %v405
      %v526 = vmul.f32 %v388, %v406
      %v527 = vmul.f32 %v389, %v403
      %v528 = vmul.f32 %v390, %v404
      %v529 = vmul.f32 %v391, %v405
      %v530 = vmul.f32 %v392, %v406
      %v531 = vmul.f32 %v393, %v403
      %v532 = vmul.f32 %v394, %v404
      %v533 = vmul.f32 %v395, %v405
      %v534 = vmul.f32 %v396, %v406
      %v535 = vmul.f32 %v397, %v403
      %v536 = vmul.f32 %v398, %v404
      %v537 = vmul.f32 %v399, %v405
      %v538 = vmul.f32 %v400, %v406
      %v539 = vld [vmem:[%s2] sm:$0xf]
      %v541 = vperm.slane %v539, 0
      %v542 = vperm.slane %v539, 1
      %v543 = vperm.slane %v539, 2
      %v544 = vperm.slane %v539, 3
      %v549 = vadd.f32 %v411, %v541
      %v550 = vadd.f32 %v412, %v542
      %v551 = vadd.f32 %v413, %v543
      %v552 = vadd.f32 %v414, %v544
      %v553 = vadd.f32 %v415, %v541
      %v554 = vadd.f32 %v416, %v542
      %v555 = vadd.f32 %v417, %v543
      %v556 = vadd.f32 %v418, %v544
      %v557 = vadd.f32 %v419, %v541
      %v558 = vadd.f32 %v420, %v542
      %v559 = vadd.f32 %v421, %v543
      %v560 = vadd.f32 %v422, %v544
      %v561 = vadd.f32 %v423, %v541
      %v562 = vadd.f32 %v424, %v542
      %v563 = vadd.f32 %v425, %v543
      %v564 = vadd.f32 %v426, %v544
      %v565 = vadd.f32 %v427, %v541
      %v566 = vadd.f32 %v428, %v542
      %v567 = vadd.f32 %v429, %v543
      %v568 = vadd.f32 %v430, %v544
      %v569 = vadd.f32 %v431, %v541
      %v570 = vadd.f32 %v432, %v542
      %v571 = vadd.f32 %v433, %v543
      %v572 = vadd.f32 %v434, %v544
      %v573 = vadd.f32 %v435, %v541
      %v574 = vadd.f32 %v436, %v542
      %v575 = vadd.f32 %v437, %v543
      %v576 = vadd.f32 %v438, %v544
      %v577 = vadd.f32 %v439, %v541
      %v578 = vadd.f32 %v440, %v542
      %v579 = vadd.f32 %v441, %v543
      %v580 = vadd.f32 %v442, %v544
      %v581 = vadd.f32 %v443, %v541
      %v582 = vadd.f32 %v444, %v542
      %v583 = vadd.f32 %v445, %v543
      %v584 = vadd.f32 %v446, %v544
      %v585 = vadd.f32 %v447, %v541
      %v586 = vadd.f32 %v448, %v542
      %v587 = vadd.f32 %v449, %v543
      %v588 = vadd.f32 %v450, %v544
      %v589 = vadd.f32 %v451, %v541
      %v590 = vadd.f32 %v452, %v542
      %v591 = vadd.f32 %v453, %v543
      %v592 = vadd.f32 %v454, %v544
      %v593 = vadd.f32 %v455, %v541
      %v594 = vadd.f32 %v456, %v542
      %v595 = vadd.f32 %v457, %v543
      %v596 = vadd.f32 %v458, %v544
      %v597 = vadd.f32 %v459, %v541
      %v598 = vadd.f32 %v460, %v542
      %v599 = vadd.f32 %v461, %v543
      %v600 = vadd.f32 %v462, %v544
      %v601 = vadd.f32 %v463, %v541
      %v602 = vadd.f32 %v464, %v542
      %v603 = vadd.f32 %v465, %v543
      %v604 = vadd.f32 %v466, %v544
      %v605 = vadd.f32 %v467, %v541
      %v606 = vadd.f32 %v468, %v542
      %v607 = vadd.f32 %v469, %v543
      %v608 = vadd.f32 %v470, %v544
      %v609 = vadd.f32 %v471, %v541
      %v610 = vadd.f32 %v472, %v542
      %v611 = vadd.f32 %v473, %v543
      %v612 = vadd.f32 %v474, %v544
      %v613 = vadd.f32 %v475, %v541
      %v614 = vadd.f32 %v476, %v542
      %v615 = vadd.f32 %v477, %v543
      %v616 = vadd.f32 %v478, %v544
      %v617 = vadd.f32 %v479, %v541
      %v618 = vadd.f32 %v480, %v542
      %v619 = vadd.f32 %v481, %v543
      %v620 = vadd.f32 %v482, %v544
      %v621 = vadd.f32 %v483, %v541
      %v622 = vadd.f32 %v484, %v542
      %v623 = vadd.f32 %v485, %v543
      %v624 = vadd.f32 %v486, %v544
      %v625 = vadd.f32 %v487, %v541
      %v626 = vadd.f32 %v488, %v542
      %v627 = vadd.f32 %v489, %v543
      %v628 = vadd.f32 %v490, %v544
      %v629 = vadd.f32 %v491, %v541
      %v630 = vadd.f32 %v492, %v542
      %v631 = vadd.f32 %v493, %v543
      %v632 = vadd.f32 %v494, %v544
      %v633 = vadd.f32 %v495, %v541
      %v634 = vadd.f32 %v496, %v542
      %v635 = vadd.f32 %v497, %v543
      %v636 = vadd.f32 %v498, %v544
      %v637 = vadd.f32 %v499, %v541
      %v638 = vadd.f32 %v500, %v542
      %v639 = vadd.f32 %v501, %v543
      %v640 = vadd.f32 %v502, %v544
      %v641 = vadd.f32 %v503, %v541
      %v642 = vadd.f32 %v504, %v542
      %v643 = vadd.f32 %v505, %v543
      %v644 = vadd.f32 %v506, %v544
      %v645 = vadd.f32 %v507, %v541
      %v646 = vadd.f32 %v508, %v542
      %v647 = vadd.f32 %v509, %v543
      %v648 = vadd.f32 %v510, %v544
      %v649 = vadd.f32 %v511, %v541
      %v650 = vadd.f32 %v512, %v542
      %v651 = vadd.f32 %v513, %v543
      %v652 = vadd.f32 %v514, %v544
      %v653 = vadd.f32 %v515, %v541
      %v654 = vadd.f32 %v516, %v542
      %v655 = vadd.f32 %v517, %v543
      %v656 = vadd.f32 %v518, %v544
      %v657 = vadd.f32 %v519, %v541
      %v658 = vadd.f32 %v520, %v542
      %v659 = vadd.f32 %v521, %v543
      %v660 = vadd.f32 %v522, %v544
      %v661 = vadd.f32 %v523, %v541
      %v662 = vadd.f32 %v524, %v542
      %v663 = vadd.f32 %v525, %v543
      %v664 = vadd.f32 %v526, %v544
      %v665 = vadd.f32 %v527, %v541
      %v666 = vadd.f32 %v528, %v542
      %v667 = vadd.f32 %v529, %v543
      %v668 = vadd.f32 %v530, %v544
      %v669 = vadd.f32 %v531, %v541
      %v670 = vadd.f32 %v532, %v542
      %v671 = vadd.f32 %v533, %v543
      %v672 = vadd.f32 %v534, %v544
      %v673 = vadd.f32 %v535, %v541
      %v674 = vadd.f32 %v536, %v542
      %v675 = vadd.f32 %v537, %v543
      %v676 = vadd.f32 %v538, %v544
      %v677 = vmax.f32 %v549, 0.0
      %v678 = vmax.f32 %v550, 0.0
      %v679 = vmax.f32 %v551, 0.0
      %v680 = vmax.f32 %v552, 0.0
      %v681 = vmax.f32 %v553, 0.0
      %v682 = vmax.f32 %v554, 0.0
      %v683 = vmax.f32 %v555, 0.0
      %v684 = vmax.f32 %v556, 0.0
      %v685 = vmax.f32 %v557, 0.0
      %v686 = vmax.f32 %v558, 0.0
      %v687 = vmax.f32 %v559, 0.0
      %v688 = vmax.f32 %v560, 0.0
      %v689 = vmax.f32 %v561, 0.0
      %v690 = vmax.f32 %v562, 0.0
      %v691 = vmax.f32 %v563, 0.0
      %v692 = vmax.f32 %v564, 0.0
      %v693 = vmax.f32 %v565, 0.0
      %v694 = vmax.f32 %v566, 0.0
      %v695 = vmax.f32 %v567, 0.0
      %v696 = vmax.f32 %v568, 0.0
      %v697 = vmax.f32 %v569, 0.0
      %v698 = vmax.f32 %v570, 0.0
      %v699 = vmax.f32 %v571, 0.0
      %v700 = vmax.f32 %v572, 0.0
      %v701 = vmax.f32 %v573, 0.0
      %v702 = vmax.f32 %v574, 0.0
      %v703 = vmax.f32 %v575, 0.0
      %v704 = vmax.f32 %v576, 0.0
      %v705 = vmax.f32 %v577, 0.0
      %v706 = vmax.f32 %v578, 0.0
      %v707 = vmax.f32 %v579, 0.0
      %v708 = vmax.f32 %v580, 0.0
      %v709 = vmax.f32 %v581, 0.0
      %v710 = vmax.f32 %v582, 0.0
      %v711 = vmax.f32 %v583, 0.0
      %v712 = vmax.f32 %v584, 0.0
      %v713 = vmax.f32 %v585, 0.0
      %v714 = vmax.f32 %v586, 0.0
      %v715 = vmax.f32 %v587, 0.0
      %v716 = vmax.f32 %v588, 0.0
      %v717 = vmax.f32 %v589, 0.0
      %v718 = vmax.f32 %v590, 0.0
      %v719 = vmax.f32 %v591, 0.0
      %v720 = vmax.f32 %v592, 0.0
      %v721 = vmax.f32 %v593, 0.0
      %v722 = vmax.f32 %v594, 0.0
      %v723 = vmax.f32 %v595, 0.0
      %v724 = vmax.f32 %v596, 0.0
      %v725 = vmax.f32 %v597, 0.0
      %v726 = vmax.f32 %v598, 0.0
      %v727 = vmax.f32 %v599, 0.0
      %v728 = vmax.f32 %v600, 0.0
      %v729 = vmax.f32 %v601, 0.0
      %v730 = vmax.f32 %v602, 0.0
      %v731 = vmax.f32 %v603, 0.0
      %v732 = vmax.f32 %v604, 0.0
      %v733 = vmax.f32 %v605, 0.0
      %v734 = vmax.f32 %v606, 0.0
      %v735 = vmax.f32 %v607, 0.0
      %v736 = vmax.f32 %v608, 0.0
      %v737 = vmax.f32 %v609, 0.0
      %v738 = vmax.f32 %v610, 0.0
      %v739 = vmax.f32 %v611, 0.0
      %v740 = vmax.f32 %v612, 0.0
      %v741 = vmax.f32 %v613, 0.0
      %v742 = vmax.f32 %v614, 0.0
      %v743 = vmax.f32 %v615, 0.0
      %v744 = vmax.f32 %v616, 0.0
      %v745 = vmax.f32 %v617, 0.0
      %v746 = vmax.f32 %v618, 0.0
      %v747 = vmax.f32 %v619, 0.0
      %v748 = vmax.f32 %v620, 0.0
      %v749 = vmax.f32 %v621, 0.0
      %v750 = vmax.f32 %v622, 0.0
      %v751 = vmax.f32 %v623, 0.0
      %v752 = vmax.f32 %v624, 0.0
      %v753 = vmax.f32 %v625, 0.0
      %v754 = vmax.f32 %v626, 0.0
      %v755 = vmax.f32 %v627, 0.0
      %v756 = vmax.f32 %v628, 0.0
      %v757 = vmax.f32 %v629, 0.0
      %v758 = vmax.f32 %v630, 0.0
      %v759 = vmax.f32 %v631, 0.0
      %v760 = vmax.f32 %v632, 0.0
      %v761 = vmax.f32 %v633, 0.0
      %v762 = vmax.f32 %v634, 0.0
      %v763 = vmax.f32 %v635, 0.0
      %v764 = vmax.f32 %v636, 0.0
      %v765 = vmax.f32 %v637, 0.0
      %v766 = vmax.f32 %v638, 0.0
      %v767 = vmax.f32 %v639, 0.0
      %v768 = vmax.f32 %v640, 0.0
      %v769 = vmax.f32 %v641, 0.0
      %v770 = vmax.f32 %v642, 0.0
      %v771 = vmax.f32 %v643, 0.0
      %v772 = vmax.f32 %v644, 0.0
      %v773 = vmax.f32 %v645, 0.0
      %v774 = vmax.f32 %v646, 0.0
      %v775 = vmax.f32 %v647, 0.0
      %v776 = vmax.f32 %v648, 0.0
      %v777 = vmax.f32 %v649, 0.0
      %v778 = vmax.f32 %v650, 0.0
      %v779 = vmax.f32 %v651, 0.0
      %v780 = vmax.f32 %v652, 0.0
      %v781 = vmax.f32 %v653, 0.0
      %v782 = vmax.f32 %v654, 0.0
      %v783 = vmax.f32 %v655, 0.0
      %v784 = vmax.f32 %v656, 0.0
      %v785 = vmax.f32 %v657, 0.0
      %v786 = vmax.f32 %v658, 0.0
      %v787 = vmax.f32 %v659, 0.0
      %v788 = vmax.f32 %v660, 0.0
      %v789 = vmax.f32 %v661, 0.0
      %v790 = vmax.f32 %v662, 0.0
      %v791 = vmax.f32 %v663, 0.0
      %v792 = vmax.f32 %v664, 0.0
      %v793 = vmax.f32 %v665, 0.0
      %v794 = vmax.f32 %v666, 0.0
      %v795 = vmax.f32 %v667, 0.0
      %v796 = vmax.f32 %v668, 0.0
      %v797 = vmax.f32 %v669, 0.0
      %v798 = vmax.f32 %v670, 0.0
      %v799 = vmax.f32 %v671, 0.0
      %v800 = vmax.f32 %v672, 0.0
      %v801 = vmax.f32 %v673, 0.0
      %v802 = vmax.f32 %v674, 0.0
      %v803 = vmax.f32 %v675, 0.0
      %v804 = vmax.f32 %v676, 0.0
      %v805 = vld [vmem:[%s3] sm:$0xff]
      %v806 = vld [vmem:[%s3 + $0x8] sm:$0xff]
      %v807 = vld [vmem:[%s3 + $0x10] sm:$0xff]
      %v808 = vld [vmem:[%s3 + $0x18] sm:$0xff]
      %v809 = vld [vmem:[%s3 + $0x20] sm:$0xff]
      %v810 = vld [vmem:[%s3 + $0x28] sm:$0xff]
      %v811 = vld [vmem:[%s3 + $0x30] sm:$0xff]
      %v812 = vld [vmem:[%s3 + $0x38] sm:$0xff]
      %v813 = vld [vmem:[%s3 + $0x40] sm:$0xff]
      %v814 = vld [vmem:[%s3 + $0x48] sm:$0xff]
      %v815 = vld [vmem:[%s3 + $0x50] sm:$0xff]
      %v816 = vld [vmem:[%s3 + $0x58] sm:$0xff]
      %v817 = vld [vmem:[%s3 + $0x60] sm:$0xff]
      %v818 = vld [vmem:[%s3 + $0x68] sm:$0xff]
      %v819 = vld [vmem:[%s3 + $0x70] sm:$0xff]
      %v820 = vld [vmem:[%s3 + $0x78] sm:$0xff]
      %821 = vmatpush.msra.mxu0 %v820
      %822 = vmatpush.msra.mxu0 %v819
      %823 = vmatpush.msra.mxu0 %v818
      %824 = vmatpush.msra.mxu0 %v817
      %825 = vmatpush.msra.mxu0 %v816
      %826 = vmatpush.msra.mxu0 %v815
      %827 = vmatpush.msra.mxu0 %v814
      %828 = vmatpush.msra.mxu0 %v813
      %829 = vmatpush.msra.mxu0 %v812
      %830 = vmatpush.msra.mxu0 %v811
      %831 = vmatpush.msra.mxu0 %v810
      %832 = vmatpush.msra.mxu0 %v809
      %833 = vmatpush.msra.mxu0 %v808
      %834 = vmatpush.msra.mxu0 %v807
      %835 = vmatpush.msra.mxu0 %v806
      %836 = vmatpush.msra.mxu0 %v805
      %837 = vmatmul.f32.gmra.mxu0 %v677
      %v838 = vpop.f32.mrf.mxu0
      %v839 = vadd.f32 0.0, %v838
      %840 = vmatmul.f32.gmra.mxu0 %v681
      %v841 = vpop.f32.mrf.mxu0
      %v842 = vadd.f32 0.0, %v841
      %843 = vmatmul.f32.gmra.mxu0 %v685
      %v844 = vpop.f32.mrf.mxu0
      %v845 = vadd.f32 0.0, %v844
      %846 = vmatmul.f32.gmra.mxu0 %v689
      %v847 = vpop.f32.mrf.mxu0
      %v848 = vadd.f32 0.0, %v847
      %849 = vmatmul.f32.gmra.mxu0 %v693
      %v850 = vpop.f32.mrf.mxu0
      %v851 = vadd.f32 0.0, %v850
      %852 = vmatmul.f32.gmra.mxu0 %v697
      %v853 = vpop.f32.mrf.mxu0
      %v854 = vadd.f32 0.0, %v853
      %855 = vmatmul.f32.gmra.mxu0 %v701
      %v856 = vpop.f32.mrf.mxu0
      %v857 = vadd.f32 0.0, %v856
      %858 = vmatmul.f32.gmra.mxu0 %v705
      %v859 = vpop.f32.mrf.mxu0
      %v860 = vadd.f32 0.0, %v859
      %861 = vmatmul.f32.gmra.mxu0 %v709
      %v862 = vpop.f32.mrf.mxu0
      %v863 = vadd.f32 0.0, %v862
      %864 = vmatmul.f32.gmra.mxu0 %v713
      %v865 = vpop.f32.mrf.mxu0
      %v866 = vadd.f32 0.0, %v865
      %867 = vmatmul.f32.gmra.mxu0 %v717
      %v868 = vpop.f32.mrf.mxu0
      %v869 = vadd.f32 0.0, %v868
      %870 = vmatmul.f32.gmra.mxu0 %v721
      %v871 = vpop.f32.mrf.mxu0
      %v872 = vadd.f32 0.0, %v871
      %873 = vmatmul.f32.gmra.mxu0 %v725
      %v874 = vpop.f32.mrf.mxu0
      %v875 = vadd.f32 0.0, %v874
      %876 = vmatmul.f32.gmra.mxu0 %v729
      %v877 = vpop.f32.mrf.mxu0
      %v878 = vadd.f32 0.0, %v877
      %879 = vmatmul.f32.gmra.mxu0 %v733
      %v880 = vpop.f32.mrf.mxu0
      %v881 = vadd.f32 0.0, %v880
      %882 = vmatmul.f32.gmra.mxu0 %v737
      %v883 = vpop.f32.mrf.mxu0
      %v884 = vadd.f32 0.0, %v883
      %885 = vmatmul.f32.gmra.mxu0 %v741
      %v886 = vpop.f32.mrf.mxu0
      %v887 = vadd.f32 0.0, %v886
      %888 = vmatmul.f32.gmra.mxu0 %v745
      %v889 = vpop.f32.mrf.mxu0
      %v890 = vadd.f32 0.0, %v889
      %891 = vmatmul.f32.gmra.mxu0 %v749
      %v892 = vpop.f32.mrf.mxu0
      %v893 = vadd.f32 0.0, %v892
      %894 = vmatmul.f32.gmra.mxu0 %v753
      %v895 = vpop.f32.mrf.mxu0
      %v896 = vadd.f32 0.0, %v895
      %897 = vmatmul.f32.gmra.mxu0 %v757
      %v898 = vpop.f32.mrf.mxu0
      %v899 = vadd.f32 0.0, %v898
      %900 = vmatmul.f32.gmra.mxu0 %v761
      %v901 = vpop.f32.mrf.mxu0
      %v902 = vadd.f32 0.0, %v901
      %903 = vmatmul.f32.gmra.mxu0 %v765
      %v904 = vpop.f32.mrf.mxu0
      %v905 = vadd.f32 0.0, %v904
      %906 = vmatmul.f32.gmra.mxu0 %v769
      %v907 = vpop.f32.mrf.mxu0
      %v908 = vadd.f32 0.0, %v907
      %909 = vmatmul.f32.gmra.mxu0 %v773
      %v910 = vpop.f32.mrf.mxu0
      %v911 = vadd.f32 0.0, %v910
      %912 = vmatmul.f32.gmra.mxu0 %v777
      %v913 = vpop.f32.mrf.mxu0
      %v914 = vadd.f32 0.0, %v913
      %915 = vmatmul.f32.gmra.mxu0 %v781
      %v916 = vpop.f32.mrf.mxu0
      %v917 = vadd.f32 0.0, %v916
      %918 = vmatmul.f32.gmra.mxu0 %v785
      %v919 = vpop.f32.mrf.mxu0
      %v920 = vadd.f32 0.0, %v919
      %921 = vmatmul.f32.gmra.mxu0 %v789
      %v922 = vpop.f32.mrf.mxu0
      %v923 = vadd.f32 0.0, %v922
      %924 = vmatmul.f32.gmra.mxu0 %v793
      %v925 = vpop.f32.mrf.mxu0
      %v926 = vadd.f32 0.0, %v925
      %927 = vmatmul.f32.gmra.mxu0 %v797
      %v928 = vpop.f32.mrf.mxu0
      %v929 = vadd.f32 0.0, %v928
      %930 = vmatmul.f32.gmra.mxu0 %v801
      %v931 = vpop.f32.mrf.mxu0
      %v932 = vadd.f32 0.0, %v931
      %933 = vdwg.mxu0
      %v934 = vld [vmem:[%s3 + $0x80] sm:$0xff]
      %v935 = vld [vmem:[%s3 + $0x88] sm:$0xff]
      %v936 = vld [vmem:[%s3 + $0x90] sm:$0xff]
      %v937 = vld [vmem:[%s3 + $0x98] sm:$0xff]
      %v938 = vld [vmem:[%s3 + $0xa0] sm:$0xff]
      %v939 = vld [vmem:[%s3 + $0xa8] sm:$0xff]
      %v940 = vld [vmem:[%s3 + $0xb0] sm:$0xff]
      %v941 = vld [vmem:[%s3 + $0xb8] sm:$0xff]
      %v942 = vld [vmem:[%s3 + $0xc0] sm:$0xff]
      %v943 = vld [vmem:[%s3 + $0xc8] sm:$0xff]
      %v944 = vld [vmem:[%s3 + $0xd0] sm:$0xff]
      %v945 = vld [vmem:[%s3 + $0xd8] sm:$0xff]
      %v946 = vld [vmem:[%s3 + $0xe0] sm:$0xff]
      %v947 = vld [vmem:[%s3 + $0xe8] sm:$0xff]
      %v948 = vld [vmem:[%s3 + $0xf0] sm:$0xff]
      %v949 = vld [vmem:[%s3 + $0xf8] sm:$0xff]
      %950 = vmatpush.msra.mxu0 %v949
      %951 = vmatpush.msra.mxu0 %v948
      %952 = vmatpush.msra.mxu0 %v947
      %953 = vmatpush.msra.mxu0 %v946
      %954 = vmatpush.msra.mxu0 %v945
      %955 = vmatpush.msra.mxu0 %v944
      %956 = vmatpush.msra.mxu0 %v943
      %957 = vmatpush.msra.mxu0 %v942
      %958 = vmatpush.msra.mxu0 %v941
      %959 = vmatpush.msra.mxu0 %v940
      %960 = vmatpush.msra.mxu0 %v939
      %961 = vmatpush.msra.mxu0 %v938
      %962 = vmatpush.msra.mxu0 %v937
      %963 = vmatpush.msra.mxu0 %v936
      %964 = vmatpush.msra.mxu0 %v935
      %965 = vmatpush.msra.mxu0 %v934
      %966 = vmatmul.f32.gmra.mxu0 %v678
      %v967 = vpop.f32.mrf.mxu0
      %v968 = vadd.f32 0.0, %v967
      %969 = vmatmul.f32.gmra.mxu0 %v682
      %v970 = vpop.f32.mrf.mxu0
      %v971 = vadd.f32 0.0, %v970
      %972 = vmatmul.f32.gmra.mxu0 %v686
      %v973 = vpop.f32.mrf.mxu0
      %v974 = vadd.f32 0.0, %v973
      %975 = vmatmul.f32.gmra.mxu0 %v690
      %v976 = vpop.f32.mrf.mxu0
      %v977 = vadd.f32 0.0, %v976
      %978 = vmatmul.f32.gmra.mxu0 %v694
      %v979 = vpop.f32.mrf.mxu0
      %v980 = vadd.f32 0.0, %v979
      %981 = vmatmul.f32.gmra.mxu0 %v698
      %v982 = vpop.f32.mrf.mxu0
      %v983 = vadd.f32 0.0, %v982
      %984 = vmatmul.f32.gmra.mxu0 %v702
      %v985 = vpop.f32.mrf.mxu0
      %v986 = vadd.f32 0.0, %v985
      %987 = vmatmul.f32.gmra.mxu0 %v706
      %v988 = vpop.f32.mrf.mxu0
      %v989 = vadd.f32 0.0, %v988
      %990 = vmatmul.f32.gmra.mxu0 %v710
      %v991 = vpop.f32.mrf.mxu0
      %v992 = vadd.f32 0.0, %v991
      %993 = vmatmul.f32.gmra.mxu0 %v714
      %v994 = vpop.f32.mrf.mxu0
      %v995 = vadd.f32 0.0, %v994
      %996 = vmatmul.f32.gmra.mxu0 %v718
      %v997 = vpop.f32.mrf.mxu0
      %v998 = vadd.f32 0.0, %v997
      %999 = vmatmul.f32.gmra.mxu0 %v722
      %v1000 = vpop.f32.mrf.mxu0
      %v1001 = vadd.f32 0.0, %v1000
      %1002 = vmatmul.f32.gmra.mxu0 %v726
      %v1003 = vpop.f32.mrf.mxu0
      %v1004 = vadd.f32 0.0, %v1003
      %1005 = vmatmul.f32.gmra.mxu0 %v730
      %v1006 = vpop.f32.mrf.mxu0
      %v1007 = vadd.f32 0.0, %v1006
      %1008 = vmatmul.f32.gmra.mxu0 %v734
      %v1009 = vpop.f32.mrf.mxu0
      %v1010 = vadd.f32 0.0, %v1009
      %1011 = vmatmul.f32.gmra.mxu0 %v738
      %v1012 = vpop.f32.mrf.mxu0
      %v1013 = vadd.f32 0.0, %v1012
      %1014 = vmatmul.f32.gmra.mxu0 %v742
      %v1015 = vpop.f32.mrf.mxu0
      %v1016 = vadd.f32 0.0, %v1015
      %1017 = vmatmul.f32.gmra.mxu0 %v746
      %v1018 = vpop.f32.mrf.mxu0
      %v1019 = vadd.f32 0.0, %v1018
      %1020 = vmatmul.f32.gmra.mxu0 %v750
      %v1021 = vpop.f32.mrf.mxu0
      %v1022 = vadd.f32 0.0, %v1021
      %1023 = vmatmul.f32.gmra.mxu0 %v754
      %v1024 = vpop.f32.mrf.mxu0
      %v1025 = vadd.f32 0.0, %v1024
      %1026 = vmatmul.f32.gmra.mxu0 %v758
      %v1027 = vpop.f32.mrf.mxu0
      %v1028 = vadd.f32 0.0, %v1027
      %1029 = vmatmul.f32.gmra.mxu0 %v762
      %v1030 = vpop.f32.mrf.mxu0
      %v1031 = vadd.f32 0.0, %v1030
      %1032 = vmatmul.f32.gmra.mxu0 %v766
      %v1033 = vpop.f32.mrf.mxu0
      %v1034 = vadd.f32 0.0, %v1033
      %1035 = vmatmul.f32.gmra.mxu0 %v770
      %v1036 = vpop.f32.mrf.mxu0
      %v1037 = vadd.f32 0.0, %v1036
      %1038 = vmatmul.f32.gmra.mxu0 %v774
      %v1039 = vpop.f32.mrf.mxu0
      %v1040 = vadd.f32 0.0, %v1039
      %1041 = vmatmul.f32.gmra.mxu0 %v778
      %v1042 = vpop.f32.mrf.mxu0
      %v1043 = vadd.f32 0.0, %v1042
      %1044 = vmatmul.f32.gmra.mxu0 %v782
      %v1045 = vpop.f32.mrf.mxu0
      %v1046 = vadd.f32 0.0, %v1045
      %1047 = vmatmul.f32.gmra.mxu0 %v786
      %v1048 = vpop.f32.mrf.mxu0
      %v1049 = vadd.f32 0.0, %v1048
      %1050 = vmatmul.f32.gmra.mxu0 %v790
      %v1051 = vpop.f32.mrf.mxu0
      %v1052 = vadd.f32 0.0, %v1051
      %1053 = vmatmul.f32.gmra.mxu0 %v794
      %v1054 = vpop.f32.mrf.mxu0
      %v1055 = vadd.f32 0.0, %v1054
      %1056 = vmatmul.f32.gmra.mxu0 %v798
      %v1057 = vpop.f32.mrf.mxu0
      %v1058 = vadd.f32 0.0, %v1057
      %1059 = vmatmul.f32.gmra.mxu0 %v802
      %v1060 = vpop.f32.mrf.mxu0
      %v1061 = vadd.f32 0.0, %v1060
      %1062 = vdwg.mxu0
      %v1063 = vld [vmem:[%s3 + $0x100] sm:$0xff]
      %v1064 = vld [vmem:[%s3 + $0x108] sm:$0xff]
      %v1065 = vld [vmem:[%s3 + $0x110] sm:$0xff]
      %v1066 = vld [vmem:[%s3 + $0x118] sm:$0xff]
      %v1067 = vld [vmem:[%s3 + $0x120] sm:$0xff]
      %v1068 = vld [vmem:[%s3 + $0x128] sm:$0xff]
      %v1069 = vld [vmem:[%s3 + $0x130] sm:$0xff]
      %v1070 = vld [vmem:[%s3 + $0x138] sm:$0xff]
      %v1071 = vld [vmem:[%s3 + $0x140] sm:$0xff]
      %v1072 = vld [vmem:[%s3 + $0x148] sm:$0xff]
      %v1073 = vld [vmem:[%s3 + $0x150] sm:$0xff]
      %v1074 = vld [vmem:[%s3 + $0x158] sm:$0xff]
      %v1075 = vld [vmem:[%s3 + $0x160] sm:$0xff]
      %v1076 = vld [vmem:[%s3 + $0x168] sm:$0xff]
      %v1077 = vld [vmem:[%s3 + $0x170] sm:$0xff]
      %v1078 = vld [vmem:[%s3 + $0x178] sm:$0xff]
      %1079 = vmatpush.msra.mxu0 %v1078
      %1080 = vmatpush.msra.mxu0 %v1077
      %1081 = vmatpush.msra.mxu0 %v1076
      %1082 = vmatpush.msra.mxu0 %v1075
      %1083 = vmatpush.msra.mxu0 %v1074
      %1084 = vmatpush.msra.mxu0 %v1073
      %1085 = vmatpush.msra.mxu0 %v1072
      %1086 = vmatpush.msra.mxu0 %v1071
      %1087 = vmatpush.msra.mxu0 %v1070
      %1088 = vmatpush.msra.mxu0 %v1069
      %1089 = vmatpush.msra.mxu0 %v1068
      %1090 = vmatpush.msra.mxu0 %v1067
      %1091 = vmatpush.msra.mxu0 %v1066
      %1092 = vmatpush.msra.mxu0 %v1065
      %1093 = vmatpush.msra.mxu0 %v1064
      %1094 = vmatpush.msra.mxu0 %v1063
      %1095 = vmatmul.f32.gmra.mxu0 %v679
      %v1096 = vpop.f32.mrf.mxu0
      %v1097 = vadd.f32 0.0, %v1096
      %1098 = vmatmul.f32.gmra.mxu0 %v683
      %v1099 = vpop.f32.mrf.mxu0
      %v1100 = vadd.f32 0.0, %v1099
      %1101 = vmatmul.f32.gmra.mxu0 %v687
      %v1102 = vpop.f32.mrf.mxu0
      %v1103 = vadd.f32 0.0, %v1102
      %1104 = vmatmul.f32.gmra.mxu0 %v691
      %v1105 = vpop.f32.mrf.mxu0
      %v1106 = vadd.f32 0.0, %v1105
      %1107 = vmatmul.f32.gmra.mxu0 %v695
      %v1108 = vpop.f32.mrf.mxu0
      %v1109 = vadd.f32 0.0, %v1108
      %1110 = vmatmul.f32.gmra.mxu0 %v699
      %v1111 = vpop.f32.mrf.mxu0
      %v1112 = vadd.f32 0.0, %v1111
      %1113 = vmatmul.f32.gmra.mxu0 %v703
      %v1114 = vpop.f32.mrf.mxu0
      %v1115 = vadd.f32 0.0, %v1114
      %1116 = vmatmul.f32.gmra.mxu0 %v707
      %v1117 = vpop.f32.mrf.mxu0
      %v1118 = vadd.f32 0.0, %v1117
      %1119 = vmatmul.f32.gmra.mxu0 %v711
      %v1120 = vpop.f32.mrf.mxu0
      %v1121 = vadd.f32 0.0, %v1120
      %1122 = vmatmul.f32.gmra.mxu0 %v715
      %v1123 = vpop.f32.mrf.mxu0
      %v1124 = vadd.f32 0.0, %v1123
      %1125 = vmatmul.f32.gmra.mxu0 %v719
      %v1126 = vpop.f32.mrf.mxu0
      %v1127 = vadd.f32 0.0, %v1126
      %1128 = vmatmul.f32.gmra.mxu0 %v723
      %v1129 = vpop.f32.mrf.mxu0
      %v1130 = vadd.f32 0.0, %v1129
      %1131 = vmatmul.f32.gmra.mxu0 %v727
      %v1132 = vpop.f32.mrf.mxu0
      %v1133 = vadd.f32 0.0, %v1132
      %1134 = vmatmul.f32.gmra.mxu0 %v731
      %v1135 = vpop.f32.mrf.mxu0
      %v1136 = vadd.f32 0.0, %v1135
      %1137 = vmatmul.f32.gmra.mxu0 %v735
      %v1138 = vpop.f32.mrf.mxu0
      %v1139 = vadd.f32 0.0, %v1138
      %1140 = vmatmul.f32.gmra.mxu0 %v739
      %v1141 = vpop.f32.mrf.mxu0
      %v1142 = vadd.f32 0.0, %v1141
      %1143 = vmatmul.f32.gmra.mxu0 %v743
      %v1144 = vpop.f32.mrf.mxu0
      %v1145 = vadd.f32 0.0, %v1144
      %1146 = vmatmul.f32.gmra.mxu0 %v747
      %v1147 = vpop.f32.mrf.mxu0
      %v1148 = vadd.f32 0.0, %v1147
      %1149 = vmatmul.f32.gmra.mxu0 %v751
      %v1150 = vpop.f32.mrf.mxu0
      %v1151 = vadd.f32 0.0, %v1150
      %1152 = vmatmul.f32.gmra.mxu0 %v755
      %v1153 = vpop.f32.mrf.mxu0
      %v1154 = vadd.f32 0.0, %v1153
      %1155 = vmatmul.f32.gmra.mxu0 %v759
      %v1156 = vpop.f32.mrf.mxu0
      %v1157 = vadd.f32 0.0, %v1156
      %1158 = vmatmul.f32.gmra.mxu0 %v763
      %v1159 = vpop.f32.mrf.mxu0
      %v1160 = vadd.f32 0.0, %v1159
      %1161 = vmatmul.f32.gmra.mxu0 %v767
      %v1162 = vpop.f32.mrf.mxu0
      %v1163 = vadd.f32 0.0, %v1162
      %1164 = vmatmul.f32.gmra.mxu0 %v771
      %v1165 = vpop.f32.mrf.mxu0
      %v1166 = vadd.f32 0.0, %v1165
      %1167 = vmatmul.f32.gmra.mxu0 %v775
      %v1168 = vpop.f32.mrf.mxu0
      %v1169 = vadd.f32 0.0, %v1168
      %1170 = vmatmul.f32.gmra.mxu0 %v779
      %v1171 = vpop.f32.mrf.mxu0
      %v1172 = vadd.f32 0.0, %v1171
      %1173 = vmatmul.f32.gmra.mxu0 %v783
      %v1174 = vpop.f32.mrf.mxu0
      %v1175 = vadd.f32 0.0, %v1174
      %1176 = vmatmul.f32.gmra.mxu0 %v787
      %v1177 = vpop.f32.mrf.mxu0
      %v1178 = vadd.f32 0.0, %v1177
      %1179 = vmatmul.f32.gmra.mxu0 %v791
      %v1180 = vpop.f32.mrf.mxu0
      %v1181 = vadd.f32 0.0, %v1180
      %1182 = vmatmul.f32.gmra.mxu0 %v795
      %v1183 = vpop.f32.mrf.mxu0
      %v1184 = vadd.f32 0.0, %v1183
      %1185 = vmatmul.f32.gmra.mxu0 %v799
      %v1186 = vpop.f32.mrf.mxu0
      %v1187 = vadd.f32 0.0, %v1186
      %1188 = vmatmul.f32.gmra.mxu0 %v803
      %v1189 = vpop.f32.mrf.mxu0
      %v1190 = vadd.f32 0.0, %v1189
      %1191 = vdwg.mxu0
      %v1192 = vld [vmem:[%s3 + $0x180] sm:$0xff]
      %v1193 = vld [vmem:[%s3 + $0x188] sm:$0xff]
      %v1194 = vld [vmem:[%s3 + $0x190] sm:$0xff]
      %v1195 = vld [vmem:[%s3 + $0x198] sm:$0xff]
      %v1196 = vld [vmem:[%s3 + $0x1a0] sm:$0xff]
      %v1197 = vld [vmem:[%s3 + $0x1a8] sm:$0xff]
      %v1198 = vld [vmem:[%s3 + $0x1b0] sm:$0xff]
      %v1199 = vld [vmem:[%s3 + $0x1b8] sm:$0xff]
      %v1200 = vld [vmem:[%s3 + $0x1c0] sm:$0xff]
      %v1201 = vld [vmem:[%s3 + $0x1c8] sm:$0xff]
      %v1202 = vld [vmem:[%s3 + $0x1d0] sm:$0xff]
      %v1203 = vld [vmem:[%s3 + $0x1d8] sm:$0xff]
      %v1204 = vld [vmem:[%s3 + $0x1e0] sm:$0xff]
      %v1205 = vld [vmem:[%s3 + $0x1e8] sm:$0xff]
      %v1206 = vld [vmem:[%s3 + $0x1f0] sm:$0xff]
      %v1207 = vld [vmem:[%s3 + $0x1f8] sm:$0xff]
      %1208 = vmatpush.msra.mxu0 %v1207
      %1209 = vmatpush.msra.mxu0 %v1206
      %1210 = vmatpush.msra.mxu0 %v1205
      %1211 = vmatpush.msra.mxu0 %v1204
      %1212 = vmatpush.msra.mxu0 %v1203
      %1213 = vmatpush.msra.mxu0 %v1202
      %1214 = vmatpush.msra.mxu0 %v1201
      %1215 = vmatpush.msra.mxu0 %v1200
      %1216 = vmatpush.msra.mxu0 %v1199
      %1217 = vmatpush.msra.mxu0 %v1198
      %1218 = vmatpush.msra.mxu0 %v1197
      %1219 = vmatpush.msra.mxu0 %v1196
      %1220 = vmatpush.msra.mxu0 %v1195
      %1221 = vmatpush.msra.mxu0 %v1194
      %1222 = vmatpush.msra.mxu0 %v1193
      %1223 = vmatpush.msra.mxu0 %v1192
      %1224 = vmatmul.f32.gmra.mxu0 %v680
      %v1225 = vpop.f32.mrf.mxu0
      %v1226 = vadd.f32 0.0, %v1225
      %1227 = vmatmul.f32.gmra.mxu0 %v684
      %v1228 = vpop.f32.mrf.mxu0
      %v1229 = vadd.f32 0.0, %v1228
      %1230 = vmatmul.f32.gmra.mxu0 %v688
      %v1231 = vpop.f32.mrf.mxu0
      %v1232 = vadd.f32 0.0, %v1231
      %1233 = vmatmul.f32.gmra.mxu0 %v692
      %v1234 = vpop.f32.mrf.mxu0
      %v1235 = vadd.f32 0.0, %v1234
      %1236 = vmatmul.f32.gmra.mxu0 %v696
      %v1237 = vpop.f32.mrf.mxu0
      %v1238 = vadd.f32 0.0, %v1237
      %1239 = vmatmul.f32.gmra.mxu0 %v700
      %v1240 = vpop.f32.mrf.mxu0
      %v1241 = vadd.f32 0.0, %v1240
      %1242 = vmatmul.f32.gmra.mxu0 %v704
      %v1243 = vpop.f32.mrf.mxu0
      %v1244 = vadd.f32 0.0, %v1243
      %1245 = vmatmul.f32.gmra.mxu0 %v708
      %v1246 = vpop.f32.mrf.mxu0
      %v1247 = vadd.f32 0.0, %v1246
      %1248 = vmatmul.f32.gmra.mxu0 %v712
      %v1249 = vpop.f32.mrf.mxu0
      %v1250 = vadd.f32 0.0, %v1249
      %1251 = vmatmul.f32.gmra.mxu0 %v716
      %v1252 = vpop.f32.mrf.mxu0
      %v1253 = vadd.f32 0.0, %v1252
      %1254 = vmatmul.f32.gmra.mxu0 %v720
      %v1255 = vpop.f32.mrf.mxu0
      %v1256 = vadd.f32 0.0, %v1255
      %1257 = vmatmul.f32.gmra.mxu0 %v724
      %v1258 = vpop.f32.mrf.mxu0
      %v1259 = vadd.f32 0.0, %v1258
      %1260 = vmatmul.f32.gmra.mxu0 %v728
      %v1261 = vpop.f32.mrf.mxu0
      %v1262 = vadd.f32 0.0, %v1261
      %1263 = vmatmul.f32.gmra.mxu0 %v732
      %v1264 = vpop.f32.mrf.mxu0
      %v1265 = vadd.f32 0.0, %v1264
      %1266 = vmatmul.f32.gmra.mxu0 %v736
      %v1267 = vpop.f32.mrf.mxu0
      %v1268 = vadd.f32 0.0, %v1267
      %1269 = vmatmul.f32.gmra.mxu0 %v740
      %v1270 = vpop.f32.mrf.mxu0
      %v1271 = vadd.f32 0.0, %v1270
      %1272 = vmatmul.f32.gmra.mxu0 %v744
      %v1273 = vpop.f32.mrf.mxu0
      %v1274 = vadd.f32 0.0, %v1273
      %1275 = vmatmul.f32.gmra.mxu0 %v748
      %v1276 = vpop.f32.mrf.mxu0
      %v1277 = vadd.f32 0.0, %v1276
      %1278 = vmatmul.f32.gmra.mxu0 %v752
      %v1279 = vpop.f32.mrf.mxu0
      %v1280 = vadd.f32 0.0, %v1279
      %1281 = vmatmul.f32.gmra.mxu0 %v756
      %v1282 = vpop.f32.mrf.mxu0
      %v1283 = vadd.f32 0.0, %v1282
      %1284 = vmatmul.f32.gmra.mxu0 %v760
      %v1285 = vpop.f32.mrf.mxu0
      %v1286 = vadd.f32 0.0, %v1285
      %1287 = vmatmul.f32.gmra.mxu0 %v764
      %v1288 = vpop.f32.mrf.mxu0
      %v1289 = vadd.f32 0.0, %v1288
      %1290 = vmatmul.f32.gmra.mxu0 %v768
      %v1291 = vpop.f32.mrf.mxu0
      %v1292 = vadd.f32 0.0, %v1291
      %1293 = vmatmul.f32.gmra.mxu0 %v772
      %v1294 = vpop.f32.mrf.mxu0
      %v1295 = vadd.f32 0.0, %v1294
      %1296 = vmatmul.f32.gmra.mxu0 %v776
      %v1297 = vpop.f32.mrf.mxu0
      %v1298 = vadd.f32 0.0, %v1297
      %1299 = vmatmul.f32.gmra.mxu0 %v780
      %v1300 = vpop.f32.mrf.mxu0
      %v1301 = vadd.f32 0.0, %v1300
      %1302 = vmatmul.f32.gmra.mxu0 %v784
      %v1303 = vpop.f32.mrf.mxu0
      %v1304 = vadd.f32 0.0, %v1303
      %1305 = vmatmul.f32.gmra.mxu0 %v788
      %v1306 = vpop.f32.mrf.mxu0
      %v1307 = vadd.f32 0.0, %v1306
      %1308 = vmatmul.f32.gmra.mxu0 %v792
      %v1309 = vpop.f32.mrf.mxu0
      %v1310 = vadd.f32 0.0, %v1309
      %1311 = vmatmul.f32.gmra.mxu0 %v796
      %v1312 = vpop.f32.mrf.mxu0
      %v1313 = vadd.f32 0.0, %v1312
      %1314 = vmatmul.f32.gmra.mxu0 %v800
      %v1315 = vpop.f32.mrf.mxu0
      %v1316 = vadd.f32 0.0, %v1315
      %1317 = vmatmul.f32.gmra.mxu0 %v804
      %v1318 = vpop.f32.mrf.mxu0
      %v1319 = vadd.f32 0.0, %v1318
      %1320 = vdwg.mxu0
      %v1321 = vld [vmem:[%s4] sm:$0xf]
      %v1323 = vperm.slane %v1321, 0
      %v1324 = vperm.slane %v1321, 1
      %v1325 = vperm.slane %v1321, 2
      %v1326 = vperm.slane %v1321, 3
      %v1331 = vadd.f32 %v839, %v1323
      %v1332 = vadd.f32 %v968, %v1324
      %v1333 = vadd.f32 %v1097, %v1325
      %v1334 = vadd.f32 %v1226, %v1326
      %v1335 = vadd.f32 %v842, %v1323
      %v1336 = vadd.f32 %v971, %v1324
      %v1337 = vadd.f32 %v1100, %v1325
      %v1338 = vadd.f32 %v1229, %v1326
      %v1339 = vadd.f32 %v845, %v1323
      %v1340 = vadd.f32 %v974, %v1324
      %v1341 = vadd.f32 %v1103, %v1325
      %v1342 = vadd.f32 %v1232, %v1326
      %v1343 = vadd.f32 %v848, %v1323
      %v1344 = vadd.f32 %v977, %v1324
      %v1345 = vadd.f32 %v1106, %v1325
      %v1346 = vadd.f32 %v1235, %v1326
      %v1347 = vadd.f32 %v851, %v1323
      %v1348 = vadd.f32 %v980, %v1324
      %v1349 = vadd.f32 %v1109, %v1325
      %v1350 = vadd.f32 %v1238, %v1326
      %v1351 = vadd.f32 %v854, %v1323
      %v1352 = vadd.f32 %v983, %v1324
      %v1353 = vadd.f32 %v1112, %v1325
      %v1354 = vadd.f32 %v1241, %v1326
      %v1355 = vadd.f32 %v857, %v1323
      %v1356 = vadd.f32 %v986, %v1324
      %v1357 = vadd.f32 %v1115, %v1325
      %v1358 = vadd.f32 %v1244, %v1326
      %v1359 = vadd.f32 %v860, %v1323
      %v1360 = vadd.f32 %v989, %v1324
      %v1361 = vadd.f32 %v1118, %v1325
      %v1362 = vadd.f32 %v1247, %v1326
      %v1363 = vadd.f32 %v863, %v1323
      %v1364 = vadd.f32 %v992, %v1324
      %v1365 = vadd.f32 %v1121, %v1325
      %v1366 = vadd.f32 %v1250, %v1326
      %v1367 = vadd.f32 %v866, %v1323
      %v1368 = vadd.f32 %v995, %v1324
      %v1369 = vadd.f32 %v1124, %v1325
      %v1370 = vadd.f32 %v1253, %v1326
      %v1371 = vadd.f32 %v869, %v1323
      %v1372 = vadd.f32 %v998, %v1324
      %v1373 = vadd.f32 %v1127, %v1325
      %v1374 = vadd.f32 %v1256, %v1326
      %v1375 = vadd.f32 %v872, %v1323
      %v1376 = vadd.f32 %v1001, %v1324
      %v1377 = vadd.f32 %v1130, %v1325
      %v1378 = vadd.f32 %v1259, %v1326
      %v1379 = vadd.f32 %v875, %v1323
      %v1380 = vadd.f32 %v1004, %v1324
      %v1381 = vadd.f32 %v1133, %v1325
      %v1382 = vadd.f32 %v1262, %v1326
      %v1383 = vadd.f32 %v878, %v1323
      %v1384 = vadd.f32 %v1007, %v1324
      %v1385 = vadd.f32 %v1136, %v1325
      %v1386 = vadd.f32 %v1265, %v1326
      %v1387 = vadd.f32 %v881, %v1323
      %v1388 = vadd.f32 %v1010, %v1324
      %v1389 = vadd.f32 %v1139, %v1325
      %v1390 = vadd.f32 %v1268, %v1326
      %v1391 = vadd.f32 %v884, %v1323
      %v1392 = vadd.f32 %v1013, %v1324
      %v1393 = vadd.f32 %v1142, %v1325
      %v1394 = vadd.f32 %v1271, %v1326
      %v1395 = vadd.f32 %v887, %v1323
      %v1396 = vadd.f32 %v1016, %v1324
      %v1397 = vadd.f32 %v1145, %v1325
      %v1398 = vadd.f32 %v1274, %v1326
      %v1399 = vadd.f32 %v890, %v1323
      %v1400 = vadd.f32 %v1019, %v1324
      %v1401 = vadd.f32 %v1148, %v1325
      %v1402 = vadd.f32 %v1277, %v1326
      %v1403 = vadd.f32 %v893, %v1323
      %v1404 = vadd.f32 %v1022, %v1324
      %v1405 = vadd.f32 %v1151, %v1325
      %v1406 = vadd.f32 %v1280, %v1326
      %v1407 = vadd.f32 %v896, %v1323
      %v1408 = vadd.f32 %v1025, %v1324
      %v1409 = vadd.f32 %v1154, %v1325
      %v1410 = vadd.f32 %v1283, %v1326
      %v1411 = vadd.f32 %v899, %v1323
      %v1412 = vadd.f32 %v1028, %v1324
      %v1413 = vadd.f32 %v1157, %v1325
      %v1414 = vadd.f32 %v1286, %v1326
      %v1415 = vadd.f32 %v902, %v1323
      %v1416 = vadd.f32 %v1031, %v1324
      %v1417 = vadd.f32 %v1160, %v1325
      %v1418 = vadd.f32 %v1289, %v1326
      %v1419 = vadd.f32 %v905, %v1323
      %v1420 = vadd.f32 %v1034, %v1324
      %v1421 = vadd.f32 %v1163, %v1325
      %v1422 = vadd.f32 %v1292, %v1326
      %v1423 = vadd.f32 %v908, %v1323
      %v1424 = vadd.f32 %v1037, %v1324
      %v1425 = vadd.f32 %v1166, %v1325
      %v1426 = vadd.f32 %v1295, %v1326
      %v1427 = vadd.f32 %v911, %v1323
      %v1428 = vadd.f32 %v1040, %v1324
      %v1429 = vadd.f32 %v1169, %v1325
      %v1430 = vadd.f32 %v1298, %v1326
      %v1431 = vadd.f32 %v914, %v1323
      %v1432 = vadd.f32 %v1043, %v1324
      %v1433 = vadd.f32 %v1172, %v1325
      %v1434 = vadd.f32 %v1301, %v1326
      %v1435 = vadd.f32 %v917, %v1323
      %v1436 = vadd.f32 %v1046, %v1324
      %v1437 = vadd.f32 %v1175, %v1325
      %v1438 = vadd.f32 %v1304, %v1326
      %v1439 = vadd.f32 %v920, %v1323
      %v1440 = vadd.f32 %v1049, %v1324
      %v1441 = vadd.f32 %v1178, %v1325
      %v1442 = vadd.f32 %v1307, %v1326
      %v1443 = vadd.f32 %v923, %v1323
      %v1444 = vadd.f32 %v1052, %v1324
      %v1445 = vadd.f32 %v1181, %v1325
      %v1446 = vadd.f32 %v1310, %v1326
      %v1447 = vadd.f32 %v926, %v1323
      %v1448 = vadd.f32 %v1055, %v1324
      %v1449 = vadd.f32 %v1184, %v1325
      %v1450 = vadd.f32 %v1313, %v1326
      %v1451 = vadd.f32 %v929, %v1323
      %v1452 = vadd.f32 %v1058, %v1324
      %v1453 = vadd.f32 %v1187, %v1325
      %v1454 = vadd.f32 %v1316, %v1326
      %v1455 = vadd.f32 %v932, %v1323
      %v1456 = vadd.f32 %v1061, %v1324
      %v1457 = vadd.f32 %v1190, %v1325
      %v1458 = vadd.f32 %v1319, %v1326
      %1459 = vst [vmem:[%s266] sm:$0xff] %v1331
      %1460 = vst [vmem:[%s266 + $0x8] sm:$0xff] %v1332
      %1461 = vst [vmem:[%s266 + $0x10] sm:$0xff] %v1333
      %1462 = vst [vmem:[%s266 + $0x18] sm:$0xff] %v1334
      %1463 = vst [vmem:[%s266 + $0x20] sm:$0xff] %v1335
      %1464 = vst [vmem:[%s266 + $0x28] sm:$0xff] %v1336
      %1465 = vst [vmem:[%s266 + $0x30] sm:$0xff] %v1337
      %1466 = vst [vmem:[%s266 + $0x38] sm:$0xff] %v1338
      %1467 = vst [vmem:[%s266 + $0x40] sm:$0xff] %v1339
      %1468 = vst [vmem:[%s266 + $0x48] sm:$0xff] %v1340
      %1469 = vst [vmem:[%s266 + $0x50] sm:$0xff] %v1341
      %1470 = vst [vmem:[%s266 + $0x58] sm:$0xff] %v1342
      %1471 = vst [vmem:[%s266 + $0x60] sm:$0xff] %v1343
      %1472 = vst [vmem:[%s266 + $0x68] sm:$0xff] %v1344
      %1473 = vst [vmem:[%s266 + $0x70] sm:$0xff] %v1345
      %1474 = vst [vmem:[%s266 + $0x78] sm:$0xff] %v1346
      %1475 = vst [vmem:[%s266 + $0x80] sm:$0xff] %v1347
      %1476 = vst [vmem:[%s266 + $0x88] sm:$0xff] %v1348
      %1477 = vst [vmem:[%s266 + $0x90] sm:$0xff] %v1349
      %1478 = vst [vmem:[%s266 + $0x98] sm:$0xff] %v1350
      %1479 = vst [vmem:[%s266 + $0xa0] sm:$0xff] %v1351
      %1480 = vst [vmem:[%s266 + $0xa8] sm:$0xff] %v1352
      %1481 = vst [vmem:[%s266 + $0xb0] sm:$0xff] %v1353
      %1482 = vst [vmem:[%s266 + $0xb8] sm:$0xff] %v1354
      %1483 = vst [vmem:[%s266 + $0xc0] sm:$0xff] %v1355
      %1484 = vst [vmem:[%s266 + $0xc8] sm:$0xff] %v1356
      %1485 = vst [vmem:[%s266 + $0xd0] sm:$0xff] %v1357
      %1486 = vst [vmem:[%s266 + $0xd8] sm:$0xff] %v1358
      %1487 = vst [vmem:[%s266 + $0xe0] sm:$0xff] %v1359
      %1488 = vst [vmem:[%s266 + $0xe8] sm:$0xff] %v1360
      %1489 = vst [vmem:[%s266 + $0xf0] sm:$0xff] %v1361
      %1490 = vst [vmem:[%s266 + $0xf8] sm:$0xff] %v1362
      %1491 = vst [vmem:[%s266 + $0x100] sm:$0xff] %v1363
      %1492 = vst [vmem:[%s266 + $0x108] sm:$0xff] %v1364
      %1493 = vst [vmem:[%s266 + $0x110] sm:$0xff] %v1365
      %1494 = vst [vmem:[%s266 + $0x118] sm:$0xff] %v1366
      %1495 = vst [vmem:[%s266 + $0x120] sm:$0xff] %v1367
      %1496 = vst [vmem:[%s266 + $0x128] sm:$0xff] %v1368
      %1497 = vst [vmem:[%s266 + $0x130] sm:$0xff] %v1369
      %1498 = vst [vmem:[%s266 + $0x138] sm:$0xff] %v1370
      %1499 = vst [vmem:[%s266 + $0x140] sm:$0xff] %v1371
      %1500 = vst [vmem:[%s266 + $0x148] sm:$0xff] %v1372
      %1501 = vst [vmem:[%s266 + $0x150] sm:$0xff] %v1373
      %1502 = vst [vmem:[%s266 + $0x158] sm:$0xff] %v1374
      %1503 = vst [vmem:[%s266 + $0x160] sm:$0xff] %v1375
      %1504 = vst [vmem:[%s266 + $0x168] sm:$0xff] %v1376
      %1505 = vst [vmem:[%s266 + $0x170] sm:$0xff] %v1377
      %1506 = vst [vmem:[%s266 + $0x178] sm:$0xff] %v1378
      %1507 = vst [vmem:[%s266 + $0x180] sm:$0xff] %v1379
      %1508 = vst [vmem:[%s266 + $0x188] sm:$0xff] %v1380
      %1509 = vst [vmem:[%s266 + $0x190] sm:$0xff] %v1381
      %1510 = vst [vmem:[%s266 + $0x198] sm:$0xff] %v1382
      %1511 = vst [vmem:[%s266 + $0x1a0] sm:$0xff] %v1383
      %1512 = vst [vmem:[%s266 + $0x1a8] sm:$0xff] %v1384
      %1513 = vst [vmem:[%s266 + $0x1b0] sm:$0xff] %v1385
      %1514 = vst [vmem:[%s266 + $0x1b8] sm:$0xff] %v1386
      %1515 = vst [vmem:[%s266 + $0x1c0] sm:$0xff] %v1387
      %1516 = vst [vmem:[%s266 + $0x1c8] sm:$0xff] %v1388
      %1517 = vst [vmem:[%s266 + $0x1d0] sm:$0xff] %v1389
      %1518 = vst [vmem:[%s266 + $0x1d8] sm:$0xff] %v1390
      %1519 = vst [vmem:[%s266 + $0x1e0] sm:$0xff] %v1391
      %1520 = vst [vmem:[%s266 + $0x1e8] sm:$0xff] %v1392
      %1521 = vst [vmem:[%s266 + $0x1f0] sm:$0xff] %v1393
      %1522 = vst [vmem:[%s266 + $0x1f8] sm:$0xff] %v1394
      %1523 = vst [vmem:[%s266 + $0x200] sm:$0xff] %v1395
      %1524 = vst [vmem:[%s266 + $0x208] sm:$0xff] %v1396
      %1525 = vst [vmem:[%s266 + $0x210] sm:$0xff] %v1397
      %1526 = vst [vmem:[%s266 + $0x218] sm:$0xff] %v1398
      %1527 = vst [vmem:[%s266 + $0x220] sm:$0xff] %v1399
      %1528 = vst [vmem:[%s266 + $0x228] sm:$0xff] %v1400
      %1529 = vst [vmem:[%s266 + $0x230] sm:$0xff] %v1401
      %1530 = vst [vmem:[%s266 + $0x238] sm:$0xff] %v1402
      %1531 = vst [vmem:[%s266 + $0x240] sm:$0xff] %v1403
      %1532 = vst [vmem:[%s266 + $0x248] sm:$0xff] %v1404
      %1533 = vst [vmem:[%s266 + $0x250] sm:$0xff] %v1405
      %1534 = vst [vmem:[%s266 + $0x258] sm:$0xff] %v1406
      %1535 = vst [vmem:[%s266 + $0x260] sm:$0xff] %v1407
      %1536 = vst [vmem:[%s266 + $0x268] sm:$0xff] %v1408
      %1537 = vst [vmem:[%s266 + $0x270] sm:$0xff] %v1409
      %1538 = vst [vmem:[%s266 + $0x278] sm:$0xff] %v1410
      %1539 = vst [vmem:[%s266 + $0x280] sm:$0xff] %v1411
      %1540 = vst [vmem:[%s266 + $0x288] sm:$0xff] %v1412
      %1541 = vst [vmem:[%s266 + $0x290] sm:$0xff] %v1413
      %1542 = vst [vmem:[%s266 + $0x298] sm:$0xff] %v1414
      %1543 = vst [vmem:[%s266 + $0x2a0] sm:$0xff] %v1415
      %1544 = vst [vmem:[%s266 + $0x2a8] sm:$0xff] %v1416
      %1545 = vst [vmem:[%s266 + $0x2b0] sm:$0xff] %v1417
      %1546 = vst [vmem:[%s266 + $0x2b8] sm:$0xff] %v1418
      %1547 = vst [vmem:[%s266 + $0x2c0] sm:$0xff] %v1419
      %1548 = vst [vmem:[%s266 + $0x2c8] sm:$0xff] %v1420
      %1549 = vst [vmem:[%s266 + $0x2d0] sm:$0xff] %v1421
      %1550 = vst [vmem:[%s266 + $0x2d8] sm:$0xff] %v1422
      %1551 = vst [vmem:[%s266 + $0x2e0] sm:$0xff] %v1423
      %1552 = vst [vmem:[%s266 + $0x2e8] sm:$0xff] %v1424
      %1553 = vst [vmem:[%s266 + $0x2f0] sm:$0xff] %v1425
      %1554 = vst [vmem:[%s266 + $0x2f8] sm:$0xff] %v1426
      %1555 = vst [vmem:[%s266 + $0x300] sm:$0xff] %v1427
      %1556 = vst [vmem:[%s266 + $0x308] sm:$0xff] %v1428
      %1557 = vst [vmem:[%s266 + $0x310] sm:$0xff] %v1429
      %1558 = vst [vmem:[%s266 + $0x318] sm:$0xff] %v1430
      %1559 = vst [vmem:[%s266 + $0x320] sm:$0xff] %v1431
      %1560 = vst [vmem:[%s266 + $0x328] sm:$0xff] %v1432
      %1561 = vst [vmem:[%s266 + $0x330] sm:$0xff] %v1433
      %1562 = vst [vmem:[%s266 + $0x338] sm:$0xff] %v1434
      %1563 = vst [vmem:[%s266 + $0x340] sm:$0xff] %v1435
      %1564 = vst [vmem:[%s266 + $0x348] sm:$0xff] %v1436
      %1565 = vst [vmem:[%s266 + $0x350] sm:$0xff] %v1437
      %1566 = vst [vmem:[%s266 + $0x358] sm:$0xff] %v1438
      %1567 = vst [vmem:[%s266 + $0x360] sm:$0xff] %v1439
      %1568 = vst [vmem:[%s266 + $0x368] sm:$0xff] %v1440
      %1569 = vst [vmem:[%s266 + $0x370] sm:$0xff] %v1441
      %1570 = vst [vmem:[%s266 + $0x378] sm:$0xff] %v1442
      %1571 = vst [vmem:[%s266 + $0x380] sm:$0xff] %v1443
      %1572 = vst [vmem:[%s266 + $0x388] sm:$0xff] %v1444
      %1573 = vst [vmem:[%s266 + $0x390] sm:$0xff] %v1445
      %1574 = vst [vmem:[%s266 + $0x398] sm:$0xff] %v1446
      %1575 = vst [vmem:[%s266 + $0x3a0] sm:$0xff] %v1447
      %1576 = vst [vmem:[%s266 + $0x3a8] sm:$0xff] %v1448
      %1577 = vst [vmem:[%s266 + $0x3b0] sm:$0xff] %v1449
      %1578 = vst [vmem:[%s266 + $0x3b8] sm:$0xff] %v1450
      %1579 = vst [vmem:[%s266 + $0x3c0] sm:$0xff] %v1451
      %1580 = vst [vmem:[%s266 + $0x3c8] sm:$0xff] %v1452
      %1581 = vst [vmem:[%s266 + $0x3d0] sm:$0xff] %v1453
      %1582 = vst [vmem:[%s266 + $0x3d8] sm:$0xff] %v1454
      %1583 = vst [vmem:[%s266 + $0x3e0] sm:$0xff] %v1455
      %1584 = vst [vmem:[%s266 + $0x3e8] sm:$0xff] %v1456
      %1585 = vst [vmem:[%s266 + $0x3f0] sm:$0xff] %v1457
      %1586 = vst [vmem:[%s266 + $0x3f8] sm:$0xff] %v1458
      %v1587 = vadd.f32 %v1331, %v1335
      %v1588 = vadd.f32 %v1587, %v1339
      %v1589 = vadd.f32 %v1588, %v1343
      %v1590 = vadd.f32 %v1589, %v1347
      %v1591 = vadd.f32 %v1590, %v1351
      %v1592 = vadd.f32 %v1591, %v1355
      %v1593 = vadd.f32 %v1592, %v1359
      %v1594 = vadd.f32 %v1593, %v1363
      %v1595 = vadd.f32 %v1594, %v1367
      %v1596 = vadd.f32 %v1595, %v1371
      %v1597 = vadd.f32 %v1596, %v1375
      %v1598 = vadd.f32 %v1597, %v1379
      %v1599 = vadd.f32 %v1598, %v1383
      %v1600 = vadd.f32 %v1599, %v1387
      %v1601 = vadd.f32 %v1600, %v1391
      %v1602 = vadd.f32 %v1601, %v1395
      %v1603 = vadd.f32 %v1602, %v1399
      %v1604 = vadd.f32 %v1603, %v1403
      %v1605 = vadd.f32 %v1604, %v1407
      %v1606 = vadd.f32 %v1605, %v1411
      %v1607 = vadd.f32 %v1606, %v1415
      %v1608 = vadd.f32 %v1607, %v1419
      %v1609 = vadd.f32 %v1608, %v1423
      %v1610 = vadd.f32 %v1609, %v1427
      %v1611 = vadd.f32 %v1610, %v1431
      %v1612 = vadd.f32 %v1611, %v1435
      %v1613 = vadd.f32 %v1612, %v1439
      %v1614 = vadd.f32 %v1613, %v1443
      %v1615 = vadd.f32 %v1614, %v1447
      %v1616 = vadd.f32 %v1615, %v1451
      %v1617 = vadd.f32 %v1616, %v1455
      %v1618 = vrot.slane %v1617, 4
      %v1619 = vadd.f32 %v1617, %v1618
      %v1620 = vrot.slane %v1619, 2
      %v1621 = vadd.f32 %v1619, %v1620
      %v1622 = vrot.slane %v1621, 1
      %v1623 = vadd.f32 %v1621, %v1622
      %v1624 = vadd.f32 %v1332, %v1336
      %v1625 = vadd.f32 %v1624, %v1340
      %v1626 = vadd.f32 %v1625, %v1344
      %v1627 = vadd.f32 %v1626, %v1348
      %v1628 = vadd.f32 %v1627, %v1352
      %v1629 = vadd.f32 %v1628, %v1356
      %v1630 = vadd.f32 %v1629, %v1360
      %v1631 = vadd.f32 %v1630, %v1364
      %v1632 = vadd.f32 %v1631, %v1368
      %v1633 = vadd.f32 %v1632, %v1372
      %v1634 = vadd.f32 %v1633, %v1376
      %v1635 = vadd.f32 %v1634, %v1380
      %v1636 = vadd.f32 %v1635, %v1384
      %v1637 = vadd.f32 %v1636, %v1388
      %v1638 = vadd.f32 %v1637, %v1392
      %v1639 = vadd.f32 %v1638, %v1396
      %v1640 = vadd.f32 %v1639, %v1400
      %v1641 = vadd.f32 %v1640, %v1404
      %v1642 = vadd.f32 %v1641, %v1408
      %v1643 = vadd.f32 %v1642, %v1412
      %v1644 = vadd.f32 %v1643, %v1416
      %v1645 = vadd.f32 %v1644, %v1420
      %v1646 = vadd.f32 %v1645, %v1424
      %v1647 = vadd.f32 %v1646, %v1428
      %v1648 = vadd.f32 %v1647, %v1432
      %v1649 = vadd.f32 %v1648, %v1436
      %v1650 = vadd.f32 %v1649, %v1440
      %v1651 = vadd.f32 %v1650, %v1444
      %v1652 = vadd.f32 %v1651, %v1448
      %v1653 = vadd.f32 %v1652, %v1452
      %v1654 = vadd.f32 %v1653, %v1456
      %v1655 = vrot.slane %v1654, 4
      %v1656 = vadd.f32 %v1654, %v1655
      %v1657 = vrot.slane %v1656, 2
      %v1658 = vadd.f32 %v1656, %v1657
      %v1659 = vrot.slane %v1658, 1
      %v1660 = vadd.f32 %v1658, %v1659
      %v1661 = vadd.f32 %v1333, %v1337
      %v1662 = vadd.f32 %v1661, %v1341
      %v1663 = vadd.f32 %v1662, %v1345
      %v1664 = vadd.f32 %v1663, %v1349
      %v1665 = vadd.f32 %v1664, %v1353
      %v1666 = vadd.f32 %v1665, %v1357
      %v1667 = vadd.f32 %v1666, %v1361
      %v1668 = vadd.f32 %v1667, %v1365
      %v1669 = vadd.f32 %v1668, %v1369
      %v1670 = vadd.f32 %v1669, %v1373
      %v1671 = vadd.f32 %v1670, %v1377
      %v1672 = vadd.f32 %v1671, %v1381
      %v1673 = vadd.f32 %v1672, %v1385
      %v1674 = vadd.f32 %v1673, %v1389
      %v1675 = vadd.f32 %v1674, %v1393
      %v1676 = vadd.f32 %v1675, %v1397
      %v1677 = vadd.f32 %v1676, %v1401
      %v1678 = vadd.f32 %v1677, %v1405
      %v1679 = vadd.f32 %v1678, %v1409
      %v1680 = vadd.f32 %v1679, %v1413
      %v1681 = vadd.f32 %v1680, %v1417
      %v1682 = vadd.f32 %v1681, %v1421
      %v1683 = vadd.f32 %v1682, %v1425
      %v1684 = vadd.f32 %v1683, %v1429
      %v1685 = vadd.f32 %v1684, %v1433
      %v1686 = vadd.f32 %v1685, %v1437
      %v1687 = vadd.f32 %v1686, %v1441
      %v1688 = vadd.f32 %v1687, %v1445
      %v1689 = vadd.f32 %v1688, %v1449
      %v1690 = vadd.f32 %v1689, %v1453
      %v1691 = vadd.f32 %v1690, %v1457
      %v1692 = vrot.slane %v1691, 4
      %v1693 = vadd.f32 %v1691, %v1692
      %v1694 = vrot.slane %v1693, 2
      %v1695 = vadd.f32 %v1693, %v1694
      %v1696 = vrot.slane %v1695, 1
      %v1697 = vadd.f32 %v1695, %v1696
      %v1698 = vadd.f32 %v1334, %v1338
      %v1699 = vadd.f32 %v1698, %v1342
      %v1700 = vadd.f32 %v1699, %v1346
      %v1701 = vadd.f32 %v1700, %v1350
      %v1702 = vadd.f32 %v1701, %v1354
      %v1703 = vadd.f32 %v1702, %v1358
      %v1704 = vadd.f32 %v1703, %v1362
      %v1705 = vadd.f32 %v1704, %v1366
      %v1706 = vadd.f32 %v1705, %v1370
      %v1707 = vadd.f32 %v1706, %v1374
      %v1708 = vadd.f32 %v1707, %v1378
      %v1709 = vadd.f32 %v1708, %v1382
      %v1710 = vadd.f32 %v1709, %v1386
      %v1711 = vadd.f32 %v1710, %v1390
      %v1712 = vadd.f32 %v1711, %v1394
      %v1713 = vadd.f32 %v1712, %v1398
      %v1714 = vadd.f32 %v1713, %v1402
      %v1715 = vadd.f32 %v1714, %v1406
      %v1716 = vadd.f32 %v1715, %v1410
      %v1717 = vadd.f32 %v1716, %v1414
      %v1718 = vadd.f32 %v1717, %v1418
      %v1719 = vadd.f32 %v1718, %v1422
      %v1720 = vadd.f32 %v1719, %v1426
      %v1721 = vadd.f32 %v1720, %v1430
      %v1722 = vadd.f32 %v1721, %v1434
      %v1723 = vadd.f32 %v1722, %v1438
      %v1724 = vadd.f32 %v1723, %v1442
      %v1725 = vadd.f32 %v1724, %v1446
      %v1726 = vadd.f32 %v1725, %v1450
      %v1727 = vadd.f32 %v1726, %v1454
      %v1728 = vadd.f32 %v1727, %v1458
      %v1729 = vrot.slane %v1728, 4
      %v1730 = vadd.f32 %v1728, %v1729
      %v1731 = vrot.slane %v1730, 2
      %v1732 = vadd.f32 %v1730, %v1731
      %v1733 = vrot.slane %v1732, 1
      %v1734 = vadd.f32 %v1732, %v1733
      %v1735 = vmul.f32 %v1331, %v1331
      %v1736 = vmul.f32 %v1332, %v1332
      %v1737 = vmul.f32 %v1333, %v1333
      %v1738 = vmul.f32 %v1334, %v1334
      %v1739 = vmul.f32 %v1335, %v1335
      %v1740 = vmul.f32 %v1336, %v1336
      %v1741 = vmul.f32 %v1337, %v1337
      %v1742 = vmul.f32 %v1338, %v1338
      %v1743 = vmul.f32 %v1339, %v1339
      %v1744 = vmul.f32 %v1340, %v1340
      %v1745 = vmul.f32 %v1341, %v1341
      %v1746 = vmul.f32 %v1342, %v1342
      %v1747 = vmul.f32 %v1343, %v1343
      %v1748 = vmul.f32 %v1344, %v1344
      %v1749 = vmul.f32 %v1345, %v1345
      %v1750 = vmul.f32 %v1346, %v1346
      %v1751 = vmul.f32 %v1347, %v1347
      %v1752 = vmul.f32 %v1348, %v1348
      %v1753 = vmul.f32 %v1349, %v1349
      %v1754 = vmul.f32 %v1350, %v1350
      %v1755 = vmul.f32 %v1351, %v1351
      %v1756 = vmul.f32 %v1352, %v1352
      %v1757 = vmul.f32 %v1353, %v1353
      %v1758 = vmul.f32 %v1354, %v1354
      %v1759 = vmul.f32 %v1355, %v1355
      %v1760 = vmul.f32 %v1356, %v1356
      %v1761 = vmul.f32 %v1357, %v1357
      %v1762 = vmul.f32 %v1358, %v1358
      %v1763 = vmul.f32 %v1359, %v1359
      %v1764 = vmul.f32 %v1360, %v1360
      %v1765 = vmul.f32 %v1361, %v1361
      %v1766 = vmul.f32 %v1362, %v1362
      %v1767 = vmul.f32 %v1363, %v1363
      %v1768 = vmul.f32 %v1364, %v1364
      %v1769 = vmul.f32 %v1365, %v1365
      %v1770 = vmul.f32 %v1366, %v1366
      %v1771 = vmul.f32 %v1367, %v1367
      %v1772 = vmul.f32 %v1368, %v1368
      %v1773 = vmul.f32 %v1369, %v1369
      %v1774 = vmul.f32 %v1370, %v1370
      %v1775 = vmul.f32 %v1371, %v1371
      %v1776 = vmul.f32 %v1372, %v1372
      %v1777 = vmul.f32 %v1373, %v1373
      %v1778 = vmul.f32 %v1374, %v1374
      %v1779 = vmul.f32 %v1375, %v1375
      %v1780 = vmul.f32 %v1376, %v1376
      %v1781 = vmul.f32 %v1377, %v1377
      %v1782 = vmul.f32 %v1378, %v1378
      %v1783 = vmul.f32 %v1379, %v1379
      %v1784 = vmul.f32 %v1380, %v1380
      %v1785 = vmul.f32 %v1381, %v1381
      %v1786 = vmul.f32 %v1382, %v1382
      %v1787 = vmul.f32 %v1383, %v1383
      %v1788 = vmul.f32 %v1384, %v1384
      %v1789 = vmul.f32 %v1385, %v1385
      %v1790 = vmul.f32 %v1386, %v1386
      %v1791 = vmul.f32 %v1387, %v1387
      %v1792 = vmul.f32 %v1388, %v1388
      %v1793 = vmul.f32 %v1389, %v1389
      %v1794 = vmul.f32 %v1390, %v1390
      %v1795 = vmul.f32 %v1391, %v1391
      %v1796 = vmul.f32 %v1392, %v1392
      %v1797 = vmul.f32 %v1393, %v1393
      %v1798 = vmul.f32 %v1394, %v1394
      %v1799 = vmul.f32 %v1395, %v1395
      %v1800 = vmul.f32 %v1396, %v1396
      %v1801 = vmul.f32 %v1397, %v1397
      %v1802 = vmul.f32 %v1398, %v1398
      %v1803 = vmul.f32 %v1399, %v1399
      %v1804 = vmul.f32 %v1400, %v1400
      %v1805 = vmul.f32 %v1401, %v1401
      %v1806 = vmul.f32 %v1402, %v1402
      %v1807 = vmul.f32 %v1403, %v1403
      %v1808 = vmul.f32 %v1404, %v1404
      %v1809 = vmul.f32 %v1405, %v1405
      %v1810 = vmul.f32 %v1406, %v1406
      %v1811 = vmul.f32 %v1407, %v1407
      %v1812 = vmul.f32 %v1408, %v1408
      %v1813 = vmul.f32 %v1409, %v1409
      %v1814 = vmul.f32 %v1410, %v1410
      %v1815 = vmul.f32 %v1411, %v1411
      %v1816 = vmul.f32 %v1412, %v1412
      %v1817 = vmul.f32 %v1413, %v1413
      %v1818 = vmul.f32 %v1414, %v1414
      %v1819 = vmul.f32 %v1415, %v1415
      %v1820 = vmul.f32 %v1416, %v1416
      %v1821 = vmul.f32 %v1417, %v1417
      %v1822 = vmul.f32 %v1418, %v1418
      %v1823 = vmul.f32 %v1419, %v1419
      %v1824 = vmul.f32 %v1420, %v1420
      %v1825 = vmul.f32 %v1421, %v1421
      %v1826 = vmul.f32 %v1422, %v1422
      %v1827 = vmul.f32 %v1423, %v1423
      %v1828 = vmul.f32 %v1424, %v1424
      %v1829 = vmul.f32 %v1425, %v1425
      %v1830 = vmul.f32 %v1426, %v1426
      %v1831 = vmul.f32 %v1427, %v1427
      %v1832 = vmul.f32 %v1428, %v1428
      %v1833 = vmul.f32 %v1429, %v1429
      %v1834 = vmul.f32 %v1430, %v1430
      %v1835 = vmul.f32 %v1431, %v1431
      %v1836 = vmul.f32 %v1432, %v1432
      %v1837 = vmul.f32 %v1433, %v1433
      %v1838 = vmul.f32 %v1434, %v1434
      %v1839 = vmul.f32 %v1435, %v1435
      %v1840 = vmul.f32 %v1436, %v1436
      %v1841 = vmul.f32 %v1437, %v1437
      %v1842 = vmul.f32 %v1438, %v1438
      %v1843 = vmul.f32 %v1439, %v1439
      %v1844 = vmul.f32 %v1440, %v1440
      %v1845 = vmul.f32 %v1441, %v1441
      %v1846 = vmul.f32 %v1442, %v1442
      %v1847 = vmul.f32 %v1443, %v1443
      %v1848 = vmul.f32 %v1444, %v1444
      %v1849 = vmul.f32 %v1445, %v1445
      %v1850 = vmul.f32 %v1446, %v1446
      %v1851 = vmul.f32 %v1447, %v1447
      %v1852 = vmul.f32 %v1448, %v1448
      %v1853 = vmul.f32 %v1449, %v1449
      %v1854 = vmul.f32 %v1450, %v1450
      %v1855 = vmul.f32 %v1451, %v1451
      %v1856 = vmul.f32 %v1452, %v1452
      %v1857 = vmul.f32 %v1453, %v1453
      %v1858 = vmul.f32 %v1454, %v1454
      %v1859 = vmul.f32 %v1455, %v1455
      %v1860 = vmul.f32 %v1456, %v1456
      %v1861 = vmul.f32 %v1457, %v1457
      %v1862 = vmul.f32 %v1458, %v1458
      %v1863 = vadd.f32 %v1735, %v1739
      %v1864 = vadd.f32 %v1863, %v1743
      %v1865 = vadd.f32 %v1864, %v1747
      %v1866 = vadd.f32 %v1865, %v1751
      %v1867 = vadd.f32 %v1866, %v1755
      %v1868 = vadd.f32 %v1867, %v1759
      %v1869 = vadd.f32 %v1868, %v1763
      %v1870 = vadd.f32 %v1869, %v1767
      %v1871 = vadd.f32 %v1870, %v1771
      %v1872 = vadd.f32 %v1871, %v1775
      %v1873 = vadd.f32 %v1872, %v1779
      %v1874 = vadd.f32 %v1873, %v1783
      %v1875 = vadd.f32 %v1874, %v1787
      %v1876 = vadd.f32 %v1875, %v1791
      %v1877 = vadd.f32 %v1876, %v1795
      %v1878 = vadd.f32 %v1877, %v1799
      %v1879 = vadd.f32 %v1878, %v1803
      %v1880 = vadd.f32 %v1879, %v1807
      %v1881 = vadd.f32 %v1880, %v1811
      %v1882 = vadd.f32 %v1881, %v1815
      %v1883 = vadd.f32 %v1882, %v1819
      %v1884 = vadd.f32 %v1883, %v1823
      %v1885 = vadd.f32 %v1884, %v1827
      %v1886 = vadd.f32 %v1885, %v1831
      %v1887 = vadd.f32 %v1886, %v1835
      %v1888 = vadd.f32 %v1887, %v1839
      %v1889 = vadd.f32 %v1888, %v1843
      %v1890 = vadd.f32 %v1889, %v1847
      %v1891 = vadd.f32 %v1890, %v1851
      %v1892 = vadd.f32 %v1891, %v1855
      %v1893 = vadd.f32 %v1892, %v1859
      %v1894 = vrot.slane %v1893, 4
      %v1895 = vadd.f32 %v1893, %v1894
      %v1896 = vrot.slane %v1895, 2
      %v1897 = vadd.f32 %v1895, %v1896
      %v1898 = vrot.slane %v1897, 1
      %v1899 = vadd.f32 %v1897, %v1898
      %v1900 = vadd.f32 %v1736, %v1740
      %v1901 = vadd.f32 %v1900, %v1744
      %v1902 = vadd.f32 %v1901, %v1748
      %v1903 = vadd.f32 %v1902, %v1752
      %v1904 = vadd.f32 %v1903, %v1756
      %v1905 = vadd.f32 %v1904, %v1760
      %v1906 = vadd.f32 %v1905, %v1764
      %v1907 = vadd.f32 %v1906, %v1768
      %v1908 = vadd.f32 %v1907, %v1772
      %v1909 = vadd.f32 %v1908, %v1776
      %v1910 = vadd.f32 %v1909, %v1780
      %v1911 = vadd.f32 %v1910, %v1784
      %v1912 = vadd.f32 %v1911, %v1788
      %v1913 = vadd.f32 %v1912, %v1792
      %v1914 = vadd.f32 %v1913, %v1796
      %v1915 = vadd.f32 %v1914, %v1800
      %v1916 = vadd.f32 %v1915, %v1804
      %v1917 = vadd.f32 %v1916, %v1808
      %v1918 = vadd.f32 %v1917, %v1812
      %v1919 = vadd.f32 %v1918, %v1816
      %v1920 = vadd.f32 %v1919, %v1820
      %v1921 = vadd.f32 %v1920, %v1824
      %v1922 = vadd.f32 %v1921, %v1828
      %v1923 = vadd.f32 %v1922, %v1832
      %v1924 = vadd.f32 %v1923, %v1836
      %v1925 = vadd.f32 %v1924, %v1840
      %v1926 = vadd.f32 %v1925, %v1844
      %v1927 = vadd.f32 %v1926, %v1848
      %v1928 = vadd.f32 %v1927, %v1852
      %v1929 = vadd.f32 %v1928, %v1856
      %v1930 = vadd.f32 %v1929, %v1860
      %v1931 = vrot.slane %v1930, 4
      %v1932 = vadd.f32 %v1930, %v1931
      %v1933 = vrot.slane %v1932, 2
      %v1934 = vadd.f32 %v1932, %v1933
      %v1935 = vrot.slane %v1934, 1
      %v1936 = vadd.f32 %v1934, %v1935
      %v1937 = vadd.f32 %v1737, %v1741
      %v1938 = vadd.f32 %v1937, %v1745
      %v1939 = vadd.f32 %v1938, %v1749
      %v1940 = vadd.f32 %v1939, %v1753
      %v1941 = vadd.f32 %v1940, %v1757
      %v1942 = vadd.f32 %v1941, %v1761
      %v1943 = vadd.f32 %v1942, %v1765
      %v1944 = vadd.f32 %v1943, %v1769
      %v1945 = vadd.f32 %v1944, %v1773
      %v1946 = vadd.f32 %v1945, %v1777
      %v1947 = vadd.f32 %v1946, %v1781
      %v1948 = vadd.f32 %v1947, %v1785
      %v1949 = vadd.f32 %v1948, %v1789
      %v1950 = vadd.f32 %v1949, %v1793
      %v1951 = vadd.f32 %v1950, %v1797
      %v1952 = vadd.f32 %v1951, %v1801
      %v1953 = vadd.f32 %v1952, %v1805
      %v1954 = vadd.f32 %v1953, %v1809
      %v1955 = vadd.f32 %v1954, %v1813
      %v1956 = vadd.f32 %v1955, %v1817
      %v1957 = vadd.f32 %v1956, %v1821
      %v1958 = vadd.f32 %v1957, %v1825
      %v1959 = vadd.f32 %v1958, %v1829
      %v1960 = vadd.f32 %v1959, %v1833
      %v1961 = vadd.f32 %v1960, %v1837
      %v1962 = vadd.f32 %v1961, %v1841
      %v1963 = vadd.f32 %v1962, %v1845
      %v1964 = vadd.f32 %v1963, %v1849
      %v1965 = vadd.f32 %v1964, %v1853
      %v1966 = vadd.f32 %v1965, %v1857
      %v1967 = vadd.f32 %v1966, %v1861
      %v1968 = vrot.slane %v1967, 4
      %v1969 = vadd.f32 %v1967, %v1968
      %v1970 = vrot.slane %v1969, 2
      %v1971 = vadd.f32 %v1969, %v1970
      %v1972 = vrot.slane %v1971, 1
      %v1973 = vadd.f32 %v1971, %v1972
      %v1974 = vadd.f32 %v1738, %v1742
      %v1975 = vadd.f32 %v1974, %v1746
      %v1976 = vadd.f32 %v1975, %v1750
      %v1977 = vadd.f32 %v1976, %v1754
      %v1978 = vadd.f32 %v1977, %v1758
      %v1979 = vadd.f32 %v1978, %v1762
      %v1980 = vadd.f32 %v1979, %v1766
      %v1981 = vadd.f32 %v1980, %v1770
      %v1982 = vadd.f32 %v1981, %v1774
      %v1983 = vadd.f32 %v1982, %v1778
      %v1984 = vadd.f32 %v1983, %v1782
      %v1985 = vadd.f32 %v1984, %v1786
      %v1986 = vadd.f32 %v1985, %v1790
      %v1987 = vadd.f32 %v1986, %v1794
      %v1988 = vadd.f32 %v1987, %v1798
      %v1989 = vadd.f32 %v1988, %v1802
      %v1990 = vadd.f32 %v1989, %v1806
      %v1991 = vadd.f32 %v1990, %v1810
      %v1992 = vadd.f32 %v1991, %v1814
      %v1993 = vadd.f32 %v1992, %v1818
      %v1994 = vadd.f32 %v1993, %v1822
      %v1995 = vadd.f32 %v1994, %v1826
      %v1996 = vadd.f32 %v1995, %v1830
      %v1997 = vadd.f32 %v1996, %v1834
      %v1998 = vadd.f32 %v1997, %v1838
      %v1999 = vadd.f32 %v1998, %v1842
      %v2000 = vadd.f32 %v1999, %v1846
      %v2001 = vadd.f32 %v2000, %v1850
      %v2002 = vadd.f32 %v2001, %v1854
      %v2003 = vadd.f32 %v2002, %v1858
      %v2004 = vadd.f32 %v2003, %v1862
      %v2005 = vrot.slane %v2004, 4
      %v2006 = vadd.f32 %v2004, %v2005
      %v2007 = vrot.slane %v2006, 2
      %v2008 = vadd.f32 %v2006, %v2007
      %v2009 = vrot.slane %v2008, 1
      %v2010 = vadd.f32 %v2008, %v2009
      %vm2011 = vcmask 1040384
      %v2012 = vsel %vm2011, %v1623, %v1899
      %v2013 = vsel %vm2011, %v1660, %v1936
      %v2014 = vsel %vm2011, %v1697, %v1973
      %v2015 = vsel %vm2011, %v1734, %v2010
      %v2020 = vrot.slane %v2013, 6
      %v2021 = vrot.slane %v2014, 4
      %v2022 = vrot.slane %v2015, 2
      %vm2023 = vcmask 1041408
      %v2024 = vsel %vm2023, %v2012, %v2020
      %vm2025 = vcmask 1045508
      %v2026 = vsel %vm2025, %v2021, %v2022
      %vm2027 = vcmask 1043456
      %v2028 = vsel %vm2027, %v2024, %v2026
      %2030 = vst [vmem:[%s272] sm:$0xff] %v2028
      %s2031 = smul.u32 32, %s18
      %p2032 = scmp.lt.s32.totalorder %s2031, 63
      %s2033 = scalar_select %p2032, %s2031, 63
      %s2034 = smul.addr %s2033, 4
      %s2035 = smul.addr %s2034, 8
      %s2036 = scalar_lea.vmem %s5, %s2035
      %p2037 = scmp.lt.s32.totalorder %s18, 1
      %s2038 = scalar_select %p2037, %s18, 1
      %s2039 = smul.addr %s2038, 4
      %s2040 = smul.addr %s2039, 2
      %s2041 = scalar_lea.vmem %s6, %s2040
      // Predicated region
      $region41: #{refinenet_forward.22} parent=39 // pred_check
        %p2042 = pneg %p146
      $region42: #{refinenet_forward.22} parent=39 // pred_check_branch
        %2044 = sbr.rel (%p2042) target = $region44
      $region43: #{refinenet_forward.22} parent=39 // pred_region
        %s2045 = smul.u32 32, %s18
      $region44: #{refinenet_forward.22} parent=39 // pred_fallthru
        _
      // Predicated region
      $region45: #{refinenet_forward.22} parent=39 // pred_check
        %p2046 = pneg %p172
      $region46: #{refinenet_forward.22} parent=39 // pred_check_branch
        %2048 = sbr.rel (%p2046) target = $region48
      $region47: #{refinenet_forward.22} parent=39 // pred_region
        _
      $region48: #{refinenet_forward.22} parent=39 // pred_fallthru
        _
    $region40: #{refinenet_forward.22} parent=5 // pred_fallthru
      _
    %p2049 = scmp.le.s32.totalorder 2, %s13
    // Predicated region
    $region49: #{refinenet_forward.22} parent=5 // pred_check
      %p2050 = pneg %p2049
    $region50: #{refinenet_forward.22} parent=5 // pred_check_branch
      %2052 = sbr.rel (%p2050) target = $region52
    $region51: #{refinenet_forward.22} parent=5 // pred_region
      %s2053 = ssub.s32 %s13, 2
      // Predicated region
      $region53: #{refinenet_forward.22} parent=51 // pred_check
        %p2054 = pneg %p152
      $region54: #{refinenet_forward.22} parent=51 // pred_check_branch
        %2056 = sbr.rel (%p2054) target = $region56
      $region55: #{refinenet_forward.22} parent=51 // pred_region
        %s2057 = smul.u32 32, %s19
        %p2058 = scmp.lt.s32.totalorder %s2057, 63
        %s2059 = scalar_select %p2058, %s2057, 63
        %s2060 = smul.addr %s2059, 4
        %s2061 = smul.addr %s2060, 8
        %s2062 = scalar_lea.vmem %s5, %s2061
      $region56: #{refinenet_forward.22} parent=51 // pred_fallthru
        _
      // Predicated region
      $region57: #{refinenet_forward.22} parent=51 // pred_check
        %p2063 = pneg %p178
      $region58: #{refinenet_forward.22} parent=51 // pred_check_branch
        %2065 = sbr.rel (%p2063) target = $region60
      $region59: #{refinenet_forward.22} parent=51 // pred_region
        %p2066 = scmp.lt.s32.totalorder %s19, 1
        %s2067 = scalar_select %p2066, %s19, 1
        %s2068 = smul.addr %s2067, 4
        %s2069 = smul.addr %s2068, 2
        %s2070 = scalar_lea.vmem %s6, %s2069
      $region60: #{refinenet_forward.22} parent=51 // pred_fallthru
        _
    $region52: #{refinenet_forward.22} parent=5 // pred_fallthru
      _
  $region6: #{refinenet_forward.22} parent=0 // loop_footer
    %s17 = sadd.s32 1, %s13
  $region7: #{refinenet_forward.22} parent=0 // loop_footer_branch
    %12 = sbr.rel target = $region3
  $region8: #{refinenet_forward.22} parent=0 // loop_exit
    _

</llo_original>
